<compile_context>
chip_gen: v7x
topology: tpu7x:2x2x1
jax: 0.10.0
libtpu: 0.0.40
codegen_flags: <defaults>
</compile_context>

<pallas_src>
import math

import jax
import jax.numpy as jnp
from jax.experimental import pallas as pl
from jax.experimental.pallas import tpu as pltpu

# ----------------------------- config (small shapes) -----------------------------
BATCH             = 2
INPUT_CONTENT_NUM = 2     # content_inputs channels
INPUT_STYLE_NUM   = 2     # number of style reference images
IMG_W             = 32    # imgWidth
NUM_CONTENT_CAT   = 10    # len(loadedLabel0Vec)
NUM_STYLE_CAT     = 12    # len(loadedLabel1Vec)
CHANNELS          = [8, 16, 32, 64, 64]   # encoder block output channels (5 blocks)

_MICRO_M = 64             # below this many rows, use a plain XLA dot (no Pallas)


def _round_up(x, m):
    return ((x + m - 1) // m) * m


# ----------------------------- Pallas fused matmul kernel ------------------------
def _make_mm_kernel(act):
    """Single-shot matmul+bias+activation: whole K in one tile (no reduction axis)."""
    def kernel(x_ref, w_ref, b_ref, o_ref):
        y = jnp.dot(x_ref[...], w_ref[...], preferred_element_type=jnp.float32)
        y = y + b_ref[...]                 # (1, TN) broadcasts over (TM, TN)
        if act == "relu":
            y = jnp.maximum(y, 0.0)
        elif act == "tanh":
            y = jnp.tanh(y)
        o_ref[...] = y.astype(o_ref.dtype)
    return kernel


def _pick_tm(M):
    """Tile M: big tiles for big M, but keep >=2 M steps so v7x's 2 TCs both work."""
    Mp8 = _round_up(M, 8)
    if Mp8 >= 1024:
        return 512
    return max(8, _round_up((Mp8 + 1) // 2, 8))


def matmul_bias_act(x, p, act="none"):
    """y = act(x @ W + b).  x:(M,K).  p holds unpadded f32 (w,b) and pre-padded
    bf16 (wp) / f32 (bp) copies created once at init.  All shapes are taken from
    the arrays' static .shape (never from pytree scalars)."""
    M, K = x.shape                         # static Python ints
    N = p["w"].shape[1]                    # static

    # Micro path: padding/launch overhead would dominate; let XLA fuse it.
    if M < _MICRO_M:
        y = jnp.dot(x.astype(jnp.float32), p["w"],
                    preferred_element_type=jnp.float32) + p["b"]
        if act == "relu":
            y = jnp.maximum(y, 0.0)
        elif act == "tanh":
            y = jnp.tanh(y)
        return y

    Kp, Np = p["wp"].shape                 # pre-padded at init (multiples of 128)
    assert Kp <= 2048, "single-shot kernel assumes full K fits one tile"
    TM = _pick_tm(M)
    TN = 128
    Mp = _round_up(M, TM)

    # Only the activation is padded per call (M to TM multiple, K to Kp).
    xp = jnp.pad(x.astype(jnp.bfloat16), ((0, Mp - M), (0, Kp - K)))

    out = pl.pallas_call(
        _make_mm_kernel(act),
        out_shape=jax.ShapeDtypeStruct((Mp, Np), jnp.float32),
        grid_spec=pltpu.PrefetchScalarGridSpec(
            num_scalar_prefetch=0,
            grid=(Mp // TM, Np // TN),
            in_specs=[
                pl.BlockSpec((TM, Kp), lambda i, j: (i, 0)),
                pl.BlockSpec((Kp, TN), lambda i, j: (0, j)),
                pl.BlockSpec((1, TN), lambda i, j: (0, j)),
            ],
            out_specs=pl.BlockSpec((TM, TN), lambda i, j: (i, j)),
        ),
        compiler_params=pltpu.CompilerParams(
            dimension_semantics=("parallel", "parallel"),
            vmem_limit_bytes=32 * 1024 * 1024),
    )(xp, p["wp"], p["bp"])
    return out[:M, :N]


# ----------------------------- conv via im2col + Pallas matmul -------------------
def _im2col(x, ksize, stride, pad):
    """x: (B,H,W,C) -> (B,Ho,Wo,ksize*ksize*C)."""
    B, H, W, C = x.shape
    xp = jnp.pad(x, ((0, 0), (pad, pad), (pad, pad), (0, 0)))
    Ho = (H + 2 * pad - ksize) // stride + 1
    Wo = (W + 2 * pad - ksize) // stride + 1
    patches = []
    for dh in range(ksize):
        for dw in range(ksize):
            patches.append(xp[:, dh:dh + stride * Ho:stride,
                              dw:dw + stride * Wo:stride, :])
    return jnp.concatenate(patches, axis=-1), Ho, Wo


def conv2d(x, p, stride, act):
    """3x3 conv, padding=1.  x:(B,H,W,Cin)."""
    cols, Ho, Wo = _im2col(x.astype(jnp.bfloat16), 3, stride, 1)
    B = x.shape[0]
    K = cols.shape[-1]
    cout = p["w"].shape[1]
    y = matmul_bias_act(cols.reshape(B * Ho * Wo, K), p, act)
    return y.reshape(B, Ho, Wo, cout)


def upsample2x(x):
    B, H, W, C = x.shape
    y = jnp.broadcast_to(x[:, :, None, :, None, :], (B, H, 2, W, 2, C))
    return y.reshape(B, 2 * H, 2 * W, C)


def nhwc_to_nchw(x):
    return jnp.transpose(x, (0, 3, 1, 2))


# ----------------------------- parameters ----------------------------------------
def _dense_param(key, K, N):
    w = jax.random.normal(key, (K, N), jnp.float32) / math.sqrt(K)
    b = jnp.zeros((N,), jnp.float32)
    Kp, Np = _round_up(K, 128), _round_up(N, 128)
    wp = jnp.pad(w, ((0, Kp - K), (0, Np - N))).astype(jnp.bfloat16)
    bp = jnp.pad(b.reshape(1, -1), ((0, 0), (0, Np - N)))
    # NOTE: only arrays in the pytree (no Python ints) — shapes are read from
    # .shape so they stay static under jax.jit.
    return {"w": w, "b": b, "wp": wp, "bp": bp}


def _conv_param(key, cin, cout, k=3):
    return _dense_param(key, k * k * cin, cout)


def init_params(key):
    params = {}
    idx = [0]

    def nk():
        idx[0] += 1
        return jax.random.fold_in(key, idx[0])

    cin = INPUT_CONTENT_NUM
    for i, c in enumerate(CHANNELS):
        params[f"content_conv{i}"] = _conv_param(nk(), cin, c)
        cin = c
    params["content_fc"] = _dense_param(nk(), CHANNELS[-1], NUM_CONTENT_CAT)

    cin = 1
    for i, c in enumerate(CHANNELS):
        params[f"style_conv{i}"] = _conv_param(nk(), cin, c)
        cin = c
    params["style_fc"] = _dense_param(nk(), CHANNELS[-1], NUM_STYLE_CAT)

    for li in range(1, 5):
        c = CHANNELS[li]
        params[f"mix_conv{li}"] = _conv_param(nk(), 2 * c, c)

    params["dec_conv0"] = _conv_param(nk(), CHANNELS[4], 64)
    params["dec_conv1"] = _conv_param(nk(), 64 + CHANNELS[3], 64)
    params["dec_conv2"] = _conv_param(nk(), 64 + CHANNELS[2], 32)
    params["dec_conv3"] = _conv_param(nk(), 32 + CHANNELS[1], 16)
    params["dec_conv4"] = _conv_param(nk(), 16, 8)
    params["dec_conv5"] = _conv_param(nk(), 8, 1)
    return params


# ----------------------------- sub-networks --------------------------------------
def encoder(params, x_nhwc, prefix):
    feats = []
    h = x_nhwc
    for i in range(len(CHANNELS)):
        h = conv2d(h, params[f"{prefix}_conv{i}"], stride=2, act="relu")
        feats.append(h)
    pooled = jnp.mean(h, axis=(1, 2))                 # global average pool
    category = matmul_bias_act(pooled, params[f"{prefix}_fc"], act="none")
    return category, feats


def mixer(params, style_feature_list, content_features):
    fused = []
    for li in range(1, 5):
        style_mean = jnp.mean(jnp.stack(style_feature_list[li], axis=0), axis=0)
        x = jnp.concatenate([content_features[li], style_mean], axis=-1)
        fused.append(conv2d(x, params[f"mix_conv{li}"], stride=1, act="relu"))
    return fused


def decoder(params, fused):
    m1, m2, m3, m4 = fused
    d_a = conv2d(m4, params["dec_conv0"], 1, "relu")
    d_b = conv2d(jnp.concatenate([upsample2x(d_a), m3], axis=-1), params["dec_conv1"], 1, "relu")
    d_c = conv2d(jnp.concatenate([upsample2x(d_b), m2], axis=-1), params["dec_conv2"], 1, "relu")
    d_d = conv2d(jnp.concatenate([upsample2x(d_c), m1], axis=-1), params["dec_conv3"], 1, "relu")
    x = conv2d(upsample2x(d_d), params["dec_conv4"], 1, "relu")
    generated = conv2d(upsample2x(x), params["dec_conv5"], 1, "tanh")
    return [generated, d_d, d_c, d_b, d_a]


# ----------------------------- WNetGeneratorBase.forward -------------------------
def forward(params, content_inputs, style_inputs, GT):
    """content_inputs:(B,Cc,H,W)  style_inputs:(B,Ns,H,W)  GT:(B,1,H,W)  (NCHW)."""
    B = BATCH
    NS = INPUT_STYLE_NUM
    content_nhwc = jnp.transpose(content_inputs, (0, 2, 3, 1))
    GT_nhwc = jnp.transpose(GT, (0, 2, 3, 1))

    # ---- batched content encode: [real content ; GT repeated to Cc channels] ----
    GT_rep = jnp.tile(GT_nhwc, (1, 1, 1, INPUT_CONTENT_NUM))
    content_batch = jnp.concatenate([content_nhwc, GT_rep], axis=0)        # (2B,...)
    cat_c, feats_c = encoder(params, content_batch, "content")
    contentCategory_onReal = cat_c[:B]
    GT_content_category = cat_c[B:]
    contentFeatures_onReal = [f[:B] for f in feats_c]
    GT_content_outputs = [f[B:] for f in feats_c]

    # ---- batched style encode: [style_0 ; style_1 ; ... ; GT]  (style-major) ----
    style_inputs_r = style_inputs.reshape(B, NS, IMG_W, IMG_W)
    style_slices = [style_inputs_r[:, ii, :, :][..., None] for ii in range(NS)]
    style_batch = jnp.concatenate(style_slices + [GT_nhwc], axis=0)        # ((NS+1)B,...)
    cat_s, feats_s = encoder(params, style_batch, "style")
    # Style-major row order [s0·b0..s0·bB-1, s1·b0..] — identical to the torch concat.
    styleCategoryFull_onReal = cat_s[:NS * B]
    GT_style_category = cat_s[NS * B:]
    styleFeatureList_onReal = [[f[ii * B:(ii + 1) * B] for ii in range(NS)]
                               for f in feats_s]
    GT_style_outputs = [f[NS * B:] for f in feats_s]

    # reshaped style feature list (stack over style axis, NCHW to match torch)
    reshaped_style_list_onReal = []
    for lvl in styleFeatureList_onReal:
        stacked = jnp.stack([nhwc_to_nchw(f) for f in lvl], axis=1)  # (B,Ns,C,H,W)
        reshaped_style_list_onReal.append(stacked)

    enc_content_list_onReal = [nhwc_to_nchw(f) for f in contentFeatures_onReal]

    # ---- mixer + decoder ----
    mix_output = mixer(params, styleFeatureList_onReal, contentFeatures_onReal)
    decode_output_list = decoder(params, mix_output)
    generated_nhwc = decode_output_list[0]
    generated = nhwc_to_nchw(generated_nhwc)                         # (B,1,H,W)

    # ---- re-encodes on generated (depend on decoder output) ----
    gen_rep = jnp.tile(generated_nhwc, (1, 1, 1, INPUT_CONTENT_NUM))
    contentCategoryOnGenerated, contentFeaturesOnGenerated = encoder(params, gen_rep, "content")
    styleCategoryOnGenerated, styleFeaturesOnGenerated = encoder(params, generated_nhwc, "style")

    # category reshape + max over replica axis (matches reshape_tensor + torch.max,
    # including the style-major grouping of styleCategoryFull_onReal)
    def reshape_max(cat2d):
        r = cat2d.reshape(B, cat2d.shape[0] // B, cat2d.shape[1])
        return jnp.max(r, axis=1)

    encodedContentFeatures = {
        "real": enc_content_list_onReal[-1],
        "fake": nhwc_to_nchw(contentFeaturesOnGenerated[-1]),
        "groundtruth": nhwc_to_nchw(GT_content_outputs[-1]),
    }
    encodedStyleFeatures = {
        "real": reshaped_style_list_onReal[-1],
        "fake": nhwc_to_nchw(styleFeaturesOnGenerated[-1]),
        "groundtruth": nhwc_to_nchw(GT_style_outputs[-1]),
    }
    encodedContentCategory = {
        "real": reshape_max(contentCategory_onReal),
        "fake": reshape_max(contentCategoryOnGenerated),
        "groundtruth": GT_content_category,
    }
    encodedStyleCategory = {
        "real": reshape_max(styleCategoryFull_onReal),
        "fake": reshape_max(styleCategoryOnGenerated),
        "groundtruth": GT_style_category,
    }
    return (encodedContentFeatures, encodedStyleFeatures,
            encodedContentCategory, encodedStyleCategory, generated)


# ----------------------------- main -----------------------------------------------
if __name__ == "__main__":
    key = jax.random.PRNGKey(0)
    k1, k2, k3 = jax.random.split(key, 3)
    content = jax.random.normal(k1, (BATCH, INPUT_CONTENT_NUM, IMG_W, IMG_W), jnp.float32)
    style = jax.random.normal(k2, (BATCH, INPUT_STYLE_NUM, IMG_W, IMG_W), jnp.float32)
    GT = jax.random.normal(k3, (BATCH, 1, IMG_W, IMG_W), jnp.float32)

    params = init_params(jax.random.PRNGKey(42))

    fwd = jax.jit(forward)
    outs = fwd(params, content, style, GT)
    jax.block_until_ready(outs)

    gen = outs[4]
    assert gen.shape == (BATCH, 1, IMG_W, IMG_W)
    assert outs[2]["real"].shape == (BATCH, NUM_CONTENT_CAT)
    assert outs[3]["real"].shape == (BATCH, NUM_STYLE_CAT)
    print("KERNEL_OK")
</pallas_src>

<mosaic_0001>
module attributes {stable_mosaic.version = 11 : i64} {
  func.func @kernel(%arg0: i32, %arg1: i32, %arg2: memref<512x128xbf16, #tpu.memory_space<vmem>>, %arg3: memref<128x128xbf16, #tpu.memory_space<vmem>>, %arg4: memref<1x128xf32, #tpu.memory_space<vmem>>, %arg5: memref<512x128xf32, #tpu.memory_space<vmem>>) attributes {dimension_semantics = [#tpu.dimension_semantics<parallel>, #tpu.dimension_semantics<parallel>], iteration_bounds = array<i64: 3, 1>, scalar_prefetch = 0 : i64, scratch_operands = 0 : i64, tpu.core_type = #tpu.core_type<tc>, window_params = [{transform_indices = @transform_0, window_bounds = array<i64: 512, 128>}, {transform_indices = @transform_1, window_bounds = array<i64: 128, 128>}, {transform_indices = @transform_2, window_bounds = array<i64: 1, 128>}, {transform_indices = @transform_3, window_bounds = array<i64: 512, 128>}]} {
    %c0 = arith.constant 0 : index
    %c0_0 = arith.constant 0 : index
    %0 = vector.load %arg2[%c0, %c0_0] : memref<512x128xbf16, #tpu.memory_space<vmem>>, vector<512x128xbf16>
    %c0_1 = arith.constant 0 : index
    %c0_2 = arith.constant 0 : index
    %1 = vector.load %arg3[%c0_1, %c0_2] : memref<128x128xbf16, #tpu.memory_space<vmem>>, vector<128x128xbf16>
    %cst = arith.constant dense<0.000000e+00> : vector<512x128xf32>
    %2 = tpu.matmul %0, %1, %cst {dimension_numbers = #tpu.dot_dimension_numbers<[1], [0], [0], [1], [0, 0, 1, 1], [], []>} : vector<512x128xbf16>, vector<128x128xbf16>, vector<512x128xf32> -> vector<512x128xf32>
    %c0_3 = arith.constant 0 : index
    %c0_4 = arith.constant 0 : index
    %3 = vector.load %arg4[%c0_3, %c0_4] : memref<1x128xf32, #tpu.memory_space<vmem>>, vector<1x128xf32>
    %4 = vector.broadcast %3 : vector<1x128xf32> to vector<512x128xf32>
    %5 = arith.addf %2, %4 : vector<512x128xf32>
    %cst_5 = arith.constant 0.000000e+00 : f32
    %6 = vector.broadcast %cst_5 : f32 to vector<512x128xf32>
    %7 = arith.maximumf %5, %6 : vector<512x128xf32>
    %c0_6 = arith.constant 0 : index
    %c0_7 = arith.constant 0 : index
    %8 = vector.load %arg5[%c0_6, %c0_7] : memref<512x128xf32, #tpu.memory_space<vmem>>, vector<512x128xf32>
    tpu.vector_store %arg5[%c0_6, %c0_7], %7 {strides = array<i32>} : memref<512x128xf32, #tpu.memory_space<vmem>>, vector<512x128xf32>,
    return
  }
  func.func @transform_0(%arg0: i32, %arg1: i32) -> (i32, i32) {
    %c0_i32 = arith.constant 0 : i32
    %c0_i32_0 = arith.constant 0 : i32
    return %arg0, %c0_i32 : i32, i32
  }
  func.func @transform_1(%arg0: i32, %arg1: i32) -> (i32, i32) {
    %c0_i32 = arith.constant 0 : i32
    %c0_i32_0 = arith.constant 0 : i32
    return %c0_i32, %arg1 : i32, i32
  }
  func.func @transform_2(%arg0: i32, %arg1: i32) -> (i32, i32) {
    %c0_i32 = arith.constant 0 : i32
    %c0_i32_0 = arith.constant 0 : i32
    return %c0_i32, %arg1 : i32, i32
  }
  func.func @transform_3(%arg0: i32, %arg1: i32) -> (i32, i32) {
    %c0_i32 = arith.constant 0 : i32
    return %arg0, %arg1 : i32, i32
  }
}

module attributes {stable_mosaic.version = 11 : i64} {
  func.func @kernel(%arg0: i32, %arg1: i32, %arg2: memref<192x128xbf16, #tpu.memory_space<vmem>>, %arg3: memref<128x128xbf16, #tpu.memory_space<vmem>>, %arg4: memref<1x128xf32, #tpu.memory_space<vmem>>, %arg5: memref<192x128xf32, #tpu.memory_space<vmem>>) attributes {dimension_semantics = [#tpu.dimension_semantics<parallel>, #tpu.dimension_semantics<parallel>], iteration_bounds = array<i64: 2, 1>, scalar_prefetch = 0 : i64, scratch_operands = 0 : i64, tpu.core_type = #tpu.core_type<tc>, window_params = [{transform_indices = @transform_0, window_bounds = array<i64: 192, 128>}, {transform_indices = @transform_1, window_bounds = array<i64: 128, 128>}, {transform_indices = @transform_2, window_bounds = array<i64: 1, 128>}, {transform_indices = @transform_3, window_bounds = array<i64: 192, 128>}]} {
    %c0 = arith.constant 0 : index
    %c0_0 = arith.constant 0 : index
    %0 = vector.load %arg2[%c0, %c0_0] : memref<192x128xbf16, #tpu.memory_space<vmem>>, vector<192x128xbf16>
    %c0_1 = arith.constant 0 : index
    %c0_2 = arith.constant 0 : index
    %1 = vector.load %arg3[%c0_1, %c0_2] : memref<128x128xbf16, #tpu.memory_space<vmem>>, vector<128x128xbf16>
    %cst = arith.constant dense<0.000000e+00> : vector<192x128xf32>
    %2 = tpu.matmul %0, %1, %cst {dimension_numbers = #tpu.dot_dimension_numbers<[1], [0], [0], [1], [0, 0, 1, 1], [], []>} : vector<192x128xbf16>, vector<128x128xbf16>, vector<192x128xf32> -> vector<192x128xf32>
    %c0_3 = arith.constant 0 : index
    %c0_4 = arith.constant 0 : index
    %3 = vector.load %arg4[%c0_3, %c0_4] : memref<1x128xf32, #tpu.memory_space<vmem>>, vector<1x128xf32>
    %4 = vector.broadcast %3 : vector<1x128xf32> to vector<192x128xf32>
    %5 = arith.addf %2, %4 : vector<192x128xf32>
    %cst_5 = arith.constant 0.000000e+00 : f32
    %6 = vector.broadcast %cst_5 : f32 to vector<192x128xf32>
    %7 = arith.maximumf %5, %6 : vector<192x128xf32>
    %c0_6 = arith.constant 0 : index
    %c0_7 = arith.constant 0 : index
    %8 = vector.load %arg5[%c0_6, %c0_7] : memref<192x128xf32, #tpu.memory_space<vmem>>, vector<192x128xf32>
    tpu.vector_store %arg5[%c0_6, %c0_7], %7 {strides = array<i32>} : memref<192x128xf32, #tpu.memory_space<vmem>>, vector<192x128xf32>,
    return
  }
  func.func @transform_0(%arg0: i32, %arg1: i32) -> (i32, i32) {
    %c0_i32 = arith.constant 0 : i32
    %c0_i32_0 = arith.constant 0 : i32
    return %arg0, %c0_i32 : i32, i32
  }
  func.func @transform_1(%arg0: i32, %arg1: i32) -> (i32, i32) {
    %c0_i32 = arith.constant 0 : i32
    %c0_i32_0 = arith.constant 0 : i32
    return %c0_i32, %arg1 : i32, i32
  }
  func.func @transform_2(%arg0: i32, %arg1: i32) -> (i32, i32) {
    %c0_i32 = arith.constant 0 : i32
    %c0_i32_0 = arith.constant 0 : i32
    return %c0_i32, %arg1 : i32, i32
  }
  func.func @transform_3(%arg0: i32, %arg1: i32) -> (i32, i32) {
    %c0_i32 = arith.constant 0 : i32
    return %arg0, %arg1 : i32, i32
  }
}

module attributes {stable_mosaic.version = 11 : i64} {
  func.func @kernel(%arg0: i32, %arg1: i32, %arg2: memref<48x256xbf16, #tpu.memory_space<vmem>>, %arg3: memref<256x128xbf16, #tpu.memory_space<vmem>>, %arg4: memref<1x128xf32, #tpu.memory_space<vmem>>, %arg5: memref<48x128xf32, #tpu.memory_space<vmem>>) attributes {dimension_semantics = [#tpu.dimension_semantics<parallel>, #tpu.dimension_semantics<parallel>], iteration_bounds = array<i64: 2, 1>, scalar_prefetch = 0 : i64, scratch_operands = 0 : i64, tpu.core_type = #tpu.core_type<tc>, window_params = [{transform_indices = @transform_0, window_bounds = array<i64: 48, 256>}, {transform_indices = @transform_1, window_bounds = array<i64: 256, 128>}, {transform_indices = @transform_2, window_bounds = array<i64: 1, 128>}, {transform_indices = @transform_3, window_bounds = array<i64: 48, 128>}]} {
    %c0 = arith.constant 0 : index
    %c0_0 = arith.constant 0 : index
    %0 = vector.load %arg2[%c0, %c0_0] : memref<48x256xbf16, #tpu.memory_space<vmem>>, vector<48x256xbf16>
    %c0_1 = arith.constant 0 : index
    %c0_2 = arith.constant 0 : index
    %1 = vector.load %arg3[%c0_1, %c0_2] : memref<256x128xbf16, #tpu.memory_space<vmem>>, vector<256x128xbf16>
    %cst = arith.constant dense<0.000000e+00> : vector<48x128xf32>
    %2 = tpu.matmul %0, %1, %cst {dimension_numbers = #tpu.dot_dimension_numbers<[1], [0], [0], [1], [0, 0, 1, 1], [], []>} : vector<48x256xbf16>, vector<256x128xbf16>, vector<48x128xf32> -> vector<48x128xf32>
    %c0_3 = arith.constant 0 : index
    %c0_4 = arith.constant 0 : index
    %3 = vector.load %arg4[%c0_3, %c0_4] : memref<1x128xf32, #tpu.memory_space<vmem>>, vector<1x128xf32>
    %4 = vector.broadcast %3 : vector<1x128xf32> to vector<48x128xf32>
    %5 = arith.addf %2, %4 : vector<48x128xf32>
    %cst_5 = arith.constant 0.000000e+00 : f32
    %6 = vector.broadcast %cst_5 : f32 to vector<48x128xf32>
    %7 = arith.maximumf %5, %6 : vector<48x128xf32>
    %c0_6 = arith.constant 0 : index
    %c0_7 = arith.constant 0 : index
    %8 = vector.load %arg5[%c0_6, %c0_7] : memref<48x128xf32, #tpu.memory_space<vmem>>, vector<48x128xf32>
    tpu.vector_store %arg5[%c0_6, %c0_7], %7 {strides = array<i32>} : memref<48x128xf32, #tpu.memory_space<vmem>>, vector<48x128xf32>,
    return
  }
  func.func @transform_0(%arg0: i32, %arg1: i32) -> (i32, i32) {
    %c0_i32 = arith.constant 0 : i32
    %c0_i32_0 = arith.constant 0 : i32
    return %arg0, %c0_i32 : i32, i32
  }
  func.func @transform_1(%arg0: i32, %arg1: i32) -> (i32, i32) {
    %c0_i32 = arith.constant 0 : i32
    %c0_i32_0 = arith.constant 0 : i32
    return %c0_i32, %arg1 : i32, i32
  }
  func.func @transform_2(%arg0: i32, %arg1: i32) -> (i32, i32) {
    %c0_i32 = arith.constant 0 : i32
    %c0_i32_0 = arith.constant 0 : i32
    return %c0_i32, %arg1 : i32, i32
  }
  func.func @transform_3(%arg0: i32, %arg1: i32) -> (i32, i32) {
    %c0_i32 = arith.constant 0 : i32
    return %arg0, %arg1 : i32, i32
  }
}

module attributes {stable_mosaic.version = 11 : i64} {
  func.func @kernel(%arg0: i32, %arg1: i32, %arg2: memref<512x128xbf16, #tpu.memory_space<vmem>>, %arg3: memref<128x128xbf16, #tpu.memory_space<vmem>>, %arg4: memref<1x128xf32, #tpu.memory_space<vmem>>, %arg5: memref<512x128xf32, #tpu.memory_space<vmem>>) attributes {dimension_semantics = [#tpu.dimension_semantics<parallel>, #tpu.dimension_semantics<parallel>], iteration_bounds = array<i64: 2, 1>, scalar_prefetch = 0 : i64, scratch_operands = 0 : i64, tpu.core_type = #tpu.core_type<tc>, window_params = [{transform_indices = @transform_0, window_bounds = array<i64: 512, 128>}, {transform_indices = @transform_1, window_bounds = array<i64: 128, 128>}, {transform_indices = @transform_2, window_bounds = array<i64: 1, 128>}, {transform_indices = @transform_3, window_bounds = array<i64: 512, 128>}]} {
    %c0 = arith.constant 0 : index
    %c0_0 = arith.constant 0 : index
    %0 = vector.load %arg2[%c0, %c0_0] : memref<512x128xbf16, #tpu.memory_space<vmem>>, vector<512x128xbf16>
    %c0_1 = arith.constant 0 : index
    %c0_2 = arith.constant 0 : index
    %1 = vector.load %arg3[%c0_1, %c0_2] : memref<128x128xbf16, #tpu.memory_space<vmem>>, vector<128x128xbf16>
    %cst = arith.constant dense<0.000000e+00> : vector<512x128xf32>
    %2 = tpu.matmul %0, %1, %cst {dimension_numbers = #tpu.dot_dimension_numbers<[1], [0], [0], [1], [0, 0, 1, 1], [], []>} : vector<512x128xbf16>, vector<128x128xbf16>, vector<512x128xf32> -> vector<512x128xf32>
    %c0_3 = arith.constant 0 : index
    %c0_4 = arith.constant 0 : index
    %3 = vector.load %arg4[%c0_3, %c0_4] : memref<1x128xf32, #tpu.memory_space<vmem>>, vector<1x128xf32>
    %4 = vector.broadcast %3 : vector<1x128xf32> to vector<512x128xf32>
    %5 = arith.addf %2, %4 : vector<512x128xf32>
    %cst_5 = arith.constant 0.000000e+00 : f32
    %6 = vector.broadcast %cst_5 : f32 to vector<512x128xf32>
    %7 = arith.maximumf %5, %6 : vector<512x128xf32>
    %c0_6 = arith.constant 0 : index
    %c0_7 = arith.constant 0 : index
    %8 = vector.load %arg5[%c0_6, %c0_7] : memref<512x128xf32, #tpu.memory_space<vmem>>, vector<512x128xf32>
    tpu.vector_store %arg5[%c0_6, %c0_7], %7 {strides = array<i32>} : memref<512x128xf32, #tpu.memory_space<vmem>>, vector<512x128xf32>,
    return
  }
  func.func @transform_0(%arg0: i32, %arg1: i32) -> (i32, i32) {
    %c0_i32 = arith.constant 0 : i32
    %c0_i32_0 = arith.constant 0 : i32
    return %arg0, %c0_i32 : i32, i32
  }
  func.func @transform_1(%arg0: i32, %arg1: i32) -> (i32, i32) {
    %c0_i32 = arith.constant 0 : i32
    %c0_i32_0 = arith.constant 0 : i32
    return %c0_i32, %arg1 : i32, i32
  }
  func.func @transform_2(%arg0: i32, %arg1: i32) -> (i32, i32) {
    %c0_i32 = arith.constant 0 : i32
    %c0_i32_0 = arith.constant 0 : i32
    return %c0_i32, %arg1 : i32, i32
  }
  func.func @transform_3(%arg0: i32, %arg1: i32) -> (i32, i32) {
    %c0_i32 = arith.constant 0 : i32
    return %arg0, %arg1 : i32, i32
  }
}

module attributes {stable_mosaic.version = 11 : i64} {
  func.func @kernel(%arg0: i32, %arg1: i32, %arg2: memref<128x128xbf16, #tpu.memory_space<vmem>>, %arg3: memref<128x128xbf16, #tpu.memory_space<vmem>>, %arg4: memref<1x128xf32, #tpu.memory_space<vmem>>, %arg5: memref<128x128xf32, #tpu.memory_space<vmem>>) attributes {dimension_semantics = [#tpu.dimension_semantics<parallel>, #tpu.dimension_semantics<parallel>], iteration_bounds = array<i64: 2, 1>, scalar_prefetch = 0 : i64, scratch_operands = 0 : i64, tpu.core_type = #tpu.core_type<tc>, window_params = [{transform_indices = @transform_0, window_bounds = array<i64: 128, 128>}, {transform_indices = @transform_1, window_bounds = array<i64: 128, 128>}, {transform_indices = @transform_2, window_bounds = array<i64: 1, 128>}, {transform_indices = @transform_3, window_bounds = array<i64: 128, 128>}]} {
    %c0 = arith.constant 0 : index
    %c0_0 = arith.constant 0 : index
    %0 = vector.load %arg2[%c0, %c0_0] : memref<128x128xbf16, #tpu.memory_space<vmem>>, vector<128x128xbf16>
    %c0_1 = arith.constant 0 : index
    %c0_2 = arith.constant 0 : index
    %1 = vector.load %arg3[%c0_1, %c0_2] : memref<128x128xbf16, #tpu.memory_space<vmem>>, vector<128x128xbf16>
    %cst = arith.constant dense<0.000000e+00> : vector<128x128xf32>
    %2 = tpu.matmul %0, %1, %cst {dimension_numbers = #tpu.dot_dimension_numbers<[1], [0], [0], [1], [0, 0, 1, 1], [], []>} : vector<128x128xbf16>, vector<128x128xbf16>, vector<128x128xf32> -> vector<128x128xf32>
    %c0_3 = arith.constant 0 : index
    %c0_4 = arith.constant 0 : index
    %3 = vector.load %arg4[%c0_3, %c0_4] : memref<1x128xf32, #tpu.memory_space<vmem>>, vector<1x128xf32>
    %4 = vector.broadcast %3 : vector<1x128xf32> to vector<128x128xf32>
    %5 = arith.addf %2, %4 : vector<128x128xf32>
    %cst_5 = arith.constant 0.000000e+00 : f32
    %6 = vector.broadcast %cst_5 : f32 to vector<128x128xf32>
    %7 = arith.maximumf %5, %6 : vector<128x128xf32>
    %c0_6 = arith.constant 0 : index
    %c0_7 = arith.constant 0 : index
    %8 = vector.load %arg5[%c0_6, %c0_7] : memref<128x128xf32, #tpu.memory_space<vmem>>, vector<128x128xf32>
    tpu.vector_store %arg5[%c0_6, %c0_7], %7 {strides = array<i32>} : memref<128x128xf32, #tpu.memory_space<vmem>>, vector<128x128xf32>,
    return
  }
  func.func @transform_0(%arg0: i32, %arg1: i32) -> (i32, i32) {
    %c0_i32 = arith.constant 0 : i32
    %c0_i32_0 = arith.constant 0 : i32
    return %arg0, %c0_i32 : i32, i32
  }
  func.func @transform_1(%arg0: i32, %arg1: i32) -> (i32, i32) {
    %c0_i32 = arith.constant 0 : i32
    %c0_i32_0 = arith.constant 0 : i32
    return %c0_i32, %arg1 : i32, i32
  }
  func.func @transform_2(%arg0: i32, %arg1: i32) -> (i32, i32) {
    %c0_i32 = arith.constant 0 : i32
    %c0_i32_0 = arith.constant 0 : i32
    return %c0_i32, %arg1 : i32, i32
  }
  func.func @transform_3(%arg0: i32, %arg1: i32) -> (i32, i32) {
    %c0_i32 = arith.constant 0 : i32
    return %arg0, %arg1 : i32, i32
  }
}

module attributes {stable_mosaic.version = 11 : i64} {
  func.func @kernel(%arg0: i32, %arg1: i32, %arg2: memref<32x256xbf16, #tpu.memory_space<vmem>>, %arg3: memref<256x128xbf16, #tpu.memory_space<vmem>>, %arg4: memref<1x128xf32, #tpu.memory_space<vmem>>, %arg5: memref<32x128xf32, #tpu.memory_space<vmem>>) attributes {dimension_semantics = [#tpu.dimension_semantics<parallel>, #tpu.dimension_semantics<parallel>], iteration_bounds = array<i64: 2, 1>, scalar_prefetch = 0 : i64, scratch_operands = 0 : i64, tpu.core_type = #tpu.core_type<tc>, window_params = [{transform_indices = @transform_0, window_bounds = array<i64: 32, 256>}, {transform_indices = @transform_1, window_bounds = array<i64: 256, 128>}, {transform_indices = @transform_2, window_bounds = array<i64: 1, 128>}, {transform_indices = @transform_3, window_bounds = array<i64: 32, 128>}]} {
    %c0 = arith.constant 0 : index
    %c0_0 = arith.constant 0 : index
    %0 = vector.load %arg2[%c0, %c0_0] : memref<32x256xbf16, #tpu.memory_space<vmem>>, vector<32x256xbf16>
    %c0_1 = arith.constant 0 : index
    %c0_2 = arith.constant 0 : index
    %1 = vector.load %arg3[%c0_1, %c0_2] : memref<256x128xbf16, #tpu.memory_space<vmem>>, vector<256x128xbf16>
    %cst = arith.constant dense<0.000000e+00> : vector<32x128xf32>
    %2 = tpu.matmul %0, %1, %cst {dimension_numbers = #tpu.dot_dimension_numbers<[1], [0], [0], [1], [0, 0, 1, 1], [], []>} : vector<32x256xbf16>, vector<256x128xbf16>, vector<32x128xf32> -> vector<32x128xf32>
    %c0_3 = arith.constant 0 : index
    %c0_4 = arith.constant 0 : index
    %3 = vector.load %arg4[%c0_3, %c0_4] : memref<1x128xf32, #tpu.memory_space<vmem>>, vector<1x128xf32>
    %4 = vector.broadcast %3 : vector<1x128xf32> to vector<32x128xf32>
    %5 = arith.addf %2, %4 : vector<32x128xf32>
    %cst_5 = arith.constant 0.000000e+00 : f32
    %6 = vector.broadcast %cst_5 : f32 to vector<32x128xf32>
    %7 = arith.maximumf %5, %6 : vector<32x128xf32>
    %c0_6 = arith.constant 0 : index
    %c0_7 = arith.constant 0 : index
    %8 = vector.load %arg5[%c0_6, %c0_7] : memref<32x128xf32, #tpu.memory_space<vmem>>, vector<32x128xf32>
    tpu.vector_store %arg5[%c0_6, %c0_7], %7 {strides = array<i32>} : memref<32x128xf32, #tpu.memory_space<vmem>>, vector<32x128xf32>,
    return
  }
  func.func @transform_0(%arg0: i32, %arg1: i32) -> (i32, i32) {
    %c0_i32 = arith.constant 0 : i32
    %c0_i32_0 = arith.constant 0 : i32
    return %arg0, %c0_i32 : i32, i32
  }
  func.func @transform_1(%arg0: i32, %arg1: i32) -> (i32, i32) {
    %c0_i32 = arith.constant 0 : i32
    %c0_i32_0 = arith.constant 0 : i32
    return %c0_i32, %arg1 : i32, i32
  }
  func.func @transform_2(%arg0: i32, %arg1: i32) -> (i32, i32) {
    %c0_i32 = arith.constant 0 : i32
    %c0_i32_0 = arith.constant 0 : i32
    return %c0_i32, %arg1 : i32, i32
  }
  func.func @transform_3(%arg0: i32, %arg1: i32) -> (i32, i32) {
    %c0_i32 = arith.constant 0 : i32
    return %arg0, %arg1 : i32, i32
  }
}

module attributes {stable_mosaic.version = 11 : i64} {
  func.func @kernel(%arg0: i32, %arg1: i32, %arg2: memref<64x384xbf16, #tpu.memory_space<vmem>>, %arg3: memref<384x128xbf16, #tpu.memory_space<vmem>>, %arg4: memref<1x128xf32, #tpu.memory_space<vmem>>, %arg5: memref<64x128xf32, #tpu.memory_space<vmem>>) attributes {dimension_semantics = [#tpu.dimension_semantics<parallel>, #tpu.dimension_semantics<parallel>], iteration_bounds = array<i64: 2, 1>, scalar_prefetch = 0 : i64, scratch_operands = 0 : i64, tpu.core_type = #tpu.core_type<tc>, window_params = [{transform_indices = @transform_0, window_bounds = array<i64: 64, 384>}, {transform_indices = @transform_1, window_bounds = array<i64: 384, 128>}, {transform_indices = @transform_2, window_bounds = array<i64: 1, 128>}, {transform_indices = @transform_3, window_bounds = array<i64: 64, 128>}]} {
    %c0 = arith.constant 0 : index
    %c0_0 = arith.constant 0 : index
    %0 = vector.load %arg2[%c0, %c0_0] : memref<64x384xbf16, #tpu.memory_space<vmem>>, vector<64x384xbf16>
    %c0_1 = arith.constant 0 : index
    %c0_2 = arith.constant 0 : index
    %1 = vector.load %arg3[%c0_1, %c0_2] : memref<384x128xbf16, #tpu.memory_space<vmem>>, vector<384x128xbf16>
    %cst = arith.constant dense<0.000000e+00> : vector<64x128xf32>
    %2 = tpu.matmul %0, %1, %cst {dimension_numbers = #tpu.dot_dimension_numbers<[1], [0], [0], [1], [0, 0, 1, 1], [], []>} : vector<64x384xbf16>, vector<384x128xbf16>, vector<64x128xf32> -> vector<64x128xf32>
    %c0_3 = arith.constant 0 : index
    %c0_4 = arith.constant 0 : index
    %3 = vector.load %arg4[%c0_3, %c0_4] : memref<1x128xf32, #tpu.memory_space<vmem>>, vector<1x128xf32>
    %4 = vector.broadcast %3 : vector<1x128xf32> to vector<64x128xf32>
    %5 = arith.addf %2, %4 : vector<64x128xf32>
    %cst_5 = arith.constant 0.000000e+00 : f32
    %6 = vector.broadcast %cst_5 : f32 to vector<64x128xf32>
    %7 = arith.maximumf %5, %6 : vector<64x128xf32>
    %c0_6 = arith.constant 0 : index
    %c0_7 = arith.constant 0 : index
    %8 = vector.load %arg5[%c0_6, %c0_7] : memref<64x128xf32, #tpu.memory_space<vmem>>, vector<64x128xf32>
    tpu.vector_store %arg5[%c0_6, %c0_7], %7 {strides = array<i32>} : memref<64x128xf32, #tpu.memory_space<vmem>>, vector<64x128xf32>,
    return
  }
  func.func @transform_0(%arg0: i32, %arg1: i32) -> (i32, i32) {
    %c0_i32 = arith.constant 0 : i32
    %c0_i32_0 = arith.constant 0 : i32
    return %arg0, %c0_i32 : i32, i32
  }
  func.func @transform_1(%arg0: i32, %arg1: i32) -> (i32, i32) {
    %c0_i32 = arith.constant 0 : i32
    %c0_i32_0 = arith.constant 0 : i32
    return %c0_i32, %arg1 : i32, i32
  }
  func.func @transform_2(%arg0: i32, %arg1: i32) -> (i32, i32) {
    %c0_i32 = arith.constant 0 : i32
    %c0_i32_0 = arith.constant 0 : i32
    return %c0_i32, %arg1 : i32, i32
  }
  func.func @transform_3(%arg0: i32, %arg1: i32) -> (i32, i32) {
    %c0_i32 = arith.constant 0 : i32
    return %arg0, %arg1 : i32, i32
  }
}

module attributes {stable_mosaic.version = 11 : i64} {
  func.func @kernel(%arg0: i32, %arg1: i32, %arg2: memref<64x512xbf16, #tpu.memory_space<vmem>>, %arg3: memref<512x128xbf16, #tpu.memory_space<vmem>>, %arg4: memref<1x128xf32, #tpu.memory_space<vmem>>, %arg5: memref<64x128xf32, #tpu.memory_space<vmem>>) attributes {dimension_semantics = [#tpu.dimension_semantics<parallel>, #tpu.dimension_semantics<parallel>], iteration_bounds = array<i64: 2, 1>, scalar_prefetch = 0 : i64, scratch_operands = 0 : i64, tpu.core_type = #tpu.core_type<tc>, window_params = [{transform_indices = @transform_0, window_bounds = array<i64: 64, 512>}, {transform_indices = @transform_1, window_bounds = array<i64: 512, 128>}, {transform_indices = @transform_2, window_bounds = array<i64: 1, 128>}, {transform_indices = @transform_3, window_bounds = array<i64: 64, 128>}]} {
    %c0 = arith.constant 0 : index
    %c0_0 = arith.constant 0 : index
    %0 = vector.load %arg2[%c0, %c0_0] : memref<64x512xbf16, #tpu.memory_space<vmem>>, vector<64x512xbf16>
    %c0_1 = arith.constant 0 : index
    %c0_2 = arith.constant 0 : index
    %1 = vector.load %arg3[%c0_1, %c0_2] : memref<512x128xbf16, #tpu.memory_space<vmem>>, vector<512x128xbf16>
    %cst = arith.constant dense<0.000000e+00> : vector<64x128xf32>
    %2 = tpu.matmul %0, %1, %cst {dimension_numbers = #tpu.dot_dimension_numbers<[1], [0], [0], [1], [0, 0, 1, 1], [], []>} : vector<64x512xbf16>, vector<512x128xbf16>, vector<64x128xf32> -> vector<64x128xf32>
    %c0_3 = arith.constant 0 : index
    %c0_4 = arith.constant 0 : index
    %3 = vector.load %arg4[%c0_3, %c0_4] : memref<1x128xf32, #tpu.memory_space<vmem>>, vector<1x128xf32>
    %4 = vector.broadcast %3 : vector<1x128xf32> to vector<64x128xf32>
    %5 = arith.addf %2, %4 : vector<64x128xf32>
    %cst_5 = arith.constant 0.000000e+00 : f32
    %6 = vector.broadcast %cst_5 : f32 to vector<64x128xf32>
    %7 = arith.maximumf %5, %6 : vector<64x128xf32>
    %c0_6 = arith.constant 0 : index
    %c0_7 = arith.constant 0 : index
    %8 = vector.load %arg5[%c0_6, %c0_7] : memref<64x128xf32, #tpu.memory_space<vmem>>, vector<64x128xf32>
    tpu.vector_store %arg5[%c0_6, %c0_7], %7 {strides = array<i32>} : memref<64x128xf32, #tpu.memory_space<vmem>>, vector<64x128xf32>,
    return
  }
  func.func @transform_0(%arg0: i32, %arg1: i32) -> (i32, i32) {
    %c0_i32 = arith.constant 0 : i32
    %c0_i32_0 = arith.constant 0 : i32
    return %arg0, %c0_i32 : i32, i32
  }
  func.func @transform_1(%arg0: i32, %arg1: i32) -> (i32, i32) {
    %c0_i32 = arith.constant 0 : i32
    %c0_i32_0 = arith.constant 0 : i32
    return %c0_i32, %arg1 : i32, i32
  }
  func.func @transform_2(%arg0: i32, %arg1: i32) -> (i32, i32) {
    %c0_i32 = arith.constant 0 : i32
    %c0_i32_0 = arith.constant 0 : i32
    return %c0_i32, %arg1 : i32, i32
  }
  func.func @transform_3(%arg0: i32, %arg1: i32) -> (i32, i32) {
    %c0_i32 = arith.constant 0 : i32
    return %arg0, %arg1 : i32, i32
  }
}

module attributes {stable_mosaic.version = 11 : i64} {
  func.func @kernel(%arg0: i32, %arg1: i32, %arg2: memref<256x256xbf16, #tpu.memory_space<vmem>>, %arg3: memref<256x128xbf16, #tpu.memory_space<vmem>>, %arg4: memref<1x128xf32, #tpu.memory_space<vmem>>, %arg5: memref<256x128xf32, #tpu.memory_space<vmem>>) attributes {dimension_semantics = [#tpu.dimension_semantics<parallel>, #tpu.dimension_semantics<parallel>], iteration_bounds = array<i64: 2, 1>, scalar_prefetch = 0 : i64, scratch_operands = 0 : i64, tpu.core_type = #tpu.core_type<tc>, window_params = [{transform_indices = @transform_0, window_bounds = array<i64: 256, 256>}, {transform_indices = @transform_1, window_bounds = array<i64: 256, 128>}, {transform_indices = @transform_2, window_bounds = array<i64: 1, 128>}, {transform_indices = @transform_3, window_bounds = array<i64: 256, 128>}]} {
    %c0 = arith.constant 0 : index
    %c0_0 = arith.constant 0 : index
    %0 = vector.load %arg2[%c0, %c0_0] : memref<256x256xbf16, #tpu.memory_space<vmem>>, vector<256x256xbf16>
    %c0_1 = arith.constant 0 : index
    %c0_2 = arith.constant 0 : index
    %1 = vector.load %arg3[%c0_1, %c0_2] : memref<256x128xbf16, #tpu.memory_space<vmem>>, vector<256x128xbf16>
    %cst = arith.constant dense<0.000000e+00> : vector<256x128xf32>
    %2 = tpu.matmul %0, %1, %cst {dimension_numbers = #tpu.dot_dimension_numbers<[1], [0], [0], [1], [0, 0, 1, 1], [], []>} : vector<256x256xbf16>, vector<256x128xbf16>, vector<256x128xf32> -> vector<256x128xf32>
    %c0_3 = arith.constant 0 : index
    %c0_4 = arith.constant 0 : index
    %3 = vector.load %arg4[%c0_3, %c0_4] : memref<1x128xf32, #tpu.memory_space<vmem>>, vector<1x128xf32>
    %4 = vector.broadcast %3 : vector<1x128xf32> to vector<256x128xf32>
    %5 = arith.addf %2, %4 : vector<256x128xf32>
    %cst_5 = arith.constant 0.000000e+00 : f32
    %6 = vector.broadcast %cst_5 : f32 to vector<256x128xf32>
    %7 = arith.maximumf %5, %6 : vector<256x128xf32>
    %c0_6 = arith.constant 0 : index
    %c0_7 = arith.constant 0 : index
    %8 = vector.load %arg5[%c0_6, %c0_7] : memref<256x128xf32, #tpu.memory_space<vmem>>, vector<256x128xf32>
    tpu.vector_store %arg5[%c0_6, %c0_7], %7 {strides = array<i32>} : memref<256x128xf32, #tpu.memory_space<vmem>>, vector<256x128xf32>,
    return
  }
  func.func @transform_0(%arg0: i32, %arg1: i32) -> (i32, i32) {
    %c0_i32 = arith.constant 0 : i32
    %c0_i32_0 = arith.constant 0 : i32
    return %arg0, %c0_i32 : i32, i32
  }
  func.func @transform_1(%arg0: i32, %arg1: i32) -> (i32, i32) {
    %c0_i32 = arith.constant 0 : i32
    %c0_i32_0 = arith.constant 0 : i32
    return %c0_i32, %arg1 : i32, i32
  }
  func.func @transform_2(%arg0: i32, %arg1: i32) -> (i32, i32) {
    %c0_i32 = arith.constant 0 : i32
    %c0_i32_0 = arith.constant 0 : i32
    return %c0_i32, %arg1 : i32, i32
  }
  func.func @transform_3(%arg0: i32, %arg1: i32) -> (i32, i32) {
    %c0_i32 = arith.constant 0 : i32
    return %arg0, %arg1 : i32, i32
  }
}

module attributes {stable_mosaic.version = 11 : i64} {
  func.func @kernel(%arg0: i32, %arg1: i32, %arg2: memref<512x128xbf16, #tpu.memory_space<vmem>>, %arg3: memref<128x128xbf16, #tpu.memory_space<vmem>>, %arg4: memref<1x128xf32, #tpu.memory_space<vmem>>, %arg5: memref<512x128xf32, #tpu.memory_space<vmem>>) attributes {dimension_semantics = [#tpu.dimension_semantics<parallel>, #tpu.dimension_semantics<parallel>], iteration_bounds = array<i64: 4, 1>, scalar_prefetch = 0 : i64, scratch_operands = 0 : i64, tpu.core_type = #tpu.core_type<tc>, window_params = [{transform_indices = @transform_0, window_bounds = array<i64: 512, 128>}, {transform_indices = @transform_1, window_bounds = array<i64: 128, 128>}, {transform_indices = @transform_2, window_bounds = array<i64: 1, 128>}, {transform_indices = @transform_3, window_bounds = array<i64: 512, 128>}]} {
    %c0 = arith.constant 0 : index
    %c0_0 = arith.constant 0 : index
    %0 = vector.load %arg2[%c0, %c0_0] : memref<512x128xbf16, #tpu.memory_space<vmem>>, vector<512x128xbf16>
    %c0_1 = arith.constant 0 : index
    %c0_2 = arith.constant 0 : index
    %1 = vector.load %arg3[%c0_1, %c0_2] : memref<128x128xbf16, #tpu.memory_space<vmem>>, vector<128x128xbf16>
    %cst = arith.constant dense<0.000000e+00> : vector<512x128xf32>
    %2 = tpu.matmul %0, %1, %cst {dimension_numbers = #tpu.dot_dimension_numbers<[1], [0], [0], [1], [0, 0, 1, 1], [], []>} : vector<512x128xbf16>, vector<128x128xbf16>, vector<512x128xf32> -> vector<512x128xf32>
    %c0_3 = arith.constant 0 : index
    %c0_4 = arith.constant 0 : index
    %3 = vector.load %arg4[%c0_3, %c0_4] : memref<1x128xf32, #tpu.memory_space<vmem>>, vector<1x128xf32>
    %4 = vector.broadcast %3 : vector<1x128xf32> to vector<512x128xf32>
    %5 = arith.addf %2, %4 : vector<512x128xf32>
    %6 = math.tanh %5 : vector<512x128xf32>
    %c0_5 = arith.constant 0 : index
    %c0_6 = arith.constant 0 : index
    %7 = vector.load %arg5[%c0_5, %c0_6] : memref<512x128xf32, #tpu.memory_space<vmem>>, vector<512x128xf32>
    tpu.vector_store %arg5[%c0_5, %c0_6], %6 {strides = array<i32>} : memref<512x128xf32, #tpu.memory_space<vmem>>, vector<512x128xf32>,
    return
  }
  func.func @transform_0(%arg0: i32, %arg1: i32) -> (i32, i32) {
    %c0_i32 = arith.constant 0 : i32
    %c0_i32_0 = arith.constant 0 : i32
    return %arg0, %c0_i32 : i32, i32
  }
  func.func @transform_1(%arg0: i32, %arg1: i32) -> (i32, i32) {
    %c0_i32 = arith.constant 0 : i32
    %c0_i32_0 = arith.constant 0 : i32
    return %c0_i32, %arg1 : i32, i32
  }
  func.func @transform_2(%arg0: i32, %arg1: i32) -> (i32, i32) {
    %c0_i32 = arith.constant 0 : i32
    %c0_i32_0 = arith.constant 0 : i32
    return %c0_i32, %arg1 : i32, i32
  }
  func.func @transform_3(%arg0: i32, %arg1: i32) -> (i32, i32) {
    %c0_i32 = arith.constant 0 : i32
    return %arg0, %arg1 : i32, i32
  }
}

module attributes {stable_mosaic.version = 11 : i64} {
  func.func @kernel(%arg0: i32, %arg1: i32, %arg2: memref<256x128xbf16, #tpu.memory_space<vmem>>, %arg3: memref<128x128xbf16, #tpu.memory_space<vmem>>, %arg4: memref<1x128xf32, #tpu.memory_space<vmem>>, %arg5: memref<256x128xf32, #tpu.memory_space<vmem>>) attributes {dimension_semantics = [#tpu.dimension_semantics<parallel>, #tpu.dimension_semantics<parallel>], iteration_bounds = array<i64: 2, 1>, scalar_prefetch = 0 : i64, scratch_operands = 0 : i64, tpu.core_type = #tpu.core_type<tc>, window_params = [{transform_indices = @transform_0, window_bounds = array<i64: 256, 128>}, {transform_indices = @transform_1, window_bounds = array<i64: 128, 128>}, {transform_indices = @transform_2, window_bounds = array<i64: 1, 128>}, {transform_indices = @transform_3, window_bounds = array<i64: 256, 128>}]} {
    %c0 = arith.constant 0 : index
    %c0_0 = arith.constant 0 : index
    %0 = vector.load %arg2[%c0, %c0_0] : memref<256x128xbf16, #tpu.memory_space<vmem>>, vector<256x128xbf16>
    %c0_1 = arith.constant 0 : index
    %c0_2 = arith.constant 0 : index
    %1 = vector.load %arg3[%c0_1, %c0_2] : memref<128x128xbf16, #tpu.memory_space<vmem>>, vector<128x128xbf16>
    %cst = arith.constant dense<0.000000e+00> : vector<256x128xf32>
    %2 = tpu.matmul %0, %1, %cst {dimension_numbers = #tpu.dot_dimension_numbers<[1], [0], [0], [1], [0, 0, 1, 1], [], []>} : vector<256x128xbf16>, vector<128x128xbf16>, vector<256x128xf32> -> vector<256x128xf32>
    %c0_3 = arith.constant 0 : index
    %c0_4 = arith.constant 0 : index
    %3 = vector.load %arg4[%c0_3, %c0_4] : memref<1x128xf32, #tpu.memory_space<vmem>>, vector<1x128xf32>
    %4 = vector.broadcast %3 : vector<1x128xf32> to vector<256x128xf32>
    %5 = arith.addf %2, %4 : vector<256x128xf32>
    %cst_5 = arith.constant 0.000000e+00 : f32
    %6 = vector.broadcast %cst_5 : f32 to vector<256x128xf32>
    %7 = arith.maximumf %5, %6 : vector<256x128xf32>
    %c0_6 = arith.constant 0 : index
    %c0_7 = arith.constant 0 : index
    %8 = vector.load %arg5[%c0_6, %c0_7] : memref<256x128xf32, #tpu.memory_space<vmem>>, vector<256x128xf32>
    tpu.vector_store %arg5[%c0_6, %c0_7], %7 {strides = array<i32>} : memref<256x128xf32, #tpu.memory_space<vmem>>, vector<256x128xf32>,
    return
  }
  func.func @transform_0(%arg0: i32, %arg1: i32) -> (i32, i32) {
    %c0_i32 = arith.constant 0 : i32
    %c0_i32_0 = arith.constant 0 : i32
    return %arg0, %c0_i32 : i32, i32
  }
  func.func @transform_1(%arg0: i32, %arg1: i32) -> (i32, i32) {
    %c0_i32 = arith.constant 0 : i32
    %c0_i32_0 = arith.constant 0 : i32
    return %c0_i32, %arg1 : i32, i32
  }
  func.func @transform_2(%arg0: i32, %arg1: i32) -> (i32, i32) {
    %c0_i32 = arith.constant 0 : i32
    %c0_i32_0 = arith.constant 0 : i32
    return %c0_i32, %arg1 : i32, i32
  }
  func.func @transform_3(%arg0: i32, %arg1: i32) -> (i32, i32) {
    %c0_i32 = arith.constant 0 : i32
    return %arg0, %arg1 : i32, i32
  }
}

module attributes {stable_mosaic.version = 11 : i64} {
  func.func @kernel(%arg0: i32, %arg1: i32, %arg2: memref<64x128xbf16, #tpu.memory_space<vmem>>, %arg3: memref<128x128xbf16, #tpu.memory_space<vmem>>, %arg4: memref<1x128xf32, #tpu.memory_space<vmem>>, %arg5: memref<64x128xf32, #tpu.memory_space<vmem>>) attributes {dimension_semantics = [#tpu.dimension_semantics<parallel>, #tpu.dimension_semantics<parallel>], iteration_bounds = array<i64: 2, 1>, scalar_prefetch = 0 : i64, scratch_operands = 0 : i64, tpu.core_type = #tpu.core_type<tc>, window_params = [{transform_indices = @transform_0, window_bounds = array<i64: 64, 128>}, {transform_indices = @transform_1, window_bounds = array<i64: 128, 128>}, {transform_indices = @transform_2, window_bounds = array<i64: 1, 128>}, {transform_indices = @transform_3, window_bounds = array<i64: 64, 128>}]} {
    %c0 = arith.constant 0 : index
    %c0_0 = arith.constant 0 : index
    %0 = vector.load %arg2[%c0, %c0_0] : memref<64x128xbf16, #tpu.memory_space<vmem>>, vector<64x128xbf16>
    %c0_1 = arith.constant 0 : index
    %c0_2 = arith.constant 0 : index
    %1 = vector.load %arg3[%c0_1, %c0_2] : memref<128x128xbf16, #tpu.memory_space<vmem>>, vector<128x128xbf16>
    %cst = arith.constant dense<0.000000e+00> : vector<64x128xf32>
    %2 = tpu.matmul %0, %1, %cst {dimension_numbers = #tpu.dot_dimension_numbers<[1], [0], [0], [1], [0, 0, 1, 1], [], []>} : vector<64x128xbf16>, vector<128x128xbf16>, vector<64x128xf32> -> vector<64x128xf32>
    %c0_3 = arith.constant 0 : index
    %c0_4 = arith.constant 0 : index
    %3 = vector.load %arg4[%c0_3, %c0_4] : memref<1x128xf32, #tpu.memory_space<vmem>>, vector<1x128xf32>
    %4 = vector.broadcast %3 : vector<1x128xf32> to vector<64x128xf32>
    %5 = arith.addf %2, %4 : vector<64x128xf32>
    %cst_5 = arith.constant 0.000000e+00 : f32
    %6 = vector.broadcast %cst_5 : f32 to vector<64x128xf32>
    %7 = arith.maximumf %5, %6 : vector<64x128xf32>
    %c0_6 = arith.constant 0 : index
    %c0_7 = arith.constant 0 : index
    %8 = vector.load %arg5[%c0_6, %c0_7] : memref<64x128xf32, #tpu.memory_space<vmem>>, vector<64x128xf32>
    tpu.vector_store %arg5[%c0_6, %c0_7], %7 {strides = array<i32>} : memref<64x128xf32, #tpu.memory_space<vmem>>, vector<64x128xf32>,
    return
  }
  func.func @transform_0(%arg0: i32, %arg1: i32) -> (i32, i32) {
    %c0_i32 = arith.constant 0 : i32
    %c0_i32_0 = arith.constant 0 : i32
    return %arg0, %c0_i32 : i32, i32
  }
  func.func @transform_1(%arg0: i32, %arg1: i32) -> (i32, i32) {
    %c0_i32 = arith.constant 0 : i32
    %c0_i32_0 = arith.constant 0 : i32
    return %c0_i32, %arg1 : i32, i32
  }
  func.func @transform_2(%arg0: i32, %arg1: i32) -> (i32, i32) {
    %c0_i32 = arith.constant 0 : i32
    %c0_i32_0 = arith.constant 0 : i32
    return %c0_i32, %arg1 : i32, i32
  }
  func.func @transform_3(%arg0: i32, %arg1: i32) -> (i32, i32) {
    %c0_i32 = arith.constant 0 : i32
    return %arg0, %arg1 : i32, i32
  }
}

</mosaic_0001>

<llo_original>
// kernel: forward.17
$region0: #{forward.17}
  #allocation0 [shape = 'u32[]', space=smem, size = 0x4, offset = 0x4, fixed_abs, tag = 'smem constant byte address 0x4 - core index']
  #allocation1 [shape = 'u32[144,128]{1,0:T(1,128)}', space=vmem, size = 0x12000, scoped, tag = 'internal scratch']
  %s0 = inlined_call_operand.vmem [shape: bf16[1536,128], index: 0, kind: input, shape index: {}]
  %s1 = inlined_call_operand.vmem [shape: bf16[128,128], index: 1, kind: input, shape index: {}]
  %s2 = inlined_call_operand.vmem [shape: f32[1,128], index: 2, kind: input, shape index: {}]
  %s3 = inlined_call_operand.vmem [shape: f32[1536,128], index: 3, kind: output, shape index: {}]
  %s4 = sld [smem:[#allocation0]]
  $region45: #{forward.17} parent=0
    _
  %s6 = ssub.s32 1, %s4
  %s7 = scalar_select 0, %s6, %s4
  loop: start=0, step=1, limit=5
  $region2: #{forward.17} parent=0 // loop_pre_header
    _
  $region3: #{forward.17} parent=0 // loop_header
    %s9 = sphi 0, %s13
    %p10 = scmp.ge.s32.totalorder %s9, 5
    %s16 = sphi 0, %s28
    %s17 = sphi 0, %s24
    %s18 = sphi 0, %s16
    %s19 = sphi 0, %s17
    %s20 = sphi 0, %s18
    %s21 = sphi 0, %s19
    %s31 = sphi 0, %s33
    %s34 = sphi 0, %s31
    %s35 = sphi 0, %s34
    %s51 = sphi 0, %s35
    %s57 = sphi 0, %s59
    %s60 = sphi 0, %s57
    %s61 = sphi 0, %s60
    %s77 = sphi 0, %s61
    %s83 = sphi 0, %s85
    %s86 = sphi 0, %s83
    %s87 = sphi 0, %s86
    %s103 = sphi 0, %s87
    %s111 = sphi 0, %s113
    %s114 = sphi 0, %s111
    %s115 = sphi 0, %s114
    %s131 = sphi 0, %s115
  $region4: #{forward.17} parent=0 // loop_header_branch
    %12 = sbr.rel (%p10) target = $region8
  $region5: #{forward.17} parent=0 // loop_body
    %s14 = ssub.s32 %s9, 1
    %s15 = ssub.s32 %s9, 2
    %s22 = sadd.s32 1, %s17
    %p23 = scmp.ge.s32.totalorder %s22, 1
    %s24 = scalar_select %p23, 0, %s22
    %s25 = sadd.s32 1, %s16
    %s26 = scalar_select %p23, %s25, %s16
    %p27 = scmp.ge.s32.totalorder %s26, 3
    %s28 = scalar_select %p27, 0, %s26
    %s29 = ssub.s32 %s16, %s28
    %p30 = scmp.eq.s32.totalorder %s29, 0
    %s32 = sadd.s32 %s31, 1
    %s33 = scalar_select %p30, %s31, %s32
    %p36 = pneg %p30
    %p37 = scmp.eq.s32.totalorder %s9, 2
    %p38 = por %p36, %p37
    %p39 = scmp.ne.s32.totalorder %s31, %s34
    %p40 = scmp.eq.s32.totalorder %s9, 0
    %p41 = por %p39, %p40
    %p42 = scmp.ne.s32.totalorder %s31, %s34
    %p43 = scmp.eq.s32.totalorder %s14, 2
    %p44 = por %p42, %p43
    %p45 = scmp.ne.s32.totalorder %s34, %s35
    %p46 = scmp.eq.s32.totalorder %s14, 0
    %p47 = por %p45, %p46
    %p48 = scmp.ne.s32.totalorder %s34, %s35
    %p49 = scmp.eq.s32.totalorder %s15, 2
    %p50 = por %p48, %p49
    %p52 = scmp.ne.s32.totalorder %s35, %s51
    %p53 = scmp.eq.s32.totalorder %s15, 0
    %p54 = por %p52, %p53
    %s55 = ssub.s32 %s17, %s24
    %p56 = scmp.eq.s32.totalorder %s55, 0
    %s58 = sadd.s32 %s57, 1
    %s59 = scalar_select %p56, %s57, %s58
    %p62 = pneg %p56
    %p63 = scmp.eq.s32.totalorder %s9, 2
    %p64 = por %p62, %p63
    %p65 = scmp.ne.s32.totalorder %s57, %s60
    %p66 = scmp.eq.s32.totalorder %s9, 0
    %p67 = por %p65, %p66
    %p68 = scmp.ne.s32.totalorder %s57, %s60
    %p69 = scmp.eq.s32.totalorder %s14, 2
    %p70 = por %p68, %p69
    %p71 = scmp.ne.s32.totalorder %s60, %s61
    %p72 = scmp.eq.s32.totalorder %s14, 0
    %p73 = por %p71, %p72
    %p74 = scmp.ne.s32.totalorder %s60, %s61
    %p75 = scmp.eq.s32.totalorder %s15, 2
    %p76 = por %p74, %p75
    %p78 = scmp.ne.s32.totalorder %s61, %s77
    %p79 = scmp.eq.s32.totalorder %s15, 0
    %p80 = por %p78, %p79
    %s81 = ssub.s32 %s17, %s24
    %p82 = scmp.eq.s32.totalorder %s81, 0
    %s84 = sadd.s32 %s83, 1
    %s85 = scalar_select %p82, %s83, %s84
    %p88 = pneg %p82
    %p89 = scmp.eq.s32.totalorder %s9, 2
    %p90 = por %p88, %p89
    %p91 = scmp.ne.s32.totalorder %s83, %s86
    %p92 = scmp.eq.s32.totalorder %s9, 0
    %p93 = por %p91, %p92
    %p94 = scmp.ne.s32.totalorder %s83, %s86
    %p95 = scmp.eq.s32.totalorder %s14, 2
    %p96 = por %p94, %p95
    %p97 = scmp.ne.s32.totalorder %s86, %s87
    %p98 = scmp.eq.s32.totalorder %s14, 0
    %p99 = por %p97, %p98
    %p100 = scmp.ne.s32.totalorder %s86, %s87
    %p101 = scmp.eq.s32.totalorder %s15, 2
    %p102 = por %p100, %p101
    %p104 = scmp.ne.s32.totalorder %s87, %s103
    %p105 = scmp.eq.s32.totalorder %s15, 0
    %p106 = por %p104, %p105
    %s107 = ssub.s32 %s16, %s28
    %s108 = ssub.s32 %s17, %s24
    %s109 = sor.u32 %s107, %s108
    %p110 = scmp.eq.s32.totalorder %s109, 0
    %s112 = sadd.s32 %s111, 1
    %s113 = scalar_select %p110, %s111, %s112
    %p116 = pneg %p110
    %p117 = scmp.eq.s32.totalorder %s9, 2
    %p118 = por %p116, %p117
    %p119 = scmp.ne.s32.totalorder %s111, %s114
    %p120 = scmp.eq.s32.totalorder %s9, 0
    %p121 = por %p119, %p120
    %p122 = scmp.ne.s32.totalorder %s111, %s114
    %p123 = scmp.eq.s32.totalorder %s14, 2
    %p124 = por %p122, %p123
    %p125 = scmp.ne.s32.totalorder %s114, %s115
    %p126 = scmp.eq.s32.totalorder %s14, 0
    %p127 = por %p125, %p126
    %p128 = scmp.ne.s32.totalorder %s114, %s115
    %p129 = scmp.eq.s32.totalorder %s15, 2
    %p130 = por %p128, %p129
    %p132 = scmp.ne.s32.totalorder %s115, %s131
    %p133 = scmp.eq.s32.totalorder %s15, 0
    %p134 = por %p132, %p133
    %p135 = scmp.le.s32.totalorder 1, %s9
    %p136 = scmp.lt.s32.totalorder %s9, 4
    %p137 = pnand %p135, %p136
    %p138 = pneg %p137
    // Predicated region
    $region9: #{forward.17} parent=5 // pred_check
      _
    $region10: #{forward.17} parent=5 // pred_check_branch
      %140 = sbr.rel (%p137) target = $region12
    $region11: #{forward.17} parent=5 // pred_region
      %s141 = ssub.s32 %s9, 1
      // Predicated region
      $region13: #{forward.17} parent=11 // pred_check
        %p142 = pneg %p73
      $region14: #{forward.17} parent=11 // pred_check_branch
        %144 = sbr.rel (%p142) target = $region16
      $region15: #{forward.17} parent=11 // pred_region
        %p145 = scmp.lt.s32.totalorder %s19, 0
        %s146 = scalar_select %p145, %s19, 0
        %s147 = smul.addr %s146, 4
        %s148 = scalar_lea.vmem %s1, %s147
      $region16: #{forward.17} parent=11 // pred_fallthru
        _
      // Predicated region
      $region17: #{forward.17} parent=11 // pred_check
        %p149 = pneg %p99
      $region18: #{forward.17} parent=11 // pred_check_branch
        %151 = sbr.rel (%p149) target = $region20
      $region19: #{forward.17} parent=11 // pred_region
        %p152 = scmp.lt.s32.totalorder %s19, 0
        %s153 = scalar_select %p152, %s19, 0
        %s154 = scalar_lea.vmem %s2, %s153
      $region20: #{forward.17} parent=11 // pred_fallthru
        _
    $region12: #{forward.17} parent=5 // pred_fallthru
      _
    %p155 = scmp.lt.s32.totalorder %s9, 3
    // Predicated region
    $region21: #{forward.17} parent=5 // pred_check
      %p156 = pneg %p155
    $region22: #{forward.17} parent=5 // pred_check_branch
      %158 = sbr.rel (%p156) target = $region24
    $region23: #{forward.17} parent=5 // pred_region
      // Predicated region
      $region25: #{forward.17} parent=23 // pred_check
        %p159 = pneg %p41
      $region26: #{forward.17} parent=23 // pred_check_branch
        %161 = sbr.rel (%p159) target = $region28
      $region27: #{forward.17} parent=23 // pred_region
        %s162 = smul.u32 64, %s16
        %p163 = scmp.lt.s32.totalorder %s162, 191
        %s164 = scalar_select %p163, %s162, 191
        %s165 = smul.addr %s164, 4
        %s166 = scalar_lea.vmem %s0, %s165
        %s167 = smul.u32 64, %s16
      $region28: #{forward.17} parent=23 // pred_fallthru
        _
    $region24: #{forward.17} parent=5 // pred_fallthru
      _
    %p168 = scmp.le.s32.totalorder 1, %s9
    %p169 = scmp.lt.s32.totalorder %s9, 4
    %p170 = pnand %p168, %p169
    %p171 = pneg %p170
    // Predicated region
    $region29: #{forward.17} parent=5 // pred_check
      _
    $region30: #{forward.17} parent=5 // pred_check_branch
      %173 = sbr.rel (%p170) target = $region32
    $region31: #{forward.17} parent=5 // pred_region
      %s174 = ssub.s32 %s9, 1
      %s175 = smul.u32 64, %s18
      %p176 = scmp.lt.s32.totalorder %s175, 191
      %s177 = scalar_select %p176, %s175, 191
      %s178 = smul.addr %s177, 4
      %s179 = scalar_lea.vmem %s0, %s178
      %p180 = pneg %p47
      %p181 = pneg %p44
      %p182 = scmp.lt.s32.totalorder %s19, 0
      %s183 = scalar_select %p182, %s19, 0
      %s184 = smul.addr %s183, 4
      %s185 = scalar_lea.vmem %s1, %s184
      %p186 = pneg %p73
      %p187 = pneg %p70
      %p188 = scmp.lt.s32.totalorder %s19, 0
      %s189 = scalar_select %p188, %s19, 0
      %s190 = scalar_lea.vmem %s2, %s189
      %p191 = pneg %p99
      %p192 = pneg %p96
      %p193 = pneg %p127
      %p194 = pneg %p124
      %s195 = smul.u32 64, %s18
      %p196 = scmp.lt.s32.totalorder %s195, 191
      %s197 = scalar_select %p196, %s195, 191
      %p198 = scmp.lt.s32.totalorder %s19, 0
      %s199 = scalar_select %p198, %s19, 0
      %s200 = sadd.s32 %s199, %s197
      %s201 = smul.addr %s200, 8
      %s202 = scalar_lea.vmem %s3, %s201
      %s203 = smul.u32 64, %s18
      %p204 = scmp.lt.s32.totalorder %s203, 191
      %s205 = scalar_select %p204, %s203, 191
      %s206 = smul.addr %s205, 4
      %s207 = scalar_lea.vmem %s0, %s206
      %s208 = smul.u32 64, %s18
      %p209 = scmp.lt.s32.totalorder %s19, 0
      %s210 = scalar_select %p209, %s19, 0
      %s211 = smul.addr %s210, 4
      %s212 = scalar_lea.vmem %s1, %s211
      %p213 = scmp.lt.s32.totalorder %s19, 0
      %s214 = scalar_select %p213, %s19, 0
      %s215 = scalar_lea.vmem %s2, %s214
      %s216 = smul.u32 64, %s18
      %p217 = scmp.lt.s32.totalorder %s216, 191
      %s218 = scalar_select %p217, %s216, 191
      %p219 = scmp.lt.s32.totalorder %s19, 0
      %s220 = scalar_select %p219, %s19, 0
      %s221 = sadd.s32 %s220, %s218
      %s222 = smul.addr %s221, 8
      %s223 = scalar_lea.vmem %s3, %s222
      %s224 = smul.u32 64, %s18
      %v226 = vld [vmem:[%s207] sm:$0xf]
      %v227 = vld [vmem:[%s207 + $0x4] sm:$0xf]
      %v228 = vld [vmem:[%s207 + $0x8] sm:$0xf]
      %v229 = vld [vmem:[%s207 + $0xc] sm:$0xf]
      %v230 = vld [vmem:[%s207 + $0x10] sm:$0xf]
      %v231 = vld [vmem:[%s207 + $0x14] sm:$0xf]
      %v232 = vld [vmem:[%s207 + $0x18] sm:$0xf]
      %v233 = vld [vmem:[%s207 + $0x1c] sm:$0xf]
      %v234 = vld [vmem:[%s207 + $0x20] sm:$0xf]
      %v235 = vld [vmem:[%s207 + $0x24] sm:$0xf]
      %v236 = vld [vmem:[%s207 + $0x28] sm:$0xf]
      %v237 = vld [vmem:[%s207 + $0x2c] sm:$0xf]
      %v238 = vld [vmem:[%s207 + $0x30] sm:$0xf]
      %v239 = vld [vmem:[%s207 + $0x34] sm:$0xf]
      %v240 = vld [vmem:[%s207 + $0x38] sm:$0xf]
      %v241 = vld [vmem:[%s207 + $0x3c] sm:$0xf]
      %v242 = vld [vmem:[%s207 + $0x40] sm:$0xf]
      %v243 = vld [vmem:[%s207 + $0x44] sm:$0xf]
      %v244 = vld [vmem:[%s207 + $0x48] sm:$0xf]
      %v245 = vld [vmem:[%s207 + $0x4c] sm:$0xf]
      %v246 = vld [vmem:[%s207 + $0x50] sm:$0xf]
      %v247 = vld [vmem:[%s207 + $0x54] sm:$0xf]
      %v248 = vld [vmem:[%s207 + $0x58] sm:$0xf]
      %v249 = vld [vmem:[%s207 + $0x5c] sm:$0xf]
      %v250 = vld [vmem:[%s207 + $0x60] sm:$0xf]
      %v251 = vld [vmem:[%s207 + $0x64] sm:$0xf]
      %v252 = vld [vmem:[%s207 + $0x68] sm:$0xf]
      %v253 = vld [vmem:[%s207 + $0x6c] sm:$0xf]
      %v254 = vld [vmem:[%s207 + $0x70] sm:$0xf]
      %v255 = vld [vmem:[%s207 + $0x74] sm:$0xf]
      %v256 = vld [vmem:[%s207 + $0x78] sm:$0xf]
      %v257 = vld [vmem:[%s207 + $0x7c] sm:$0xf]
      %v258 = vld [vmem:[%s207 + $0x80] sm:$0xf]
      %v259 = vld [vmem:[%s207 + $0x84] sm:$0xf]
      %v260 = vld [vmem:[%s207 + $0x88] sm:$0xf]
      %v261 = vld [vmem:[%s207 + $0x8c] sm:$0xf]
      %v262 = vld [vmem:[%s207 + $0x90] sm:$0xf]
      %v263 = vld [vmem:[%s207 + $0x94] sm:$0xf]
      %v264 = vld [vmem:[%s207 + $0x98] sm:$0xf]
      %v265 = vld [vmem:[%s207 + $0x9c] sm:$0xf]
      %v266 = vld [vmem:[%s207 + $0xa0] sm:$0xf]
      %v267 = vld [vmem:[%s207 + $0xa4] sm:$0xf]
      %v268 = vld [vmem:[%s207 + $0xa8] sm:$0xf]
      %v269 = vld [vmem:[%s207 + $0xac] sm:$0xf]
      %v270 = vld [vmem:[%s207 + $0xb0] sm:$0xf]
      %v271 = vld [vmem:[%s207 + $0xb4] sm:$0xf]
      %v272 = vld [vmem:[%s207 + $0xb8] sm:$0xf]
      %v273 = vld [vmem:[%s207 + $0xbc] sm:$0xf]
      %v274 = vld [vmem:[%s207 + $0xc0] sm:$0xf]
      %v275 = vld [vmem:[%s207 + $0xc4] sm:$0xf]
      %v276 = vld [vmem:[%s207 + $0xc8] sm:$0xf]
      %v277 = vld [vmem:[%s207 + $0xcc] sm:$0xf]
      %v278 = vld [vmem:[%s207 + $0xd0] sm:$0xf]
      %v279 = vld [vmem:[%s207 + $0xd4] sm:$0xf]
      %v280 = vld [vmem:[%s207 + $0xd8] sm:$0xf]
      %v281 = vld [vmem:[%s207 + $0xdc] sm:$0xf]
      %v282 = vld [vmem:[%s207 + $0xe0] sm:$0xf]
      %v283 = vld [vmem:[%s207 + $0xe4] sm:$0xf]
      %v284 = vld [vmem:[%s207 + $0xe8] sm:$0xf]
      %v285 = vld [vmem:[%s207 + $0xec] sm:$0xf]
      %v286 = vld [vmem:[%s207 + $0xf0] sm:$0xf]
      %v287 = vld [vmem:[%s207 + $0xf4] sm:$0xf]
      %v288 = vld [vmem:[%s207 + $0xf8] sm:$0xf]
      %v289 = vld [vmem:[%s207 + $0xfc] sm:$0xf]
      %v290 = vld [vmem:[%s212] sm:$0xf]
      %v291 = vld [vmem:[%s212 + $0x4] sm:$0xf]
      %v292 = vld [vmem:[%s212 + $0x8] sm:$0xf]
      %v293 = vld [vmem:[%s212 + $0xc] sm:$0xf]
      %v294 = vld [vmem:[%s212 + $0x10] sm:$0xf]
      %v295 = vld [vmem:[%s212 + $0x14] sm:$0xf]
      %v296 = vld [vmem:[%s212 + $0x18] sm:$0xf]
      %v297 = vld [vmem:[%s212 + $0x1c] sm:$0xf]
      %v298 = vld [vmem:[%s212 + $0x20] sm:$0xf]
      %v299 = vld [vmem:[%s212 + $0x24] sm:$0xf]
      %v300 = vld [vmem:[%s212 + $0x28] sm:$0xf]
      %v301 = vld [vmem:[%s212 + $0x2c] sm:$0xf]
      %v302 = vld [vmem:[%s212 + $0x30] sm:$0xf]
      %v303 = vld [vmem:[%s212 + $0x34] sm:$0xf]
      %v304 = vld [vmem:[%s212 + $0x38] sm:$0xf]
      %v305 = vld [vmem:[%s212 + $0x3c] sm:$0xf]
      %v306 = vld [vmem:[%s215] sm:$0x1]
      %v308 = vlaneseq
      %v309 = vshrl.u32 %v308, 7
      %v310 = vsub.s32 0, %v309
      %v311 = vrot.slane %v306, %v310
      %v377 = vunpack.c.l.b16 %v226
      %v378 = vunpack.c.l.b16 %v227
      %v379 = vunpack.c.l.b16 %v228
      %v380 = vunpack.c.l.b16 %v229
      %v381 = vunpack.c.l.b16 %v230
      %v382 = vunpack.c.l.b16 %v231
      %v383 = vunpack.c.l.b16 %v232
      %v384 = vunpack.c.l.b16 %v233
      %v385 = vunpack.c.l.b16 %v234
      %v386 = vunpack.c.l.b16 %v235
      %v387 = vunpack.c.l.b16 %v236
      %v388 = vunpack.c.l.b16 %v237
      %v389 = vunpack.c.l.b16 %v238
      %v390 = vunpack.c.l.b16 %v239
      %v391 = vunpack.c.l.b16 %v240
      %v392 = vunpack.c.l.b16 %v241
      %v393 = vunpack.c.l.b16 %v242
      %v394 = vunpack.c.l.b16 %v243
      %v395 = vunpack.c.l.b16 %v244
      %v396 = vunpack.c.l.b16 %v245
      %v397 = vunpack.c.l.b16 %v246
      %v398 = vunpack.c.l.b16 %v247
      %v399 = vunpack.c.l.b16 %v248
      %v400 = vunpack.c.l.b16 %v249
      %v401 = vunpack.c.l.b16 %v250
      %v402 = vunpack.c.l.b16 %v251
      %v403 = vunpack.c.l.b16 %v252
      %v404 = vunpack.c.l.b16 %v253
      %v405 = vunpack.c.l.b16 %v254
      %v406 = vunpack.c.l.b16 %v255
      %v407 = vunpack.c.l.b16 %v256
      %v408 = vunpack.c.l.b16 %v257
      %v409 = vunpack.c.l.b16 %v258
      %v410 = vunpack.c.l.b16 %v259
      %v411 = vunpack.c.l.b16 %v260
      %v412 = vunpack.c.l.b16 %v261
      %v413 = vunpack.c.l.b16 %v262
      %v414 = vunpack.c.l.b16 %v263
      %v415 = vunpack.c.l.b16 %v264
      %v416 = vunpack.c.l.b16 %v265
      %v417 = vunpack.c.l.b16 %v266
      %v418 = vunpack.c.l.b16 %v267
      %v419 = vunpack.c.l.b16 %v268
      %v420 = vunpack.c.l.b16 %v269
      %v421 = vunpack.c.l.b16 %v270
      %v422 = vunpack.c.l.b16 %v271
      %v423 = vunpack.c.l.b16 %v272
      %v424 = vunpack.c.l.b16 %v273
      %v425 = vunpack.c.l.b16 %v274
      %v426 = vunpack.c.l.b16 %v275
      %v427 = vunpack.c.l.b16 %v276
      %v428 = vunpack.c.l.b16 %v277
      %v429 = vunpack.c.l.b16 %v278
      %v430 = vunpack.c.l.b16 %v279
      %v431 = vunpack.c.l.b16 %v280
      %v432 = vunpack.c.l.b16 %v281
      %v433 = vunpack.c.l.b16 %v282
      %v434 = vunpack.c.l.b16 %v283
      %v435 = vunpack.c.l.b16 %v284
      %v436 = vunpack.c.l.b16 %v285
      %v437 = vunpack.c.l.b16 %v286
      %v438 = vunpack.c.l.b16 %v287
      %v439 = vunpack.c.l.b16 %v288
      %v440 = vunpack.c.l.b16 %v289
      %v441 = vpack.c.b16 %v378, %v377
      %v442 = vpack.c.b16 %v380, %v379
      %v443 = vpack.c.b16 %v382, %v381
      %v444 = vpack.c.b16 %v384, %v383
      %v445 = vpack.c.b16 %v386, %v385
      %v446 = vpack.c.b16 %v388, %v387
      %v447 = vpack.c.b16 %v390, %v389
      %v448 = vpack.c.b16 %v392, %v391
      %v449 = vpack.c.b16 %v394, %v393
      %v450 = vpack.c.b16 %v396, %v395
      %v451 = vpack.c.b16 %v398, %v397
      %v452 = vpack.c.b16 %v400, %v399
      %v453 = vpack.c.b16 %v402, %v401
      %v454 = vpack.c.b16 %v404, %v403
      %v455 = vpack.c.b16 %v406, %v405
      %v456 = vpack.c.b16 %v408, %v407
      %v457 = vpack.c.b16 %v410, %v409
      %v458 = vpack.c.b16 %v412, %v411
      %v459 = vpack.c.b16 %v414, %v413
      %v460 = vpack.c.b16 %v416, %v415
      %v461 = vpack.c.b16 %v418, %v417
      %v462 = vpack.c.b16 %v420, %v419
      %v463 = vpack.c.b16 %v422, %v421
      %v464 = vpack.c.b16 %v424, %v423
      %v465 = vpack.c.b16 %v426, %v425
      %v466 = vpack.c.b16 %v428, %v427
      %v467 = vpack.c.b16 %v430, %v429
      %v468 = vpack.c.b16 %v432, %v431
      %v469 = vpack.c.b16 %v434, %v433
      %v470 = vpack.c.b16 %v436, %v435
      %v471 = vpack.c.b16 %v438, %v437
      %v472 = vpack.c.b16 %v440, %v439
      %v521 = vunpack.c.l.b16 %v290
      %v522 = vunpack.c.l.b16 %v291
      %v523 = vunpack.c.l.b16 %v292
      %v524 = vunpack.c.l.b16 %v293
      %v525 = vunpack.c.l.b16 %v294
      %v526 = vunpack.c.l.b16 %v295
      %v527 = vunpack.c.l.b16 %v296
      %v528 = vunpack.c.l.b16 %v297
      %v529 = vunpack.c.l.b16 %v298
      %v530 = vunpack.c.l.b16 %v299
      %v531 = vunpack.c.l.b16 %v300
      %v532 = vunpack.c.l.b16 %v301
      %v533 = vunpack.c.l.b16 %v302
      %v534 = vunpack.c.l.b16 %v303
      %v535 = vunpack.c.l.b16 %v304
      %v536 = vunpack.c.l.b16 %v305
      %v537 = vpack.c.b16 %v522, %v521
      %v538 = vpack.c.b16 %v524, %v523
      %v539 = vpack.c.b16 %v526, %v525
      %v540 = vpack.c.b16 %v528, %v527
      %v541 = vpack.c.b16 %v530, %v529
      %v542 = vpack.c.b16 %v532, %v531
      %v543 = vpack.c.b16 %v534, %v533
      %v544 = vpack.c.b16 %v536, %v535
      %553 = vmatprep.subr.bf16.mxu0 0
      %554 = vmatpush1.bf16.msra.mxu0 %v537
      %555 = vmatprep.subr.bf16.mxu0 0
      %556 = vmatpush1.bf16.msra.mxu0 %v538
      %557 = vmatprep.subr.bf16.mxu0 0
      %558 = vmatpush1.bf16.msra.mxu0 %v539
      %559 = vmatprep.subr.bf16.mxu0 0
      %560 = vmatpush1.bf16.msra.mxu0 %v540
      %561 = vmatprep.subr.bf16.mxu0 0
      %562 = vmatpush1.bf16.msra.mxu0 %v541
      %563 = vmatprep.subr.bf16.mxu0 0
      %564 = vmatpush1.bf16.msra.mxu0 %v542
      %565 = vmatprep.subr.bf16.mxu0 0
      %566 = vmatpush1.bf16.msra.mxu0 %v543
      %567 = vmatprep.subr.bf16.mxu0 0
      %568 = vmatpush1.bf16.msra.mxu0 %v544
      %569 = vmatprep.subr.bf16.mxu0 0
      %570 = vmatpush1.bf16.msra.mxu0 0
      %571 = vmatprep.subr.bf16.mxu0 0
      %572 = vmatpush1.bf16.msra.mxu0 0
      %573 = vmatprep.subr.bf16.mxu0 0
      %574 = vmatpush1.bf16.msra.mxu0 0
      %575 = vmatprep.subr.bf16.mxu0 0
      %576 = vmatpush1.bf16.msra.mxu0 0
      %577 = vmatprep.subr.bf16.mxu0 0
      %578 = vmatpush1.bf16.msra.mxu0 0
      %579 = vmatprep.subr.bf16.mxu0 0
      %580 = vmatpush1.bf16.msra.mxu0 0
      %581 = vmatprep.subr.bf16.mxu0 0
      %582 = vmatpush1.bf16.msra.mxu0 0
      %583 = vmatprep.subr.bf16.mxu0 0
      %584 = vmatpush1.bf16.msra.mxu0 0
      %585 = vmatprep.mubr.bf16.mxu0 0
      %586 = vmatmul.mubr.bf16.gmra.mrb[0].mxu0 %v441
      %v587 = vpop.f32.mrb[0].mxu0
      %v588 = vadd.f32 %v311, %v587
      %v589 = vpop.f32.mrb[0].mxu0
      %v590 = vpop.f32.mrb[0].mxu0
      %v591 = vadd.f32 %v311, %v590
      %v592 = vpop.f32.mrb[0].mxu0
      %593 = vmatprep.mubr.bf16.mxu0 0
      %594 = vmatmul.mubr.bf16.gmra.mrb[0].mxu0 %v442
      %v595 = vpop.f32.mrb[0].mxu0
      %v596 = vadd.f32 %v311, %v595
      %v597 = vpop.f32.mrb[0].mxu0
      %v598 = vpop.f32.mrb[0].mxu0
      %v599 = vadd.f32 %v311, %v598
      %v600 = vpop.f32.mrb[0].mxu0
      %601 = vmatprep.mubr.bf16.mxu0 0
      %602 = vmatmul.mubr.bf16.gmra.mrb[0].mxu0 %v443
      %v603 = vpop.f32.mrb[0].mxu0
      %v604 = vadd.f32 %v311, %v603
      %v605 = vpop.f32.mrb[0].mxu0
      %v606 = vpop.f32.mrb[0].mxu0
      %v607 = vadd.f32 %v311, %v606
      %v608 = vpop.f32.mrb[0].mxu0
      %609 = vmatprep.mubr.bf16.mxu0 0
      %610 = vmatmul.mubr.bf16.gmra.mrb[0].mxu0 %v444
      %v611 = vpop.f32.mrb[0].mxu0
      %v612 = vadd.f32 %v311, %v611
      %v613 = vpop.f32.mrb[0].mxu0
      %v614 = vpop.f32.mrb[0].mxu0
      %v615 = vadd.f32 %v311, %v614
      %v616 = vpop.f32.mrb[0].mxu0
      %617 = vmatprep.mubr.bf16.mxu0 0
      %618 = vmatmul.mubr.bf16.gmra.mrb[0].mxu0 %v445
      %v619 = vpop.f32.mrb[0].mxu0
      %v620 = vadd.f32 %v311, %v619
      %v621 = vpop.f32.mrb[0].mxu0
      %v622 = vpop.f32.mrb[0].mxu0
      %v623 = vadd.f32 %v311, %v622
      %v624 = vpop.f32.mrb[0].mxu0
      %625 = vmatprep.mubr.bf16.mxu0 0
      %626 = vmatmul.mubr.bf16.gmra.mrb[0].mxu0 %v446
      %v627 = vpop.f32.mrb[0].mxu0
      %v628 = vadd.f32 %v311, %v627
      %v629 = vpop.f32.mrb[0].mxu0
      %v630 = vpop.f32.mrb[0].mxu0
      %v631 = vadd.f32 %v311, %v630
      %v632 = vpop.f32.mrb[0].mxu0
      %633 = vmatprep.mubr.bf16.mxu0 0
      %634 = vmatmul.mubr.bf16.gmra.mrb[0].mxu0 %v447
      %v635 = vpop.f32.mrb[0].mxu0
      %v636 = vadd.f32 %v311, %v635
      %v637 = vpop.f32.mrb[0].mxu0
      %v638 = vpop.f32.mrb[0].mxu0
      %v639 = vadd.f32 %v311, %v638
      %v640 = vpop.f32.mrb[0].mxu0
      %641 = vmatprep.mubr.bf16.mxu0 0
      %642 = vmatmul.mubr.bf16.gmra.mrb[0].mxu0 %v448
      %v643 = vpop.f32.mrb[0].mxu0
      %v644 = vadd.f32 %v311, %v643
      %v645 = vpop.f32.mrb[0].mxu0
      %v646 = vpop.f32.mrb[0].mxu0
      %v647 = vadd.f32 %v311, %v646
      %v648 = vpop.f32.mrb[0].mxu0
      %649 = vmatprep.mubr.bf16.mxu0 0
      %650 = vmatmul.mubr.bf16.gmra.mrb[0].mxu0 %v449
      %v651 = vpop.f32.mrb[0].mxu0
      %v652 = vadd.f32 %v311, %v651
      %v653 = vpop.f32.mrb[0].mxu0
      %v654 = vpop.f32.mrb[0].mxu0
      %v655 = vadd.f32 %v311, %v654
      %v656 = vpop.f32.mrb[0].mxu0
      %657 = vmatprep.mubr.bf16.mxu0 0
      %658 = vmatmul.mubr.bf16.gmra.mrb[0].mxu0 %v450
      %v659 = vpop.f32.mrb[0].mxu0
      %v660 = vadd.f32 %v311, %v659
      %v661 = vpop.f32.mrb[0].mxu0
      %v662 = vpop.f32.mrb[0].mxu0
      %v663 = vadd.f32 %v311, %v662
      %v664 = vpop.f32.mrb[0].mxu0
      %665 = vmatprep.mubr.bf16.mxu0 0
      %666 = vmatmul.mubr.bf16.gmra.mrb[0].mxu0 %v451
      %v667 = vpop.f32.mrb[0].mxu0
      %v668 = vadd.f32 %v311, %v667
      %v669 = vpop.f32.mrb[0].mxu0
      %v670 = vpop.f32.mrb[0].mxu0
      %v671 = vadd.f32 %v311, %v670
      %v672 = vpop.f32.mrb[0].mxu0
      %673 = vmatprep.mubr.bf16.mxu0 0
      %674 = vmatmul.mubr.bf16.gmra.mrb[0].mxu0 %v452
      %v675 = vpop.f32.mrb[0].mxu0
      %v676 = vadd.f32 %v311, %v675
      %v677 = vpop.f32.mrb[0].mxu0
      %v678 = vpop.f32.mrb[0].mxu0
      %v679 = vadd.f32 %v311, %v678
      %v680 = vpop.f32.mrb[0].mxu0
      %681 = vmatprep.mubr.bf16.mxu0 0
      %682 = vmatmul.mubr.bf16.gmra.mrb[0].mxu0 %v453
      %v683 = vpop.f32.mrb[0].mxu0
      %v684 = vadd.f32 %v311, %v683
      %v685 = vpop.f32.mrb[0].mxu0
      %v686 = vpop.f32.mrb[0].mxu0
      %v687 = vadd.f32 %v311, %v686
      %v688 = vpop.f32.mrb[0].mxu0
      %689 = vmatprep.mubr.bf16.mxu0 0
      %690 = vmatmul.mubr.bf16.gmra.mrb[0].mxu0 %v454
      %v691 = vpop.f32.mrb[0].mxu0
      %v692 = vadd.f32 %v311, %v691
      %v693 = vpop.f32.mrb[0].mxu0
      %v694 = vpop.f32.mrb[0].mxu0
      %v695 = vadd.f32 %v311, %v694
      %v696 = vpop.f32.mrb[0].mxu0
      %697 = vmatprep.mubr.bf16.mxu0 0
      %698 = vmatmul.mubr.bf16.gmra.mrb[0].mxu0 %v455
      %v699 = vpop.f32.mrb[0].mxu0
      %v700 = vadd.f32 %v311, %v699
      %v701 = vpop.f32.mrb[0].mxu0
      %v702 = vpop.f32.mrb[0].mxu0
      %v703 = vadd.f32 %v311, %v702
      %v704 = vpop.f32.mrb[0].mxu0
      %705 = vmatprep.mubr.bf16.mxu0 0
      %706 = vmatmul.mubr.bf16.gmra.mrb[0].mxu0 %v456
      %v707 = vpop.f32.mrb[0].mxu0
      %v708 = vadd.f32 %v311, %v707
      %v709 = vpop.f32.mrb[0].mxu0
      %v710 = vpop.f32.mrb[0].mxu0
      %v711 = vadd.f32 %v311, %v710
      %v712 = vpop.f32.mrb[0].mxu0
      %713 = vmatprep.mubr.bf16.mxu0 0
      %714 = vmatmul.mubr.bf16.gmra.mrb[0].mxu0 %v457
      %v715 = vpop.f32.mrb[0].mxu0
      %v716 = vadd.f32 %v311, %v715
      %v717 = vpop.f32.mrb[0].mxu0
      %v718 = vpop.f32.mrb[0].mxu0
      %v719 = vadd.f32 %v311, %v718
      %v720 = vpop.f32.mrb[0].mxu0
      %721 = vmatprep.mubr.bf16.mxu0 0
      %722 = vmatmul.mubr.bf16.gmra.mrb[0].mxu0 %v458
      %v723 = vpop.f32.mrb[0].mxu0
      %v724 = vadd.f32 %v311, %v723
      %v725 = vpop.f32.mrb[0].mxu0
      %v726 = vpop.f32.mrb[0].mxu0
      %v727 = vadd.f32 %v311, %v726
      %v728 = vpop.f32.mrb[0].mxu0
      %729 = vmatprep.mubr.bf16.mxu0 0
      %730 = vmatmul.mubr.bf16.gmra.mrb[0].mxu0 %v459
      %v731 = vpop.f32.mrb[0].mxu0
      %v732 = vadd.f32 %v311, %v731
      %v733 = vpop.f32.mrb[0].mxu0
      %v734 = vpop.f32.mrb[0].mxu0
      %v735 = vadd.f32 %v311, %v734
      %v736 = vpop.f32.mrb[0].mxu0
      %737 = vmatprep.mubr.bf16.mxu0 0
      %738 = vmatmul.mubr.bf16.gmra.mrb[0].mxu0 %v460
      %v739 = vpop.f32.mrb[0].mxu0
      %v740 = vadd.f32 %v311, %v739
      %v741 = vpop.f32.mrb[0].mxu0
      %v742 = vpop.f32.mrb[0].mxu0
      %v743 = vadd.f32 %v311, %v742
      %v744 = vpop.f32.mrb[0].mxu0
      %745 = vmatprep.mubr.bf16.mxu0 0
      %746 = vmatmul.mubr.bf16.gmra.mrb[0].mxu0 %v461
      %v747 = vpop.f32.mrb[0].mxu0
      %v748 = vadd.f32 %v311, %v747
      %v749 = vpop.f32.mrb[0].mxu0
      %v750 = vpop.f32.mrb[0].mxu0
      %v751 = vadd.f32 %v311, %v750
      %v752 = vpop.f32.mrb[0].mxu0
      %753 = vmatprep.mubr.bf16.mxu0 0
      %754 = vmatmul.mubr.bf16.gmra.mrb[0].mxu0 %v462
      %v755 = vpop.f32.mrb[0].mxu0
      %v756 = vadd.f32 %v311, %v755
      %v757 = vpop.f32.mrb[0].mxu0
      %v758 = vpop.f32.mrb[0].mxu0
      %v759 = vadd.f32 %v311, %v758
      %v760 = vpop.f32.mrb[0].mxu0
      %761 = vmatprep.mubr.bf16.mxu0 0
      %762 = vmatmul.mubr.bf16.gmra.mrb[0].mxu0 %v463
      %v763 = vpop.f32.mrb[0].mxu0
      %v764 = vadd.f32 %v311, %v763
      %v765 = vpop.f32.mrb[0].mxu0
      %v766 = vpop.f32.mrb[0].mxu0
      %v767 = vadd.f32 %v311, %v766
      %v768 = vpop.f32.mrb[0].mxu0
      %769 = vmatprep.mubr.bf16.mxu0 0
      %770 = vmatmul.mubr.bf16.gmra.mrb[0].mxu0 %v464
      %v771 = vpop.f32.mrb[0].mxu0
      %v772 = vadd.f32 %v311, %v771
      %v773 = vpop.f32.mrb[0].mxu0
      %v774 = vpop.f32.mrb[0].mxu0
      %v775 = vadd.f32 %v311, %v774
      %v776 = vpop.f32.mrb[0].mxu0
      %777 = vmatprep.mubr.bf16.mxu0 0
      %778 = vmatmul.mubr.bf16.gmra.mrb[0].mxu0 %v465
      %v779 = vpop.f32.mrb[0].mxu0
      %v780 = vadd.f32 %v311, %v779
      %v781 = vpop.f32.mrb[0].mxu0
      %v782 = vpop.f32.mrb[0].mxu0
      %v783 = vadd.f32 %v311, %v782
      %v784 = vpop.f32.mrb[0].mxu0
      %785 = vmatprep.mubr.bf16.mxu0 0
      %786 = vmatmul.mubr.bf16.gmra.mrb[0].mxu0 %v466
      %v787 = vpop.f32.mrb[0].mxu0
      %v788 = vadd.f32 %v311, %v787
      %v789 = vpop.f32.mrb[0].mxu0
      %v790 = vpop.f32.mrb[0].mxu0
      %v791 = vadd.f32 %v311, %v790
      %v792 = vpop.f32.mrb[0].mxu0
      %793 = vmatprep.mubr.bf16.mxu0 0
      %794 = vmatmul.mubr.bf16.gmra.mrb[0].mxu0 %v467
      %v795 = vpop.f32.mrb[0].mxu0
      %v796 = vadd.f32 %v311, %v795
      %v797 = vpop.f32.mrb[0].mxu0
      %v798 = vpop.f32.mrb[0].mxu0
      %v799 = vadd.f32 %v311, %v798
      %v800 = vpop.f32.mrb[0].mxu0
      %801 = vmatprep.mubr.bf16.mxu0 0
      %802 = vmatmul.mubr.bf16.gmra.mrb[0].mxu0 %v468
      %v803 = vpop.f32.mrb[0].mxu0
      %v804 = vadd.f32 %v311, %v803
      %v805 = vpop.f32.mrb[0].mxu0
      %v806 = vpop.f32.mrb[0].mxu0
      %v807 = vadd.f32 %v311, %v806
      %v808 = vpop.f32.mrb[0].mxu0
      %809 = vmatprep.mubr.bf16.mxu0 0
      %810 = vmatmul.mubr.bf16.gmra.mrb[0].mxu0 %v469
      %v811 = vpop.f32.mrb[0].mxu0
      %v812 = vadd.f32 %v311, %v811
      %v813 = vpop.f32.mrb[0].mxu0
      %v814 = vpop.f32.mrb[0].mxu0
      %v815 = vadd.f32 %v311, %v814
      %v816 = vpop.f32.mrb[0].mxu0
      %817 = vmatprep.mubr.bf16.mxu0 0
      %818 = vmatmul.mubr.bf16.gmra.mrb[0].mxu0 %v470
      %v819 = vpop.f32.mrb[0].mxu0
      %v820 = vadd.f32 %v311, %v819
      %v821 = vpop.f32.mrb[0].mxu0
      %v822 = vpop.f32.mrb[0].mxu0
      %v823 = vadd.f32 %v311, %v822
      %v824 = vpop.f32.mrb[0].mxu0
      %825 = vmatprep.mubr.bf16.mxu0 0
      %826 = vmatmul.mubr.bf16.gmra.mrb[0].mxu0 %v471
      %v827 = vpop.f32.mrb[0].mxu0
      %v828 = vadd.f32 %v311, %v827
      %v829 = vpop.f32.mrb[0].mxu0
      %v830 = vpop.f32.mrb[0].mxu0
      %v831 = vadd.f32 %v311, %v830
      %v832 = vpop.f32.mrb[0].mxu0
      %833 = vmatprep.mubr.bf16.mxu0 0
      %834 = vmatmul.mubr.bf16.gmra.mrb[0].mxu0 %v472
      %v835 = vpop.f32.mrb[0].mxu0
      %v836 = vadd.f32 %v311, %v835
      %v837 = vpop.f32.mrb[0].mxu0
      %v838 = vpop.f32.mrb[0].mxu0
      %v839 = vadd.f32 %v311, %v838
      %v840 = vpop.f32.mrb[0].mxu0
      %841 = vdwg.mxu0
      %v842 = vmax.f32 %v588, 0.0
      %v843 = vmax.f32 %v591, 0.0
      %v844 = vmax.f32 %v596, 0.0
      %v845 = vmax.f32 %v599, 0.0
      %v846 = vmax.f32 %v604, 0.0
      %v847 = vmax.f32 %v607, 0.0
      %v848 = vmax.f32 %v612, 0.0
      %v849 = vmax.f32 %v615, 0.0
      %v850 = vmax.f32 %v620, 0.0
      %v851 = vmax.f32 %v623, 0.0
      %v852 = vmax.f32 %v628, 0.0
      %v853 = vmax.f32 %v631, 0.0
      %v854 = vmax.f32 %v636, 0.0
      %v855 = vmax.f32 %v639, 0.0
      %v856 = vmax.f32 %v644, 0.0
      %v857 = vmax.f32 %v647, 0.0
      %v858 = vmax.f32 %v652, 0.0
      %v859 = vmax.f32 %v655, 0.0
      %v860 = vmax.f32 %v660, 0.0
      %v861 = vmax.f32 %v663, 0.0
      %v862 = vmax.f32 %v668, 0.0
      %v863 = vmax.f32 %v671, 0.0
      %v864 = vmax.f32 %v676, 0.0
      %v865 = vmax.f32 %v679, 0.0
      %v866 = vmax.f32 %v684, 0.0
      %v867 = vmax.f32 %v687, 0.0
      %v868 = vmax.f32 %v692, 0.0
      %v869 = vmax.f32 %v695, 0.0
      %v870 = vmax.f32 %v700, 0.0
      %v871 = vmax.f32 %v703, 0.0
      %v872 = vmax.f32 %v708, 0.0
      %v873 = vmax.f32 %v711, 0.0
      %v874 = vmax.f32 %v716, 0.0
      %v875 = vmax.f32 %v719, 0.0
      %v876 = vmax.f32 %v724, 0.0
      %v877 = vmax.f32 %v727, 0.0
      %v878 = vmax.f32 %v732, 0.0
      %v879 = vmax.f32 %v735, 0.0
      %v880 = vmax.f32 %v740, 0.0
      %v881 = vmax.f32 %v743, 0.0
      %v882 = vmax.f32 %v748, 0.0
      %v883 = vmax.f32 %v751, 0.0
      %v884 = vmax.f32 %v756, 0.0
      %v885 = vmax.f32 %v759, 0.0
      %v886 = vmax.f32 %v764, 0.0
      %v887 = vmax.f32 %v767, 0.0
      %v888 = vmax.f32 %v772, 0.0
      %v889 = vmax.f32 %v775, 0.0
      %v890 = vmax.f32 %v780, 0.0
      %v891 = vmax.f32 %v783, 0.0
      %v892 = vmax.f32 %v788, 0.0
      %v893 = vmax.f32 %v791, 0.0
      %v894 = vmax.f32 %v796, 0.0
      %v895 = vmax.f32 %v799, 0.0
      %v896 = vmax.f32 %v804, 0.0
      %v897 = vmax.f32 %v807, 0.0
      %v898 = vmax.f32 %v812, 0.0
      %v899 = vmax.f32 %v815, 0.0
      %v900 = vmax.f32 %v820, 0.0
      %v901 = vmax.f32 %v823, 0.0
      %v902 = vmax.f32 %v828, 0.0
      %v903 = vmax.f32 %v831, 0.0
      %v904 = vmax.f32 %v836, 0.0
      %v905 = vmax.f32 %v839, 0.0
      %906 = vst [vmem:[%s223] sm:$0xff] %v842
      %907 = vst [vmem:[%s223 + $0x8] sm:$0xff] %v843
      %908 = vst [vmem:[%s223 + $0x10] sm:$0xff] %v844
      %909 = vst [vmem:[%s223 + $0x18] sm:$0xff] %v845
      %910 = vst [vmem:[%s223 + $0x20] sm:$0xff] %v846
      %911 = vst [vmem:[%s223 + $0x28] sm:$0xff] %v847
      %912 = vst [vmem:[%s223 + $0x30] sm:$0xff] %v848
      %913 = vst [vmem:[%s223 + $0x38] sm:$0xff] %v849
      %914 = vst [vmem:[%s223 + $0x40] sm:$0xff] %v850
      %915 = vst [vmem:[%s223 + $0x48] sm:$0xff] %v851
      %916 = vst [vmem:[%s223 + $0x50] sm:$0xff] %v852
      %917 = vst [vmem:[%s223 + $0x58] sm:$0xff] %v853
      %918 = vst [vmem:[%s223 + $0x60] sm:$0xff] %v854
      %919 = vst [vmem:[%s223 + $0x68] sm:$0xff] %v855
      %920 = vst [vmem:[%s223 + $0x70] sm:$0xff] %v856
      %921 = vst [vmem:[%s223 + $0x78] sm:$0xff] %v857
      %922 = vst [vmem:[%s223 + $0x80] sm:$0xff] %v858
      %923 = vst [vmem:[%s223 + $0x88] sm:$0xff] %v859
      %924 = vst [vmem:[%s223 + $0x90] sm:$0xff] %v860
      %925 = vst [vmem:[%s223 + $0x98] sm:$0xff] %v861
      %926 = vst [vmem:[%s223 + $0xa0] sm:$0xff] %v862
      %927 = vst [vmem:[%s223 + $0xa8] sm:$0xff] %v863
      %928 = vst [vmem:[%s223 + $0xb0] sm:$0xff] %v864
      %929 = vst [vmem:[%s223 + $0xb8] sm:$0xff] %v865
      %930 = vst [vmem:[%s223 + $0xc0] sm:$0xff] %v866
      %931 = vst [vmem:[%s223 + $0xc8] sm:$0xff] %v867
      %932 = vst [vmem:[%s223 + $0xd0] sm:$0xff] %v868
      %933 = vst [vmem:[%s223 + $0xd8] sm:$0xff] %v869
      %934 = vst [vmem:[%s223 + $0xe0] sm:$0xff] %v870
      %935 = vst [vmem:[%s223 + $0xe8] sm:$0xff] %v871
      %936 = vst [vmem:[%s223 + $0xf0] sm:$0xff] %v872
      %937 = vst [vmem:[%s223 + $0xf8] sm:$0xff] %v873
      %938 = vst [vmem:[%s223 + $0x100] sm:$0xff] %v874
      %939 = vst [vmem:[%s223 + $0x108] sm:$0xff] %v875
      %940 = vst [vmem:[%s223 + $0x110] sm:$0xff] %v876
      %941 = vst [vmem:[%s223 + $0x118] sm:$0xff] %v877
      %942 = vst [vmem:[%s223 + $0x120] sm:$0xff] %v878
      %943 = vst [vmem:[%s223 + $0x128] sm:$0xff] %v879
      %944 = vst [vmem:[%s223 + $0x130] sm:$0xff] %v880
      %945 = vst [vmem:[%s223 + $0x138] sm:$0xff] %v881
      %946 = vst [vmem:[%s223 + $0x140] sm:$0xff] %v882
      %947 = vst [vmem:[%s223 + $0x148] sm:$0xff] %v883
      %948 = vst [vmem:[%s223 + $0x150] sm:$0xff] %v884
      %949 = vst [vmem:[%s223 + $0x158] sm:$0xff] %v885
      %950 = vst [vmem:[%s223 + $0x160] sm:$0xff] %v886
      %951 = vst [vmem:[%s223 + $0x168] sm:$0xff] %v887
      %952 = vst [vmem:[%s223 + $0x170] sm:$0xff] %v888
      %953 = vst [vmem:[%s223 + $0x178] sm:$0xff] %v889
      %954 = vst [vmem:[%s223 + $0x180] sm:$0xff] %v890
      %955 = vst [vmem:[%s223 + $0x188] sm:$0xff] %v891
      %956 = vst [vmem:[%s223 + $0x190] sm:$0xff] %v892
      %957 = vst [vmem:[%s223 + $0x198] sm:$0xff] %v893
      %958 = vst [vmem:[%s223 + $0x1a0] sm:$0xff] %v894
      %959 = vst [vmem:[%s223 + $0x1a8] sm:$0xff] %v895
      %960 = vst [vmem:[%s223 + $0x1b0] sm:$0xff] %v896
      %961 = vst [vmem:[%s223 + $0x1b8] sm:$0xff] %v897
      %962 = vst [vmem:[%s223 + $0x1c0] sm:$0xff] %v898
      %963 = vst [vmem:[%s223 + $0x1c8] sm:$0xff] %v899
      %964 = vst [vmem:[%s223 + $0x1d0] sm:$0xff] %v900
      %965 = vst [vmem:[%s223 + $0x1d8] sm:$0xff] %v901
      %966 = vst [vmem:[%s223 + $0x1e0] sm:$0xff] %v902
      %967 = vst [vmem:[%s223 + $0x1e8] sm:$0xff] %v903
      %968 = vst [vmem:[%s223 + $0x1f0] sm:$0xff] %v904
      %969 = vst [vmem:[%s223 + $0x1f8] sm:$0xff] %v905
      %s970 = smul.u32 64, %s18
      %p971 = scmp.lt.s32.totalorder %s970, 191
      %s972 = scalar_select %p971, %s970, 191
      %p973 = scmp.lt.s32.totalorder %s19, 0
      %s974 = scalar_select %p973, %s19, 0
      %s975 = sadd.s32 %s974, %s972
      %s976 = smul.addr %s975, 8
      %s977 = scalar_lea.vmem %s3, %s976
      // Predicated region
      $region33: #{forward.17} parent=31 // pred_check
        %p978 = pneg %p124
      $region34: #{forward.17} parent=31 // pred_check_branch
        %980 = sbr.rel (%p978) target = $region36
      $region35: #{forward.17} parent=31 // pred_region
        %s981 = smul.u32 64, %s18
      $region36: #{forward.17} parent=31 // pred_fallthru
        _
    $region32: #{forward.17} parent=5 // pred_fallthru
      _
    %p982 = scmp.le.s32.totalorder 2, %s9
    // Predicated region
    $region37: #{forward.17} parent=5 // pred_check
      %p983 = pneg %p982
    $region38: #{forward.17} parent=5 // pred_check_branch
      %985 = sbr.rel (%p983) target = $region40
    $region39: #{forward.17} parent=5 // pred_region
      %s986 = ssub.s32 %s9, 2
      // Predicated region
      $region41: #{forward.17} parent=39 // pred_check
        %p987 = pneg %p130
      $region42: #{forward.17} parent=39 // pred_check_branch
        %989 = sbr.rel (%p987) target = $region44
      $region43: #{forward.17} parent=39 // pred_region
        %s990 = smul.u32 64, %s20
        %p991 = scmp.lt.s32.totalorder %s990, 191
        %s992 = scalar_select %p991, %s990, 191
        %p993 = scmp.lt.s32.totalorder %s21, 0
        %s994 = scalar_select %p993, %s21, 0
        %s995 = sadd.s32 %s994, %s992
        %s996 = smul.addr %s995, 8
        %s997 = scalar_lea.vmem %s3, %s996
      $region44: #{forward.17} parent=39 // pred_fallthru
        _
    $region40: #{forward.17} parent=5 // pred_fallthru
      _
  $region6: #{forward.17} parent=0 // loop_footer
    %s13 = sadd.s32 1, %s9
  $region7: #{forward.17} parent=0 // loop_footer_branch
    %8 = sbr.rel target = $region3
  $region8: #{forward.17} parent=0 // loop_exit
    _

// kernel: forward.18
$region0: #{forward.18}
  #allocation0 [shape = 'u32[]', space=smem, size = 0x4, offset = 0x4, fixed_abs, tag = 'smem constant byte address 0x4 - core index']
  #allocation1 [shape = 'u32[144,128]{1,0:T(1,128)}', space=vmem, size = 0x12000, scoped, tag = 'internal scratch']
  %s0 = inlined_call_operand.vmem [shape: bf16[384,128], index: 0, kind: input, shape index: {}]
  %s1 = inlined_call_operand.vmem [shape: bf16[128,128], index: 1, kind: input, shape index: {}]
  %s2 = inlined_call_operand.vmem [shape: f32[1,128], index: 2, kind: input, shape index: {}]
  %s3 = inlined_call_operand.vmem [shape: f32[384,128], index: 3, kind: output, shape index: {}]
  %s4 = sld [smem:[#allocation0]]
  $region45: #{forward.18} parent=0
    _
  %s6 = ssub.s32 1, %s4
  %s7 = scalar_select 0, %s6, %s4
  loop: start=0, step=1, limit=4
  $region2: #{forward.18} parent=0 // loop_pre_header
    _
  $region3: #{forward.18} parent=0 // loop_header
    %s9 = sphi 0, %s13
    %p10 = scmp.ge.s32.totalorder %s9, 4
    %s16 = sphi 0, %s28
    %s17 = sphi 0, %s24
    %s18 = sphi 0, %s16
    %s19 = sphi 0, %s17
    %s20 = sphi 0, %s18
    %s21 = sphi 0, %s19
    %s31 = sphi 0, %s33
    %s34 = sphi 0, %s31
    %s35 = sphi 0, %s34
    %s51 = sphi 0, %s35
    %s57 = sphi 0, %s59
    %s60 = sphi 0, %s57
    %s61 = sphi 0, %s60
    %s77 = sphi 0, %s61
    %s83 = sphi 0, %s85
    %s86 = sphi 0, %s83
    %s87 = sphi 0, %s86
    %s103 = sphi 0, %s87
    %s111 = sphi 0, %s113
    %s114 = sphi 0, %s111
    %s115 = sphi 0, %s114
    %s131 = sphi 0, %s115
  $region4: #{forward.18} parent=0 // loop_header_branch
    %12 = sbr.rel (%p10) target = $region8
  $region5: #{forward.18} parent=0 // loop_body
    %s14 = ssub.s32 %s9, 1
    %s15 = ssub.s32 %s9, 2
    %s22 = sadd.s32 1, %s17
    %p23 = scmp.ge.s32.totalorder %s22, 1
    %s24 = scalar_select %p23, 0, %s22
    %s25 = sadd.s32 1, %s16
    %s26 = scalar_select %p23, %s25, %s16
    %p27 = scmp.ge.s32.totalorder %s26, 2
    %s28 = scalar_select %p27, 0, %s26
    %s29 = ssub.s32 %s16, %s28
    %p30 = scmp.eq.s32.totalorder %s29, 0
    %s32 = sadd.s32 %s31, 1
    %s33 = scalar_select %p30, %s31, %s32
    %p36 = pneg %p30
    %p37 = scmp.eq.s32.totalorder %s9, 1
    %p38 = por %p36, %p37
    %p39 = scmp.ne.s32.totalorder %s31, %s34
    %p40 = scmp.eq.s32.totalorder %s9, 0
    %p41 = por %p39, %p40
    %p42 = scmp.ne.s32.totalorder %s31, %s34
    %p43 = scmp.eq.s32.totalorder %s14, 1
    %p44 = por %p42, %p43
    %p45 = scmp.ne.s32.totalorder %s34, %s35
    %p46 = scmp.eq.s32.totalorder %s14, 0
    %p47 = por %p45, %p46
    %p48 = scmp.ne.s32.totalorder %s34, %s35
    %p49 = scmp.eq.s32.totalorder %s15, 1
    %p50 = por %p48, %p49
    %p52 = scmp.ne.s32.totalorder %s35, %s51
    %p53 = scmp.eq.s32.totalorder %s15, 0
    %p54 = por %p52, %p53
    %s55 = ssub.s32 %s17, %s24
    %p56 = scmp.eq.s32.totalorder %s55, 0
    %s58 = sadd.s32 %s57, 1
    %s59 = scalar_select %p56, %s57, %s58
    %p62 = pneg %p56
    %p63 = scmp.eq.s32.totalorder %s9, 1
    %p64 = por %p62, %p63
    %p65 = scmp.ne.s32.totalorder %s57, %s60
    %p66 = scmp.eq.s32.totalorder %s9, 0
    %p67 = por %p65, %p66
    %p68 = scmp.ne.s32.totalorder %s57, %s60
    %p69 = scmp.eq.s32.totalorder %s14, 1
    %p70 = por %p68, %p69
    %p71 = scmp.ne.s32.totalorder %s60, %s61
    %p72 = scmp.eq.s32.totalorder %s14, 0
    %p73 = por %p71, %p72
    %p74 = scmp.ne.s32.totalorder %s60, %s61
    %p75 = scmp.eq.s32.totalorder %s15, 1
    %p76 = por %p74, %p75
    %p78 = scmp.ne.s32.totalorder %s61, %s77
    %p79 = scmp.eq.s32.totalorder %s15, 0
    %p80 = por %p78, %p79
    %s81 = ssub.s32 %s17, %s24
    %p82 = scmp.eq.s32.totalorder %s81, 0
    %s84 = sadd.s32 %s83, 1
    %s85 = scalar_select %p82, %s83, %s84
    %p88 = pneg %p82
    %p89 = scmp.eq.s32.totalorder %s9, 1
    %p90 = por %p88, %p89
    %p91 = scmp.ne.s32.totalorder %s83, %s86
    %p92 = scmp.eq.s32.totalorder %s9, 0
    %p93 = por %p91, %p92
    %p94 = scmp.ne.s32.totalorder %s83, %s86
    %p95 = scmp.eq.s32.totalorder %s14, 1
    %p96 = por %p94, %p95
    %p97 = scmp.ne.s32.totalorder %s86, %s87
    %p98 = scmp.eq.s32.totalorder %s14, 0
    %p99 = por %p97, %p98
    %p100 = scmp.ne.s32.totalorder %s86, %s87
    %p101 = scmp.eq.s32.totalorder %s15, 1
    %p102 = por %p100, %p101
    %p104 = scmp.ne.s32.totalorder %s87, %s103
    %p105 = scmp.eq.s32.totalorder %s15, 0
    %p106 = por %p104, %p105
    %s107 = ssub.s32 %s16, %s28
    %s108 = ssub.s32 %s17, %s24
    %s109 = sor.u32 %s107, %s108
    %p110 = scmp.eq.s32.totalorder %s109, 0
    %s112 = sadd.s32 %s111, 1
    %s113 = scalar_select %p110, %s111, %s112
    %p116 = pneg %p110
    %p117 = scmp.eq.s32.totalorder %s9, 1
    %p118 = por %p116, %p117
    %p119 = scmp.ne.s32.totalorder %s111, %s114
    %p120 = scmp.eq.s32.totalorder %s9, 0
    %p121 = por %p119, %p120
    %p122 = scmp.ne.s32.totalorder %s111, %s114
    %p123 = scmp.eq.s32.totalorder %s14, 1
    %p124 = por %p122, %p123
    %p125 = scmp.ne.s32.totalorder %s114, %s115
    %p126 = scmp.eq.s32.totalorder %s14, 0
    %p127 = por %p125, %p126
    %p128 = scmp.ne.s32.totalorder %s114, %s115
    %p129 = scmp.eq.s32.totalorder %s15, 1
    %p130 = por %p128, %p129
    %p132 = scmp.ne.s32.totalorder %s115, %s131
    %p133 = scmp.eq.s32.totalorder %s15, 0
    %p134 = por %p132, %p133
    %p135 = scmp.le.s32.totalorder 1, %s9
    %p136 = scmp.lt.s32.totalorder %s9, 3
    %p137 = pnand %p135, %p136
    %p138 = pneg %p137
    // Predicated region
    $region9: #{forward.18} parent=5 // pred_check
      _
    $region10: #{forward.18} parent=5 // pred_check_branch
      %140 = sbr.rel (%p137) target = $region12
    $region11: #{forward.18} parent=5 // pred_region
      %s141 = ssub.s32 %s9, 1
      // Predicated region
      $region13: #{forward.18} parent=11 // pred_check
        %p142 = pneg %p73
      $region14: #{forward.18} parent=11 // pred_check_branch
        %144 = sbr.rel (%p142) target = $region16
      $region15: #{forward.18} parent=11 // pred_region
        %p145 = scmp.lt.s32.totalorder %s19, 0
        %s146 = scalar_select %p145, %s19, 0
        %s147 = smul.addr %s146, 4
        %s148 = scalar_lea.vmem %s1, %s147
      $region16: #{forward.18} parent=11 // pred_fallthru
        _
      // Predicated region
      $region17: #{forward.18} parent=11 // pred_check
        %p149 = pneg %p99
      $region18: #{forward.18} parent=11 // pred_check_branch
        %151 = sbr.rel (%p149) target = $region20
      $region19: #{forward.18} parent=11 // pred_region
        %p152 = scmp.lt.s32.totalorder %s19, 0
        %s153 = scalar_select %p152, %s19, 0
        %s154 = scalar_lea.vmem %s2, %s153
      $region20: #{forward.18} parent=11 // pred_fallthru
        _
    $region12: #{forward.18} parent=5 // pred_fallthru
      _
    %p155 = scmp.lt.s32.totalorder %s9, 2
    // Predicated region
    $region21: #{forward.18} parent=5 // pred_check
      %p156 = pneg %p155
    $region22: #{forward.18} parent=5 // pred_check_branch
      %158 = sbr.rel (%p156) target = $region24
    $region23: #{forward.18} parent=5 // pred_region
      // Predicated region
      $region25: #{forward.18} parent=23 // pred_check
        %p159 = pneg %p41
      $region26: #{forward.18} parent=23 // pred_check_branch
        %161 = sbr.rel (%p159) target = $region28
      $region27: #{forward.18} parent=23 // pred_region
        %s162 = smul.u32 24, %s16
        %p163 = scmp.lt.s32.totalorder %s162, 47
        %s164 = scalar_select %p163, %s162, 47
        %s165 = smul.addr %s164, 4
        %s166 = scalar_lea.vmem %s0, %s165
        %s167 = smul.u32 24, %s16
      $region28: #{forward.18} parent=23 // pred_fallthru
        _
    $region24: #{forward.18} parent=5 // pred_fallthru
      _
    %p168 = scmp.le.s32.totalorder 1, %s9
    %p169 = scmp.lt.s32.totalorder %s9, 3
    %p170 = pnand %p168, %p169
    %p171 = pneg %p170
    // Predicated region
    $region29: #{forward.18} parent=5 // pred_check
      _
    $region30: #{forward.18} parent=5 // pred_check_branch
      %173 = sbr.rel (%p170) target = $region32
    $region31: #{forward.18} parent=5 // pred_region
      %s174 = ssub.s32 %s9, 1
      %s175 = smul.u32 24, %s18
      %p176 = scmp.lt.s32.totalorder %s175, 47
      %s177 = scalar_select %p176, %s175, 47
      %s178 = smul.addr %s177, 4
      %s179 = scalar_lea.vmem %s0, %s178
      %p180 = pneg %p47
      %p181 = pneg %p44
      %p182 = scmp.lt.s32.totalorder %s19, 0
      %s183 = scalar_select %p182, %s19, 0
      %s184 = smul.addr %s183, 4
      %s185 = scalar_lea.vmem %s1, %s184
      %p186 = pneg %p73
      %p187 = pneg %p70
      %p188 = scmp.lt.s32.totalorder %s19, 0
      %s189 = scalar_select %p188, %s19, 0
      %s190 = scalar_lea.vmem %s2, %s189
      %p191 = pneg %p99
      %p192 = pneg %p96
      %p193 = pneg %p127
      %p194 = pneg %p124
      %s195 = smul.u32 24, %s18
      %p196 = scmp.lt.s32.totalorder %s195, 47
      %s197 = scalar_select %p196, %s195, 47
      %p198 = scmp.lt.s32.totalorder %s19, 0
      %s199 = scalar_select %p198, %s19, 0
      %s200 = sadd.s32 %s199, %s197
      %s201 = smul.addr %s200, 8
      %s202 = scalar_lea.vmem %s3, %s201
      %s203 = smul.u32 24, %s18
      %p204 = scmp.lt.s32.totalorder %s203, 47
      %s205 = scalar_select %p204, %s203, 47
      %s206 = smul.addr %s205, 4
      %s207 = scalar_lea.vmem %s0, %s206
      %s208 = smul.u32 24, %s18
      %p209 = scmp.lt.s32.totalorder %s19, 0
      %s210 = scalar_select %p209, %s19, 0
      %s211 = smul.addr %s210, 4
      %s212 = scalar_lea.vmem %s1, %s211
      %p213 = scmp.lt.s32.totalorder %s19, 0
      %s214 = scalar_select %p213, %s19, 0
      %s215 = scalar_lea.vmem %s2, %s214
      %s216 = smul.u32 24, %s18
      %p217 = scmp.lt.s32.totalorder %s216, 47
      %s218 = scalar_select %p217, %s216, 47
      %p219 = scmp.lt.s32.totalorder %s19, 0
      %s220 = scalar_select %p219, %s19, 0
      %s221 = sadd.s32 %s220, %s218
      %s222 = smul.addr %s221, 8
      %s223 = scalar_lea.vmem %s3, %s222
      %s224 = smul.u32 24, %s18
      %v226 = vld [vmem:[%s207] sm:$0xf]
      %v227 = vld [vmem:[%s207 + $0x4] sm:$0xf]
      %v228 = vld [vmem:[%s207 + $0x8] sm:$0xf]
      %v229 = vld [vmem:[%s207 + $0xc] sm:$0xf]
      %v230 = vld [vmem:[%s207 + $0x10] sm:$0xf]
      %v231 = vld [vmem:[%s207 + $0x14] sm:$0xf]
      %v232 = vld [vmem:[%s207 + $0x18] sm:$0xf]
      %v233 = vld [vmem:[%s207 + $0x1c] sm:$0xf]
      %v234 = vld [vmem:[%s207 + $0x20] sm:$0xf]
      %v235 = vld [vmem:[%s207 + $0x24] sm:$0xf]
      %v236 = vld [vmem:[%s207 + $0x28] sm:$0xf]
      %v237 = vld [vmem:[%s207 + $0x2c] sm:$0xf]
      %v238 = vld [vmem:[%s207 + $0x30] sm:$0xf]
      %v239 = vld [vmem:[%s207 + $0x34] sm:$0xf]
      %v240 = vld [vmem:[%s207 + $0x38] sm:$0xf]
      %v241 = vld [vmem:[%s207 + $0x3c] sm:$0xf]
      %v242 = vld [vmem:[%s207 + $0x40] sm:$0xf]
      %v243 = vld [vmem:[%s207 + $0x44] sm:$0xf]
      %v244 = vld [vmem:[%s207 + $0x48] sm:$0xf]
      %v245 = vld [vmem:[%s207 + $0x4c] sm:$0xf]
      %v246 = vld [vmem:[%s207 + $0x50] sm:$0xf]
      %v247 = vld [vmem:[%s207 + $0x54] sm:$0xf]
      %v248 = vld [vmem:[%s207 + $0x58] sm:$0xf]
      %v249 = vld [vmem:[%s207 + $0x5c] sm:$0xf]
      %v250 = vld [vmem:[%s212] sm:$0xf]
      %v251 = vld [vmem:[%s212 + $0x4] sm:$0xf]
      %v252 = vld [vmem:[%s212 + $0x8] sm:$0xf]
      %v253 = vld [vmem:[%s212 + $0xc] sm:$0xf]
      %v254 = vld [vmem:[%s212 + $0x10] sm:$0xf]
      %v255 = vld [vmem:[%s212 + $0x14] sm:$0xf]
      %v256 = vld [vmem:[%s212 + $0x18] sm:$0xf]
      %v257 = vld [vmem:[%s212 + $0x1c] sm:$0xf]
      %v258 = vld [vmem:[%s212 + $0x20] sm:$0xf]
      %v259 = vld [vmem:[%s212 + $0x24] sm:$0xf]
      %v260 = vld [vmem:[%s212 + $0x28] sm:$0xf]
      %v261 = vld [vmem:[%s212 + $0x2c] sm:$0xf]
      %v262 = vld [vmem:[%s212 + $0x30] sm:$0xf]
      %v263 = vld [vmem:[%s212 + $0x34] sm:$0xf]
      %v264 = vld [vmem:[%s212 + $0x38] sm:$0xf]
      %v265 = vld [vmem:[%s212 + $0x3c] sm:$0xf]
      %v266 = vld [vmem:[%s215] sm:$0x1]
      %v268 = vlaneseq
      %v269 = vshrl.u32 %v268, 7
      %v270 = vsub.s32 0, %v269
      %v271 = vrot.slane %v266, %v270
      %v297 = vunpack.c.l.b16 %v226
      %v298 = vunpack.c.l.b16 %v227
      %v299 = vunpack.c.l.b16 %v228
      %v300 = vunpack.c.l.b16 %v229
      %v301 = vunpack.c.l.b16 %v230
      %v302 = vunpack.c.l.b16 %v231
      %v303 = vunpack.c.l.b16 %v232
      %v304 = vunpack.c.l.b16 %v233
      %v305 = vunpack.c.l.b16 %v234
      %v306 = vunpack.c.l.b16 %v235
      %v307 = vunpack.c.l.b16 %v236
      %v308 = vunpack.c.l.b16 %v237
      %v309 = vunpack.c.l.b16 %v238
      %v310 = vunpack.c.l.b16 %v239
      %v311 = vunpack.c.l.b16 %v240
      %v312 = vunpack.c.l.b16 %v241
      %v313 = vunpack.c.l.b16 %v242
      %v314 = vunpack.c.l.b16 %v243
      %v315 = vunpack.c.l.b16 %v244
      %v316 = vunpack.c.l.b16 %v245
      %v317 = vunpack.c.l.b16 %v246
      %v318 = vunpack.c.l.b16 %v247
      %v319 = vunpack.c.l.b16 %v248
      %v320 = vunpack.c.l.b16 %v249
      %v321 = vpack.c.b16 %v298, %v297
      %v322 = vpack.c.b16 %v300, %v299
      %v323 = vpack.c.b16 %v302, %v301
      %v324 = vpack.c.b16 %v304, %v303
      %v325 = vpack.c.b16 %v306, %v305
      %v326 = vpack.c.b16 %v308, %v307
      %v327 = vpack.c.b16 %v310, %v309
      %v328 = vpack.c.b16 %v312, %v311
      %v329 = vpack.c.b16 %v314, %v313
      %v330 = vpack.c.b16 %v316, %v315
      %v331 = vpack.c.b16 %v318, %v317
      %v332 = vpack.c.b16 %v320, %v319
      %v361 = vunpack.c.l.b16 %v250
      %v362 = vunpack.c.l.b16 %v251
      %v363 = vunpack.c.l.b16 %v252
      %v364 = vunpack.c.l.b16 %v253
      %v365 = vunpack.c.l.b16 %v254
      %v366 = vunpack.c.l.b16 %v255
      %v367 = vunpack.c.l.b16 %v256
      %v368 = vunpack.c.l.b16 %v257
      %v369 = vunpack.c.l.b16 %v258
      %v370 = vunpack.c.l.b16 %v259
      %v371 = vunpack.c.l.b16 %v260
      %v372 = vunpack.c.l.b16 %v261
      %v373 = vunpack.c.l.b16 %v262
      %v374 = vunpack.c.l.b16 %v263
      %v375 = vunpack.c.l.b16 %v264
      %v376 = vunpack.c.l.b16 %v265
      %v377 = vpack.c.b16 %v362, %v361
      %v378 = vpack.c.b16 %v364, %v363
      %v379 = vpack.c.b16 %v366, %v365
      %v380 = vpack.c.b16 %v368, %v367
      %v381 = vpack.c.b16 %v370, %v369
      %v382 = vpack.c.b16 %v372, %v371
      %v383 = vpack.c.b16 %v374, %v373
      %v384 = vpack.c.b16 %v376, %v375
      %393 = vmatprep.subr.bf16.mxu0 0
      %394 = vmatpush1.bf16.msra.mxu0 %v377
      %395 = vmatprep.subr.bf16.mxu0 0
      %396 = vmatpush1.bf16.msra.mxu0 %v378
      %397 = vmatprep.subr.bf16.mxu0 0
      %398 = vmatpush1.bf16.msra.mxu0 %v379
      %399 = vmatprep.subr.bf16.mxu0 0
      %400 = vmatpush1.bf16.msra.mxu0 %v380
      %401 = vmatprep.subr.bf16.mxu0 0
      %402 = vmatpush1.bf16.msra.mxu0 %v381
      %403 = vmatprep.subr.bf16.mxu0 0
      %404 = vmatpush1.bf16.msra.mxu0 %v382
      %405 = vmatprep.subr.bf16.mxu0 0
      %406 = vmatpush1.bf16.msra.mxu0 %v383
      %407 = vmatprep.subr.bf16.mxu0 0
      %408 = vmatpush1.bf16.msra.mxu0 %v384
      %409 = vmatprep.subr.bf16.mxu0 0
      %410 = vmatpush1.bf16.msra.mxu0 0
      %411 = vmatprep.subr.bf16.mxu0 0
      %412 = vmatpush1.bf16.msra.mxu0 0
      %413 = vmatprep.subr.bf16.mxu0 0
      %414 = vmatpush1.bf16.msra.mxu0 0
      %415 = vmatprep.subr.bf16.mxu0 0
      %416 = vmatpush1.bf16.msra.mxu0 0
      %417 = vmatprep.subr.bf16.mxu0 0
      %418 = vmatpush1.bf16.msra.mxu0 0
      %419 = vmatprep.subr.bf16.mxu0 0
      %420 = vmatpush1.bf16.msra.mxu0 0
      %421 = vmatprep.subr.bf16.mxu0 0
      %422 = vmatpush1.bf16.msra.mxu0 0
      %423 = vmatprep.subr.bf16.mxu0 0
      %424 = vmatpush1.bf16.msra.mxu0 0
      %425 = vmatprep.mubr.bf16.mxu0 0
      %426 = vmatmul.mubr.bf16.gmra.mrb[0].mxu0 %v321
      %v427 = vpop.f32.mrb[0].mxu0
      %v428 = vadd.f32 %v271, %v427
      %v429 = vpop.f32.mrb[0].mxu0
      %v430 = vpop.f32.mrb[0].mxu0
      %v431 = vadd.f32 %v271, %v430
      %v432 = vpop.f32.mrb[0].mxu0
      %433 = vmatprep.mubr.bf16.mxu0 0
      %434 = vmatmul.mubr.bf16.gmra.mrb[0].mxu0 %v322
      %v435 = vpop.f32.mrb[0].mxu0
      %v436 = vadd.f32 %v271, %v435
      %v437 = vpop.f32.mrb[0].mxu0
      %v438 = vpop.f32.mrb[0].mxu0
      %v439 = vadd.f32 %v271, %v438
      %v440 = vpop.f32.mrb[0].mxu0
      %441 = vmatprep.mubr.bf16.mxu0 0
      %442 = vmatmul.mubr.bf16.gmra.mrb[0].mxu0 %v323
      %v443 = vpop.f32.mrb[0].mxu0
      %v444 = vadd.f32 %v271, %v443
      %v445 = vpop.f32.mrb[0].mxu0
      %v446 = vpop.f32.mrb[0].mxu0
      %v447 = vadd.f32 %v271, %v446
      %v448 = vpop.f32.mrb[0].mxu0
      %449 = vmatprep.mubr.bf16.mxu0 0
      %450 = vmatmul.mubr.bf16.gmra.mrb[0].mxu0 %v324
      %v451 = vpop.f32.mrb[0].mxu0
      %v452 = vadd.f32 %v271, %v451
      %v453 = vpop.f32.mrb[0].mxu0
      %v454 = vpop.f32.mrb[0].mxu0
      %v455 = vadd.f32 %v271, %v454
      %v456 = vpop.f32.mrb[0].mxu0
      %457 = vmatprep.mubr.bf16.mxu0 0
      %458 = vmatmul.mubr.bf16.gmra.mrb[0].mxu0 %v325
      %v459 = vpop.f32.mrb[0].mxu0
      %v460 = vadd.f32 %v271, %v459
      %v461 = vpop.f32.mrb[0].mxu0
      %v462 = vpop.f32.mrb[0].mxu0
      %v463 = vadd.f32 %v271, %v462
      %v464 = vpop.f32.mrb[0].mxu0
      %465 = vmatprep.mubr.bf16.mxu0 0
      %466 = vmatmul.mubr.bf16.gmra.mrb[0].mxu0 %v326
      %v467 = vpop.f32.mrb[0].mxu0
      %v468 = vadd.f32 %v271, %v467
      %v469 = vpop.f32.mrb[0].mxu0
      %v470 = vpop.f32.mrb[0].mxu0
      %v471 = vadd.f32 %v271, %v470
      %v472 = vpop.f32.mrb[0].mxu0
      %473 = vmatprep.mubr.bf16.mxu0 0
      %474 = vmatmul.mubr.bf16.gmra.mrb[0].mxu0 %v327
      %v475 = vpop.f32.mrb[0].mxu0
      %v476 = vadd.f32 %v271, %v475
      %v477 = vpop.f32.mrb[0].mxu0
      %v478 = vpop.f32.mrb[0].mxu0
      %v479 = vadd.f32 %v271, %v478
      %v480 = vpop.f32.mrb[0].mxu0
      %481 = vmatprep.mubr.bf16.mxu0 0
      %482 = vmatmul.mubr.bf16.gmra.mrb[0].mxu0 %v328
      %v483 = vpop.f32.mrb[0].mxu0
      %v484 = vadd.f32 %v271, %v483
      %v485 = vpop.f32.mrb[0].mxu0
      %v486 = vpop.f32.mrb[0].mxu0
      %v487 = vadd.f32 %v271, %v486
      %v488 = vpop.f32.mrb[0].mxu0
      %489 = vmatprep.mubr.bf16.mxu0 0
      %490 = vmatmul.mubr.bf16.gmra.mrb[0].mxu0 %v329
      %v491 = vpop.f32.mrb[0].mxu0
      %v492 = vadd.f32 %v271, %v491
      %v493 = vpop.f32.mrb[0].mxu0
      %v494 = vpop.f32.mrb[0].mxu0
      %v495 = vadd.f32 %v271, %v494
      %v496 = vpop.f32.mrb[0].mxu0
      %497 = vmatprep.mubr.bf16.mxu0 0
      %498 = vmatmul.mubr.bf16.gmra.mrb[0].mxu0 %v330
      %v499 = vpop.f32.mrb[0].mxu0
      %v500 = vadd.f32 %v271, %v499
      %v501 = vpop.f32.mrb[0].mxu0
      %v502 = vpop.f32.mrb[0].mxu0
      %v503 = vadd.f32 %v271, %v502
      %v504 = vpop.f32.mrb[0].mxu0
      %505 = vmatprep.mubr.bf16.mxu0 0
      %506 = vmatmul.mubr.bf16.gmra.mrb[0].mxu0 %v331
      %v507 = vpop.f32.mrb[0].mxu0
      %v508 = vadd.f32 %v271, %v507
      %v509 = vpop.f32.mrb[0].mxu0
      %v510 = vpop.f32.mrb[0].mxu0
      %v511 = vadd.f32 %v271, %v510
      %v512 = vpop.f32.mrb[0].mxu0
      %513 = vmatprep.mubr.bf16.mxu0 0
      %514 = vmatmul.mubr.bf16.gmra.mrb[0].mxu0 %v332
      %v515 = vpop.f32.mrb[0].mxu0
      %v516 = vadd.f32 %v271, %v515
      %v517 = vpop.f32.mrb[0].mxu0
      %v518 = vpop.f32.mrb[0].mxu0
      %v519 = vadd.f32 %v271, %v518
      %v520 = vpop.f32.mrb[0].mxu0
      %521 = vdwg.mxu0
      %v522 = vmax.f32 %v428, 0.0
      %v523 = vmax.f32 %v431, 0.0
      %v524 = vmax.f32 %v436, 0.0
      %v525 = vmax.f32 %v439, 0.0
      %v526 = vmax.f32 %v444, 0.0
      %v527 = vmax.f32 %v447, 0.0
      %v528 = vmax.f32 %v452, 0.0
      %v529 = vmax.f32 %v455, 0.0
      %v530 = vmax.f32 %v460, 0.0
      %v531 = vmax.f32 %v463, 0.0
      %v532 = vmax.f32 %v468, 0.0
      %v533 = vmax.f32 %v471, 0.0
      %v534 = vmax.f32 %v476, 0.0
      %v535 = vmax.f32 %v479, 0.0
      %v536 = vmax.f32 %v484, 0.0
      %v537 = vmax.f32 %v487, 0.0
      %v538 = vmax.f32 %v492, 0.0
      %v539 = vmax.f32 %v495, 0.0
      %v540 = vmax.f32 %v500, 0.0
      %v541 = vmax.f32 %v503, 0.0
      %v542 = vmax.f32 %v508, 0.0
      %v543 = vmax.f32 %v511, 0.0
      %v544 = vmax.f32 %v516, 0.0
      %v545 = vmax.f32 %v519, 0.0
      %546 = vst [vmem:[%s223] sm:$0xff] %v522
      %547 = vst [vmem:[%s223 + $0x8] sm:$0xff] %v523
      %548 = vst [vmem:[%s223 + $0x10] sm:$0xff] %v524
      %549 = vst [vmem:[%s223 + $0x18] sm:$0xff] %v525
      %550 = vst [vmem:[%s223 + $0x20] sm:$0xff] %v526
      %551 = vst [vmem:[%s223 + $0x28] sm:$0xff] %v527
      %552 = vst [vmem:[%s223 + $0x30] sm:$0xff] %v528
      %553 = vst [vmem:[%s223 + $0x38] sm:$0xff] %v529
      %554 = vst [vmem:[%s223 + $0x40] sm:$0xff] %v530
      %555 = vst [vmem:[%s223 + $0x48] sm:$0xff] %v531
      %556 = vst [vmem:[%s223 + $0x50] sm:$0xff] %v532
      %557 = vst [vmem:[%s223 + $0x58] sm:$0xff] %v533
      %558 = vst [vmem:[%s223 + $0x60] sm:$0xff] %v534
      %559 = vst [vmem:[%s223 + $0x68] sm:$0xff] %v535
      %560 = vst [vmem:[%s223 + $0x70] sm:$0xff] %v536
      %561 = vst [vmem:[%s223 + $0x78] sm:$0xff] %v537
      %562 = vst [vmem:[%s223 + $0x80] sm:$0xff] %v538
      %563 = vst [vmem:[%s223 + $0x88] sm:$0xff] %v539
      %564 = vst [vmem:[%s223 + $0x90] sm:$0xff] %v540
      %565 = vst [vmem:[%s223 + $0x98] sm:$0xff] %v541
      %566 = vst [vmem:[%s223 + $0xa0] sm:$0xff] %v542
      %567 = vst [vmem:[%s223 + $0xa8] sm:$0xff] %v543
      %568 = vst [vmem:[%s223 + $0xb0] sm:$0xff] %v544
      %569 = vst [vmem:[%s223 + $0xb8] sm:$0xff] %v545
      %s570 = smul.u32 24, %s18
      %p571 = scmp.lt.s32.totalorder %s570, 47
      %s572 = scalar_select %p571, %s570, 47
      %p573 = scmp.lt.s32.totalorder %s19, 0
      %s574 = scalar_select %p573, %s19, 0
      %s575 = sadd.s32 %s574, %s572
      %s576 = smul.addr %s575, 8
      %s577 = scalar_lea.vmem %s3, %s576
      // Predicated region
      $region33: #{forward.18} parent=31 // pred_check
        %p578 = pneg %p124
      $region34: #{forward.18} parent=31 // pred_check_branch
        %580 = sbr.rel (%p578) target = $region36
      $region35: #{forward.18} parent=31 // pred_region
        %s581 = smul.u32 24, %s18
      $region36: #{forward.18} parent=31 // pred_fallthru
        _
    $region32: #{forward.18} parent=5 // pred_fallthru
      _
    %p582 = scmp.le.s32.totalorder 2, %s9
    // Predicated region
    $region37: #{forward.18} parent=5 // pred_check
      %p583 = pneg %p582
    $region38: #{forward.18} parent=5 // pred_check_branch
      %585 = sbr.rel (%p583) target = $region40
    $region39: #{forward.18} parent=5 // pred_region
      %s586 = ssub.s32 %s9, 2
      // Predicated region
      $region41: #{forward.18} parent=39 // pred_check
        %p587 = pneg %p130
      $region42: #{forward.18} parent=39 // pred_check_branch
        %589 = sbr.rel (%p587) target = $region44
      $region43: #{forward.18} parent=39 // pred_region
        %s590 = smul.u32 24, %s20
        %p591 = scmp.lt.s32.totalorder %s590, 47
        %s592 = scalar_select %p591, %s590, 47
        %p593 = scmp.lt.s32.totalorder %s21, 0
        %s594 = scalar_select %p593, %s21, 0
        %s595 = sadd.s32 %s594, %s592
        %s596 = smul.addr %s595, 8
        %s597 = scalar_lea.vmem %s3, %s596
      $region44: #{forward.18} parent=39 // pred_fallthru
        _
    $region40: #{forward.18} parent=5 // pred_fallthru
      _
  $region6: #{forward.18} parent=0 // loop_footer
    %s13 = sadd.s32 1, %s9
  $region7: #{forward.18} parent=0 // loop_footer_branch
    %8 = sbr.rel target = $region3
  $region8: #{forward.18} parent=0 // loop_exit
    _

// kernel: forward.19
$region0: #{forward.19}
  #allocation0 [shape = 'u32[]', space=smem, size = 0x4, offset = 0x4, fixed_abs, tag = 'smem constant byte address 0x4 - core index']
  #allocation1 [shape = 'u32[144,128]{1,0:T(1,128)}', space=vmem, size = 0x12000, scoped, tag = 'internal scratch']
  %s0 = inlined_call_operand.vmem [shape: bf16[96,256], index: 0, kind: input, shape index: {}]
  %s1 = inlined_call_operand.vmem [shape: bf16[256,128], index: 1, kind: input, shape index: {}]
  %s2 = inlined_call_operand.vmem [shape: f32[1,128], index: 2, kind: input, shape index: {}]
  %s3 = inlined_call_operand.vmem [shape: f32[96,128], index: 3, kind: output, shape index: {}]
  %s4 = sld [smem:[#allocation0]]
  $region45: #{forward.19} parent=0
    _
  %s6 = ssub.s32 1, %s4
  %s7 = scalar_select 0, %s6, %s4
  loop: start=0, step=1, limit=4
  $region2: #{forward.19} parent=0 // loop_pre_header
    _
  $region3: #{forward.19} parent=0 // loop_header
    %s9 = sphi 0, %s13
    %p10 = scmp.ge.s32.totalorder %s9, 4
    %s16 = sphi 0, %s28
    %s17 = sphi 0, %s24
    %s18 = sphi 0, %s16
    %s19 = sphi 0, %s17
    %s20 = sphi 0, %s18
    %s21 = sphi 0, %s19
    %s31 = sphi 0, %s33
    %s34 = sphi 0, %s31
    %s35 = sphi 0, %s34
    %s51 = sphi 0, %s35
    %s57 = sphi 0, %s59
    %s60 = sphi 0, %s57
    %s61 = sphi 0, %s60
    %s77 = sphi 0, %s61
    %s83 = sphi 0, %s85
    %s86 = sphi 0, %s83
    %s87 = sphi 0, %s86
    %s103 = sphi 0, %s87
    %s111 = sphi 0, %s113
    %s114 = sphi 0, %s111
    %s115 = sphi 0, %s114
    %s131 = sphi 0, %s115
  $region4: #{forward.19} parent=0 // loop_header_branch
    %12 = sbr.rel (%p10) target = $region8
  $region5: #{forward.19} parent=0 // loop_body
    %s14 = ssub.s32 %s9, 1
    %s15 = ssub.s32 %s9, 2
    %s22 = sadd.s32 1, %s17
    %p23 = scmp.ge.s32.totalorder %s22, 1
    %s24 = scalar_select %p23, 0, %s22
    %s25 = sadd.s32 1, %s16
    %s26 = scalar_select %p23, %s25, %s16
    %p27 = scmp.ge.s32.totalorder %s26, 2
    %s28 = scalar_select %p27, 0, %s26
    %s29 = ssub.s32 %s16, %s28
    %p30 = scmp.eq.s32.totalorder %s29, 0
    %s32 = sadd.s32 %s31, 1
    %s33 = scalar_select %p30, %s31, %s32
    %p36 = pneg %p30
    %p37 = scmp.eq.s32.totalorder %s9, 1
    %p38 = por %p36, %p37
    %p39 = scmp.ne.s32.totalorder %s31, %s34
    %p40 = scmp.eq.s32.totalorder %s9, 0
    %p41 = por %p39, %p40
    %p42 = scmp.ne.s32.totalorder %s31, %s34
    %p43 = scmp.eq.s32.totalorder %s14, 1
    %p44 = por %p42, %p43
    %p45 = scmp.ne.s32.totalorder %s34, %s35
    %p46 = scmp.eq.s32.totalorder %s14, 0
    %p47 = por %p45, %p46
    %p48 = scmp.ne.s32.totalorder %s34, %s35
    %p49 = scmp.eq.s32.totalorder %s15, 1
    %p50 = por %p48, %p49
    %p52 = scmp.ne.s32.totalorder %s35, %s51
    %p53 = scmp.eq.s32.totalorder %s15, 0
    %p54 = por %p52, %p53
    %s55 = ssub.s32 %s17, %s24
    %p56 = scmp.eq.s32.totalorder %s55, 0
    %s58 = sadd.s32 %s57, 1
    %s59 = scalar_select %p56, %s57, %s58
    %p62 = pneg %p56
    %p63 = scmp.eq.s32.totalorder %s9, 1
    %p64 = por %p62, %p63
    %p65 = scmp.ne.s32.totalorder %s57, %s60
    %p66 = scmp.eq.s32.totalorder %s9, 0
    %p67 = por %p65, %p66
    %p68 = scmp.ne.s32.totalorder %s57, %s60
    %p69 = scmp.eq.s32.totalorder %s14, 1
    %p70 = por %p68, %p69
    %p71 = scmp.ne.s32.totalorder %s60, %s61
    %p72 = scmp.eq.s32.totalorder %s14, 0
    %p73 = por %p71, %p72
    %p74 = scmp.ne.s32.totalorder %s60, %s61
    %p75 = scmp.eq.s32.totalorder %s15, 1
    %p76 = por %p74, %p75
    %p78 = scmp.ne.s32.totalorder %s61, %s77
    %p79 = scmp.eq.s32.totalorder %s15, 0
    %p80 = por %p78, %p79
    %s81 = ssub.s32 %s17, %s24
    %p82 = scmp.eq.s32.totalorder %s81, 0
    %s84 = sadd.s32 %s83, 1
    %s85 = scalar_select %p82, %s83, %s84
    %p88 = pneg %p82
    %p89 = scmp.eq.s32.totalorder %s9, 1
    %p90 = por %p88, %p89
    %p91 = scmp.ne.s32.totalorder %s83, %s86
    %p92 = scmp.eq.s32.totalorder %s9, 0
    %p93 = por %p91, %p92
    %p94 = scmp.ne.s32.totalorder %s83, %s86
    %p95 = scmp.eq.s32.totalorder %s14, 1
    %p96 = por %p94, %p95
    %p97 = scmp.ne.s32.totalorder %s86, %s87
    %p98 = scmp.eq.s32.totalorder %s14, 0
    %p99 = por %p97, %p98
    %p100 = scmp.ne.s32.totalorder %s86, %s87
    %p101 = scmp.eq.s32.totalorder %s15, 1
    %p102 = por %p100, %p101
    %p104 = scmp.ne.s32.totalorder %s87, %s103
    %p105 = scmp.eq.s32.totalorder %s15, 0
    %p106 = por %p104, %p105
    %s107 = ssub.s32 %s16, %s28
    %s108 = ssub.s32 %s17, %s24
    %s109 = sor.u32 %s107, %s108
    %p110 = scmp.eq.s32.totalorder %s109, 0
    %s112 = sadd.s32 %s111, 1
    %s113 = scalar_select %p110, %s111, %s112
    %p116 = pneg %p110
    %p117 = scmp.eq.s32.totalorder %s9, 1
    %p118 = por %p116, %p117
    %p119 = scmp.ne.s32.totalorder %s111, %s114
    %p120 = scmp.eq.s32.totalorder %s9, 0
    %p121 = por %p119, %p120
    %p122 = scmp.ne.s32.totalorder %s111, %s114
    %p123 = scmp.eq.s32.totalorder %s14, 1
    %p124 = por %p122, %p123
    %p125 = scmp.ne.s32.totalorder %s114, %s115
    %p126 = scmp.eq.s32.totalorder %s14, 0
    %p127 = por %p125, %p126
    %p128 = scmp.ne.s32.totalorder %s114, %s115
    %p129 = scmp.eq.s32.totalorder %s15, 1
    %p130 = por %p128, %p129
    %p132 = scmp.ne.s32.totalorder %s115, %s131
    %p133 = scmp.eq.s32.totalorder %s15, 0
    %p134 = por %p132, %p133
    %p135 = scmp.le.s32.totalorder 1, %s9
    %p136 = scmp.lt.s32.totalorder %s9, 3
    %p137 = pnand %p135, %p136
    %p138 = pneg %p137
    // Predicated region
    $region9: #{forward.19} parent=5 // pred_check
      _
    $region10: #{forward.19} parent=5 // pred_check_branch
      %140 = sbr.rel (%p137) target = $region12
    $region11: #{forward.19} parent=5 // pred_region
      %s141 = ssub.s32 %s9, 1
      // Predicated region
      $region13: #{forward.19} parent=11 // pred_check
        %p142 = pneg %p73
      $region14: #{forward.19} parent=11 // pred_check_branch
        %144 = sbr.rel (%p142) target = $region16
      $region15: #{forward.19} parent=11 // pred_region
        %p145 = scmp.lt.s32.totalorder %s19, 0
        %s146 = scalar_select %p145, %s19, 0
        %s147 = smul.addr %s146, 4
        %s148 = scalar_lea.vmem %s1, %s147
      $region16: #{forward.19} parent=11 // pred_fallthru
        _
      // Predicated region
      $region17: #{forward.19} parent=11 // pred_check
        %p149 = pneg %p99
      $region18: #{forward.19} parent=11 // pred_check_branch
        %151 = sbr.rel (%p149) target = $region20
      $region19: #{forward.19} parent=11 // pred_region
        %p152 = scmp.lt.s32.totalorder %s19, 0
        %s153 = scalar_select %p152, %s19, 0
        %s154 = scalar_lea.vmem %s2, %s153
      $region20: #{forward.19} parent=11 // pred_fallthru
        _
    $region12: #{forward.19} parent=5 // pred_fallthru
      _
    %p155 = scmp.lt.s32.totalorder %s9, 2
    // Predicated region
    $region21: #{forward.19} parent=5 // pred_check
      %p156 = pneg %p155
    $region22: #{forward.19} parent=5 // pred_check_branch
      %158 = sbr.rel (%p156) target = $region24
    $region23: #{forward.19} parent=5 // pred_region
      // Predicated region
      $region25: #{forward.19} parent=23 // pred_check
        %p159 = pneg %p41
      $region26: #{forward.19} parent=23 // pred_check_branch
        %161 = sbr.rel (%p159) target = $region28
      $region27: #{forward.19} parent=23 // pred_region
        %s162 = smul.u32 6, %s16
        %p163 = scmp.lt.s32.totalorder %s162, 11
        %s164 = scalar_select %p163, %s162, 11
        %s165 = smul.addr %s164, 2
        %s166 = smul.addr %s165, 4
        %s167 = scalar_lea.vmem %s0, %s166
        %s168 = smul.u32 6, %s16
      $region28: #{forward.19} parent=23 // pred_fallthru
        _
    $region24: #{forward.19} parent=5 // pred_fallthru
      _
    %p169 = scmp.le.s32.totalorder 1, %s9
    %p170 = scmp.lt.s32.totalorder %s9, 3
    %p171 = pnand %p169, %p170
    %p172 = pneg %p171
    // Predicated region
    $region29: #{forward.19} parent=5 // pred_check
      _
    $region30: #{forward.19} parent=5 // pred_check_branch
      %174 = sbr.rel (%p171) target = $region32
    $region31: #{forward.19} parent=5 // pred_region
      %s175 = ssub.s32 %s9, 1
      %s176 = smul.u32 6, %s18
      %p177 = scmp.lt.s32.totalorder %s176, 11
      %s178 = scalar_select %p177, %s176, 11
      %s179 = smul.addr %s178, 2
      %s180 = smul.addr %s179, 4
      %s181 = scalar_lea.vmem %s0, %s180
      %p182 = pneg %p47
      %p183 = pneg %p44
      %p184 = scmp.lt.s32.totalorder %s19, 0
      %s185 = scalar_select %p184, %s19, 0
      %s186 = smul.addr %s185, 4
      %s187 = scalar_lea.vmem %s1, %s186
      %p188 = pneg %p73
      %p189 = pneg %p70
      %p190 = scmp.lt.s32.totalorder %s19, 0
      %s191 = scalar_select %p190, %s19, 0
      %s192 = scalar_lea.vmem %s2, %s191
      %p193 = pneg %p99
      %p194 = pneg %p96
      %p195 = pneg %p127
      %p196 = pneg %p124
      %s197 = smul.u32 6, %s18
      %p198 = scmp.lt.s32.totalorder %s197, 11
      %s199 = scalar_select %p198, %s197, 11
      %p200 = scmp.lt.s32.totalorder %s19, 0
      %s201 = scalar_select %p200, %s19, 0
      %s202 = sadd.s32 %s201, %s199
      %s203 = smul.addr %s202, 8
      %s204 = scalar_lea.vmem %s3, %s203
      %s205 = smul.u32 6, %s18
      %p206 = scmp.lt.s32.totalorder %s205, 11
      %s207 = scalar_select %p206, %s205, 11
      %s208 = smul.addr %s207, 2
      %s209 = smul.addr %s208, 4
      %s210 = scalar_lea.vmem %s0, %s209
      %s211 = smul.u32 6, %s18
      %p212 = scmp.lt.s32.totalorder %s19, 0
      %s213 = scalar_select %p212, %s19, 0
      %s214 = smul.addr %s213, 4
      %s215 = scalar_lea.vmem %s1, %s214
      %p216 = scmp.lt.s32.totalorder %s19, 0
      %s217 = scalar_select %p216, %s19, 0
      %s218 = scalar_lea.vmem %s2, %s217
      %s219 = smul.u32 6, %s18
      %p220 = scmp.lt.s32.totalorder %s219, 11
      %s221 = scalar_select %p220, %s219, 11
      %p222 = scmp.lt.s32.totalorder %s19, 0
      %s223 = scalar_select %p222, %s19, 0
      %s224 = sadd.s32 %s223, %s221
      %s225 = smul.addr %s224, 8
      %s226 = scalar_lea.vmem %s3, %s225
      %s227 = smul.u32 6, %s18
      %v229 = vld [vmem:[%s210] sm:$0xff]
      %v230 = vld [vmem:[%s210 + $0x8] sm:$0xff]
      %v231 = vld [vmem:[%s210 + $0x10] sm:$0xff]
      %v232 = vld [vmem:[%s210 + $0x18] sm:$0xff]
      %v233 = vld [vmem:[%s210 + $0x20] sm:$0xff]
      %v234 = vld [vmem:[%s210 + $0x28] sm:$0xff]
      %v235 = vld [vmem:[%s215] sm:$0xf]
      %v236 = vld [vmem:[%s215 + $0x4] sm:$0xf]
      %v237 = vld [vmem:[%s215 + $0x8] sm:$0xf]
      %v238 = vld [vmem:[%s215 + $0xc] sm:$0xf]
      %v239 = vld [vmem:[%s215 + $0x10] sm:$0xf]
      %v240 = vld [vmem:[%s215 + $0x14] sm:$0xf]
      %v241 = vld [vmem:[%s215 + $0x18] sm:$0xf]
      %v242 = vld [vmem:[%s215 + $0x1c] sm:$0xf]
      %v243 = vld [vmem:[%s215 + $0x20] sm:$0xf]
      %v244 = vld [vmem:[%s215 + $0x24] sm:$0xf]
      %v245 = vld [vmem:[%s215 + $0x28] sm:$0xf]
      %v246 = vld [vmem:[%s215 + $0x2c] sm:$0xf]
      %v247 = vld [vmem:[%s215 + $0x30] sm:$0xf]
      %v248 = vld [vmem:[%s215 + $0x34] sm:$0xf]
      %v249 = vld [vmem:[%s215 + $0x38] sm:$0xf]
      %v250 = vld [vmem:[%s215 + $0x3c] sm:$0xf]
      %v251 = vld [vmem:[%s215 + $0x40] sm:$0xf]
      %v252 = vld [vmem:[%s215 + $0x44] sm:$0xf]
      %v253 = vld [vmem:[%s215 + $0x48] sm:$0xf]
      %v254 = vld [vmem:[%s215 + $0x4c] sm:$0xf]
      %v255 = vld [vmem:[%s215 + $0x50] sm:$0xf]
      %v256 = vld [vmem:[%s215 + $0x54] sm:$0xf]
      %v257 = vld [vmem:[%s215 + $0x58] sm:$0xf]
      %v258 = vld [vmem:[%s215 + $0x5c] sm:$0xf]
      %v259 = vld [vmem:[%s215 + $0x60] sm:$0xf]
      %v260 = vld [vmem:[%s215 + $0x64] sm:$0xf]
      %v261 = vld [vmem:[%s215 + $0x68] sm:$0xf]
      %v262 = vld [vmem:[%s215 + $0x6c] sm:$0xf]
      %v263 = vld [vmem:[%s215 + $0x70] sm:$0xf]
      %v264 = vld [vmem:[%s215 + $0x74] sm:$0xf]
      %v265 = vld [vmem:[%s215 + $0x78] sm:$0xf]
      %v266 = vld [vmem:[%s215 + $0x7c] sm:$0xf]
      %v267 = vld [vmem:[%s218] sm:$0x1]
      %v269 = vlaneseq
      %v270 = vshrl.u32 %v269, 7
      %v271 = vsub.s32 0, %v270
      %v272 = vrot.slane %v267, %v271
      %v280 = vunpack.c.l.b16 %v229
      %v281 = vunpack.c.h.b16 %v229
      %v282 = vunpack.c.l.b16 %v230
      %v283 = vunpack.c.h.b16 %v230
      %v284 = vunpack.c.l.b16 %v231
      %v285 = vunpack.c.h.b16 %v231
      %v286 = vunpack.c.l.b16 %v232
      %v287 = vunpack.c.h.b16 %v232
      %v288 = vunpack.c.l.b16 %v233
      %v289 = vunpack.c.h.b16 %v233
      %v290 = vunpack.c.l.b16 %v234
      %v291 = vunpack.c.h.b16 %v234
      %v292 = vpack.c.b16 %v282, %v280
      %v293 = vpack.c.b16 %v283, %v281
      %v294 = vpack.c.b16 %v286, %v284
      %v295 = vpack.c.b16 %v287, %v285
      %v296 = vpack.c.b16 %v290, %v288
      %v297 = vpack.c.b16 %v291, %v289
      %v336 = vunpack.c.l.b16 %v235
      %v337 = vunpack.c.l.b16 %v236
      %v338 = vunpack.c.l.b16 %v237
      %v339 = vunpack.c.l.b16 %v238
      %v340 = vunpack.c.l.b16 %v239
      %v341 = vunpack.c.l.b16 %v240
      %v342 = vunpack.c.l.b16 %v241
      %v343 = vunpack.c.l.b16 %v242
      %v344 = vunpack.c.l.b16 %v243
      %v345 = vunpack.c.l.b16 %v244
      %v346 = vunpack.c.l.b16 %v245
      %v347 = vunpack.c.l.b16 %v246
      %v348 = vunpack.c.l.b16 %v247
      %v349 = vunpack.c.l.b16 %v248
      %v350 = vunpack.c.l.b16 %v249
      %v351 = vunpack.c.l.b16 %v250
      %v352 = vunpack.c.l.b16 %v251
      %v353 = vunpack.c.l.b16 %v252
      %v354 = vunpack.c.l.b16 %v253
      %v355 = vunpack.c.l.b16 %v254
      %v356 = vunpack.c.l.b16 %v255
      %v357 = vunpack.c.l.b16 %v256
      %v358 = vunpack.c.l.b16 %v257
      %v359 = vunpack.c.l.b16 %v258
      %v360 = vunpack.c.l.b16 %v259
      %v361 = vunpack.c.l.b16 %v260
      %v362 = vunpack.c.l.b16 %v261
      %v363 = vunpack.c.l.b16 %v262
      %v364 = vunpack.c.l.b16 %v263
      %v365 = vunpack.c.l.b16 %v264
      %v366 = vunpack.c.l.b16 %v265
      %v367 = vunpack.c.l.b16 %v266
      %v368 = vpack.c.b16 %v337, %v336
      %v369 = vpack.c.b16 %v339, %v338
      %v370 = vpack.c.b16 %v341, %v340
      %v371 = vpack.c.b16 %v343, %v342
      %v372 = vpack.c.b16 %v345, %v344
      %v373 = vpack.c.b16 %v347, %v346
      %v374 = vpack.c.b16 %v349, %v348
      %v375 = vpack.c.b16 %v351, %v350
      %v376 = vpack.c.b16 %v353, %v352
      %v377 = vpack.c.b16 %v355, %v354
      %v378 = vpack.c.b16 %v357, %v356
      %v379 = vpack.c.b16 %v359, %v358
      %v380 = vpack.c.b16 %v361, %v360
      %v381 = vpack.c.b16 %v363, %v362
      %v382 = vpack.c.b16 %v365, %v364
      %v383 = vpack.c.b16 %v367, %v366
      %400 = vmatprep.subr.bf16.mxu0 0
      %401 = vmatpush1.bf16.msra.mxu0 %v368
      %402 = vmatprep.subr.bf16.mxu0 0
      %403 = vmatpush1.bf16.msra.mxu0 %v369
      %404 = vmatprep.subr.bf16.mxu0 0
      %405 = vmatpush1.bf16.msra.mxu0 %v370
      %406 = vmatprep.subr.bf16.mxu0 0
      %407 = vmatpush1.bf16.msra.mxu0 %v371
      %408 = vmatprep.subr.bf16.mxu0 0
      %409 = vmatpush1.bf16.msra.mxu0 %v372
      %410 = vmatprep.subr.bf16.mxu0 0
      %411 = vmatpush1.bf16.msra.mxu0 %v373
      %412 = vmatprep.subr.bf16.mxu0 0
      %413 = vmatpush1.bf16.msra.mxu0 %v374
      %414 = vmatprep.subr.bf16.mxu0 0
      %415 = vmatpush1.bf16.msra.mxu0 %v375
      %416 = vmatprep.subr.bf16.mxu0 0
      %417 = vmatpush1.bf16.msra.mxu0 %v376
      %418 = vmatprep.subr.bf16.mxu0 0
      %419 = vmatpush1.bf16.msra.mxu0 %v377
      %420 = vmatprep.subr.bf16.mxu0 0
      %421 = vmatpush1.bf16.msra.mxu0 %v378
      %422 = vmatprep.subr.bf16.mxu0 0
      %423 = vmatpush1.bf16.msra.mxu0 %v379
      %424 = vmatprep.subr.bf16.mxu0 0
      %425 = vmatpush1.bf16.msra.mxu0 %v380
      %426 = vmatprep.subr.bf16.mxu0 0
      %427 = vmatpush1.bf16.msra.mxu0 %v381
      %428 = vmatprep.subr.bf16.mxu0 0
      %429 = vmatpush1.bf16.msra.mxu0 %v382
      %430 = vmatprep.subr.bf16.mxu0 0
      %431 = vmatpush1.bf16.msra.mxu0 %v383
      %432 = vmatprep.mubr.bf16.mxu0 %v293
      %433 = vmatmul.mubr.bf16.gmra.mrb[0].mxu0 %v292
      %v434 = vpop.f32.mrb[0].mxu0
      %v435 = vadd.f32 %v272, %v434
      %v436 = vpop.f32.mrb[0].mxu0
      %v437 = vpop.f32.mrb[0].mxu0
      %v438 = vadd.f32 %v272, %v437
      %v439 = vpop.f32.mrb[0].mxu0
      %440 = vmatprep.mubr.bf16.mxu0 %v295
      %441 = vmatmul.mubr.bf16.gmra.mrb[0].mxu0 %v294
      %v442 = vpop.f32.mrb[0].mxu0
      %v443 = vadd.f32 %v272, %v442
      %v444 = vpop.f32.mrb[0].mxu0
      %v445 = vpop.f32.mrb[0].mxu0
      %v446 = vadd.f32 %v272, %v445
      %v447 = vpop.f32.mrb[0].mxu0
      %448 = vmatprep.mubr.bf16.mxu0 %v297
      %449 = vmatmul.mubr.bf16.gmra.mrb[0].mxu0 %v296
      %v450 = vpop.f32.mrb[0].mxu0
      %v451 = vadd.f32 %v272, %v450
      %v452 = vpop.f32.mrb[0].mxu0
      %v453 = vpop.f32.mrb[0].mxu0
      %v454 = vadd.f32 %v272, %v453
      %v455 = vpop.f32.mrb[0].mxu0
      %456 = vdwg.mxu0
      %v457 = vmax.f32 %v435, 0.0
      %v458 = vmax.f32 %v438, 0.0
      %v459 = vmax.f32 %v443, 0.0
      %v460 = vmax.f32 %v446, 0.0
      %v461 = vmax.f32 %v451, 0.0
      %v462 = vmax.f32 %v454, 0.0
      %463 = vst [vmem:[%s226] sm:$0xff] %v457
      %464 = vst [vmem:[%s226 + $0x8] sm:$0xff] %v458
      %465 = vst [vmem:[%s226 + $0x10] sm:$0xff] %v459
      %466 = vst [vmem:[%s226 + $0x18] sm:$0xff] %v460
      %467 = vst [vmem:[%s226 + $0x20] sm:$0xff] %v461
      %468 = vst [vmem:[%s226 + $0x28] sm:$0xff] %v462
      %s469 = smul.u32 6, %s18
      %p470 = scmp.lt.s32.totalorder %s469, 11
      %s471 = scalar_select %p470, %s469, 11
      %p472 = scmp.lt.s32.totalorder %s19, 0
      %s473 = scalar_select %p472, %s19, 0
      %s474 = sadd.s32 %s473, %s471
      %s475 = smul.addr %s474, 8
      %s476 = scalar_lea.vmem %s3, %s475
      // Predicated region
      $region33: #{forward.19} parent=31 // pred_check
        %p477 = pneg %p124
      $region34: #{forward.19} parent=31 // pred_check_branch
        %479 = sbr.rel (%p477) target = $region36
      $region35: #{forward.19} parent=31 // pred_region
        %s480 = smul.u32 6, %s18
      $region36: #{forward.19} parent=31 // pred_fallthru
        _
    $region32: #{forward.19} parent=5 // pred_fallthru
      _
    %p481 = scmp.le.s32.totalorder 2, %s9
    // Predicated region
    $region37: #{forward.19} parent=5 // pred_check
      %p482 = pneg %p481
    $region38: #{forward.19} parent=5 // pred_check_branch
      %484 = sbr.rel (%p482) target = $region40
    $region39: #{forward.19} parent=5 // pred_region
      %s485 = ssub.s32 %s9, 2
      // Predicated region
      $region41: #{forward.19} parent=39 // pred_check
        %p486 = pneg %p130
      $region42: #{forward.19} parent=39 // pred_check_branch
        %488 = sbr.rel (%p486) target = $region44
      $region43: #{forward.19} parent=39 // pred_region
        %s489 = smul.u32 6, %s20
        %p490 = scmp.lt.s32.totalorder %s489, 11
        %s491 = scalar_select %p490, %s489, 11
        %p492 = scmp.lt.s32.totalorder %s21, 0
        %s493 = scalar_select %p492, %s21, 0
        %s494 = sadd.s32 %s493, %s491
        %s495 = smul.addr %s494, 8
        %s496 = scalar_lea.vmem %s3, %s495
      $region44: #{forward.19} parent=39 // pred_fallthru
        _
    $region40: #{forward.19} parent=5 // pred_fallthru
      _
  $region6: #{forward.19} parent=0 // loop_footer
    %s13 = sadd.s32 1, %s9
  $region7: #{forward.19} parent=0 // loop_footer_branch
    %8 = sbr.rel target = $region3
  $region8: #{forward.19} parent=0 // loop_exit
    _

// kernel: forward.14
$region0: #{forward.14}
  #allocation0 [shape = 'u32[]', space=smem, size = 0x4, offset = 0x4, fixed_abs, tag = 'smem constant byte address 0x4 - core index']
  #allocation1 [shape = 'u32[144,128]{1,0:T(1,128)}', space=vmem, size = 0x12000, scoped, tag = 'internal scratch']
  %s0 = inlined_call_operand.vmem [shape: bf16[1024,128], index: 0, kind: input, shape index: {}]
  %s1 = inlined_call_operand.vmem [shape: bf16[128,128], index: 1, kind: input, shape index: {}]
  %s2 = inlined_call_operand.vmem [shape: f32[1,128], index: 2, kind: input, shape index: {}]
  %s3 = inlined_call_operand.vmem [shape: f32[1024,128], index: 3, kind: output, shape index: {}]
  %s4 = sld [smem:[#allocation0]]
  $region45: #{forward.14} parent=0
    _
  %s6 = ssub.s32 1, %s4
  %s7 = scalar_select 0, %s6, %s4
  loop: start=0, step=1, limit=4
  $region2: #{forward.14} parent=0 // loop_pre_header
    _
  $region3: #{forward.14} parent=0 // loop_header
    %s9 = sphi 0, %s13
    %p10 = scmp.ge.s32.totalorder %s9, 4
    %s16 = sphi 0, %s28
    %s17 = sphi 0, %s24
    %s18 = sphi 0, %s16
    %s19 = sphi 0, %s17
    %s20 = sphi 0, %s18
    %s21 = sphi 0, %s19
    %s31 = sphi 0, %s33
    %s34 = sphi 0, %s31
    %s35 = sphi 0, %s34
    %s51 = sphi 0, %s35
    %s57 = sphi 0, %s59
    %s60 = sphi 0, %s57
    %s61 = sphi 0, %s60
    %s77 = sphi 0, %s61
    %s83 = sphi 0, %s85
    %s86 = sphi 0, %s83
    %s87 = sphi 0, %s86
    %s103 = sphi 0, %s87
    %s111 = sphi 0, %s113
    %s114 = sphi 0, %s111
    %s115 = sphi 0, %s114
    %s131 = sphi 0, %s115
  $region4: #{forward.14} parent=0 // loop_header_branch
    %12 = sbr.rel (%p10) target = $region8
  $region5: #{forward.14} parent=0 // loop_body
    %s14 = ssub.s32 %s9, 1
    %s15 = ssub.s32 %s9, 2
    %s22 = sadd.s32 1, %s17
    %p23 = scmp.ge.s32.totalorder %s22, 1
    %s24 = scalar_select %p23, 0, %s22
    %s25 = sadd.s32 1, %s16
    %s26 = scalar_select %p23, %s25, %s16
    %p27 = scmp.ge.s32.totalorder %s26, 2
    %s28 = scalar_select %p27, 0, %s26
    %s29 = ssub.s32 %s16, %s28
    %p30 = scmp.eq.s32.totalorder %s29, 0
    %s32 = sadd.s32 %s31, 1
    %s33 = scalar_select %p30, %s31, %s32
    %p36 = pneg %p30
    %p37 = scmp.eq.s32.totalorder %s9, 1
    %p38 = por %p36, %p37
    %p39 = scmp.ne.s32.totalorder %s31, %s34
    %p40 = scmp.eq.s32.totalorder %s9, 0
    %p41 = por %p39, %p40
    %p42 = scmp.ne.s32.totalorder %s31, %s34
    %p43 = scmp.eq.s32.totalorder %s14, 1
    %p44 = por %p42, %p43
    %p45 = scmp.ne.s32.totalorder %s34, %s35
    %p46 = scmp.eq.s32.totalorder %s14, 0
    %p47 = por %p45, %p46
    %p48 = scmp.ne.s32.totalorder %s34, %s35
    %p49 = scmp.eq.s32.totalorder %s15, 1
    %p50 = por %p48, %p49
    %p52 = scmp.ne.s32.totalorder %s35, %s51
    %p53 = scmp.eq.s32.totalorder %s15, 0
    %p54 = por %p52, %p53
    %s55 = ssub.s32 %s17, %s24
    %p56 = scmp.eq.s32.totalorder %s55, 0
    %s58 = sadd.s32 %s57, 1
    %s59 = scalar_select %p56, %s57, %s58
    %p62 = pneg %p56
    %p63 = scmp.eq.s32.totalorder %s9, 1
    %p64 = por %p62, %p63
    %p65 = scmp.ne.s32.totalorder %s57, %s60
    %p66 = scmp.eq.s32.totalorder %s9, 0
    %p67 = por %p65, %p66
    %p68 = scmp.ne.s32.totalorder %s57, %s60
    %p69 = scmp.eq.s32.totalorder %s14, 1
    %p70 = por %p68, %p69
    %p71 = scmp.ne.s32.totalorder %s60, %s61
    %p72 = scmp.eq.s32.totalorder %s14, 0
    %p73 = por %p71, %p72
    %p74 = scmp.ne.s32.totalorder %s60, %s61
    %p75 = scmp.eq.s32.totalorder %s15, 1
    %p76 = por %p74, %p75
    %p78 = scmp.ne.s32.totalorder %s61, %s77
    %p79 = scmp.eq.s32.totalorder %s15, 0
    %p80 = por %p78, %p79
    %s81 = ssub.s32 %s17, %s24
    %p82 = scmp.eq.s32.totalorder %s81, 0
    %s84 = sadd.s32 %s83, 1
    %s85 = scalar_select %p82, %s83, %s84
    %p88 = pneg %p82
    %p89 = scmp.eq.s32.totalorder %s9, 1
    %p90 = por %p88, %p89
    %p91 = scmp.ne.s32.totalorder %s83, %s86
    %p92 = scmp.eq.s32.totalorder %s9, 0
    %p93 = por %p91, %p92
    %p94 = scmp.ne.s32.totalorder %s83, %s86
    %p95 = scmp.eq.s32.totalorder %s14, 1
    %p96 = por %p94, %p95
    %p97 = scmp.ne.s32.totalorder %s86, %s87
    %p98 = scmp.eq.s32.totalorder %s14, 0
    %p99 = por %p97, %p98
    %p100 = scmp.ne.s32.totalorder %s86, %s87
    %p101 = scmp.eq.s32.totalorder %s15, 1
    %p102 = por %p100, %p101
    %p104 = scmp.ne.s32.totalorder %s87, %s103
    %p105 = scmp.eq.s32.totalorder %s15, 0
    %p106 = por %p104, %p105
    %s107 = ssub.s32 %s16, %s28
    %s108 = ssub.s32 %s17, %s24
    %s109 = sor.u32 %s107, %s108
    %p110 = scmp.eq.s32.totalorder %s109, 0
    %s112 = sadd.s32 %s111, 1
    %s113 = scalar_select %p110, %s111, %s112
    %p116 = pneg %p110
    %p117 = scmp.eq.s32.totalorder %s9, 1
    %p118 = por %p116, %p117
    %p119 = scmp.ne.s32.totalorder %s111, %s114
    %p120 = scmp.eq.s32.totalorder %s9, 0
    %p121 = por %p119, %p120
    %p122 = scmp.ne.s32.totalorder %s111, %s114
    %p123 = scmp.eq.s32.totalorder %s14, 1
    %p124 = por %p122, %p123
    %p125 = scmp.ne.s32.totalorder %s114, %s115
    %p126 = scmp.eq.s32.totalorder %s14, 0
    %p127 = por %p125, %p126
    %p128 = scmp.ne.s32.totalorder %s114, %s115
    %p129 = scmp.eq.s32.totalorder %s15, 1
    %p130 = por %p128, %p129
    %p132 = scmp.ne.s32.totalorder %s115, %s131
    %p133 = scmp.eq.s32.totalorder %s15, 0
    %p134 = por %p132, %p133
    %p135 = scmp.le.s32.totalorder 1, %s9
    %p136 = scmp.lt.s32.totalorder %s9, 3
    %p137 = pnand %p135, %p136
    %p138 = pneg %p137
    // Predicated region
    $region9: #{forward.14} parent=5 // pred_check
      _
    $region10: #{forward.14} parent=5 // pred_check_branch
      %140 = sbr.rel (%p137) target = $region12
    $region11: #{forward.14} parent=5 // pred_region
      %s141 = ssub.s32 %s9, 1
      // Predicated region
      $region13: #{forward.14} parent=11 // pred_check
        %p142 = pneg %p73
      $region14: #{forward.14} parent=11 // pred_check_branch
        %144 = sbr.rel (%p142) target = $region16
      $region15: #{forward.14} parent=11 // pred_region
        %p145 = scmp.lt.s32.totalorder %s19, 0
        %s146 = scalar_select %p145, %s19, 0
        %s147 = smul.addr %s146, 4
        %s148 = scalar_lea.vmem %s1, %s147
      $region16: #{forward.14} parent=11 // pred_fallthru
        _
      // Predicated region
      $region17: #{forward.14} parent=11 // pred_check
        %p149 = pneg %p99
      $region18: #{forward.14} parent=11 // pred_check_branch
        %151 = sbr.rel (%p149) target = $region20
      $region19: #{forward.14} parent=11 // pred_region
        %p152 = scmp.lt.s32.totalorder %s19, 0
        %s153 = scalar_select %p152, %s19, 0
        %s154 = scalar_lea.vmem %s2, %s153
      $region20: #{forward.14} parent=11 // pred_fallthru
        _
    $region12: #{forward.14} parent=5 // pred_fallthru
      _
    %p155 = scmp.lt.s32.totalorder %s9, 2
    // Predicated region
    $region21: #{forward.14} parent=5 // pred_check
      %p156 = pneg %p155
    $region22: #{forward.14} parent=5 // pred_check_branch
      %158 = sbr.rel (%p156) target = $region24
    $region23: #{forward.14} parent=5 // pred_region
      // Predicated region
      $region25: #{forward.14} parent=23 // pred_check
        %p159 = pneg %p41
      $region26: #{forward.14} parent=23 // pred_check_branch
        %161 = sbr.rel (%p159) target = $region28
      $region27: #{forward.14} parent=23 // pred_region
        %s162 = smul.u32 64, %s16
        %p163 = scmp.lt.s32.totalorder %s162, 127
        %s164 = scalar_select %p163, %s162, 127
        %s165 = smul.addr %s164, 4
        %s166 = scalar_lea.vmem %s0, %s165
        %s167 = smul.u32 64, %s16
      $region28: #{forward.14} parent=23 // pred_fallthru
        _
    $region24: #{forward.14} parent=5 // pred_fallthru
      _
    %p168 = scmp.le.s32.totalorder 1, %s9
    %p169 = scmp.lt.s32.totalorder %s9, 3
    %p170 = pnand %p168, %p169
    %p171 = pneg %p170
    // Predicated region
    $region29: #{forward.14} parent=5 // pred_check
      _
    $region30: #{forward.14} parent=5 // pred_check_branch
      %173 = sbr.rel (%p170) target = $region32
    $region31: #{forward.14} parent=5 // pred_region
      %s174 = ssub.s32 %s9, 1
      %s175 = smul.u32 64, %s18
      %p176 = scmp.lt.s32.totalorder %s175, 127
      %s177 = scalar_select %p176, %s175, 127
      %s178 = smul.addr %s177, 4
      %s179 = scalar_lea.vmem %s0, %s178
      %p180 = pneg %p47
      %p181 = pneg %p44
      %p182 = scmp.lt.s32.totalorder %s19, 0
      %s183 = scalar_select %p182, %s19, 0
      %s184 = smul.addr %s183, 4
      %s185 = scalar_lea.vmem %s1, %s184
      %p186 = pneg %p73
      %p187 = pneg %p70
      %p188 = scmp.lt.s32.totalorder %s19, 0
      %s189 = scalar_select %p188, %s19, 0
      %s190 = scalar_lea.vmem %s2, %s189
      %p191 = pneg %p99
      %p192 = pneg %p96
      %p193 = pneg %p127
      %p194 = pneg %p124
      %s195 = smul.u32 64, %s18
      %p196 = scmp.lt.s32.totalorder %s195, 127
      %s197 = scalar_select %p196, %s195, 127
      %p198 = scmp.lt.s32.totalorder %s19, 0
      %s199 = scalar_select %p198, %s19, 0
      %s200 = sadd.s32 %s199, %s197
      %s201 = smul.addr %s200, 8
      %s202 = scalar_lea.vmem %s3, %s201
      %s203 = smul.u32 64, %s18
      %p204 = scmp.lt.s32.totalorder %s203, 127
      %s205 = scalar_select %p204, %s203, 127
      %s206 = smul.addr %s205, 4
      %s207 = scalar_lea.vmem %s0, %s206
      %s208 = smul.u32 64, %s18
      %p209 = scmp.lt.s32.totalorder %s19, 0
      %s210 = scalar_select %p209, %s19, 0
      %s211 = smul.addr %s210, 4
      %s212 = scalar_lea.vmem %s1, %s211
      %p213 = scmp.lt.s32.totalorder %s19, 0
      %s214 = scalar_select %p213, %s19, 0
      %s215 = scalar_lea.vmem %s2, %s214
      %s216 = smul.u32 64, %s18
      %p217 = scmp.lt.s32.totalorder %s216, 127
      %s218 = scalar_select %p217, %s216, 127
      %p219 = scmp.lt.s32.totalorder %s19, 0
      %s220 = scalar_select %p219, %s19, 0
      %s221 = sadd.s32 %s220, %s218
      %s222 = smul.addr %s221, 8
      %s223 = scalar_lea.vmem %s3, %s222
      %s224 = smul.u32 64, %s18
      %v226 = vld [vmem:[%s207] sm:$0xf]
      %v227 = vld [vmem:[%s207 + $0x4] sm:$0xf]
      %v228 = vld [vmem:[%s207 + $0x8] sm:$0xf]
      %v229 = vld [vmem:[%s207 + $0xc] sm:$0xf]
      %v230 = vld [vmem:[%s207 + $0x10] sm:$0xf]
      %v231 = vld [vmem:[%s207 + $0x14] sm:$0xf]
      %v232 = vld [vmem:[%s207 + $0x18] sm:$0xf]
      %v233 = vld [vmem:[%s207 + $0x1c] sm:$0xf]
      %v234 = vld [vmem:[%s207 + $0x20] sm:$0xf]
      %v235 = vld [vmem:[%s207 + $0x24] sm:$0xf]
      %v236 = vld [vmem:[%s207 + $0x28] sm:$0xf]
      %v237 = vld [vmem:[%s207 + $0x2c] sm:$0xf]
      %v238 = vld [vmem:[%s207 + $0x30] sm:$0xf]
      %v239 = vld [vmem:[%s207 + $0x34] sm:$0xf]
      %v240 = vld [vmem:[%s207 + $0x38] sm:$0xf]
      %v241 = vld [vmem:[%s207 + $0x3c] sm:$0xf]
      %v242 = vld [vmem:[%s207 + $0x40] sm:$0xf]
      %v243 = vld [vmem:[%s207 + $0x44] sm:$0xf]
      %v244 = vld [vmem:[%s207 + $0x48] sm:$0xf]
      %v245 = vld [vmem:[%s207 + $0x4c] sm:$0xf]
      %v246 = vld [vmem:[%s207 + $0x50] sm:$0xf]
      %v247 = vld [vmem:[%s207 + $0x54] sm:$0xf]
      %v248 = vld [vmem:[%s207 + $0x58] sm:$0xf]
      %v249 = vld [vmem:[%s207 + $0x5c] sm:$0xf]
      %v250 = vld [vmem:[%s207 + $0x60] sm:$0xf]
      %v251 = vld [vmem:[%s207 + $0x64] sm:$0xf]
      %v252 = vld [vmem:[%s207 + $0x68] sm:$0xf]
      %v253 = vld [vmem:[%s207 + $0x6c] sm:$0xf]
      %v254 = vld [vmem:[%s207 + $0x70] sm:$0xf]
      %v255 = vld [vmem:[%s207 + $0x74] sm:$0xf]
      %v256 = vld [vmem:[%s207 + $0x78] sm:$0xf]
      %v257 = vld [vmem:[%s207 + $0x7c] sm:$0xf]
      %v258 = vld [vmem:[%s207 + $0x80] sm:$0xf]
      %v259 = vld [vmem:[%s207 + $0x84] sm:$0xf]
      %v260 = vld [vmem:[%s207 + $0x88] sm:$0xf]
      %v261 = vld [vmem:[%s207 + $0x8c] sm:$0xf]
      %v262 = vld [vmem:[%s207 + $0x90] sm:$0xf]
      %v263 = vld [vmem:[%s207 + $0x94] sm:$0xf]
      %v264 = vld [vmem:[%s207 + $0x98] sm:$0xf]
      %v265 = vld [vmem:[%s207 + $0x9c] sm:$0xf]
      %v266 = vld [vmem:[%s207 + $0xa0] sm:$0xf]
      %v267 = vld [vmem:[%s207 + $0xa4] sm:$0xf]
      %v268 = vld [vmem:[%s207 + $0xa8] sm:$0xf]
      %v269 = vld [vmem:[%s207 + $0xac] sm:$0xf]
      %v270 = vld [vmem:[%s207 + $0xb0] sm:$0xf]
      %v271 = vld [vmem:[%s207 + $0xb4] sm:$0xf]
      %v272 = vld [vmem:[%s207 + $0xb8] sm:$0xf]
      %v273 = vld [vmem:[%s207 + $0xbc] sm:$0xf]
      %v274 = vld [vmem:[%s207 + $0xc0] sm:$0xf]
      %v275 = vld [vmem:[%s207 + $0xc4] sm:$0xf]
      %v276 = vld [vmem:[%s207 + $0xc8] sm:$0xf]
      %v277 = vld [vmem:[%s207 + $0xcc] sm:$0xf]
      %v278 = vld [vmem:[%s207 + $0xd0] sm:$0xf]
      %v279 = vld [vmem:[%s207 + $0xd4] sm:$0xf]
      %v280 = vld [vmem:[%s207 + $0xd8] sm:$0xf]
      %v281 = vld [vmem:[%s207 + $0xdc] sm:$0xf]
      %v282 = vld [vmem:[%s207 + $0xe0] sm:$0xf]
      %v283 = vld [vmem:[%s207 + $0xe4] sm:$0xf]
      %v284 = vld [vmem:[%s207 + $0xe8] sm:$0xf]
      %v285 = vld [vmem:[%s207 + $0xec] sm:$0xf]
      %v286 = vld [vmem:[%s207 + $0xf0] sm:$0xf]
      %v287 = vld [vmem:[%s207 + $0xf4] sm:$0xf]
      %v288 = vld [vmem:[%s207 + $0xf8] sm:$0xf]
      %v289 = vld [vmem:[%s207 + $0xfc] sm:$0xf]
      %v290 = vld [vmem:[%s212] sm:$0xf]
      %v291 = vld [vmem:[%s212 + $0x4] sm:$0xf]
      %v292 = vld [vmem:[%s212 + $0x8] sm:$0xf]
      %v293 = vld [vmem:[%s212 + $0xc] sm:$0xf]
      %v294 = vld [vmem:[%s212 + $0x10] sm:$0xf]
      %v295 = vld [vmem:[%s212 + $0x14] sm:$0xf]
      %v296 = vld [vmem:[%s212 + $0x18] sm:$0xf]
      %v297 = vld [vmem:[%s212 + $0x1c] sm:$0xf]
      %v298 = vld [vmem:[%s212 + $0x20] sm:$0xf]
      %v299 = vld [vmem:[%s212 + $0x24] sm:$0xf]
      %v300 = vld [vmem:[%s212 + $0x28] sm:$0xf]
      %v301 = vld [vmem:[%s212 + $0x2c] sm:$0xf]
      %v302 = vld [vmem:[%s212 + $0x30] sm:$0xf]
      %v303 = vld [vmem:[%s212 + $0x34] sm:$0xf]
      %v304 = vld [vmem:[%s212 + $0x38] sm:$0xf]
      %v305 = vld [vmem:[%s212 + $0x3c] sm:$0xf]
      %v306 = vld [vmem:[%s215] sm:$0x1]
      %v308 = vlaneseq
      %v309 = vshrl.u32 %v308, 7
      %v310 = vsub.s32 0, %v309
      %v311 = vrot.slane %v306, %v310
      %v377 = vunpack.c.l.b16 %v226
      %v378 = vunpack.c.l.b16 %v227
      %v379 = vunpack.c.l.b16 %v228
      %v380 = vunpack.c.l.b16 %v229
      %v381 = vunpack.c.l.b16 %v230
      %v382 = vunpack.c.l.b16 %v231
      %v383 = vunpack.c.l.b16 %v232
      %v384 = vunpack.c.l.b16 %v233
      %v385 = vunpack.c.l.b16 %v234
      %v386 = vunpack.c.l.b16 %v235
      %v387 = vunpack.c.l.b16 %v236
      %v388 = vunpack.c.l.b16 %v237
      %v389 = vunpack.c.l.b16 %v238
      %v390 = vunpack.c.l.b16 %v239
      %v391 = vunpack.c.l.b16 %v240
      %v392 = vunpack.c.l.b16 %v241
      %v393 = vunpack.c.l.b16 %v242
      %v394 = vunpack.c.l.b16 %v243
      %v395 = vunpack.c.l.b16 %v244
      %v396 = vunpack.c.l.b16 %v245
      %v397 = vunpack.c.l.b16 %v246
      %v398 = vunpack.c.l.b16 %v247
      %v399 = vunpack.c.l.b16 %v248
      %v400 = vunpack.c.l.b16 %v249
      %v401 = vunpack.c.l.b16 %v250
      %v402 = vunpack.c.l.b16 %v251
      %v403 = vunpack.c.l.b16 %v252
      %v404 = vunpack.c.l.b16 %v253
      %v405 = vunpack.c.l.b16 %v254
      %v406 = vunpack.c.l.b16 %v255
      %v407 = vunpack.c.l.b16 %v256
      %v408 = vunpack.c.l.b16 %v257
      %v409 = vunpack.c.l.b16 %v258
      %v410 = vunpack.c.l.b16 %v259
      %v411 = vunpack.c.l.b16 %v260
      %v412 = vunpack.c.l.b16 %v261
      %v413 = vunpack.c.l.b16 %v262
      %v414 = vunpack.c.l.b16 %v263
      %v415 = vunpack.c.l.b16 %v264
      %v416 = vunpack.c.l.b16 %v265
      %v417 = vunpack.c.l.b16 %v266
      %v418 = vunpack.c.l.b16 %v267
      %v419 = vunpack.c.l.b16 %v268
      %v420 = vunpack.c.l.b16 %v269
      %v421 = vunpack.c.l.b16 %v270
      %v422 = vunpack.c.l.b16 %v271
      %v423 = vunpack.c.l.b16 %v272
      %v424 = vunpack.c.l.b16 %v273
      %v425 = vunpack.c.l.b16 %v274
      %v426 = vunpack.c.l.b16 %v275
      %v427 = vunpack.c.l.b16 %v276
      %v428 = vunpack.c.l.b16 %v277
      %v429 = vunpack.c.l.b16 %v278
      %v430 = vunpack.c.l.b16 %v279
      %v431 = vunpack.c.l.b16 %v280
      %v432 = vunpack.c.l.b16 %v281
      %v433 = vunpack.c.l.b16 %v282
      %v434 = vunpack.c.l.b16 %v283
      %v435 = vunpack.c.l.b16 %v284
      %v436 = vunpack.c.l.b16 %v285
      %v437 = vunpack.c.l.b16 %v286
      %v438 = vunpack.c.l.b16 %v287
      %v439 = vunpack.c.l.b16 %v288
      %v440 = vunpack.c.l.b16 %v289
      %v441 = vpack.c.b16 %v378, %v377
      %v442 = vpack.c.b16 %v380, %v379
      %v443 = vpack.c.b16 %v382, %v381
      %v444 = vpack.c.b16 %v384, %v383
      %v445 = vpack.c.b16 %v386, %v385
      %v446 = vpack.c.b16 %v388, %v387
      %v447 = vpack.c.b16 %v390, %v389
      %v448 = vpack.c.b16 %v392, %v391
      %v449 = vpack.c.b16 %v394, %v393
      %v450 = vpack.c.b16 %v396, %v395
      %v451 = vpack.c.b16 %v398, %v397
      %v452 = vpack.c.b16 %v400, %v399
      %v453 = vpack.c.b16 %v402, %v401
      %v454 = vpack.c.b16 %v404, %v403
      %v455 = vpack.c.b16 %v406, %v405
      %v456 = vpack.c.b16 %v408, %v407
      %v457 = vpack.c.b16 %v410, %v409
      %v458 = vpack.c.b16 %v412, %v411
      %v459 = vpack.c.b16 %v414, %v413
      %v460 = vpack.c.b16 %v416, %v415
      %v461 = vpack.c.b16 %v418, %v417
      %v462 = vpack.c.b16 %v420, %v419
      %v463 = vpack.c.b16 %v422, %v421
      %v464 = vpack.c.b16 %v424, %v423
      %v465 = vpack.c.b16 %v426, %v425
      %v466 = vpack.c.b16 %v428, %v427
      %v467 = vpack.c.b16 %v430, %v429
      %v468 = vpack.c.b16 %v432, %v431
      %v469 = vpack.c.b16 %v434, %v433
      %v470 = vpack.c.b16 %v436, %v435
      %v471 = vpack.c.b16 %v438, %v437
      %v472 = vpack.c.b16 %v440, %v439
      %v521 = vunpack.c.l.b16 %v290
      %v522 = vunpack.c.l.b16 %v291
      %v523 = vunpack.c.l.b16 %v292
      %v524 = vunpack.c.l.b16 %v293
      %v525 = vunpack.c.l.b16 %v294
      %v526 = vunpack.c.l.b16 %v295
      %v527 = vunpack.c.l.b16 %v296
      %v528 = vunpack.c.l.b16 %v297
      %v529 = vunpack.c.l.b16 %v298
      %v530 = vunpack.c.l.b16 %v299
      %v531 = vunpack.c.l.b16 %v300
      %v532 = vunpack.c.l.b16 %v301
      %v533 = vunpack.c.l.b16 %v302
      %v534 = vunpack.c.l.b16 %v303
      %v535 = vunpack.c.l.b16 %v304
      %v536 = vunpack.c.l.b16 %v305
      %v537 = vpack.c.b16 %v522, %v521
      %v538 = vpack.c.b16 %v524, %v523
      %v539 = vpack.c.b16 %v526, %v525
      %v540 = vpack.c.b16 %v528, %v527
      %v541 = vpack.c.b16 %v530, %v529
      %v542 = vpack.c.b16 %v532, %v531
      %v543 = vpack.c.b16 %v534, %v533
      %v544 = vpack.c.b16 %v536, %v535
      %553 = vmatprep.subr.bf16.mxu0 0
      %554 = vmatpush1.bf16.msra.mxu0 %v537
      %555 = vmatprep.subr.bf16.mxu0 0
      %556 = vmatpush1.bf16.msra.mxu0 %v538
      %557 = vmatprep.subr.bf16.mxu0 0
      %558 = vmatpush1.bf16.msra.mxu0 %v539
      %559 = vmatprep.subr.bf16.mxu0 0
      %560 = vmatpush1.bf16.msra.mxu0 %v540
      %561 = vmatprep.subr.bf16.mxu0 0
      %562 = vmatpush1.bf16.msra.mxu0 %v541
      %563 = vmatprep.subr.bf16.mxu0 0
      %564 = vmatpush1.bf16.msra.mxu0 %v542
      %565 = vmatprep.subr.bf16.mxu0 0
      %566 = vmatpush1.bf16.msra.mxu0 %v543
      %567 = vmatprep.subr.bf16.mxu0 0
      %568 = vmatpush1.bf16.msra.mxu0 %v544
      %569 = vmatprep.subr.bf16.mxu0 0
      %570 = vmatpush1.bf16.msra.mxu0 0
      %571 = vmatprep.subr.bf16.mxu0 0
      %572 = vmatpush1.bf16.msra.mxu0 0
      %573 = vmatprep.subr.bf16.mxu0 0
      %574 = vmatpush1.bf16.msra.mxu0 0
      %575 = vmatprep.subr.bf16.mxu0 0
      %576 = vmatpush1.bf16.msra.mxu0 0
      %577 = vmatprep.subr.bf16.mxu0 0
      %578 = vmatpush1.bf16.msra.mxu0 0
      %579 = vmatprep.subr.bf16.mxu0 0
      %580 = vmatpush1.bf16.msra.mxu0 0
      %581 = vmatprep.subr.bf16.mxu0 0
      %582 = vmatpush1.bf16.msra.mxu0 0
      %583 = vmatprep.subr.bf16.mxu0 0
      %584 = vmatpush1.bf16.msra.mxu0 0
      %585 = vmatprep.mubr.bf16.mxu0 0
      %586 = vmatmul.mubr.bf16.gmra.mrb[0].mxu0 %v441
      %v587 = vpop.f32.mrb[0].mxu0
      %v588 = vadd.f32 %v311, %v587
      %v589 = vpop.f32.mrb[0].mxu0
      %v590 = vpop.f32.mrb[0].mxu0
      %v591 = vadd.f32 %v311, %v590
      %v592 = vpop.f32.mrb[0].mxu0
      %593 = vmatprep.mubr.bf16.mxu0 0
      %594 = vmatmul.mubr.bf16.gmra.mrb[0].mxu0 %v442
      %v595 = vpop.f32.mrb[0].mxu0
      %v596 = vadd.f32 %v311, %v595
      %v597 = vpop.f32.mrb[0].mxu0
      %v598 = vpop.f32.mrb[0].mxu0
      %v599 = vadd.f32 %v311, %v598
      %v600 = vpop.f32.mrb[0].mxu0
      %601 = vmatprep.mubr.bf16.mxu0 0
      %602 = vmatmul.mubr.bf16.gmra.mrb[0].mxu0 %v443
      %v603 = vpop.f32.mrb[0].mxu0
      %v604 = vadd.f32 %v311, %v603
      %v605 = vpop.f32.mrb[0].mxu0
      %v606 = vpop.f32.mrb[0].mxu0
      %v607 = vadd.f32 %v311, %v606
      %v608 = vpop.f32.mrb[0].mxu0
      %609 = vmatprep.mubr.bf16.mxu0 0
      %610 = vmatmul.mubr.bf16.gmra.mrb[0].mxu0 %v444
      %v611 = vpop.f32.mrb[0].mxu0
      %v612 = vadd.f32 %v311, %v611
      %v613 = vpop.f32.mrb[0].mxu0
      %v614 = vpop.f32.mrb[0].mxu0
      %v615 = vadd.f32 %v311, %v614
      %v616 = vpop.f32.mrb[0].mxu0
      %617 = vmatprep.mubr.bf16.mxu0 0
      %618 = vmatmul.mubr.bf16.gmra.mrb[0].mxu0 %v445
      %v619 = vpop.f32.mrb[0].mxu0
      %v620 = vadd.f32 %v311, %v619
      %v621 = vpop.f32.mrb[0].mxu0
      %v622 = vpop.f32.mrb[0].mxu0
      %v623 = vadd.f32 %v311, %v622
      %v624 = vpop.f32.mrb[0].mxu0
      %625 = vmatprep.mubr.bf16.mxu0 0
      %626 = vmatmul.mubr.bf16.gmra.mrb[0].mxu0 %v446
      %v627 = vpop.f32.mrb[0].mxu0
      %v628 = vadd.f32 %v311, %v627
      %v629 = vpop.f32.mrb[0].mxu0
      %v630 = vpop.f32.mrb[0].mxu0
      %v631 = vadd.f32 %v311, %v630
      %v632 = vpop.f32.mrb[0].mxu0
      %633 = vmatprep.mubr.bf16.mxu0 0
      %634 = vmatmul.mubr.bf16.gmra.mrb[0].mxu0 %v447
      %v635 = vpop.f32.mrb[0].mxu0
      %v636 = vadd.f32 %v311, %v635
      %v637 = vpop.f32.mrb[0].mxu0
      %v638 = vpop.f32.mrb[0].mxu0
      %v639 = vadd.f32 %v311, %v638
      %v640 = vpop.f32.mrb[0].mxu0
      %641 = vmatprep.mubr.bf16.mxu0 0
      %642 = vmatmul.mubr.bf16.gmra.mrb[0].mxu0 %v448
      %v643 = vpop.f32.mrb[0].mxu0
      %v644 = vadd.f32 %v311, %v643
      %v645 = vpop.f32.mrb[0].mxu0
      %v646 = vpop.f32.mrb[0].mxu0
      %v647 = vadd.f32 %v311, %v646
      %v648 = vpop.f32.mrb[0].mxu0
      %649 = vmatprep.mubr.bf16.mxu0 0
      %650 = vmatmul.mubr.bf16.gmra.mrb[0].mxu0 %v449
      %v651 = vpop.f32.mrb[0].mxu0
      %v652 = vadd.f32 %v311, %v651
      %v653 = vpop.f32.mrb[0].mxu0
      %v654 = vpop.f32.mrb[0].mxu0
      %v655 = vadd.f32 %v311, %v654
      %v656 = vpop.f32.mrb[0].mxu0
      %657 = vmatprep.mubr.bf16.mxu0 0
      %658 = vmatmul.mubr.bf16.gmra.mrb[0].mxu0 %v450
      %v659 = vpop.f32.mrb[0].mxu0
      %v660 = vadd.f32 %v311, %v659
      %v661 = vpop.f32.mrb[0].mxu0
      %v662 = vpop.f32.mrb[0].mxu0
      %v663 = vadd.f32 %v311, %v662
      %v664 = vpop.f32.mrb[0].mxu0
      %665 = vmatprep.mubr.bf16.mxu0 0
      %666 = vmatmul.mubr.bf16.gmra.mrb[0].mxu0 %v451
      %v667 = vpop.f32.mrb[0].mxu0
      %v668 = vadd.f32 %v311, %v667
      %v669 = vpop.f32.mrb[0].mxu0
      %v670 = vpop.f32.mrb[0].mxu0
      %v671 = vadd.f32 %v311, %v670
      %v672 = vpop.f32.mrb[0].mxu0
      %673 = vmatprep.mubr.bf16.mxu0 0
      %674 = vmatmul.mubr.bf16.gmra.mrb[0].mxu0 %v452
      %v675 = vpop.f32.mrb[0].mxu0
      %v676 = vadd.f32 %v311, %v675
      %v677 = vpop.f32.mrb[0].mxu0
      %v678 = vpop.f32.mrb[0].mxu0
      %v679 = vadd.f32 %v311, %v678
      %v680 = vpop.f32.mrb[0].mxu0
      %681 = vmatprep.mubr.bf16.mxu0 0
      %682 = vmatmul.mubr.bf16.gmra.mrb[0].mxu0 %v453
      %v683 = vpop.f32.mrb[0].mxu0
      %v684 = vadd.f32 %v311, %v683
      %v685 = vpop.f32.mrb[0].mxu0
      %v686 = vpop.f32.mrb[0].mxu0
      %v687 = vadd.f32 %v311, %v686
      %v688 = vpop.f32.mrb[0].mxu0
      %689 = vmatprep.mubr.bf16.mxu0 0
      %690 = vmatmul.mubr.bf16.gmra.mrb[0].mxu0 %v454
      %v691 = vpop.f32.mrb[0].mxu0
      %v692 = vadd.f32 %v311, %v691
      %v693 = vpop.f32.mrb[0].mxu0
      %v694 = vpop.f32.mrb[0].mxu0
      %v695 = vadd.f32 %v311, %v694
      %v696 = vpop.f32.mrb[0].mxu0
      %697 = vmatprep.mubr.bf16.mxu0 0
      %698 = vmatmul.mubr.bf16.gmra.mrb[0].mxu0 %v455
      %v699 = vpop.f32.mrb[0].mxu0
      %v700 = vadd.f32 %v311, %v699
      %v701 = vpop.f32.mrb[0].mxu0
      %v702 = vpop.f32.mrb[0].mxu0
      %v703 = vadd.f32 %v311, %v702
      %v704 = vpop.f32.mrb[0].mxu0
      %705 = vmatprep.mubr.bf16.mxu0 0
      %706 = vmatmul.mubr.bf16.gmra.mrb[0].mxu0 %v456
      %v707 = vpop.f32.mrb[0].mxu0
      %v708 = vadd.f32 %v311, %v707
      %v709 = vpop.f32.mrb[0].mxu0
      %v710 = vpop.f32.mrb[0].mxu0
      %v711 = vadd.f32 %v311, %v710
      %v712 = vpop.f32.mrb[0].mxu0
      %713 = vmatprep.mubr.bf16.mxu0 0
      %714 = vmatmul.mubr.bf16.gmra.mrb[0].mxu0 %v457
      %v715 = vpop.f32.mrb[0].mxu0
      %v716 = vadd.f32 %v311, %v715
      %v717 = vpop.f32.mrb[0].mxu0
      %v718 = vpop.f32.mrb[0].mxu0
      %v719 = vadd.f32 %v311, %v718
      %v720 = vpop.f32.mrb[0].mxu0
      %721 = vmatprep.mubr.bf16.mxu0 0
      %722 = vmatmul.mubr.bf16.gmra.mrb[0].mxu0 %v458
      %v723 = vpop.f32.mrb[0].mxu0
      %v724 = vadd.f32 %v311, %v723
      %v725 = vpop.f32.mrb[0].mxu0
      %v726 = vpop.f32.mrb[0].mxu0
      %v727 = vadd.f32 %v311, %v726
      %v728 = vpop.f32.mrb[0].mxu0
      %729 = vmatprep.mubr.bf16.mxu0 0
      %730 = vmatmul.mubr.bf16.gmra.mrb[0].mxu0 %v459
      %v731 = vpop.f32.mrb[0].mxu0
      %v732 = vadd.f32 %v311, %v731
      %v733 = vpop.f32.mrb[0].mxu0
      %v734 = vpop.f32.mrb[0].mxu0
      %v735 = vadd.f32 %v311, %v734
      %v736 = vpop.f32.mrb[0].mxu0
      %737 = vmatprep.mubr.bf16.mxu0 0
      %738 = vmatmul.mubr.bf16.gmra.mrb[0].mxu0 %v460
      %v739 = vpop.f32.mrb[0].mxu0
      %v740 = vadd.f32 %v311, %v739
      %v741 = vpop.f32.mrb[0].mxu0
      %v742 = vpop.f32.mrb[0].mxu0
      %v743 = vadd.f32 %v311, %v742
      %v744 = vpop.f32.mrb[0].mxu0
      %745 = vmatprep.mubr.bf16.mxu0 0
      %746 = vmatmul.mubr.bf16.gmra.mrb[0].mxu0 %v461
      %v747 = vpop.f32.mrb[0].mxu0
      %v748 = vadd.f32 %v311, %v747
      %v749 = vpop.f32.mrb[0].mxu0
      %v750 = vpop.f32.mrb[0].mxu0
      %v751 = vadd.f32 %v311, %v750
      %v752 = vpop.f32.mrb[0].mxu0
      %753 = vmatprep.mubr.bf16.mxu0 0
      %754 = vmatmul.mubr.bf16.gmra.mrb[0].mxu0 %v462
      %v755 = vpop.f32.mrb[0].mxu0
      %v756 = vadd.f32 %v311, %v755
      %v757 = vpop.f32.mrb[0].mxu0
      %v758 = vpop.f32.mrb[0].mxu0
      %v759 = vadd.f32 %v311, %v758
      %v760 = vpop.f32.mrb[0].mxu0
      %761 = vmatprep.mubr.bf16.mxu0 0
      %762 = vmatmul.mubr.bf16.gmra.mrb[0].mxu0 %v463
      %v763 = vpop.f32.mrb[0].mxu0
      %v764 = vadd.f32 %v311, %v763
      %v765 = vpop.f32.mrb[0].mxu0
      %v766 = vpop.f32.mrb[0].mxu0
      %v767 = vadd.f32 %v311, %v766
      %v768 = vpop.f32.mrb[0].mxu0
      %769 = vmatprep.mubr.bf16.mxu0 0
      %770 = vmatmul.mubr.bf16.gmra.mrb[0].mxu0 %v464
      %v771 = vpop.f32.mrb[0].mxu0
      %v772 = vadd.f32 %v311, %v771
      %v773 = vpop.f32.mrb[0].mxu0
      %v774 = vpop.f32.mrb[0].mxu0
      %v775 = vadd.f32 %v311, %v774
      %v776 = vpop.f32.mrb[0].mxu0
      %777 = vmatprep.mubr.bf16.mxu0 0
      %778 = vmatmul.mubr.bf16.gmra.mrb[0].mxu0 %v465
      %v779 = vpop.f32.mrb[0].mxu0
      %v780 = vadd.f32 %v311, %v779
      %v781 = vpop.f32.mrb[0].mxu0
      %v782 = vpop.f32.mrb[0].mxu0
      %v783 = vadd.f32 %v311, %v782
      %v784 = vpop.f32.mrb[0].mxu0
      %785 = vmatprep.mubr.bf16.mxu0 0
      %786 = vmatmul.mubr.bf16.gmra.mrb[0].mxu0 %v466
      %v787 = vpop.f32.mrb[0].mxu0
      %v788 = vadd.f32 %v311, %v787
      %v789 = vpop.f32.mrb[0].mxu0
      %v790 = vpop.f32.mrb[0].mxu0
      %v791 = vadd.f32 %v311, %v790
      %v792 = vpop.f32.mrb[0].mxu0
      %793 = vmatprep.mubr.bf16.mxu0 0
      %794 = vmatmul.mubr.bf16.gmra.mrb[0].mxu0 %v467
      %v795 = vpop.f32.mrb[0].mxu0
      %v796 = vadd.f32 %v311, %v795
      %v797 = vpop.f32.mrb[0].mxu0
      %v798 = vpop.f32.mrb[0].mxu0
      %v799 = vadd.f32 %v311, %v798
      %v800 = vpop.f32.mrb[0].mxu0
      %801 = vmatprep.mubr.bf16.mxu0 0
      %802 = vmatmul.mubr.bf16.gmra.mrb[0].mxu0 %v468
      %v803 = vpop.f32.mrb[0].mxu0
      %v804 = vadd.f32 %v311, %v803
      %v805 = vpop.f32.mrb[0].mxu0
      %v806 = vpop.f32.mrb[0].mxu0
      %v807 = vadd.f32 %v311, %v806
      %v808 = vpop.f32.mrb[0].mxu0
      %809 = vmatprep.mubr.bf16.mxu0 0
      %810 = vmatmul.mubr.bf16.gmra.mrb[0].mxu0 %v469
      %v811 = vpop.f32.mrb[0].mxu0
      %v812 = vadd.f32 %v311, %v811
      %v813 = vpop.f32.mrb[0].mxu0
      %v814 = vpop.f32.mrb[0].mxu0
      %v815 = vadd.f32 %v311, %v814
      %v816 = vpop.f32.mrb[0].mxu0
      %817 = vmatprep.mubr.bf16.mxu0 0
      %818 = vmatmul.mubr.bf16.gmra.mrb[0].mxu0 %v470
      %v819 = vpop.f32.mrb[0].mxu0
      %v820 = vadd.f32 %v311, %v819
      %v821 = vpop.f32.mrb[0].mxu0
      %v822 = vpop.f32.mrb[0].mxu0
      %v823 = vadd.f32 %v311, %v822
      %v824 = vpop.f32.mrb[0].mxu0
      %825 = vmatprep.mubr.bf16.mxu0 0
      %826 = vmatmul.mubr.bf16.gmra.mrb[0].mxu0 %v471
      %v827 = vpop.f32.mrb[0].mxu0
      %v828 = vadd.f32 %v311, %v827
      %v829 = vpop.f32.mrb[0].mxu0
      %v830 = vpop.f32.mrb[0].mxu0
      %v831 = vadd.f32 %v311, %v830
      %v832 = vpop.f32.mrb[0].mxu0
      %833 = vmatprep.mubr.bf16.mxu0 0
      %834 = vmatmul.mubr.bf16.gmra.mrb[0].mxu0 %v472
      %v835 = vpop.f32.mrb[0].mxu0
      %v836 = vadd.f32 %v311, %v835
      %v837 = vpop.f32.mrb[0].mxu0
      %v838 = vpop.f32.mrb[0].mxu0
      %v839 = vadd.f32 %v311, %v838
      %v840 = vpop.f32.mrb[0].mxu0
      %841 = vdwg.mxu0
      %v842 = vmax.f32 %v588, 0.0
      %v843 = vmax.f32 %v591, 0.0
      %v844 = vmax.f32 %v596, 0.0
      %v845 = vmax.f32 %v599, 0.0
      %v846 = vmax.f32 %v604, 0.0
      %v847 = vmax.f32 %v607, 0.0
      %v848 = vmax.f32 %v612, 0.0
      %v849 = vmax.f32 %v615, 0.0
      %v850 = vmax.f32 %v620, 0.0
      %v851 = vmax.f32 %v623, 0.0
      %v852 = vmax.f32 %v628, 0.0
      %v853 = vmax.f32 %v631, 0.0
      %v854 = vmax.f32 %v636, 0.0
      %v855 = vmax.f32 %v639, 0.0
      %v856 = vmax.f32 %v644, 0.0
      %v857 = vmax.f32 %v647, 0.0
      %v858 = vmax.f32 %v652, 0.0
      %v859 = vmax.f32 %v655, 0.0
      %v860 = vmax.f32 %v660, 0.0
      %v861 = vmax.f32 %v663, 0.0
      %v862 = vmax.f32 %v668, 0.0
      %v863 = vmax.f32 %v671, 0.0
      %v864 = vmax.f32 %v676, 0.0
      %v865 = vmax.f32 %v679, 0.0
      %v866 = vmax.f32 %v684, 0.0
      %v867 = vmax.f32 %v687, 0.0
      %v868 = vmax.f32 %v692, 0.0
      %v869 = vmax.f32 %v695, 0.0
      %v870 = vmax.f32 %v700, 0.0
      %v871 = vmax.f32 %v703, 0.0
      %v872 = vmax.f32 %v708, 0.0
      %v873 = vmax.f32 %v711, 0.0
      %v874 = vmax.f32 %v716, 0.0
      %v875 = vmax.f32 %v719, 0.0
      %v876 = vmax.f32 %v724, 0.0
      %v877 = vmax.f32 %v727, 0.0
      %v878 = vmax.f32 %v732, 0.0
      %v879 = vmax.f32 %v735, 0.0
      %v880 = vmax.f32 %v740, 0.0
      %v881 = vmax.f32 %v743, 0.0
      %v882 = vmax.f32 %v748, 0.0
      %v883 = vmax.f32 %v751, 0.0
      %v884 = vmax.f32 %v756, 0.0
      %v885 = vmax.f32 %v759, 0.0
      %v886 = vmax.f32 %v764, 0.0
      %v887 = vmax.f32 %v767, 0.0
      %v888 = vmax.f32 %v772, 0.0
      %v889 = vmax.f32 %v775, 0.0
      %v890 = vmax.f32 %v780, 0.0
      %v891 = vmax.f32 %v783, 0.0
      %v892 = vmax.f32 %v788, 0.0
      %v893 = vmax.f32 %v791, 0.0
      %v894 = vmax.f32 %v796, 0.0
      %v895 = vmax.f32 %v799, 0.0
      %v896 = vmax.f32 %v804, 0.0
      %v897 = vmax.f32 %v807, 0.0
      %v898 = vmax.f32 %v812, 0.0
      %v899 = vmax.f32 %v815, 0.0
      %v900 = vmax.f32 %v820, 0.0
      %v901 = vmax.f32 %v823, 0.0
      %v902 = vmax.f32 %v828, 0.0
      %v903 = vmax.f32 %v831, 0.0
      %v904 = vmax.f32 %v836, 0.0
      %v905 = vmax.f32 %v839, 0.0
      %906 = vst [vmem:[%s223] sm:$0xff] %v842
      %907 = vst [vmem:[%s223 + $0x8] sm:$0xff] %v843
      %908 = vst [vmem:[%s223 + $0x10] sm:$0xff] %v844
      %909 = vst [vmem:[%s223 + $0x18] sm:$0xff] %v845
      %910 = vst [vmem:[%s223 + $0x20] sm:$0xff] %v846
      %911 = vst [vmem:[%s223 + $0x28] sm:$0xff] %v847
      %912 = vst [vmem:[%s223 + $0x30] sm:$0xff] %v848
      %913 = vst [vmem:[%s223 + $0x38] sm:$0xff] %v849
      %914 = vst [vmem:[%s223 + $0x40] sm:$0xff] %v850
      %915 = vst [vmem:[%s223 + $0x48] sm:$0xff] %v851
      %916 = vst [vmem:[%s223 + $0x50] sm:$0xff] %v852
      %917 = vst [vmem:[%s223 + $0x58] sm:$0xff] %v853
      %918 = vst [vmem:[%s223 + $0x60] sm:$0xff] %v854
      %919 = vst [vmem:[%s223 + $0x68] sm:$0xff] %v855
      %920 = vst [vmem:[%s223 + $0x70] sm:$0xff] %v856
      %921 = vst [vmem:[%s223 + $0x78] sm:$0xff] %v857
      %922 = vst [vmem:[%s223 + $0x80] sm:$0xff] %v858
      %923 = vst [vmem:[%s223 + $0x88] sm:$0xff] %v859
      %924 = vst [vmem:[%s223 + $0x90] sm:$0xff] %v860
      %925 = vst [vmem:[%s223 + $0x98] sm:$0xff] %v861
      %926 = vst [vmem:[%s223 + $0xa0] sm:$0xff] %v862
      %927 = vst [vmem:[%s223 + $0xa8] sm:$0xff] %v863
      %928 = vst [vmem:[%s223 + $0xb0] sm:$0xff] %v864
      %929 = vst [vmem:[%s223 + $0xb8] sm:$0xff] %v865
      %930 = vst [vmem:[%s223 + $0xc0] sm:$0xff] %v866
      %931 = vst [vmem:[%s223 + $0xc8] sm:$0xff] %v867
      %932 = vst [vmem:[%s223 + $0xd0] sm:$0xff] %v868
      %933 = vst [vmem:[%s223 + $0xd8] sm:$0xff] %v869
      %934 = vst [vmem:[%s223 + $0xe0] sm:$0xff] %v870
      %935 = vst [vmem:[%s223 + $0xe8] sm:$0xff] %v871
      %936 = vst [vmem:[%s223 + $0xf0] sm:$0xff] %v872
      %937 = vst [vmem:[%s223 + $0xf8] sm:$0xff] %v873
      %938 = vst [vmem:[%s223 + $0x100] sm:$0xff] %v874
      %939 = vst [vmem:[%s223 + $0x108] sm:$0xff] %v875
      %940 = vst [vmem:[%s223 + $0x110] sm:$0xff] %v876
      %941 = vst [vmem:[%s223 + $0x118] sm:$0xff] %v877
      %942 = vst [vmem:[%s223 + $0x120] sm:$0xff] %v878
      %943 = vst [vmem:[%s223 + $0x128] sm:$0xff] %v879
      %944 = vst [vmem:[%s223 + $0x130] sm:$0xff] %v880
      %945 = vst [vmem:[%s223 + $0x138] sm:$0xff] %v881
      %946 = vst [vmem:[%s223 + $0x140] sm:$0xff] %v882
      %947 = vst [vmem:[%s223 + $0x148] sm:$0xff] %v883
      %948 = vst [vmem:[%s223 + $0x150] sm:$0xff] %v884
      %949 = vst [vmem:[%s223 + $0x158] sm:$0xff] %v885
      %950 = vst [vmem:[%s223 + $0x160] sm:$0xff] %v886
      %951 = vst [vmem:[%s223 + $0x168] sm:$0xff] %v887
      %952 = vst [vmem:[%s223 + $0x170] sm:$0xff] %v888
      %953 = vst [vmem:[%s223 + $0x178] sm:$0xff] %v889
      %954 = vst [vmem:[%s223 + $0x180] sm:$0xff] %v890
      %955 = vst [vmem:[%s223 + $0x188] sm:$0xff] %v891
      %956 = vst [vmem:[%s223 + $0x190] sm:$0xff] %v892
      %957 = vst [vmem:[%s223 + $0x198] sm:$0xff] %v893
      %958 = vst [vmem:[%s223 + $0x1a0] sm:$0xff] %v894
      %959 = vst [vmem:[%s223 + $0x1a8] sm:$0xff] %v895
      %960 = vst [vmem:[%s223 + $0x1b0] sm:$0xff] %v896
      %961 = vst [vmem:[%s223 + $0x1b8] sm:$0xff] %v897
      %962 = vst [vmem:[%s223 + $0x1c0] sm:$0xff] %v898
      %963 = vst [vmem:[%s223 + $0x1c8] sm:$0xff] %v899
      %964 = vst [vmem:[%s223 + $0x1d0] sm:$0xff] %v900
      %965 = vst [vmem:[%s223 + $0x1d8] sm:$0xff] %v901
      %966 = vst [vmem:[%s223 + $0x1e0] sm:$0xff] %v902
      %967 = vst [vmem:[%s223 + $0x1e8] sm:$0xff] %v903
      %968 = vst [vmem:[%s223 + $0x1f0] sm:$0xff] %v904
      %969 = vst [vmem:[%s223 + $0x1f8] sm:$0xff] %v905
      %s970 = smul.u32 64, %s18
      %p971 = scmp.lt.s32.totalorder %s970, 127
      %s972 = scalar_select %p971, %s970, 127
      %p973 = scmp.lt.s32.totalorder %s19, 0
      %s974 = scalar_select %p973, %s19, 0
      %s975 = sadd.s32 %s974, %s972
      %s976 = smul.addr %s975, 8
      %s977 = scalar_lea.vmem %s3, %s976
      // Predicated region
      $region33: #{forward.14} parent=31 // pred_check
        %p978 = pneg %p124
      $region34: #{forward.14} parent=31 // pred_check_branch
        %980 = sbr.rel (%p978) target = $region36
      $region35: #{forward.14} parent=31 // pred_region
        %s981 = smul.u32 64, %s18
      $region36: #{forward.14} parent=31 // pred_fallthru
        _
    $region32: #{forward.14} parent=5 // pred_fallthru
      _
    %p982 = scmp.le.s32.totalorder 2, %s9
    // Predicated region
    $region37: #{forward.14} parent=5 // pred_check
      %p983 = pneg %p982
    $region38: #{forward.14} parent=5 // pred_check_branch
      %985 = sbr.rel (%p983) target = $region40
    $region39: #{forward.14} parent=5 // pred_region
      %s986 = ssub.s32 %s9, 2
      // Predicated region
      $region41: #{forward.14} parent=39 // pred_check
        %p987 = pneg %p130
      $region42: #{forward.14} parent=39 // pred_check_branch
        %989 = sbr.rel (%p987) target = $region44
      $region43: #{forward.14} parent=39 // pred_region
        %s990 = smul.u32 64, %s20
        %p991 = scmp.lt.s32.totalorder %s990, 127
        %s992 = scalar_select %p991, %s990, 127
        %p993 = scmp.lt.s32.totalorder %s21, 0
        %s994 = scalar_select %p993, %s21, 0
        %s995 = sadd.s32 %s994, %s992
        %s996 = smul.addr %s995, 8
        %s997 = scalar_lea.vmem %s3, %s996
      $region44: #{forward.14} parent=39 // pred_fallthru
        _
    $region40: #{forward.14} parent=5 // pred_fallthru
      _
  $region6: #{forward.14} parent=0 // loop_footer
    %s13 = sadd.s32 1, %s9
  $region7: #{forward.14} parent=0 // loop_footer_branch
    %8 = sbr.rel target = $region3
  $region8: #{forward.14} parent=0 // loop_exit
    _

// kernel: forward.15
$region0: #{forward.15}
  #allocation0 [shape = 'u32[]', space=smem, size = 0x4, offset = 0x4, fixed_abs, tag = 'smem constant byte address 0x4 - core index']
  #allocation1 [shape = 'u32[144,128]{1,0:T(1,128)}', space=vmem, size = 0x12000, scoped, tag = 'internal scratch']
  %s0 = inlined_call_operand.vmem [shape: bf16[256,128], index: 0, kind: input, shape index: {}]
  %s1 = inlined_call_operand.vmem [shape: bf16[128,128], index: 1, kind: input, shape index: {}]
  %s2 = inlined_call_operand.vmem [shape: f32[1,128], index: 2, kind: input, shape index: {}]
  %s3 = inlined_call_operand.vmem [shape: f32[256,128], index: 3, kind: output, shape index: {}]
  %s4 = sld [smem:[#allocation0]]
  $region45: #{forward.15} parent=0
    _
  %s6 = ssub.s32 1, %s4
  %s7 = scalar_select 0, %s6, %s4
  loop: start=0, step=1, limit=4
  $region2: #{forward.15} parent=0 // loop_pre_header
    _
  $region3: #{forward.15} parent=0 // loop_header
    %s9 = sphi 0, %s13
    %p10 = scmp.ge.s32.totalorder %s9, 4
    %s16 = sphi 0, %s28
    %s17 = sphi 0, %s24
    %s18 = sphi 0, %s16
    %s19 = sphi 0, %s17
    %s20 = sphi 0, %s18
    %s21 = sphi 0, %s19
    %s31 = sphi 0, %s33
    %s34 = sphi 0, %s31
    %s35 = sphi 0, %s34
    %s51 = sphi 0, %s35
    %s57 = sphi 0, %s59
    %s60 = sphi 0, %s57
    %s61 = sphi 0, %s60
    %s77 = sphi 0, %s61
    %s83 = sphi 0, %s85
    %s86 = sphi 0, %s83
    %s87 = sphi 0, %s86
    %s103 = sphi 0, %s87
    %s111 = sphi 0, %s113
    %s114 = sphi 0, %s111
    %s115 = sphi 0, %s114
    %s131 = sphi 0, %s115
  $region4: #{forward.15} parent=0 // loop_header_branch
    %12 = sbr.rel (%p10) target = $region8
  $region5: #{forward.15} parent=0 // loop_body
    %s14 = ssub.s32 %s9, 1
    %s15 = ssub.s32 %s9, 2
    %s22 = sadd.s32 1, %s17
    %p23 = scmp.ge.s32.totalorder %s22, 1
    %s24 = scalar_select %p23, 0, %s22
    %s25 = sadd.s32 1, %s16
    %s26 = scalar_select %p23, %s25, %s16
    %p27 = scmp.ge.s32.totalorder %s26, 2
    %s28 = scalar_select %p27, 0, %s26
    %s29 = ssub.s32 %s16, %s28
    %p30 = scmp.eq.s32.totalorder %s29, 0
    %s32 = sadd.s32 %s31, 1
    %s33 = scalar_select %p30, %s31, %s32
    %p36 = pneg %p30
    %p37 = scmp.eq.s32.totalorder %s9, 1
    %p38 = por %p36, %p37
    %p39 = scmp.ne.s32.totalorder %s31, %s34
    %p40 = scmp.eq.s32.totalorder %s9, 0
    %p41 = por %p39, %p40
    %p42 = scmp.ne.s32.totalorder %s31, %s34
    %p43 = scmp.eq.s32.totalorder %s14, 1
    %p44 = por %p42, %p43
    %p45 = scmp.ne.s32.totalorder %s34, %s35
    %p46 = scmp.eq.s32.totalorder %s14, 0
    %p47 = por %p45, %p46
    %p48 = scmp.ne.s32.totalorder %s34, %s35
    %p49 = scmp.eq.s32.totalorder %s15, 1
    %p50 = por %p48, %p49
    %p52 = scmp.ne.s32.totalorder %s35, %s51
    %p53 = scmp.eq.s32.totalorder %s15, 0
    %p54 = por %p52, %p53
    %s55 = ssub.s32 %s17, %s24
    %p56 = scmp.eq.s32.totalorder %s55, 0
    %s58 = sadd.s32 %s57, 1
    %s59 = scalar_select %p56, %s57, %s58
    %p62 = pneg %p56
    %p63 = scmp.eq.s32.totalorder %s9, 1
    %p64 = por %p62, %p63
    %p65 = scmp.ne.s32.totalorder %s57, %s60
    %p66 = scmp.eq.s32.totalorder %s9, 0
    %p67 = por %p65, %p66
    %p68 = scmp.ne.s32.totalorder %s57, %s60
    %p69 = scmp.eq.s32.totalorder %s14, 1
    %p70 = por %p68, %p69
    %p71 = scmp.ne.s32.totalorder %s60, %s61
    %p72 = scmp.eq.s32.totalorder %s14, 0
    %p73 = por %p71, %p72
    %p74 = scmp.ne.s32.totalorder %s60, %s61
    %p75 = scmp.eq.s32.totalorder %s15, 1
    %p76 = por %p74, %p75
    %p78 = scmp.ne.s32.totalorder %s61, %s77
    %p79 = scmp.eq.s32.totalorder %s15, 0
    %p80 = por %p78, %p79
    %s81 = ssub.s32 %s17, %s24
    %p82 = scmp.eq.s32.totalorder %s81, 0
    %s84 = sadd.s32 %s83, 1
    %s85 = scalar_select %p82, %s83, %s84
    %p88 = pneg %p82
    %p89 = scmp.eq.s32.totalorder %s9, 1
    %p90 = por %p88, %p89
    %p91 = scmp.ne.s32.totalorder %s83, %s86
    %p92 = scmp.eq.s32.totalorder %s9, 0
    %p93 = por %p91, %p92
    %p94 = scmp.ne.s32.totalorder %s83, %s86
    %p95 = scmp.eq.s32.totalorder %s14, 1
    %p96 = por %p94, %p95
    %p97 = scmp.ne.s32.totalorder %s86, %s87
    %p98 = scmp.eq.s32.totalorder %s14, 0
    %p99 = por %p97, %p98
    %p100 = scmp.ne.s32.totalorder %s86, %s87
    %p101 = scmp.eq.s32.totalorder %s15, 1
    %p102 = por %p100, %p101
    %p104 = scmp.ne.s32.totalorder %s87, %s103
    %p105 = scmp.eq.s32.totalorder %s15, 0
    %p106 = por %p104, %p105
    %s107 = ssub.s32 %s16, %s28
    %s108 = ssub.s32 %s17, %s24
    %s109 = sor.u32 %s107, %s108
    %p110 = scmp.eq.s32.totalorder %s109, 0
    %s112 = sadd.s32 %s111, 1
    %s113 = scalar_select %p110, %s111, %s112
    %p116 = pneg %p110
    %p117 = scmp.eq.s32.totalorder %s9, 1
    %p118 = por %p116, %p117
    %p119 = scmp.ne.s32.totalorder %s111, %s114
    %p120 = scmp.eq.s32.totalorder %s9, 0
    %p121 = por %p119, %p120
    %p122 = scmp.ne.s32.totalorder %s111, %s114
    %p123 = scmp.eq.s32.totalorder %s14, 1
    %p124 = por %p122, %p123
    %p125 = scmp.ne.s32.totalorder %s114, %s115
    %p126 = scmp.eq.s32.totalorder %s14, 0
    %p127 = por %p125, %p126
    %p128 = scmp.ne.s32.totalorder %s114, %s115
    %p129 = scmp.eq.s32.totalorder %s15, 1
    %p130 = por %p128, %p129
    %p132 = scmp.ne.s32.totalorder %s115, %s131
    %p133 = scmp.eq.s32.totalorder %s15, 0
    %p134 = por %p132, %p133
    %p135 = scmp.le.s32.totalorder 1, %s9
    %p136 = scmp.lt.s32.totalorder %s9, 3
    %p137 = pnand %p135, %p136
    %p138 = pneg %p137
    // Predicated region
    $region9: #{forward.15} parent=5 // pred_check
      _
    $region10: #{forward.15} parent=5 // pred_check_branch
      %140 = sbr.rel (%p137) target = $region12
    $region11: #{forward.15} parent=5 // pred_region
      %s141 = ssub.s32 %s9, 1
      // Predicated region
      $region13: #{forward.15} parent=11 // pred_check
        %p142 = pneg %p73
      $region14: #{forward.15} parent=11 // pred_check_branch
        %144 = sbr.rel (%p142) target = $region16
      $region15: #{forward.15} parent=11 // pred_region
        %p145 = scmp.lt.s32.totalorder %s19, 0
        %s146 = scalar_select %p145, %s19, 0
        %s147 = smul.addr %s146, 4
        %s148 = scalar_lea.vmem %s1, %s147
      $region16: #{forward.15} parent=11 // pred_fallthru
        _
      // Predicated region
      $region17: #{forward.15} parent=11 // pred_check
        %p149 = pneg %p99
      $region18: #{forward.15} parent=11 // pred_check_branch
        %151 = sbr.rel (%p149) target = $region20
      $region19: #{forward.15} parent=11 // pred_region
        %p152 = scmp.lt.s32.totalorder %s19, 0
        %s153 = scalar_select %p152, %s19, 0
        %s154 = scalar_lea.vmem %s2, %s153
      $region20: #{forward.15} parent=11 // pred_fallthru
        _
    $region12: #{forward.15} parent=5 // pred_fallthru
      _
    %p155 = scmp.lt.s32.totalorder %s9, 2
    // Predicated region
    $region21: #{forward.15} parent=5 // pred_check
      %p156 = pneg %p155
    $region22: #{forward.15} parent=5 // pred_check_branch
      %158 = sbr.rel (%p156) target = $region24
    $region23: #{forward.15} parent=5 // pred_region
      // Predicated region
      $region25: #{forward.15} parent=23 // pred_check
        %p159 = pneg %p41
      $region26: #{forward.15} parent=23 // pred_check_branch
        %161 = sbr.rel (%p159) target = $region28
      $region27: #{forward.15} parent=23 // pred_region
        %s162 = smul.u32 16, %s16
        %p163 = scmp.lt.s32.totalorder %s162, 31
        %s164 = scalar_select %p163, %s162, 31
        %s165 = smul.addr %s164, 4
        %s166 = scalar_lea.vmem %s0, %s165
        %s167 = smul.u32 16, %s16
      $region28: #{forward.15} parent=23 // pred_fallthru
        _
    $region24: #{forward.15} parent=5 // pred_fallthru
      _
    %p168 = scmp.le.s32.totalorder 1, %s9
    %p169 = scmp.lt.s32.totalorder %s9, 3
    %p170 = pnand %p168, %p169
    %p171 = pneg %p170
    // Predicated region
    $region29: #{forward.15} parent=5 // pred_check
      _
    $region30: #{forward.15} parent=5 // pred_check_branch
      %173 = sbr.rel (%p170) target = $region32
    $region31: #{forward.15} parent=5 // pred_region
      %s174 = ssub.s32 %s9, 1
      %s175 = smul.u32 16, %s18
      %p176 = scmp.lt.s32.totalorder %s175, 31
      %s177 = scalar_select %p176, %s175, 31
      %s178 = smul.addr %s177, 4
      %s179 = scalar_lea.vmem %s0, %s178
      %p180 = pneg %p47
      %p181 = pneg %p44
      %p182 = scmp.lt.s32.totalorder %s19, 0
      %s183 = scalar_select %p182, %s19, 0
      %s184 = smul.addr %s183, 4
      %s185 = scalar_lea.vmem %s1, %s184
      %p186 = pneg %p73
      %p187 = pneg %p70
      %p188 = scmp.lt.s32.totalorder %s19, 0
      %s189 = scalar_select %p188, %s19, 0
      %s190 = scalar_lea.vmem %s2, %s189
      %p191 = pneg %p99
      %p192 = pneg %p96
      %p193 = pneg %p127
      %p194 = pneg %p124
      %s195 = smul.u32 16, %s18
      %p196 = scmp.lt.s32.totalorder %s195, 31
      %s197 = scalar_select %p196, %s195, 31
      %p198 = scmp.lt.s32.totalorder %s19, 0
      %s199 = scalar_select %p198, %s19, 0
      %s200 = sadd.s32 %s199, %s197
      %s201 = smul.addr %s200, 8
      %s202 = scalar_lea.vmem %s3, %s201
      %s203 = smul.u32 16, %s18
      %p204 = scmp.lt.s32.totalorder %s203, 31
      %s205 = scalar_select %p204, %s203, 31
      %s206 = smul.addr %s205, 4
      %s207 = scalar_lea.vmem %s0, %s206
      %s208 = smul.u32 16, %s18
      %p209 = scmp.lt.s32.totalorder %s19, 0
      %s210 = scalar_select %p209, %s19, 0
      %s211 = smul.addr %s210, 4
      %s212 = scalar_lea.vmem %s1, %s211
      %p213 = scmp.lt.s32.totalorder %s19, 0
      %s214 = scalar_select %p213, %s19, 0
      %s215 = scalar_lea.vmem %s2, %s214
      %s216 = smul.u32 16, %s18
      %p217 = scmp.lt.s32.totalorder %s216, 31
      %s218 = scalar_select %p217, %s216, 31
      %p219 = scmp.lt.s32.totalorder %s19, 0
      %s220 = scalar_select %p219, %s19, 0
      %s221 = sadd.s32 %s220, %s218
      %s222 = smul.addr %s221, 8
      %s223 = scalar_lea.vmem %s3, %s222
      %s224 = smul.u32 16, %s18
      %v226 = vld [vmem:[%s207] sm:$0xf]
      %v227 = vld [vmem:[%s207 + $0x4] sm:$0xf]
      %v228 = vld [vmem:[%s207 + $0x8] sm:$0xf]
      %v229 = vld [vmem:[%s207 + $0xc] sm:$0xf]
      %v230 = vld [vmem:[%s207 + $0x10] sm:$0xf]
      %v231 = vld [vmem:[%s207 + $0x14] sm:$0xf]
      %v232 = vld [vmem:[%s207 + $0x18] sm:$0xf]
      %v233 = vld [vmem:[%s207 + $0x1c] sm:$0xf]
      %v234 = vld [vmem:[%s207 + $0x20] sm:$0xf]
      %v235 = vld [vmem:[%s207 + $0x24] sm:$0xf]
      %v236 = vld [vmem:[%s207 + $0x28] sm:$0xf]
      %v237 = vld [vmem:[%s207 + $0x2c] sm:$0xf]
      %v238 = vld [vmem:[%s207 + $0x30] sm:$0xf]
      %v239 = vld [vmem:[%s207 + $0x34] sm:$0xf]
      %v240 = vld [vmem:[%s207 + $0x38] sm:$0xf]
      %v241 = vld [vmem:[%s207 + $0x3c] sm:$0xf]
      %v242 = vld [vmem:[%s212] sm:$0xf]
      %v243 = vld [vmem:[%s212 + $0x4] sm:$0xf]
      %v244 = vld [vmem:[%s212 + $0x8] sm:$0xf]
      %v245 = vld [vmem:[%s212 + $0xc] sm:$0xf]
      %v246 = vld [vmem:[%s212 + $0x10] sm:$0xf]
      %v247 = vld [vmem:[%s212 + $0x14] sm:$0xf]
      %v248 = vld [vmem:[%s212 + $0x18] sm:$0xf]
      %v249 = vld [vmem:[%s212 + $0x1c] sm:$0xf]
      %v250 = vld [vmem:[%s212 + $0x20] sm:$0xf]
      %v251 = vld [vmem:[%s212 + $0x24] sm:$0xf]
      %v252 = vld [vmem:[%s212 + $0x28] sm:$0xf]
      %v253 = vld [vmem:[%s212 + $0x2c] sm:$0xf]
      %v254 = vld [vmem:[%s212 + $0x30] sm:$0xf]
      %v255 = vld [vmem:[%s212 + $0x34] sm:$0xf]
      %v256 = vld [vmem:[%s212 + $0x38] sm:$0xf]
      %v257 = vld [vmem:[%s212 + $0x3c] sm:$0xf]
      %v258 = vld [vmem:[%s215] sm:$0x1]
      %v260 = vlaneseq
      %v261 = vshrl.u32 %v260, 7
      %v262 = vsub.s32 0, %v261
      %v263 = vrot.slane %v258, %v262
      %v281 = vunpack.c.l.b16 %v226
      %v282 = vunpack.c.l.b16 %v227
      %v283 = vunpack.c.l.b16 %v228
      %v284 = vunpack.c.l.b16 %v229
      %v285 = vunpack.c.l.b16 %v230
      %v286 = vunpack.c.l.b16 %v231
      %v287 = vunpack.c.l.b16 %v232
      %v288 = vunpack.c.l.b16 %v233
      %v289 = vunpack.c.l.b16 %v234
      %v290 = vunpack.c.l.b16 %v235
      %v291 = vunpack.c.l.b16 %v236
      %v292 = vunpack.c.l.b16 %v237
      %v293 = vunpack.c.l.b16 %v238
      %v294 = vunpack.c.l.b16 %v239
      %v295 = vunpack.c.l.b16 %v240
      %v296 = vunpack.c.l.b16 %v241
      %v297 = vpack.c.b16 %v282, %v281
      %v298 = vpack.c.b16 %v284, %v283
      %v299 = vpack.c.b16 %v286, %v285
      %v300 = vpack.c.b16 %v288, %v287
      %v301 = vpack.c.b16 %v290, %v289
      %v302 = vpack.c.b16 %v292, %v291
      %v303 = vpack.c.b16 %v294, %v293
      %v304 = vpack.c.b16 %v296, %v295
      %v329 = vunpack.c.l.b16 %v242
      %v330 = vunpack.c.l.b16 %v243
      %v331 = vunpack.c.l.b16 %v244
      %v332 = vunpack.c.l.b16 %v245
      %v333 = vunpack.c.l.b16 %v246
      %v334 = vunpack.c.l.b16 %v247
      %v335 = vunpack.c.l.b16 %v248
      %v336 = vunpack.c.l.b16 %v249
      %v337 = vunpack.c.l.b16 %v250
      %v338 = vunpack.c.l.b16 %v251
      %v339 = vunpack.c.l.b16 %v252
      %v340 = vunpack.c.l.b16 %v253
      %v341 = vunpack.c.l.b16 %v254
      %v342 = vunpack.c.l.b16 %v255
      %v343 = vunpack.c.l.b16 %v256
      %v344 = vunpack.c.l.b16 %v257
      %v345 = vpack.c.b16 %v330, %v329
      %v346 = vpack.c.b16 %v332, %v331
      %v347 = vpack.c.b16 %v334, %v333
      %v348 = vpack.c.b16 %v336, %v335
      %v349 = vpack.c.b16 %v338, %v337
      %v350 = vpack.c.b16 %v340, %v339
      %v351 = vpack.c.b16 %v342, %v341
      %v352 = vpack.c.b16 %v344, %v343
      %361 = vmatprep.subr.bf16.mxu0 0
      %362 = vmatpush1.bf16.msra.mxu0 %v345
      %363 = vmatprep.subr.bf16.mxu0 0
      %364 = vmatpush1.bf16.msra.mxu0 %v346
      %365 = vmatprep.subr.bf16.mxu0 0
      %366 = vmatpush1.bf16.msra.mxu0 %v347
      %367 = vmatprep.subr.bf16.mxu0 0
      %368 = vmatpush1.bf16.msra.mxu0 %v348
      %369 = vmatprep.subr.bf16.mxu0 0
      %370 = vmatpush1.bf16.msra.mxu0 %v349
      %371 = vmatprep.subr.bf16.mxu0 0
      %372 = vmatpush1.bf16.msra.mxu0 %v350
      %373 = vmatprep.subr.bf16.mxu0 0
      %374 = vmatpush1.bf16.msra.mxu0 %v351
      %375 = vmatprep.subr.bf16.mxu0 0
      %376 = vmatpush1.bf16.msra.mxu0 %v352
      %377 = vmatprep.subr.bf16.mxu0 0
      %378 = vmatpush1.bf16.msra.mxu0 0
      %379 = vmatprep.subr.bf16.mxu0 0
      %380 = vmatpush1.bf16.msra.mxu0 0
      %381 = vmatprep.subr.bf16.mxu0 0
      %382 = vmatpush1.bf16.msra.mxu0 0
      %383 = vmatprep.subr.bf16.mxu0 0
      %384 = vmatpush1.bf16.msra.mxu0 0
      %385 = vmatprep.subr.bf16.mxu0 0
      %386 = vmatpush1.bf16.msra.mxu0 0
      %387 = vmatprep.subr.bf16.mxu0 0
      %388 = vmatpush1.bf16.msra.mxu0 0
      %389 = vmatprep.subr.bf16.mxu0 0
      %390 = vmatpush1.bf16.msra.mxu0 0
      %391 = vmatprep.subr.bf16.mxu0 0
      %392 = vmatpush1.bf16.msra.mxu0 0
      %393 = vmatprep.mubr.bf16.mxu0 0
      %394 = vmatmul.mubr.bf16.gmra.mrb[0].mxu0 %v297
      %v395 = vpop.f32.mrb[0].mxu0
      %v396 = vadd.f32 %v263, %v395
      %v397 = vpop.f32.mrb[0].mxu0
      %v398 = vpop.f32.mrb[0].mxu0
      %v399 = vadd.f32 %v263, %v398
      %v400 = vpop.f32.mrb[0].mxu0
      %401 = vmatprep.mubr.bf16.mxu0 0
      %402 = vmatmul.mubr.bf16.gmra.mrb[0].mxu0 %v298
      %v403 = vpop.f32.mrb[0].mxu0
      %v404 = vadd.f32 %v263, %v403
      %v405 = vpop.f32.mrb[0].mxu0
      %v406 = vpop.f32.mrb[0].mxu0
      %v407 = vadd.f32 %v263, %v406
      %v408 = vpop.f32.mrb[0].mxu0
      %409 = vmatprep.mubr.bf16.mxu0 0
      %410 = vmatmul.mubr.bf16.gmra.mrb[0].mxu0 %v299
      %v411 = vpop.f32.mrb[0].mxu0
      %v412 = vadd.f32 %v263, %v411
      %v413 = vpop.f32.mrb[0].mxu0
      %v414 = vpop.f32.mrb[0].mxu0
      %v415 = vadd.f32 %v263, %v414
      %v416 = vpop.f32.mrb[0].mxu0
      %417 = vmatprep.mubr.bf16.mxu0 0
      %418 = vmatmul.mubr.bf16.gmra.mrb[0].mxu0 %v300
      %v419 = vpop.f32.mrb[0].mxu0
      %v420 = vadd.f32 %v263, %v419
      %v421 = vpop.f32.mrb[0].mxu0
      %v422 = vpop.f32.mrb[0].mxu0
      %v423 = vadd.f32 %v263, %v422
      %v424 = vpop.f32.mrb[0].mxu0
      %425 = vmatprep.mubr.bf16.mxu0 0
      %426 = vmatmul.mubr.bf16.gmra.mrb[0].mxu0 %v301
      %v427 = vpop.f32.mrb[0].mxu0
      %v428 = vadd.f32 %v263, %v427
      %v429 = vpop.f32.mrb[0].mxu0
      %v430 = vpop.f32.mrb[0].mxu0
      %v431 = vadd.f32 %v263, %v430
      %v432 = vpop.f32.mrb[0].mxu0
      %433 = vmatprep.mubr.bf16.mxu0 0
      %434 = vmatmul.mubr.bf16.gmra.mrb[0].mxu0 %v302
      %v435 = vpop.f32.mrb[0].mxu0
      %v436 = vadd.f32 %v263, %v435
      %v437 = vpop.f32.mrb[0].mxu0
      %v438 = vpop.f32.mrb[0].mxu0
      %v439 = vadd.f32 %v263, %v438
      %v440 = vpop.f32.mrb[0].mxu0
      %441 = vmatprep.mubr.bf16.mxu0 0
      %442 = vmatmul.mubr.bf16.gmra.mrb[0].mxu0 %v303
      %v443 = vpop.f32.mrb[0].mxu0
      %v444 = vadd.f32 %v263, %v443
      %v445 = vpop.f32.mrb[0].mxu0
      %v446 = vpop.f32.mrb[0].mxu0
      %v447 = vadd.f32 %v263, %v446
      %v448 = vpop.f32.mrb[0].mxu0
      %449 = vmatprep.mubr.bf16.mxu0 0
      %450 = vmatmul.mubr.bf16.gmra.mrb[0].mxu0 %v304
      %v451 = vpop.f32.mrb[0].mxu0
      %v452 = vadd.f32 %v263, %v451
      %v453 = vpop.f32.mrb[0].mxu0
      %v454 = vpop.f32.mrb[0].mxu0
      %v455 = vadd.f32 %v263, %v454
      %v456 = vpop.f32.mrb[0].mxu0
      %457 = vdwg.mxu0
      %v458 = vmax.f32 %v396, 0.0
      %v459 = vmax.f32 %v399, 0.0
      %v460 = vmax.f32 %v404, 0.0
      %v461 = vmax.f32 %v407, 0.0
      %v462 = vmax.f32 %v412, 0.0
      %v463 = vmax.f32 %v415, 0.0
      %v464 = vmax.f32 %v420, 0.0
      %v465 = vmax.f32 %v423, 0.0
      %v466 = vmax.f32 %v428, 0.0
      %v467 = vmax.f32 %v431, 0.0
      %v468 = vmax.f32 %v436, 0.0
      %v469 = vmax.f32 %v439, 0.0
      %v470 = vmax.f32 %v444, 0.0
      %v471 = vmax.f32 %v447, 0.0
      %v472 = vmax.f32 %v452, 0.0
      %v473 = vmax.f32 %v455, 0.0
      %474 = vst [vmem:[%s223] sm:$0xff] %v458
      %475 = vst [vmem:[%s223 + $0x8] sm:$0xff] %v459
      %476 = vst [vmem:[%s223 + $0x10] sm:$0xff] %v460
      %477 = vst [vmem:[%s223 + $0x18] sm:$0xff] %v461
      %478 = vst [vmem:[%s223 + $0x20] sm:$0xff] %v462
      %479 = vst [vmem:[%s223 + $0x28] sm:$0xff] %v463
      %480 = vst [vmem:[%s223 + $0x30] sm:$0xff] %v464
      %481 = vst [vmem:[%s223 + $0x38] sm:$0xff] %v465
      %482 = vst [vmem:[%s223 + $0x40] sm:$0xff] %v466
      %483 = vst [vmem:[%s223 + $0x48] sm:$0xff] %v467
      %484 = vst [vmem:[%s223 + $0x50] sm:$0xff] %v468
      %485 = vst [vmem:[%s223 + $0x58] sm:$0xff] %v469
      %486 = vst [vmem:[%s223 + $0x60] sm:$0xff] %v470
      %487 = vst [vmem:[%s223 + $0x68] sm:$0xff] %v471
      %488 = vst [vmem:[%s223 + $0x70] sm:$0xff] %v472
      %489 = vst [vmem:[%s223 + $0x78] sm:$0xff] %v473
      %s490 = smul.u32 16, %s18
      %p491 = scmp.lt.s32.totalorder %s490, 31
      %s492 = scalar_select %p491, %s490, 31
      %p493 = scmp.lt.s32.totalorder %s19, 0
      %s494 = scalar_select %p493, %s19, 0
      %s495 = sadd.s32 %s494, %s492
      %s496 = smul.addr %s495, 8
      %s497 = scalar_lea.vmem %s3, %s496
      // Predicated region
      $region33: #{forward.15} parent=31 // pred_check
        %p498 = pneg %p124
      $region34: #{forward.15} parent=31 // pred_check_branch
        %500 = sbr.rel (%p498) target = $region36
      $region35: #{forward.15} parent=31 // pred_region
        %s501 = smul.u32 16, %s18
      $region36: #{forward.15} parent=31 // pred_fallthru
        _
    $region32: #{forward.15} parent=5 // pred_fallthru
      _
    %p502 = scmp.le.s32.totalorder 2, %s9
    // Predicated region
    $region37: #{forward.15} parent=5 // pred_check
      %p503 = pneg %p502
    $region38: #{forward.15} parent=5 // pred_check_branch
      %505 = sbr.rel (%p503) target = $region40
    $region39: #{forward.15} parent=5 // pred_region
      %s506 = ssub.s32 %s9, 2
      // Predicated region
      $region41: #{forward.15} parent=39 // pred_check
        %p507 = pneg %p130
      $region42: #{forward.15} parent=39 // pred_check_branch
        %509 = sbr.rel (%p507) target = $region44
      $region43: #{forward.15} parent=39 // pred_region
        %s510 = smul.u32 16, %s20
        %p511 = scmp.lt.s32.totalorder %s510, 31
        %s512 = scalar_select %p511, %s510, 31
        %p513 = scmp.lt.s32.totalorder %s21, 0
        %s514 = scalar_select %p513, %s21, 0
        %s515 = sadd.s32 %s514, %s512
        %s516 = smul.addr %s515, 8
        %s517 = scalar_lea.vmem %s3, %s516
      $region44: #{forward.15} parent=39 // pred_fallthru
        _
    $region40: #{forward.15} parent=5 // pred_fallthru
      _
  $region6: #{forward.15} parent=0 // loop_footer
    %s13 = sadd.s32 1, %s9
  $region7: #{forward.15} parent=0 // loop_footer_branch
    %8 = sbr.rel target = $region3
  $region8: #{forward.15} parent=0 // loop_exit
    _

// kernel: forward.16
$region0: #{forward.16}
  #allocation0 [shape = 'u32[]', space=smem, size = 0x4, offset = 0x4, fixed_abs, tag = 'smem constant byte address 0x4 - core index']
  #allocation1 [shape = 'u32[144,128]{1,0:T(1,128)}', space=vmem, size = 0x12000, scoped, tag = 'internal scratch']
  %s0 = inlined_call_operand.vmem [shape: bf16[64,256], index: 0, kind: input, shape index: {}]
  %s1 = inlined_call_operand.vmem [shape: bf16[256,128], index: 1, kind: input, shape index: {}]
  %s2 = inlined_call_operand.vmem [shape: f32[1,128], index: 2, kind: input, shape index: {}]
  %s3 = inlined_call_operand.vmem [shape: f32[64,128], index: 3, kind: output, shape index: {}]
  %s4 = sld [smem:[#allocation0]]
  $region45: #{forward.16} parent=0
    _
  %s6 = ssub.s32 1, %s4
  %s7 = scalar_select 0, %s6, %s4
  loop: start=0, step=1, limit=4
  $region2: #{forward.16} parent=0 // loop_pre_header
    _
  $region3: #{forward.16} parent=0 // loop_header
    %s9 = sphi 0, %s13
    %p10 = scmp.ge.s32.totalorder %s9, 4
    %s16 = sphi 0, %s28
    %s17 = sphi 0, %s24
    %s18 = sphi 0, %s16
    %s19 = sphi 0, %s17
    %s20 = sphi 0, %s18
    %s21 = sphi 0, %s19
    %s31 = sphi 0, %s33
    %s34 = sphi 0, %s31
    %s35 = sphi 0, %s34
    %s51 = sphi 0, %s35
    %s57 = sphi 0, %s59
    %s60 = sphi 0, %s57
    %s61 = sphi 0, %s60
    %s77 = sphi 0, %s61
    %s83 = sphi 0, %s85
    %s86 = sphi 0, %s83
    %s87 = sphi 0, %s86
    %s103 = sphi 0, %s87
    %s111 = sphi 0, %s113
    %s114 = sphi 0, %s111
    %s115 = sphi 0, %s114
    %s131 = sphi 0, %s115
  $region4: #{forward.16} parent=0 // loop_header_branch
    %12 = sbr.rel (%p10) target = $region8
  $region5: #{forward.16} parent=0 // loop_body
    %s14 = ssub.s32 %s9, 1
    %s15 = ssub.s32 %s9, 2
    %s22 = sadd.s32 1, %s17
    %p23 = scmp.ge.s32.totalorder %s22, 1
    %s24 = scalar_select %p23, 0, %s22
    %s25 = sadd.s32 1, %s16
    %s26 = scalar_select %p23, %s25, %s16
    %p27 = scmp.ge.s32.totalorder %s26, 2
    %s28 = scalar_select %p27, 0, %s26
    %s29 = ssub.s32 %s16, %s28
    %p30 = scmp.eq.s32.totalorder %s29, 0
    %s32 = sadd.s32 %s31, 1
    %s33 = scalar_select %p30, %s31, %s32
    %p36 = pneg %p30
    %p37 = scmp.eq.s32.totalorder %s9, 1
    %p38 = por %p36, %p37
    %p39 = scmp.ne.s32.totalorder %s31, %s34
    %p40 = scmp.eq.s32.totalorder %s9, 0
    %p41 = por %p39, %p40
    %p42 = scmp.ne.s32.totalorder %s31, %s34
    %p43 = scmp.eq.s32.totalorder %s14, 1
    %p44 = por %p42, %p43
    %p45 = scmp.ne.s32.totalorder %s34, %s35
    %p46 = scmp.eq.s32.totalorder %s14, 0
    %p47 = por %p45, %p46
    %p48 = scmp.ne.s32.totalorder %s34, %s35
    %p49 = scmp.eq.s32.totalorder %s15, 1
    %p50 = por %p48, %p49
    %p52 = scmp.ne.s32.totalorder %s35, %s51
    %p53 = scmp.eq.s32.totalorder %s15, 0
    %p54 = por %p52, %p53
    %s55 = ssub.s32 %s17, %s24
    %p56 = scmp.eq.s32.totalorder %s55, 0
    %s58 = sadd.s32 %s57, 1
    %s59 = scalar_select %p56, %s57, %s58
    %p62 = pneg %p56
    %p63 = scmp.eq.s32.totalorder %s9, 1
    %p64 = por %p62, %p63
    %p65 = scmp.ne.s32.totalorder %s57, %s60
    %p66 = scmp.eq.s32.totalorder %s9, 0
    %p67 = por %p65, %p66
    %p68 = scmp.ne.s32.totalorder %s57, %s60
    %p69 = scmp.eq.s32.totalorder %s14, 1
    %p70 = por %p68, %p69
    %p71 = scmp.ne.s32.totalorder %s60, %s61
    %p72 = scmp.eq.s32.totalorder %s14, 0
    %p73 = por %p71, %p72
    %p74 = scmp.ne.s32.totalorder %s60, %s61
    %p75 = scmp.eq.s32.totalorder %s15, 1
    %p76 = por %p74, %p75
    %p78 = scmp.ne.s32.totalorder %s61, %s77
    %p79 = scmp.eq.s32.totalorder %s15, 0
    %p80 = por %p78, %p79
    %s81 = ssub.s32 %s17, %s24
    %p82 = scmp.eq.s32.totalorder %s81, 0
    %s84 = sadd.s32 %s83, 1
    %s85 = scalar_select %p82, %s83, %s84
    %p88 = pneg %p82
    %p89 = scmp.eq.s32.totalorder %s9, 1
    %p90 = por %p88, %p89
    %p91 = scmp.ne.s32.totalorder %s83, %s86
    %p92 = scmp.eq.s32.totalorder %s9, 0
    %p93 = por %p91, %p92
    %p94 = scmp.ne.s32.totalorder %s83, %s86
    %p95 = scmp.eq.s32.totalorder %s14, 1
    %p96 = por %p94, %p95
    %p97 = scmp.ne.s32.totalorder %s86, %s87
    %p98 = scmp.eq.s32.totalorder %s14, 0
    %p99 = por %p97, %p98
    %p100 = scmp.ne.s32.totalorder %s86, %s87
    %p101 = scmp.eq.s32.totalorder %s15, 1
    %p102 = por %p100, %p101
    %p104 = scmp.ne.s32.totalorder %s87, %s103
    %p105 = scmp.eq.s32.totalorder %s15, 0
    %p106 = por %p104, %p105
    %s107 = ssub.s32 %s16, %s28
    %s108 = ssub.s32 %s17, %s24
    %s109 = sor.u32 %s107, %s108
    %p110 = scmp.eq.s32.totalorder %s109, 0
    %s112 = sadd.s32 %s111, 1
    %s113 = scalar_select %p110, %s111, %s112
    %p116 = pneg %p110
    %p117 = scmp.eq.s32.totalorder %s9, 1
    %p118 = por %p116, %p117
    %p119 = scmp.ne.s32.totalorder %s111, %s114
    %p120 = scmp.eq.s32.totalorder %s9, 0
    %p121 = por %p119, %p120
    %p122 = scmp.ne.s32.totalorder %s111, %s114
    %p123 = scmp.eq.s32.totalorder %s14, 1
    %p124 = por %p122, %p123
    %p125 = scmp.ne.s32.totalorder %s114, %s115
    %p126 = scmp.eq.s32.totalorder %s14, 0
    %p127 = por %p125, %p126
    %p128 = scmp.ne.s32.totalorder %s114, %s115
    %p129 = scmp.eq.s32.totalorder %s15, 1
    %p130 = por %p128, %p129
    %p132 = scmp.ne.s32.totalorder %s115, %s131
    %p133 = scmp.eq.s32.totalorder %s15, 0
    %p134 = por %p132, %p133
    %p135 = scmp.le.s32.totalorder 1, %s9
    %p136 = scmp.lt.s32.totalorder %s9, 3
    %p137 = pnand %p135, %p136
    %p138 = pneg %p137
    // Predicated region
    $region9: #{forward.16} parent=5 // pred_check
      _
    $region10: #{forward.16} parent=5 // pred_check_branch
      %140 = sbr.rel (%p137) target = $region12
    $region11: #{forward.16} parent=5 // pred_region
      %s141 = ssub.s32 %s9, 1
      // Predicated region
      $region13: #{forward.16} parent=11 // pred_check
        %p142 = pneg %p73
      $region14: #{forward.16} parent=11 // pred_check_branch
        %144 = sbr.rel (%p142) target = $region16
      $region15: #{forward.16} parent=11 // pred_region
        %p145 = scmp.lt.s32.totalorder %s19, 0
        %s146 = scalar_select %p145, %s19, 0
        %s147 = smul.addr %s146, 4
        %s148 = scalar_lea.vmem %s1, %s147
      $region16: #{forward.16} parent=11 // pred_fallthru
        _
      // Predicated region
      $region17: #{forward.16} parent=11 // pred_check
        %p149 = pneg %p99
      $region18: #{forward.16} parent=11 // pred_check_branch
        %151 = sbr.rel (%p149) target = $region20
      $region19: #{forward.16} parent=11 // pred_region
        %p152 = scmp.lt.s32.totalorder %s19, 0
        %s153 = scalar_select %p152, %s19, 0
        %s154 = scalar_lea.vmem %s2, %s153
      $region20: #{forward.16} parent=11 // pred_fallthru
        _
    $region12: #{forward.16} parent=5 // pred_fallthru
      _
    %p155 = scmp.lt.s32.totalorder %s9, 2
    // Predicated region
    $region21: #{forward.16} parent=5 // pred_check
      %p156 = pneg %p155
    $region22: #{forward.16} parent=5 // pred_check_branch
      %158 = sbr.rel (%p156) target = $region24
    $region23: #{forward.16} parent=5 // pred_region
      // Predicated region
      $region25: #{forward.16} parent=23 // pred_check
        %p159 = pneg %p41
      $region26: #{forward.16} parent=23 // pred_check_branch
        %161 = sbr.rel (%p159) target = $region28
      $region27: #{forward.16} parent=23 // pred_region
        %s162 = smul.u32 4, %s16
        %p163 = scmp.lt.s32.totalorder %s162, 7
        %s164 = scalar_select %p163, %s162, 7
        %s165 = smul.addr %s164, 2
        %s166 = smul.addr %s165, 4
        %s167 = scalar_lea.vmem %s0, %s166
        %s168 = smul.u32 4, %s16
      $region28: #{forward.16} parent=23 // pred_fallthru
        _
    $region24: #{forward.16} parent=5 // pred_fallthru
      _
    %p169 = scmp.le.s32.totalorder 1, %s9
    %p170 = scmp.lt.s32.totalorder %s9, 3
    %p171 = pnand %p169, %p170
    %p172 = pneg %p171
    // Predicated region
    $region29: #{forward.16} parent=5 // pred_check
      _
    $region30: #{forward.16} parent=5 // pred_check_branch
      %174 = sbr.rel (%p171) target = $region32
    $region31: #{forward.16} parent=5 // pred_region
      %s175 = ssub.s32 %s9, 1
      %s176 = smul.u32 4, %s18
      %p177 = scmp.lt.s32.totalorder %s176, 7
      %s178 = scalar_select %p177, %s176, 7
      %s179 = smul.addr %s178, 2
      %s180 = smul.addr %s179, 4
      %s181 = scalar_lea.vmem %s0, %s180
      %p182 = pneg %p47
      %p183 = pneg %p44
      %p184 = scmp.lt.s32.totalorder %s19, 0
      %s185 = scalar_select %p184, %s19, 0
      %s186 = smul.addr %s185, 4
      %s187 = scalar_lea.vmem %s1, %s186
      %p188 = pneg %p73
      %p189 = pneg %p70
      %p190 = scmp.lt.s32.totalorder %s19, 0
      %s191 = scalar_select %p190, %s19, 0
      %s192 = scalar_lea.vmem %s2, %s191
      %p193 = pneg %p99
      %p194 = pneg %p96
      %p195 = pneg %p127
      %p196 = pneg %p124
      %s197 = smul.u32 4, %s18
      %p198 = scmp.lt.s32.totalorder %s197, 7
      %s199 = scalar_select %p198, %s197, 7
      %p200 = scmp.lt.s32.totalorder %s19, 0
      %s201 = scalar_select %p200, %s19, 0
      %s202 = sadd.s32 %s201, %s199
      %s203 = smul.addr %s202, 8
      %s204 = scalar_lea.vmem %s3, %s203
      %s205 = smul.u32 4, %s18
      %p206 = scmp.lt.s32.totalorder %s205, 7
      %s207 = scalar_select %p206, %s205, 7
      %s208 = smul.addr %s207, 2
      %s209 = smul.addr %s208, 4
      %s210 = scalar_lea.vmem %s0, %s209
      %s211 = smul.u32 4, %s18
      %p212 = scmp.lt.s32.totalorder %s19, 0
      %s213 = scalar_select %p212, %s19, 0
      %s214 = smul.addr %s213, 4
      %s215 = scalar_lea.vmem %s1, %s214
      %p216 = scmp.lt.s32.totalorder %s19, 0
      %s217 = scalar_select %p216, %s19, 0
      %s218 = scalar_lea.vmem %s2, %s217
      %s219 = smul.u32 4, %s18
      %p220 = scmp.lt.s32.totalorder %s219, 7
      %s221 = scalar_select %p220, %s219, 7
      %p222 = scmp.lt.s32.totalorder %s19, 0
      %s223 = scalar_select %p222, %s19, 0
      %s224 = sadd.s32 %s223, %s221
      %s225 = smul.addr %s224, 8
      %s226 = scalar_lea.vmem %s3, %s225
      %s227 = smul.u32 4, %s18
      %v229 = vld [vmem:[%s210] sm:$0xff]
      %v230 = vld [vmem:[%s210 + $0x8] sm:$0xff]
      %v231 = vld [vmem:[%s210 + $0x10] sm:$0xff]
      %v232 = vld [vmem:[%s210 + $0x18] sm:$0xff]
      %v233 = vld [vmem:[%s215] sm:$0xf]
      %v234 = vld [vmem:[%s215 + $0x4] sm:$0xf]
      %v235 = vld [vmem:[%s215 + $0x8] sm:$0xf]
      %v236 = vld [vmem:[%s215 + $0xc] sm:$0xf]
      %v237 = vld [vmem:[%s215 + $0x10] sm:$0xf]
      %v238 = vld [vmem:[%s215 + $0x14] sm:$0xf]
      %v239 = vld [vmem:[%s215 + $0x18] sm:$0xf]
      %v240 = vld [vmem:[%s215 + $0x1c] sm:$0xf]
      %v241 = vld [vmem:[%s215 + $0x20] sm:$0xf]
      %v242 = vld [vmem:[%s215 + $0x24] sm:$0xf]
      %v243 = vld [vmem:[%s215 + $0x28] sm:$0xf]
      %v244 = vld [vmem:[%s215 + $0x2c] sm:$0xf]
      %v245 = vld [vmem:[%s215 + $0x30] sm:$0xf]
      %v246 = vld [vmem:[%s215 + $0x34] sm:$0xf]
      %v247 = vld [vmem:[%s215 + $0x38] sm:$0xf]
      %v248 = vld [vmem:[%s215 + $0x3c] sm:$0xf]
      %v249 = vld [vmem:[%s215 + $0x40] sm:$0xf]
      %v250 = vld [vmem:[%s215 + $0x44] sm:$0xf]
      %v251 = vld [vmem:[%s215 + $0x48] sm:$0xf]
      %v252 = vld [vmem:[%s215 + $0x4c] sm:$0xf]
      %v253 = vld [vmem:[%s215 + $0x50] sm:$0xf]
      %v254 = vld [vmem:[%s215 + $0x54] sm:$0xf]
      %v255 = vld [vmem:[%s215 + $0x58] sm:$0xf]
      %v256 = vld [vmem:[%s215 + $0x5c] sm:$0xf]
      %v257 = vld [vmem:[%s215 + $0x60] sm:$0xf]
      %v258 = vld [vmem:[%s215 + $0x64] sm:$0xf]
      %v259 = vld [vmem:[%s215 + $0x68] sm:$0xf]
      %v260 = vld [vmem:[%s215 + $0x6c] sm:$0xf]
      %v261 = vld [vmem:[%s215 + $0x70] sm:$0xf]
      %v262 = vld [vmem:[%s215 + $0x74] sm:$0xf]
      %v263 = vld [vmem:[%s215 + $0x78] sm:$0xf]
      %v264 = vld [vmem:[%s215 + $0x7c] sm:$0xf]
      %v265 = vld [vmem:[%s218] sm:$0x1]
      %v267 = vlaneseq
      %v268 = vshrl.u32 %v267, 7
      %v269 = vsub.s32 0, %v268
      %v270 = vrot.slane %v265, %v269
      %v276 = vunpack.c.l.b16 %v229
      %v277 = vunpack.c.h.b16 %v229
      %v278 = vunpack.c.l.b16 %v230
      %v279 = vunpack.c.h.b16 %v230
      %v280 = vunpack.c.l.b16 %v231
      %v281 = vunpack.c.h.b16 %v231
      %v282 = vunpack.c.l.b16 %v232
      %v283 = vunpack.c.h.b16 %v232
      %v284 = vpack.c.b16 %v278, %v276
      %v285 = vpack.c.b16 %v279, %v277
      %v286 = vpack.c.b16 %v282, %v280
      %v287 = vpack.c.b16 %v283, %v281
      %v324 = vunpack.c.l.b16 %v233
      %v325 = vunpack.c.l.b16 %v234
      %v326 = vunpack.c.l.b16 %v235
      %v327 = vunpack.c.l.b16 %v236
      %v328 = vunpack.c.l.b16 %v237
      %v329 = vunpack.c.l.b16 %v238
      %v330 = vunpack.c.l.b16 %v239
      %v331 = vunpack.c.l.b16 %v240
      %v332 = vunpack.c.l.b16 %v241
      %v333 = vunpack.c.l.b16 %v242
      %v334 = vunpack.c.l.b16 %v243
      %v335 = vunpack.c.l.b16 %v244
      %v336 = vunpack.c.l.b16 %v245
      %v337 = vunpack.c.l.b16 %v246
      %v338 = vunpack.c.l.b16 %v247
      %v339 = vunpack.c.l.b16 %v248
      %v340 = vunpack.c.l.b16 %v249
      %v341 = vunpack.c.l.b16 %v250
      %v342 = vunpack.c.l.b16 %v251
      %v343 = vunpack.c.l.b16 %v252
      %v344 = vunpack.c.l.b16 %v253
      %v345 = vunpack.c.l.b16 %v254
      %v346 = vunpack.c.l.b16 %v255
      %v347 = vunpack.c.l.b16 %v256
      %v348 = vunpack.c.l.b16 %v257
      %v349 = vunpack.c.l.b16 %v258
      %v350 = vunpack.c.l.b16 %v259
      %v351 = vunpack.c.l.b16 %v260
      %v352 = vunpack.c.l.b16 %v261
      %v353 = vunpack.c.l.b16 %v262
      %v354 = vunpack.c.l.b16 %v263
      %v355 = vunpack.c.l.b16 %v264
      %v356 = vpack.c.b16 %v325, %v324
      %v357 = vpack.c.b16 %v327, %v326
      %v358 = vpack.c.b16 %v329, %v328
      %v359 = vpack.c.b16 %v331, %v330
      %v360 = vpack.c.b16 %v333, %v332
      %v361 = vpack.c.b16 %v335, %v334
      %v362 = vpack.c.b16 %v337, %v336
      %v363 = vpack.c.b16 %v339, %v338
      %v364 = vpack.c.b16 %v341, %v340
      %v365 = vpack.c.b16 %v343, %v342
      %v366 = vpack.c.b16 %v345, %v344
      %v367 = vpack.c.b16 %v347, %v346
      %v368 = vpack.c.b16 %v349, %v348
      %v369 = vpack.c.b16 %v351, %v350
      %v370 = vpack.c.b16 %v353, %v352
      %v371 = vpack.c.b16 %v355, %v354
      %388 = vmatprep.subr.bf16.mxu0 0
      %389 = vmatpush1.bf16.msra.mxu0 %v356
      %390 = vmatprep.subr.bf16.mxu0 0
      %391 = vmatpush1.bf16.msra.mxu0 %v357
      %392 = vmatprep.subr.bf16.mxu0 0
      %393 = vmatpush1.bf16.msra.mxu0 %v358
      %394 = vmatprep.subr.bf16.mxu0 0
      %395 = vmatpush1.bf16.msra.mxu0 %v359
      %396 = vmatprep.subr.bf16.mxu0 0
      %397 = vmatpush1.bf16.msra.mxu0 %v360
      %398 = vmatprep.subr.bf16.mxu0 0
      %399 = vmatpush1.bf16.msra.mxu0 %v361
      %400 = vmatprep.subr.bf16.mxu0 0
      %401 = vmatpush1.bf16.msra.mxu0 %v362
      %402 = vmatprep.subr.bf16.mxu0 0
      %403 = vmatpush1.bf16.msra.mxu0 %v363
      %404 = vmatprep.subr.bf16.mxu0 0
      %405 = vmatpush1.bf16.msra.mxu0 %v364
      %406 = vmatprep.subr.bf16.mxu0 0
      %407 = vmatpush1.bf16.msra.mxu0 %v365
      %408 = vmatprep.subr.bf16.mxu0 0
      %409 = vmatpush1.bf16.msra.mxu0 %v366
      %410 = vmatprep.subr.bf16.mxu0 0
      %411 = vmatpush1.bf16.msra.mxu0 %v367
      %412 = vmatprep.subr.bf16.mxu0 0
      %413 = vmatpush1.bf16.msra.mxu0 %v368
      %414 = vmatprep.subr.bf16.mxu0 0
      %415 = vmatpush1.bf16.msra.mxu0 %v369
      %416 = vmatprep.subr.bf16.mxu0 0
      %417 = vmatpush1.bf16.msra.mxu0 %v370
      %418 = vmatprep.subr.bf16.mxu0 0
      %419 = vmatpush1.bf16.msra.mxu0 %v371
      %420 = vmatprep.mubr.bf16.mxu0 %v285
      %421 = vmatmul.mubr.bf16.gmra.mrb[0].mxu0 %v284
      %v422 = vpop.f32.mrb[0].mxu0
      %v423 = vadd.f32 %v270, %v422
      %v424 = vpop.f32.mrb[0].mxu0
      %v425 = vpop.f32.mrb[0].mxu0
      %v426 = vadd.f32 %v270, %v425
      %v427 = vpop.f32.mrb[0].mxu0
      %428 = vmatprep.mubr.bf16.mxu0 %v287
      %429 = vmatmul.mubr.bf16.gmra.mrb[0].mxu0 %v286
      %v430 = vpop.f32.mrb[0].mxu0
      %v431 = vadd.f32 %v270, %v430
      %v432 = vpop.f32.mrb[0].mxu0
      %v433 = vpop.f32.mrb[0].mxu0
      %v434 = vadd.f32 %v270, %v433
      %v435 = vpop.f32.mrb[0].mxu0
      %436 = vdwg.mxu0
      %v437 = vmax.f32 %v423, 0.0
      %v438 = vmax.f32 %v426, 0.0
      %v439 = vmax.f32 %v431, 0.0
      %v440 = vmax.f32 %v434, 0.0
      %441 = vst [vmem:[%s226] sm:$0xff] %v437
      %442 = vst [vmem:[%s226 + $0x8] sm:$0xff] %v438
      %443 = vst [vmem:[%s226 + $0x10] sm:$0xff] %v439
      %444 = vst [vmem:[%s226 + $0x18] sm:$0xff] %v440
      %s445 = smul.u32 4, %s18
      %p446 = scmp.lt.s32.totalorder %s445, 7
      %s447 = scalar_select %p446, %s445, 7
      %p448 = scmp.lt.s32.totalorder %s19, 0
      %s449 = scalar_select %p448, %s19, 0
      %s450 = sadd.s32 %s449, %s447
      %s451 = smul.addr %s450, 8
      %s452 = scalar_lea.vmem %s3, %s451
      // Predicated region
      $region33: #{forward.16} parent=31 // pred_check
        %p453 = pneg %p124
      $region34: #{forward.16} parent=31 // pred_check_branch
        %455 = sbr.rel (%p453) target = $region36
      $region35: #{forward.16} parent=31 // pred_region
        %s456 = smul.u32 4, %s18
      $region36: #{forward.16} parent=31 // pred_fallthru
        _
    $region32: #{forward.16} parent=5 // pred_fallthru
      _
    %p457 = scmp.le.s32.totalorder 2, %s9
    // Predicated region
    $region37: #{forward.16} parent=5 // pred_check
      %p458 = pneg %p457
    $region38: #{forward.16} parent=5 // pred_check_branch
      %460 = sbr.rel (%p458) target = $region40
    $region39: #{forward.16} parent=5 // pred_region
      %s461 = ssub.s32 %s9, 2
      // Predicated region
      $region41: #{forward.16} parent=39 // pred_check
        %p462 = pneg %p130
      $region42: #{forward.16} parent=39 // pred_check_branch
        %464 = sbr.rel (%p462) target = $region44
      $region43: #{forward.16} parent=39 // pred_region
        %s465 = smul.u32 4, %s20
        %p466 = scmp.lt.s32.totalorder %s465, 7
        %s467 = scalar_select %p466, %s465, 7
        %p468 = scmp.lt.s32.totalorder %s21, 0
        %s469 = scalar_select %p468, %s21, 0
        %s470 = sadd.s32 %s469, %s467
        %s471 = smul.addr %s470, 8
        %s472 = scalar_lea.vmem %s3, %s471
      $region44: #{forward.16} parent=39 // pred_fallthru
        _
    $region40: #{forward.16} parent=5 // pred_fallthru
      _
  $region6: #{forward.16} parent=0 // loop_footer
    %s13 = sadd.s32 1, %s9
  $region7: #{forward.16} parent=0 // loop_footer_branch
    %8 = sbr.rel target = $region3
  $region8: #{forward.16} parent=0 // loop_exit
    _

// kernel: forward.20
$region0: #{forward.20}
  #allocation0 [shape = 'u32[]', space=smem, size = 0x4, offset = 0x4, fixed_abs, tag = 'smem constant byte address 0x4 - core index']
  #allocation1 [shape = 'u32[144,128]{1,0:T(1,128)}', space=vmem, size = 0x12000, scoped, tag = 'internal scratch']
  %s0 = inlined_call_operand.vmem [shape: bf16[128,384], index: 0, kind: input, shape index: {}]
  %s1 = inlined_call_operand.vmem [shape: bf16[384,128], index: 1, kind: input, shape index: {}]
  %s2 = inlined_call_operand.vmem [shape: f32[1,128], index: 2, kind: input, shape index: {}]
  %s3 = inlined_call_operand.vmem [shape: f32[128,128], index: 3, kind: output, shape index: {}]
  %s4 = sld [smem:[#allocation0]]
  $region45: #{forward.20} parent=0
    _
  %s6 = ssub.s32 1, %s4
  %s7 = scalar_select 0, %s6, %s4
  loop: start=0, step=1, limit=4
  $region2: #{forward.20} parent=0 // loop_pre_header
    _
  $region3: #{forward.20} parent=0 // loop_header
    %s9 = sphi 0, %s13
    %p10 = scmp.ge.s32.totalorder %s9, 4
    %s16 = sphi 0, %s28
    %s17 = sphi 0, %s24
    %s18 = sphi 0, %s16
    %s19 = sphi 0, %s17
    %s20 = sphi 0, %s18
    %s21 = sphi 0, %s19
    %s31 = sphi 0, %s33
    %s34 = sphi 0, %s31
    %s35 = sphi 0, %s34
    %s51 = sphi 0, %s35
    %s57 = sphi 0, %s59
    %s60 = sphi 0, %s57
    %s61 = sphi 0, %s60
    %s77 = sphi 0, %s61
    %s83 = sphi 0, %s85
    %s86 = sphi 0, %s83
    %s87 = sphi 0, %s86
    %s103 = sphi 0, %s87
    %s111 = sphi 0, %s113
    %s114 = sphi 0, %s111
    %s115 = sphi 0, %s114
    %s131 = sphi 0, %s115
  $region4: #{forward.20} parent=0 // loop_header_branch
    %12 = sbr.rel (%p10) target = $region8
  $region5: #{forward.20} parent=0 // loop_body
    %s14 = ssub.s32 %s9, 1
    %s15 = ssub.s32 %s9, 2
    %s22 = sadd.s32 1, %s17
    %p23 = scmp.ge.s32.totalorder %s22, 1
    %s24 = scalar_select %p23, 0, %s22
    %s25 = sadd.s32 1, %s16
    %s26 = scalar_select %p23, %s25, %s16
    %p27 = scmp.ge.s32.totalorder %s26, 2
    %s28 = scalar_select %p27, 0, %s26
    %s29 = ssub.s32 %s16, %s28
    %p30 = scmp.eq.s32.totalorder %s29, 0
    %s32 = sadd.s32 %s31, 1
    %s33 = scalar_select %p30, %s31, %s32
    %p36 = pneg %p30
    %p37 = scmp.eq.s32.totalorder %s9, 1
    %p38 = por %p36, %p37
    %p39 = scmp.ne.s32.totalorder %s31, %s34
    %p40 = scmp.eq.s32.totalorder %s9, 0
    %p41 = por %p39, %p40
    %p42 = scmp.ne.s32.totalorder %s31, %s34
    %p43 = scmp.eq.s32.totalorder %s14, 1
    %p44 = por %p42, %p43
    %p45 = scmp.ne.s32.totalorder %s34, %s35
    %p46 = scmp.eq.s32.totalorder %s14, 0
    %p47 = por %p45, %p46
    %p48 = scmp.ne.s32.totalorder %s34, %s35
    %p49 = scmp.eq.s32.totalorder %s15, 1
    %p50 = por %p48, %p49
    %p52 = scmp.ne.s32.totalorder %s35, %s51
    %p53 = scmp.eq.s32.totalorder %s15, 0
    %p54 = por %p52, %p53
    %s55 = ssub.s32 %s17, %s24
    %p56 = scmp.eq.s32.totalorder %s55, 0
    %s58 = sadd.s32 %s57, 1
    %s59 = scalar_select %p56, %s57, %s58
    %p62 = pneg %p56
    %p63 = scmp.eq.s32.totalorder %s9, 1
    %p64 = por %p62, %p63
    %p65 = scmp.ne.s32.totalorder %s57, %s60
    %p66 = scmp.eq.s32.totalorder %s9, 0
    %p67 = por %p65, %p66
    %p68 = scmp.ne.s32.totalorder %s57, %s60
    %p69 = scmp.eq.s32.totalorder %s14, 1
    %p70 = por %p68, %p69
    %p71 = scmp.ne.s32.totalorder %s60, %s61
    %p72 = scmp.eq.s32.totalorder %s14, 0
    %p73 = por %p71, %p72
    %p74 = scmp.ne.s32.totalorder %s60, %s61
    %p75 = scmp.eq.s32.totalorder %s15, 1
    %p76 = por %p74, %p75
    %p78 = scmp.ne.s32.totalorder %s61, %s77
    %p79 = scmp.eq.s32.totalorder %s15, 0
    %p80 = por %p78, %p79
    %s81 = ssub.s32 %s17, %s24
    %p82 = scmp.eq.s32.totalorder %s81, 0
    %s84 = sadd.s32 %s83, 1
    %s85 = scalar_select %p82, %s83, %s84
    %p88 = pneg %p82
    %p89 = scmp.eq.s32.totalorder %s9, 1
    %p90 = por %p88, %p89
    %p91 = scmp.ne.s32.totalorder %s83, %s86
    %p92 = scmp.eq.s32.totalorder %s9, 0
    %p93 = por %p91, %p92
    %p94 = scmp.ne.s32.totalorder %s83, %s86
    %p95 = scmp.eq.s32.totalorder %s14, 1
    %p96 = por %p94, %p95
    %p97 = scmp.ne.s32.totalorder %s86, %s87
    %p98 = scmp.eq.s32.totalorder %s14, 0
    %p99 = por %p97, %p98
    %p100 = scmp.ne.s32.totalorder %s86, %s87
    %p101 = scmp.eq.s32.totalorder %s15, 1
    %p102 = por %p100, %p101
    %p104 = scmp.ne.s32.totalorder %s87, %s103
    %p105 = scmp.eq.s32.totalorder %s15, 0
    %p106 = por %p104, %p105
    %s107 = ssub.s32 %s16, %s28
    %s108 = ssub.s32 %s17, %s24
    %s109 = sor.u32 %s107, %s108
    %p110 = scmp.eq.s32.totalorder %s109, 0
    %s112 = sadd.s32 %s111, 1
    %s113 = scalar_select %p110, %s111, %s112
    %p116 = pneg %p110
    %p117 = scmp.eq.s32.totalorder %s9, 1
    %p118 = por %p116, %p117
    %p119 = scmp.ne.s32.totalorder %s111, %s114
    %p120 = scmp.eq.s32.totalorder %s9, 0
    %p121 = por %p119, %p120
    %p122 = scmp.ne.s32.totalorder %s111, %s114
    %p123 = scmp.eq.s32.totalorder %s14, 1
    %p124 = por %p122, %p123
    %p125 = scmp.ne.s32.totalorder %s114, %s115
    %p126 = scmp.eq.s32.totalorder %s14, 0
    %p127 = por %p125, %p126
    %p128 = scmp.ne.s32.totalorder %s114, %s115
    %p129 = scmp.eq.s32.totalorder %s15, 1
    %p130 = por %p128, %p129
    %p132 = scmp.ne.s32.totalorder %s115, %s131
    %p133 = scmp.eq.s32.totalorder %s15, 0
    %p134 = por %p132, %p133
    %p135 = scmp.le.s32.totalorder 1, %s9
    %p136 = scmp.lt.s32.totalorder %s9, 3
    %p137 = pnand %p135, %p136
    %p138 = pneg %p137
    // Predicated region
    $region9: #{forward.20} parent=5 // pred_check
      _
    $region10: #{forward.20} parent=5 // pred_check_branch
      %140 = sbr.rel (%p137) target = $region12
    $region11: #{forward.20} parent=5 // pred_region
      %s141 = ssub.s32 %s9, 1
      // Predicated region
      $region13: #{forward.20} parent=11 // pred_check
        %p142 = pneg %p73
      $region14: #{forward.20} parent=11 // pred_check_branch
        %144 = sbr.rel (%p142) target = $region16
      $region15: #{forward.20} parent=11 // pred_region
        %p145 = scmp.lt.s32.totalorder %s19, 0
        %s146 = scalar_select %p145, %s19, 0
        %s147 = smul.addr %s146, 4
        %s148 = scalar_lea.vmem %s1, %s147
      $region16: #{forward.20} parent=11 // pred_fallthru
        _
      // Predicated region
      $region17: #{forward.20} parent=11 // pred_check
        %p149 = pneg %p99
      $region18: #{forward.20} parent=11 // pred_check_branch
        %151 = sbr.rel (%p149) target = $region20
      $region19: #{forward.20} parent=11 // pred_region
        %p152 = scmp.lt.s32.totalorder %s19, 0
        %s153 = scalar_select %p152, %s19, 0
        %s154 = scalar_lea.vmem %s2, %s153
      $region20: #{forward.20} parent=11 // pred_fallthru
        _
    $region12: #{forward.20} parent=5 // pred_fallthru
      _
    %p155 = scmp.lt.s32.totalorder %s9, 2
    // Predicated region
    $region21: #{forward.20} parent=5 // pred_check
      %p156 = pneg %p155
    $region22: #{forward.20} parent=5 // pred_check_branch
      %158 = sbr.rel (%p156) target = $region24
    $region23: #{forward.20} parent=5 // pred_region
      // Predicated region
      $region25: #{forward.20} parent=23 // pred_check
        %p159 = pneg %p41
      $region26: #{forward.20} parent=23 // pred_check_branch
        %161 = sbr.rel (%p159) target = $region28
      $region27: #{forward.20} parent=23 // pred_region
        %s162 = smul.u32 8, %s16
        %p163 = scmp.lt.s32.totalorder %s162, 15
        %s164 = scalar_select %p163, %s162, 15
        %s165 = smul.addr %s164, 3
        %s166 = smul.addr %s165, 4
        %s167 = scalar_lea.vmem %s0, %s166
        %s168 = smul.u32 8, %s16
      $region28: #{forward.20} parent=23 // pred_fallthru
        _
    $region24: #{forward.20} parent=5 // pred_fallthru
      _
    %p169 = scmp.le.s32.totalorder 1, %s9
    %p170 = scmp.lt.s32.totalorder %s9, 3
    %p171 = pnand %p169, %p170
    %p172 = pneg %p171
    // Predicated region
    $region29: #{forward.20} parent=5 // pred_check
      _
    $region30: #{forward.20} parent=5 // pred_check_branch
      %174 = sbr.rel (%p171) target = $region32
    $region31: #{forward.20} parent=5 // pred_region
      %s175 = ssub.s32 %s9, 1
      %s176 = smul.u32 8, %s18
      %p177 = scmp.lt.s32.totalorder %s176, 15
      %s178 = scalar_select %p177, %s176, 15
      %s179 = smul.addr %s178, 3
      %s180 = smul.addr %s179, 4
      %s181 = scalar_lea.vmem %s0, %s180
      %p182 = pneg %p47
      %p183 = pneg %p44
      %p184 = scmp.lt.s32.totalorder %s19, 0
      %s185 = scalar_select %p184, %s19, 0
      %s186 = smul.addr %s185, 4
      %s187 = scalar_lea.vmem %s1, %s186
      %p188 = pneg %p73
      %p189 = pneg %p70
      %p190 = scmp.lt.s32.totalorder %s19, 0
      %s191 = scalar_select %p190, %s19, 0
      %s192 = scalar_lea.vmem %s2, %s191
      %p193 = pneg %p99
      %p194 = pneg %p96
      %p195 = pneg %p127
      %p196 = pneg %p124
      %s197 = smul.u32 8, %s18
      %p198 = scmp.lt.s32.totalorder %s197, 15
      %s199 = scalar_select %p198, %s197, 15
      %p200 = scmp.lt.s32.totalorder %s19, 0
      %s201 = scalar_select %p200, %s19, 0
      %s202 = sadd.s32 %s201, %s199
      %s203 = smul.addr %s202, 8
      %s204 = scalar_lea.vmem %s3, %s203
      %s205 = smul.u32 8, %s18
      %p206 = scmp.lt.s32.totalorder %s205, 15
      %s207 = scalar_select %p206, %s205, 15
      %s208 = smul.addr %s207, 3
      %s209 = smul.addr %s208, 4
      %s210 = scalar_lea.vmem %s0, %s209
      %s211 = smul.u32 8, %s18
      %p212 = scmp.lt.s32.totalorder %s19, 0
      %s213 = scalar_select %p212, %s19, 0
      %s214 = smul.addr %s213, 4
      %s215 = scalar_lea.vmem %s1, %s214
      %p216 = scmp.lt.s32.totalorder %s19, 0
      %s217 = scalar_select %p216, %s19, 0
      %s218 = scalar_lea.vmem %s2, %s217
      %s219 = smul.u32 8, %s18
      %p220 = scmp.lt.s32.totalorder %s219, 15
      %s221 = scalar_select %p220, %s219, 15
      %p222 = scmp.lt.s32.totalorder %s19, 0
      %s223 = scalar_select %p222, %s19, 0
      %s224 = sadd.s32 %s223, %s221
      %s225 = smul.addr %s224, 8
      %s226 = scalar_lea.vmem %s3, %s225
      %s227 = smul.u32 8, %s18
      %v229 = vld [vmem:[%s210] sm:$0xff]
      %v230 = vld [vmem:[%s210 + $0x8] sm:$0xf]
      %v231 = vld [vmem:[%s210 + $0xc] sm:$0xff]
      %v232 = vld [vmem:[%s210 + $0x14] sm:$0xf]
      %v233 = vld [vmem:[%s210 + $0x18] sm:$0xff]
      %v234 = vld [vmem:[%s210 + $0x20] sm:$0xf]
      %v235 = vld [vmem:[%s210 + $0x24] sm:$0xff]
      %v236 = vld [vmem:[%s210 + $0x2c] sm:$0xf]
      %v237 = vld [vmem:[%s210 + $0x30] sm:$0xff]
      %v238 = vld [vmem:[%s210 + $0x38] sm:$0xf]
      %v239 = vld [vmem:[%s210 + $0x3c] sm:$0xff]
      %v240 = vld [vmem:[%s210 + $0x44] sm:$0xf]
      %v241 = vld [vmem:[%s210 + $0x48] sm:$0xff]
      %v242 = vld [vmem:[%s210 + $0x50] sm:$0xf]
      %v243 = vld [vmem:[%s210 + $0x54] sm:$0xff]
      %v244 = vld [vmem:[%s210 + $0x5c] sm:$0xf]
      %v245 = vld [vmem:[%s215] sm:$0xf]
      %v246 = vld [vmem:[%s215 + $0x4] sm:$0xf]
      %v247 = vld [vmem:[%s215 + $0x8] sm:$0xf]
      %v248 = vld [vmem:[%s215 + $0xc] sm:$0xf]
      %v249 = vld [vmem:[%s215 + $0x10] sm:$0xf]
      %v250 = vld [vmem:[%s215 + $0x14] sm:$0xf]
      %v251 = vld [vmem:[%s215 + $0x18] sm:$0xf]
      %v252 = vld [vmem:[%s215 + $0x1c] sm:$0xf]
      %v253 = vld [vmem:[%s215 + $0x20] sm:$0xf]
      %v254 = vld [vmem:[%s215 + $0x24] sm:$0xf]
      %v255 = vld [vmem:[%s215 + $0x28] sm:$0xf]
      %v256 = vld [vmem:[%s215 + $0x2c] sm:$0xf]
      %v257 = vld [vmem:[%s215 + $0x30] sm:$0xf]
      %v258 = vld [vmem:[%s215 + $0x34] sm:$0xf]
      %v259 = vld [vmem:[%s215 + $0x38] sm:$0xf]
      %v260 = vld [vmem:[%s215 + $0x3c] sm:$0xf]
      %v261 = vld [vmem:[%s215 + $0x40] sm:$0xf]
      %v262 = vld [vmem:[%s215 + $0x44] sm:$0xf]
      %v263 = vld [vmem:[%s215 + $0x48] sm:$0xf]
      %v264 = vld [vmem:[%s215 + $0x4c] sm:$0xf]
      %v265 = vld [vmem:[%s215 + $0x50] sm:$0xf]
      %v266 = vld [vmem:[%s215 + $0x54] sm:$0xf]
      %v267 = vld [vmem:[%s215 + $0x58] sm:$0xf]
      %v268 = vld [vmem:[%s215 + $0x5c] sm:$0xf]
      %v269 = vld [vmem:[%s215 + $0x60] sm:$0xf]
      %v270 = vld [vmem:[%s215 + $0x64] sm:$0xf]
      %v271 = vld [vmem:[%s215 + $0x68] sm:$0xf]
      %v272 = vld [vmem:[%s215 + $0x6c] sm:$0xf]
      %v273 = vld [vmem:[%s215 + $0x70] sm:$0xf]
      %v274 = vld [vmem:[%s215 + $0x74] sm:$0xf]
      %v275 = vld [vmem:[%s215 + $0x78] sm:$0xf]
      %v276 = vld [vmem:[%s215 + $0x7c] sm:$0xf]
      %v277 = vld [vmem:[%s215 + $0x80] sm:$0xf]
      %v278 = vld [vmem:[%s215 + $0x84] sm:$0xf]
      %v279 = vld [vmem:[%s215 + $0x88] sm:$0xf]
      %v280 = vld [vmem:[%s215 + $0x8c] sm:$0xf]
      %v281 = vld [vmem:[%s215 + $0x90] sm:$0xf]
      %v282 = vld [vmem:[%s215 + $0x94] sm:$0xf]
      %v283 = vld [vmem:[%s215 + $0x98] sm:$0xf]
      %v284 = vld [vmem:[%s215 + $0x9c] sm:$0xf]
      %v285 = vld [vmem:[%s215 + $0xa0] sm:$0xf]
      %v286 = vld [vmem:[%s215 + $0xa4] sm:$0xf]
      %v287 = vld [vmem:[%s215 + $0xa8] sm:$0xf]
      %v288 = vld [vmem:[%s215 + $0xac] sm:$0xf]
      %v289 = vld [vmem:[%s215 + $0xb0] sm:$0xf]
      %v290 = vld [vmem:[%s215 + $0xb4] sm:$0xf]
      %v291 = vld [vmem:[%s215 + $0xb8] sm:$0xf]
      %v292 = vld [vmem:[%s215 + $0xbc] sm:$0xf]
      %v293 = vld [vmem:[%s218] sm:$0x1]
      %v295 = vlaneseq
      %v296 = vshrl.u32 %v295, 7
      %v297 = vsub.s32 0, %v296
      %v298 = vrot.slane %v293, %v297
      %v316 = vunpack.c.l.b16 %v229
      %v317 = vunpack.c.h.b16 %v229
      %v318 = vunpack.c.l.b16 %v230
      %v319 = vunpack.c.l.b16 %v231
      %v320 = vunpack.c.h.b16 %v231
      %v321 = vunpack.c.l.b16 %v232
      %v322 = vunpack.c.l.b16 %v233
      %v323 = vunpack.c.h.b16 %v233
      %v324 = vunpack.c.l.b16 %v234
      %v325 = vunpack.c.l.b16 %v235
      %v326 = vunpack.c.h.b16 %v235
      %v327 = vunpack.c.l.b16 %v236
      %v328 = vunpack.c.l.b16 %v237
      %v329 = vunpack.c.h.b16 %v237
      %v330 = vunpack.c.l.b16 %v238
      %v331 = vunpack.c.l.b16 %v239
      %v332 = vunpack.c.h.b16 %v239
      %v333 = vunpack.c.l.b16 %v240
      %v334 = vunpack.c.l.b16 %v241
      %v335 = vunpack.c.h.b16 %v241
      %v336 = vunpack.c.l.b16 %v242
      %v337 = vunpack.c.l.b16 %v243
      %v338 = vunpack.c.h.b16 %v243
      %v339 = vunpack.c.l.b16 %v244
      %v340 = vpack.c.b16 %v319, %v316
      %v341 = vpack.c.b16 %v320, %v317
      %v342 = vpack.c.b16 %v321, %v318
      %v343 = vpack.c.b16 %v325, %v322
      %v344 = vpack.c.b16 %v326, %v323
      %v345 = vpack.c.b16 %v327, %v324
      %v346 = vpack.c.b16 %v331, %v328
      %v347 = vpack.c.b16 %v332, %v329
      %v348 = vpack.c.b16 %v333, %v330
      %v349 = vpack.c.b16 %v337, %v334
      %v350 = vpack.c.b16 %v338, %v335
      %v351 = vpack.c.b16 %v339, %v336
      %v412 = vunpack.c.l.b16 %v245
      %v413 = vunpack.c.l.b16 %v246
      %v414 = vunpack.c.l.b16 %v247
      %v415 = vunpack.c.l.b16 %v248
      %v416 = vunpack.c.l.b16 %v249
      %v417 = vunpack.c.l.b16 %v250
      %v418 = vunpack.c.l.b16 %v251
      %v419 = vunpack.c.l.b16 %v252
      %v420 = vunpack.c.l.b16 %v253
      %v421 = vunpack.c.l.b16 %v254
      %v422 = vunpack.c.l.b16 %v255
      %v423 = vunpack.c.l.b16 %v256
      %v424 = vunpack.c.l.b16 %v257
      %v425 = vunpack.c.l.b16 %v258
      %v426 = vunpack.c.l.b16 %v259
      %v427 = vunpack.c.l.b16 %v260
      %v428 = vunpack.c.l.b16 %v261
      %v429 = vunpack.c.l.b16 %v262
      %v430 = vunpack.c.l.b16 %v263
      %v431 = vunpack.c.l.b16 %v264
      %v432 = vunpack.c.l.b16 %v265
      %v433 = vunpack.c.l.b16 %v266
      %v434 = vunpack.c.l.b16 %v267
      %v435 = vunpack.c.l.b16 %v268
      %v436 = vunpack.c.l.b16 %v269
      %v437 = vunpack.c.l.b16 %v270
      %v438 = vunpack.c.l.b16 %v271
      %v439 = vunpack.c.l.b16 %v272
      %v440 = vunpack.c.l.b16 %v273
      %v441 = vunpack.c.l.b16 %v274
      %v442 = vunpack.c.l.b16 %v275
      %v443 = vunpack.c.l.b16 %v276
      %v444 = vunpack.c.l.b16 %v277
      %v445 = vunpack.c.l.b16 %v278
      %v446 = vunpack.c.l.b16 %v279
      %v447 = vunpack.c.l.b16 %v280
      %v448 = vunpack.c.l.b16 %v281
      %v449 = vunpack.c.l.b16 %v282
      %v450 = vunpack.c.l.b16 %v283
      %v451 = vunpack.c.l.b16 %v284
      %v452 = vunpack.c.l.b16 %v285
      %v453 = vunpack.c.l.b16 %v286
      %v454 = vunpack.c.l.b16 %v287
      %v455 = vunpack.c.l.b16 %v288
      %v456 = vunpack.c.l.b16 %v289
      %v457 = vunpack.c.l.b16 %v290
      %v458 = vunpack.c.l.b16 %v291
      %v459 = vunpack.c.l.b16 %v292
      %v460 = vpack.c.b16 %v413, %v412
      %v461 = vpack.c.b16 %v415, %v414
      %v462 = vpack.c.b16 %v417, %v416
      %v463 = vpack.c.b16 %v419, %v418
      %v464 = vpack.c.b16 %v421, %v420
      %v465 = vpack.c.b16 %v423, %v422
      %v466 = vpack.c.b16 %v425, %v424
      %v467 = vpack.c.b16 %v427, %v426
      %v468 = vpack.c.b16 %v429, %v428
      %v469 = vpack.c.b16 %v431, %v430
      %v470 = vpack.c.b16 %v433, %v432
      %v471 = vpack.c.b16 %v435, %v434
      %v472 = vpack.c.b16 %v437, %v436
      %v473 = vpack.c.b16 %v439, %v438
      %v474 = vpack.c.b16 %v441, %v440
      %v475 = vpack.c.b16 %v443, %v442
      %v476 = vpack.c.b16 %v445, %v444
      %v477 = vpack.c.b16 %v447, %v446
      %v478 = vpack.c.b16 %v449, %v448
      %v479 = vpack.c.b16 %v451, %v450
      %v480 = vpack.c.b16 %v453, %v452
      %v481 = vpack.c.b16 %v455, %v454
      %v482 = vpack.c.b16 %v457, %v456
      %v483 = vpack.c.b16 %v459, %v458
      %508 = vmatprep.subr.bf16.mxu0 0
      %509 = vmatpush1.bf16.msra.mxu0 %v460
      %510 = vmatprep.subr.bf16.mxu0 0
      %511 = vmatpush1.bf16.msra.mxu0 %v461
      %512 = vmatprep.subr.bf16.mxu0 0
      %513 = vmatpush1.bf16.msra.mxu0 %v462
      %514 = vmatprep.subr.bf16.mxu0 0
      %515 = vmatpush1.bf16.msra.mxu0 %v463
      %516 = vmatprep.subr.bf16.mxu0 0
      %517 = vmatpush1.bf16.msra.mxu0 %v464
      %518 = vmatprep.subr.bf16.mxu0 0
      %519 = vmatpush1.bf16.msra.mxu0 %v465
      %520 = vmatprep.subr.bf16.mxu0 0
      %521 = vmatpush1.bf16.msra.mxu0 %v466
      %522 = vmatprep.subr.bf16.mxu0 0
      %523 = vmatpush1.bf16.msra.mxu0 %v467
      %524 = vmatprep.subr.bf16.mxu0 0
      %525 = vmatpush1.bf16.msra.mxu0 %v468
      %526 = vmatprep.subr.bf16.mxu0 0
      %527 = vmatpush1.bf16.msra.mxu0 %v469
      %528 = vmatprep.subr.bf16.mxu0 0
      %529 = vmatpush1.bf16.msra.mxu0 %v470
      %530 = vmatprep.subr.bf16.mxu0 0
      %531 = vmatpush1.bf16.msra.mxu0 %v471
      %532 = vmatprep.subr.bf16.mxu0 0
      %533 = vmatpush1.bf16.msra.mxu0 %v472
      %534 = vmatprep.subr.bf16.mxu0 0
      %535 = vmatpush1.bf16.msra.mxu0 %v473
      %536 = vmatprep.subr.bf16.mxu0 0
      %537 = vmatpush1.bf16.msra.mxu0 %v474
      %538 = vmatprep.subr.bf16.mxu0 0
      %539 = vmatpush1.bf16.msra.mxu0 %v475
      %540 = vmatprep.mubr.bf16.mxu0 %v341
      %541 = vmatmul.mubr.bf16.gmra.mrb[0].mxu0 %v340
      %v542 = vpop.f32.mrb[0].mxu0
      %v543 = vadd.f32 %v298, %v542
      %v544 = vpop.f32.mrb[0].mxu0
      %v545 = vpop.f32.mrb[0].mxu0
      %v546 = vadd.f32 %v298, %v545
      %v547 = vpop.f32.mrb[0].mxu0
      %548 = vmatprep.mubr.bf16.mxu0 %v344
      %549 = vmatmul.mubr.bf16.gmra.mrb[0].mxu0 %v343
      %v550 = vpop.f32.mrb[0].mxu0
      %v551 = vadd.f32 %v298, %v550
      %v552 = vpop.f32.mrb[0].mxu0
      %v553 = vpop.f32.mrb[0].mxu0
      %v554 = vadd.f32 %v298, %v553
      %v555 = vpop.f32.mrb[0].mxu0
      %556 = vmatprep.mubr.bf16.mxu0 %v347
      %557 = vmatmul.mubr.bf16.gmra.mrb[0].mxu0 %v346
      %v558 = vpop.f32.mrb[0].mxu0
      %v559 = vadd.f32 %v298, %v558
      %v560 = vpop.f32.mrb[0].mxu0
      %v561 = vpop.f32.mrb[0].mxu0
      %v562 = vadd.f32 %v298, %v561
      %v563 = vpop.f32.mrb[0].mxu0
      %564 = vmatprep.mubr.bf16.mxu0 %v350
      %565 = vmatmul.mubr.bf16.gmra.mrb[0].mxu0 %v349
      %v566 = vpop.f32.mrb[0].mxu0
      %v567 = vadd.f32 %v298, %v566
      %v568 = vpop.f32.mrb[0].mxu0
      %v569 = vpop.f32.mrb[0].mxu0
      %v570 = vadd.f32 %v298, %v569
      %v571 = vpop.f32.mrb[0].mxu0
      %572 = vdwg.mxu0
      %573 = vmatprep.subr.bf16.mxu0 0
      %574 = vmatpush1.bf16.msra.mxu0 %v476
      %575 = vmatprep.subr.bf16.mxu0 0
      %576 = vmatpush1.bf16.msra.mxu0 %v477
      %577 = vmatprep.subr.bf16.mxu0 0
      %578 = vmatpush1.bf16.msra.mxu0 %v478
      %579 = vmatprep.subr.bf16.mxu0 0
      %580 = vmatpush1.bf16.msra.mxu0 %v479
      %581 = vmatprep.subr.bf16.mxu0 0
      %582 = vmatpush1.bf16.msra.mxu0 %v480
      %583 = vmatprep.subr.bf16.mxu0 0
      %584 = vmatpush1.bf16.msra.mxu0 %v481
      %585 = vmatprep.subr.bf16.mxu0 0
      %586 = vmatpush1.bf16.msra.mxu0 %v482
      %587 = vmatprep.subr.bf16.mxu0 0
      %588 = vmatpush1.bf16.msra.mxu0 %v483
      %589 = vmatprep.subr.bf16.mxu0 0
      %590 = vmatpush1.bf16.msra.mxu0 0
      %591 = vmatprep.subr.bf16.mxu0 0
      %592 = vmatpush1.bf16.msra.mxu0 0
      %593 = vmatprep.subr.bf16.mxu0 0
      %594 = vmatpush1.bf16.msra.mxu0 0
      %595 = vmatprep.subr.bf16.mxu0 0
      %596 = vmatpush1.bf16.msra.mxu0 0
      %597 = vmatprep.subr.bf16.mxu0 0
      %598 = vmatpush1.bf16.msra.mxu0 0
      %599 = vmatprep.subr.bf16.mxu0 0
      %600 = vmatpush1.bf16.msra.mxu0 0
      %601 = vmatprep.subr.bf16.mxu0 0
      %602 = vmatpush1.bf16.msra.mxu0 0
      %603 = vmatprep.subr.bf16.mxu0 0
      %604 = vmatpush1.bf16.msra.mxu0 0
      %605 = vmatprep.mubr.bf16.mxu0 0
      %606 = vmatmul.mubr.bf16.gmra.mrb[0].mxu0 %v342
      %v607 = vpop.f32.mrb[0].mxu0
      %v608 = vadd.f32 %v543, %v607
      %v609 = vpop.f32.mrb[0].mxu0
      %v610 = vpop.f32.mrb[0].mxu0
      %v611 = vadd.f32 %v546, %v610
      %v612 = vpop.f32.mrb[0].mxu0
      %613 = vmatprep.mubr.bf16.mxu0 0
      %614 = vmatmul.mubr.bf16.gmra.mrb[0].mxu0 %v345
      %v615 = vpop.f32.mrb[0].mxu0
      %v616 = vadd.f32 %v551, %v615
      %v617 = vpop.f32.mrb[0].mxu0
      %v618 = vpop.f32.mrb[0].mxu0
      %v619 = vadd.f32 %v554, %v618
      %v620 = vpop.f32.mrb[0].mxu0
      %621 = vmatprep.mubr.bf16.mxu0 0
      %622 = vmatmul.mubr.bf16.gmra.mrb[0].mxu0 %v348
      %v623 = vpop.f32.mrb[0].mxu0
      %v624 = vadd.f32 %v559, %v623
      %v625 = vpop.f32.mrb[0].mxu0
      %v626 = vpop.f32.mrb[0].mxu0
      %v627 = vadd.f32 %v562, %v626
      %v628 = vpop.f32.mrb[0].mxu0
      %629 = vmatprep.mubr.bf16.mxu0 0
      %630 = vmatmul.mubr.bf16.gmra.mrb[0].mxu0 %v351
      %v631 = vpop.f32.mrb[0].mxu0
      %v632 = vadd.f32 %v567, %v631
      %v633 = vpop.f32.mrb[0].mxu0
      %v634 = vpop.f32.mrb[0].mxu0
      %v635 = vadd.f32 %v570, %v634
      %v636 = vpop.f32.mrb[0].mxu0
      %637 = vdwg.mxu0
      %v638 = vmax.f32 %v608, 0.0
      %v639 = vmax.f32 %v611, 0.0
      %v640 = vmax.f32 %v616, 0.0
      %v641 = vmax.f32 %v619, 0.0
      %v642 = vmax.f32 %v624, 0.0
      %v643 = vmax.f32 %v627, 0.0
      %v644 = vmax.f32 %v632, 0.0
      %v645 = vmax.f32 %v635, 0.0
      %646 = vst [vmem:[%s226] sm:$0xff] %v638
      %647 = vst [vmem:[%s226 + $0x8] sm:$0xff] %v639
      %648 = vst [vmem:[%s226 + $0x10] sm:$0xff] %v640
      %649 = vst [vmem:[%s226 + $0x18] sm:$0xff] %v641
      %650 = vst [vmem:[%s226 + $0x20] sm:$0xff] %v642
      %651 = vst [vmem:[%s226 + $0x28] sm:$0xff] %v643
      %652 = vst [vmem:[%s226 + $0x30] sm:$0xff] %v644
      %653 = vst [vmem:[%s226 + $0x38] sm:$0xff] %v645
      %s654 = smul.u32 8, %s18
      %p655 = scmp.lt.s32.totalorder %s654, 15
      %s656 = scalar_select %p655, %s654, 15
      %p657 = scmp.lt.s32.totalorder %s19, 0
      %s658 = scalar_select %p657, %s19, 0
      %s659 = sadd.s32 %s658, %s656
      %s660 = smul.addr %s659, 8
      %s661 = scalar_lea.vmem %s3, %s660
      // Predicated region
      $region33: #{forward.20} parent=31 // pred_check
        %p662 = pneg %p124
      $region34: #{forward.20} parent=31 // pred_check_branch
        %664 = sbr.rel (%p662) target = $region36
      $region35: #{forward.20} parent=31 // pred_region
        %s665 = smul.u32 8, %s18
      $region36: #{forward.20} parent=31 // pred_fallthru
        _
    $region32: #{forward.20} parent=5 // pred_fallthru
      _
    %p666 = scmp.le.s32.totalorder 2, %s9
    // Predicated region
    $region37: #{forward.20} parent=5 // pred_check
      %p667 = pneg %p666
    $region38: #{forward.20} parent=5 // pred_check_branch
      %669 = sbr.rel (%p667) target = $region40
    $region39: #{forward.20} parent=5 // pred_region
      %s670 = ssub.s32 %s9, 2
      // Predicated region
      $region41: #{forward.20} parent=39 // pred_check
        %p671 = pneg %p130
      $region42: #{forward.20} parent=39 // pred_check_branch
        %673 = sbr.rel (%p671) target = $region44
      $region43: #{forward.20} parent=39 // pred_region
        %s674 = smul.u32 8, %s20
        %p675 = scmp.lt.s32.totalorder %s674, 15
        %s676 = scalar_select %p675, %s674, 15
        %p677 = scmp.lt.s32.totalorder %s21, 0
        %s678 = scalar_select %p677, %s21, 0
        %s679 = sadd.s32 %s678, %s676
        %s680 = smul.addr %s679, 8
        %s681 = scalar_lea.vmem %s3, %s680
      $region44: #{forward.20} parent=39 // pred_fallthru
        _
    $region40: #{forward.20} parent=5 // pred_fallthru
      _
  $region6: #{forward.20} parent=0 // loop_footer
    %s13 = sadd.s32 1, %s9
  $region7: #{forward.20} parent=0 // loop_footer_branch
    %8 = sbr.rel target = $region3
  $region8: #{forward.20} parent=0 // loop_exit
    _

// kernel: forward.21
$region0: #{forward.21}
  #allocation0 [shape = 'u32[]', space=smem, size = 0x4, offset = 0x4, fixed_abs, tag = 'smem constant byte address 0x4 - core index']
  #allocation1 [shape = 'u32[144,128]{1,0:T(1,128)}', space=vmem, size = 0x12000, scoped, tag = 'internal scratch']
  %s0 = inlined_call_operand.vmem [shape: bf16[128,512], index: 0, kind: input, shape index: {}]
  %s1 = inlined_call_operand.vmem [shape: bf16[512,128], index: 1, kind: input, shape index: {}]
  %s2 = inlined_call_operand.vmem [shape: f32[1,128], index: 2, kind: input, shape index: {}]
  %s3 = inlined_call_operand.vmem [shape: f32[128,128], index: 3, kind: output, shape index: {}]
  %s4 = sld [smem:[#allocation0]]
  $region45: #{forward.21} parent=0
    _
  %s6 = ssub.s32 1, %s4
  %s7 = scalar_select 0, %s6, %s4
  loop: start=0, step=1, limit=4
  $region2: #{forward.21} parent=0 // loop_pre_header
    _
  $region3: #{forward.21} parent=0 // loop_header
    %s9 = sphi 0, %s13
    %p10 = scmp.ge.s32.totalorder %s9, 4
    %s16 = sphi 0, %s28
    %s17 = sphi 0, %s24
    %s18 = sphi 0, %s16
    %s19 = sphi 0, %s17
    %s20 = sphi 0, %s18
    %s21 = sphi 0, %s19
    %s31 = sphi 0, %s33
    %s34 = sphi 0, %s31
    %s35 = sphi 0, %s34
    %s51 = sphi 0, %s35
    %s57 = sphi 0, %s59
    %s60 = sphi 0, %s57
    %s61 = sphi 0, %s60
    %s77 = sphi 0, %s61
    %s83 = sphi 0, %s85
    %s86 = sphi 0, %s83
    %s87 = sphi 0, %s86
    %s103 = sphi 0, %s87
    %s111 = sphi 0, %s113
    %s114 = sphi 0, %s111
    %s115 = sphi 0, %s114
    %s131 = sphi 0, %s115
  $region4: #{forward.21} parent=0 // loop_header_branch
    %12 = sbr.rel (%p10) target = $region8
  $region5: #{forward.21} parent=0 // loop_body
    %s14 = ssub.s32 %s9, 1
    %s15 = ssub.s32 %s9, 2
    %s22 = sadd.s32 1, %s17
    %p23 = scmp.ge.s32.totalorder %s22, 1
    %s24 = scalar_select %p23, 0, %s22
    %s25 = sadd.s32 1, %s16
    %s26 = scalar_select %p23, %s25, %s16
    %p27 = scmp.ge.s32.totalorder %s26, 2
    %s28 = scalar_select %p27, 0, %s26
    %s29 = ssub.s32 %s16, %s28
    %p30 = scmp.eq.s32.totalorder %s29, 0
    %s32 = sadd.s32 %s31, 1
    %s33 = scalar_select %p30, %s31, %s32
    %p36 = pneg %p30
    %p37 = scmp.eq.s32.totalorder %s9, 1
    %p38 = por %p36, %p37
    %p39 = scmp.ne.s32.totalorder %s31, %s34
    %p40 = scmp.eq.s32.totalorder %s9, 0
    %p41 = por %p39, %p40
    %p42 = scmp.ne.s32.totalorder %s31, %s34
    %p43 = scmp.eq.s32.totalorder %s14, 1
    %p44 = por %p42, %p43
    %p45 = scmp.ne.s32.totalorder %s34, %s35
    %p46 = scmp.eq.s32.totalorder %s14, 0
    %p47 = por %p45, %p46
    %p48 = scmp.ne.s32.totalorder %s34, %s35
    %p49 = scmp.eq.s32.totalorder %s15, 1
    %p50 = por %p48, %p49
    %p52 = scmp.ne.s32.totalorder %s35, %s51
    %p53 = scmp.eq.s32.totalorder %s15, 0
    %p54 = por %p52, %p53
    %s55 = ssub.s32 %s17, %s24
    %p56 = scmp.eq.s32.totalorder %s55, 0
    %s58 = sadd.s32 %s57, 1
    %s59 = scalar_select %p56, %s57, %s58
    %p62 = pneg %p56
    %p63 = scmp.eq.s32.totalorder %s9, 1
    %p64 = por %p62, %p63
    %p65 = scmp.ne.s32.totalorder %s57, %s60
    %p66 = scmp.eq.s32.totalorder %s9, 0
    %p67 = por %p65, %p66
    %p68 = scmp.ne.s32.totalorder %s57, %s60
    %p69 = scmp.eq.s32.totalorder %s14, 1
    %p70 = por %p68, %p69
    %p71 = scmp.ne.s32.totalorder %s60, %s61
    %p72 = scmp.eq.s32.totalorder %s14, 0
    %p73 = por %p71, %p72
    %p74 = scmp.ne.s32.totalorder %s60, %s61
    %p75 = scmp.eq.s32.totalorder %s15, 1
    %p76 = por %p74, %p75
    %p78 = scmp.ne.s32.totalorder %s61, %s77
    %p79 = scmp.eq.s32.totalorder %s15, 0
    %p80 = por %p78, %p79
    %s81 = ssub.s32 %s17, %s24
    %p82 = scmp.eq.s32.totalorder %s81, 0
    %s84 = sadd.s32 %s83, 1
    %s85 = scalar_select %p82, %s83, %s84
    %p88 = pneg %p82
    %p89 = scmp.eq.s32.totalorder %s9, 1
    %p90 = por %p88, %p89
    %p91 = scmp.ne.s32.totalorder %s83, %s86
    %p92 = scmp.eq.s32.totalorder %s9, 0
    %p93 = por %p91, %p92
    %p94 = scmp.ne.s32.totalorder %s83, %s86
    %p95 = scmp.eq.s32.totalorder %s14, 1
    %p96 = por %p94, %p95
    %p97 = scmp.ne.s32.totalorder %s86, %s87
    %p98 = scmp.eq.s32.totalorder %s14, 0
    %p99 = por %p97, %p98
    %p100 = scmp.ne.s32.totalorder %s86, %s87
    %p101 = scmp.eq.s32.totalorder %s15, 1
    %p102 = por %p100, %p101
    %p104 = scmp.ne.s32.totalorder %s87, %s103
    %p105 = scmp.eq.s32.totalorder %s15, 0
    %p106 = por %p104, %p105
    %s107 = ssub.s32 %s16, %s28
    %s108 = ssub.s32 %s17, %s24
    %s109 = sor.u32 %s107, %s108
    %p110 = scmp.eq.s32.totalorder %s109, 0
    %s112 = sadd.s32 %s111, 1
    %s113 = scalar_select %p110, %s111, %s112
    %p116 = pneg %p110
    %p117 = scmp.eq.s32.totalorder %s9, 1
    %p118 = por %p116, %p117
    %p119 = scmp.ne.s32.totalorder %s111, %s114
    %p120 = scmp.eq.s32.totalorder %s9, 0
    %p121 = por %p119, %p120
    %p122 = scmp.ne.s32.totalorder %s111, %s114
    %p123 = scmp.eq.s32.totalorder %s14, 1
    %p124 = por %p122, %p123
    %p125 = scmp.ne.s32.totalorder %s114, %s115
    %p126 = scmp.eq.s32.totalorder %s14, 0
    %p127 = por %p125, %p126
    %p128 = scmp.ne.s32.totalorder %s114, %s115
    %p129 = scmp.eq.s32.totalorder %s15, 1
    %p130 = por %p128, %p129
    %p132 = scmp.ne.s32.totalorder %s115, %s131
    %p133 = scmp.eq.s32.totalorder %s15, 0
    %p134 = por %p132, %p133
    %p135 = scmp.le.s32.totalorder 1, %s9
    %p136 = scmp.lt.s32.totalorder %s9, 3
    %p137 = pnand %p135, %p136
    %p138 = pneg %p137
    // Predicated region
    $region9: #{forward.21} parent=5 // pred_check
      _
    $region10: #{forward.21} parent=5 // pred_check_branch
      %140 = sbr.rel (%p137) target = $region12
    $region11: #{forward.21} parent=5 // pred_region
      %s141 = ssub.s32 %s9, 1
      // Predicated region
      $region13: #{forward.21} parent=11 // pred_check
        %p142 = pneg %p73
      $region14: #{forward.21} parent=11 // pred_check_branch
        %144 = sbr.rel (%p142) target = $region16
      $region15: #{forward.21} parent=11 // pred_region
        %p145 = scmp.lt.s32.totalorder %s19, 0
        %s146 = scalar_select %p145, %s19, 0
        %s147 = smul.addr %s146, 4
        %s148 = scalar_lea.vmem %s1, %s147
      $region16: #{forward.21} parent=11 // pred_fallthru
        _
      // Predicated region
      $region17: #{forward.21} parent=11 // pred_check
        %p149 = pneg %p99
      $region18: #{forward.21} parent=11 // pred_check_branch
        %151 = sbr.rel (%p149) target = $region20
      $region19: #{forward.21} parent=11 // pred_region
        %p152 = scmp.lt.s32.totalorder %s19, 0
        %s153 = scalar_select %p152, %s19, 0
        %s154 = scalar_lea.vmem %s2, %s153
      $region20: #{forward.21} parent=11 // pred_fallthru
        _
    $region12: #{forward.21} parent=5 // pred_fallthru
      _
    %p155 = scmp.lt.s32.totalorder %s9, 2
    // Predicated region
    $region21: #{forward.21} parent=5 // pred_check
      %p156 = pneg %p155
    $region22: #{forward.21} parent=5 // pred_check_branch
      %158 = sbr.rel (%p156) target = $region24
    $region23: #{forward.21} parent=5 // pred_region
      // Predicated region
      $region25: #{forward.21} parent=23 // pred_check
        %p159 = pneg %p41
      $region26: #{forward.21} parent=23 // pred_check_branch
        %161 = sbr.rel (%p159) target = $region28
      $region27: #{forward.21} parent=23 // pred_region
        %s162 = smul.u32 8, %s16
        %p163 = scmp.lt.s32.totalorder %s162, 15
        %s164 = scalar_select %p163, %s162, 15
        %s165 = smul.addr %s164, 4
        %s166 = smul.addr %s165, 4
        %s167 = scalar_lea.vmem %s0, %s166
        %s168 = smul.u32 8, %s16
      $region28: #{forward.21} parent=23 // pred_fallthru
        _
    $region24: #{forward.21} parent=5 // pred_fallthru
      _
    %p169 = scmp.le.s32.totalorder 1, %s9
    %p170 = scmp.lt.s32.totalorder %s9, 3
    %p171 = pnand %p169, %p170
    %p172 = pneg %p171
    // Predicated region
    $region29: #{forward.21} parent=5 // pred_check
      _
    $region30: #{forward.21} parent=5 // pred_check_branch
      %174 = sbr.rel (%p171) target = $region32
    $region31: #{forward.21} parent=5 // pred_region
      %s175 = ssub.s32 %s9, 1
      %s176 = smul.u32 8, %s18
      %p177 = scmp.lt.s32.totalorder %s176, 15
      %s178 = scalar_select %p177, %s176, 15
      %s179 = smul.addr %s178, 4
      %s180 = smul.addr %s179, 4
      %s181 = scalar_lea.vmem %s0, %s180
      %p182 = pneg %p47
      %p183 = pneg %p44
      %p184 = scmp.lt.s32.totalorder %s19, 0
      %s185 = scalar_select %p184, %s19, 0
      %s186 = smul.addr %s185, 4
      %s187 = scalar_lea.vmem %s1, %s186
      %p188 = pneg %p73
      %p189 = pneg %p70
      %p190 = scmp.lt.s32.totalorder %s19, 0
      %s191 = scalar_select %p190, %s19, 0
      %s192 = scalar_lea.vmem %s2, %s191
      %p193 = pneg %p99
      %p194 = pneg %p96
      %p195 = pneg %p127
      %p196 = pneg %p124
      %s197 = smul.u32 8, %s18
      %p198 = scmp.lt.s32.totalorder %s197, 15
      %s199 = scalar_select %p198, %s197, 15
      %p200 = scmp.lt.s32.totalorder %s19, 0
      %s201 = scalar_select %p200, %s19, 0
      %s202 = sadd.s32 %s201, %s199
      %s203 = smul.addr %s202, 8
      %s204 = scalar_lea.vmem %s3, %s203
      %s205 = smul.u32 8, %s18
      %p206 = scmp.lt.s32.totalorder %s205, 15
      %s207 = scalar_select %p206, %s205, 15
      %s208 = smul.addr %s207, 4
      %s209 = smul.addr %s208, 4
      %s210 = scalar_lea.vmem %s0, %s209
      %s211 = smul.u32 8, %s18
      %p212 = scmp.lt.s32.totalorder %s19, 0
      %s213 = scalar_select %p212, %s19, 0
      %s214 = smul.addr %s213, 4
      %s215 = scalar_lea.vmem %s1, %s214
      %p216 = scmp.lt.s32.totalorder %s19, 0
      %s217 = scalar_select %p216, %s19, 0
      %s218 = scalar_lea.vmem %s2, %s217
      %s219 = smul.u32 8, %s18
      %p220 = scmp.lt.s32.totalorder %s219, 15
      %s221 = scalar_select %p220, %s219, 15
      %p222 = scmp.lt.s32.totalorder %s19, 0
      %s223 = scalar_select %p222, %s19, 0
      %s224 = sadd.s32 %s223, %s221
      %s225 = smul.addr %s224, 8
      %s226 = scalar_lea.vmem %s3, %s225
      %s227 = smul.u32 8, %s18
      %v229 = vld [vmem:[%s210] sm:$0xff]
      %v230 = vld [vmem:[%s210 + $0x8] sm:$0xff]
      %v231 = vld [vmem:[%s210 + $0x10] sm:$0xff]
      %v232 = vld [vmem:[%s210 + $0x18] sm:$0xff]
      %v233 = vld [vmem:[%s210 + $0x20] sm:$0xff]
      %v234 = vld [vmem:[%s210 + $0x28] sm:$0xff]
      %v235 = vld [vmem:[%s210 + $0x30] sm:$0xff]
      %v236 = vld [vmem:[%s210 + $0x38] sm:$0xff]
      %v237 = vld [vmem:[%s210 + $0x40] sm:$0xff]
      %v238 = vld [vmem:[%s210 + $0x48] sm:$0xff]
      %v239 = vld [vmem:[%s210 + $0x50] sm:$0xff]
      %v240 = vld [vmem:[%s210 + $0x58] sm:$0xff]
      %v241 = vld [vmem:[%s210 + $0x60] sm:$0xff]
      %v242 = vld [vmem:[%s210 + $0x68] sm:$0xff]
      %v243 = vld [vmem:[%s210 + $0x70] sm:$0xff]
      %v244 = vld [vmem:[%s210 + $0x78] sm:$0xff]
      %v245 = vld [vmem:[%s215] sm:$0xf]
      %v246 = vld [vmem:[%s215 + $0x4] sm:$0xf]
      %v247 = vld [vmem:[%s215 + $0x8] sm:$0xf]
      %v248 = vld [vmem:[%s215 + $0xc] sm:$0xf]
      %v249 = vld [vmem:[%s215 + $0x10] sm:$0xf]
      %v250 = vld [vmem:[%s215 + $0x14] sm:$0xf]
      %v251 = vld [vmem:[%s215 + $0x18] sm:$0xf]
      %v252 = vld [vmem:[%s215 + $0x1c] sm:$0xf]
      %v253 = vld [vmem:[%s215 + $0x20] sm:$0xf]
      %v254 = vld [vmem:[%s215 + $0x24] sm:$0xf]
      %v255 = vld [vmem:[%s215 + $0x28] sm:$0xf]
      %v256 = vld [vmem:[%s215 + $0x2c] sm:$0xf]
      %v257 = vld [vmem:[%s215 + $0x30] sm:$0xf]
      %v258 = vld [vmem:[%s215 + $0x34] sm:$0xf]
      %v259 = vld [vmem:[%s215 + $0x38] sm:$0xf]
      %v260 = vld [vmem:[%s215 + $0x3c] sm:$0xf]
      %v261 = vld [vmem:[%s215 + $0x40] sm:$0xf]
      %v262 = vld [vmem:[%s215 + $0x44] sm:$0xf]
      %v263 = vld [vmem:[%s215 + $0x48] sm:$0xf]
      %v264 = vld [vmem:[%s215 + $0x4c] sm:$0xf]
      %v265 = vld [vmem:[%s215 + $0x50] sm:$0xf]
      %v266 = vld [vmem:[%s215 + $0x54] sm:$0xf]
      %v267 = vld [vmem:[%s215 + $0x58] sm:$0xf]
      %v268 = vld [vmem:[%s215 + $0x5c] sm:$0xf]
      %v269 = vld [vmem:[%s215 + $0x60] sm:$0xf]
      %v270 = vld [vmem:[%s215 + $0x64] sm:$0xf]
      %v271 = vld [vmem:[%s215 + $0x68] sm:$0xf]
      %v272 = vld [vmem:[%s215 + $0x6c] sm:$0xf]
      %v273 = vld [vmem:[%s215 + $0x70] sm:$0xf]
      %v274 = vld [vmem:[%s215 + $0x74] sm:$0xf]
      %v275 = vld [vmem:[%s215 + $0x78] sm:$0xf]
      %v276 = vld [vmem:[%s215 + $0x7c] sm:$0xf]
      %v277 = vld [vmem:[%s215 + $0x80] sm:$0xf]
      %v278 = vld [vmem:[%s215 + $0x84] sm:$0xf]
      %v279 = vld [vmem:[%s215 + $0x88] sm:$0xf]
      %v280 = vld [vmem:[%s215 + $0x8c] sm:$0xf]
      %v281 = vld [vmem:[%s215 + $0x90] sm:$0xf]
      %v282 = vld [vmem:[%s215 + $0x94] sm:$0xf]
      %v283 = vld [vmem:[%s215 + $0x98] sm:$0xf]
      %v284 = vld [vmem:[%s215 + $0x9c] sm:$0xf]
      %v285 = vld [vmem:[%s215 + $0xa0] sm:$0xf]
      %v286 = vld [vmem:[%s215 + $0xa4] sm:$0xf]
      %v287 = vld [vmem:[%s215 + $0xa8] sm:$0xf]
      %v288 = vld [vmem:[%s215 + $0xac] sm:$0xf]
      %v289 = vld [vmem:[%s215 + $0xb0] sm:$0xf]
      %v290 = vld [vmem:[%s215 + $0xb4] sm:$0xf]
      %v291 = vld [vmem:[%s215 + $0xb8] sm:$0xf]
      %v292 = vld [vmem:[%s215 + $0xbc] sm:$0xf]
      %v293 = vld [vmem:[%s215 + $0xc0] sm:$0xf]
      %v294 = vld [vmem:[%s215 + $0xc4] sm:$0xf]
      %v295 = vld [vmem:[%s215 + $0xc8] sm:$0xf]
      %v296 = vld [vmem:[%s215 + $0xcc] sm:$0xf]
      %v297 = vld [vmem:[%s215 + $0xd0] sm:$0xf]
      %v298 = vld [vmem:[%s215 + $0xd4] sm:$0xf]
      %v299 = vld [vmem:[%s215 + $0xd8] sm:$0xf]
      %v300 = vld [vmem:[%s215 + $0xdc] sm:$0xf]
      %v301 = vld [vmem:[%s215 + $0xe0] sm:$0xf]
      %v302 = vld [vmem:[%s215 + $0xe4] sm:$0xf]
      %v303 = vld [vmem:[%s215 + $0xe8] sm:$0xf]
      %v304 = vld [vmem:[%s215 + $0xec] sm:$0xf]
      %v305 = vld [vmem:[%s215 + $0xf0] sm:$0xf]
      %v306 = vld [vmem:[%s215 + $0xf4] sm:$0xf]
      %v307 = vld [vmem:[%s215 + $0xf8] sm:$0xf]
      %v308 = vld [vmem:[%s215 + $0xfc] sm:$0xf]
      %v309 = vld [vmem:[%s218] sm:$0x1]
      %v311 = vlaneseq
      %v312 = vshrl.u32 %v311, 7
      %v313 = vsub.s32 0, %v312
      %v314 = vrot.slane %v309, %v313
      %v332 = vunpack.c.l.b16 %v229
      %v333 = vunpack.c.h.b16 %v229
      %v334 = vunpack.c.l.b16 %v230
      %v335 = vunpack.c.h.b16 %v230
      %v336 = vunpack.c.l.b16 %v231
      %v337 = vunpack.c.h.b16 %v231
      %v338 = vunpack.c.l.b16 %v232
      %v339 = vunpack.c.h.b16 %v232
      %v340 = vunpack.c.l.b16 %v233
      %v341 = vunpack.c.h.b16 %v233
      %v342 = vunpack.c.l.b16 %v234
      %v343 = vunpack.c.h.b16 %v234
      %v344 = vunpack.c.l.b16 %v235
      %v345 = vunpack.c.h.b16 %v235
      %v346 = vunpack.c.l.b16 %v236
      %v347 = vunpack.c.h.b16 %v236
      %v348 = vunpack.c.l.b16 %v237
      %v349 = vunpack.c.h.b16 %v237
      %v350 = vunpack.c.l.b16 %v238
      %v351 = vunpack.c.h.b16 %v238
      %v352 = vunpack.c.l.b16 %v239
      %v353 = vunpack.c.h.b16 %v239
      %v354 = vunpack.c.l.b16 %v240
      %v355 = vunpack.c.h.b16 %v240
      %v356 = vunpack.c.l.b16 %v241
      %v357 = vunpack.c.h.b16 %v241
      %v358 = vunpack.c.l.b16 %v242
      %v359 = vunpack.c.h.b16 %v242
      %v360 = vunpack.c.l.b16 %v243
      %v361 = vunpack.c.h.b16 %v243
      %v362 = vunpack.c.l.b16 %v244
      %v363 = vunpack.c.h.b16 %v244
      %v364 = vpack.c.b16 %v336, %v332
      %v365 = vpack.c.b16 %v337, %v333
      %v366 = vpack.c.b16 %v338, %v334
      %v367 = vpack.c.b16 %v339, %v335
      %v368 = vpack.c.b16 %v344, %v340
      %v369 = vpack.c.b16 %v345, %v341
      %v370 = vpack.c.b16 %v346, %v342
      %v371 = vpack.c.b16 %v347, %v343
      %v372 = vpack.c.b16 %v352, %v348
      %v373 = vpack.c.b16 %v353, %v349
      %v374 = vpack.c.b16 %v354, %v350
      %v375 = vpack.c.b16 %v355, %v351
      %v376 = vpack.c.b16 %v360, %v356
      %v377 = vpack.c.b16 %v361, %v357
      %v378 = vpack.c.b16 %v362, %v358
      %v379 = vpack.c.b16 %v363, %v359
      %v460 = vunpack.c.l.b16 %v245
      %v461 = vunpack.c.l.b16 %v246
      %v462 = vunpack.c.l.b16 %v247
      %v463 = vunpack.c.l.b16 %v248
      %v464 = vunpack.c.l.b16 %v249
      %v465 = vunpack.c.l.b16 %v250
      %v466 = vunpack.c.l.b16 %v251
      %v467 = vunpack.c.l.b16 %v252
      %v468 = vunpack.c.l.b16 %v253
      %v469 = vunpack.c.l.b16 %v254
      %v470 = vunpack.c.l.b16 %v255
      %v471 = vunpack.c.l.b16 %v256
      %v472 = vunpack.c.l.b16 %v257
      %v473 = vunpack.c.l.b16 %v258
      %v474 = vunpack.c.l.b16 %v259
      %v475 = vunpack.c.l.b16 %v260
      %v476 = vunpack.c.l.b16 %v261
      %v477 = vunpack.c.l.b16 %v262
      %v478 = vunpack.c.l.b16 %v263
      %v479 = vunpack.c.l.b16 %v264
      %v480 = vunpack.c.l.b16 %v265
      %v481 = vunpack.c.l.b16 %v266
      %v482 = vunpack.c.l.b16 %v267
      %v483 = vunpack.c.l.b16 %v268
      %v484 = vunpack.c.l.b16 %v269
      %v485 = vunpack.c.l.b16 %v270
      %v486 = vunpack.c.l.b16 %v271
      %v487 = vunpack.c.l.b16 %v272
      %v488 = vunpack.c.l.b16 %v273
      %v489 = vunpack.c.l.b16 %v274
      %v490 = vunpack.c.l.b16 %v275
      %v491 = vunpack.c.l.b16 %v276
      %v492 = vunpack.c.l.b16 %v277
      %v493 = vunpack.c.l.b16 %v278
      %v494 = vunpack.c.l.b16 %v279
      %v495 = vunpack.c.l.b16 %v280
      %v496 = vunpack.c.l.b16 %v281
      %v497 = vunpack.c.l.b16 %v282
      %v498 = vunpack.c.l.b16 %v283
      %v499 = vunpack.c.l.b16 %v284
      %v500 = vunpack.c.l.b16 %v285
      %v501 = vunpack.c.l.b16 %v286
      %v502 = vunpack.c.l.b16 %v287
      %v503 = vunpack.c.l.b16 %v288
      %v504 = vunpack.c.l.b16 %v289
      %v505 = vunpack.c.l.b16 %v290
      %v506 = vunpack.c.l.b16 %v291
      %v507 = vunpack.c.l.b16 %v292
      %v508 = vunpack.c.l.b16 %v293
      %v509 = vunpack.c.l.b16 %v294
      %v510 = vunpack.c.l.b16 %v295
      %v511 = vunpack.c.l.b16 %v296
      %v512 = vunpack.c.l.b16 %v297
      %v513 = vunpack.c.l.b16 %v298
      %v514 = vunpack.c.l.b16 %v299
      %v515 = vunpack.c.l.b16 %v300
      %v516 = vunpack.c.l.b16 %v301
      %v517 = vunpack.c.l.b16 %v302
      %v518 = vunpack.c.l.b16 %v303
      %v519 = vunpack.c.l.b16 %v304
      %v520 = vunpack.c.l.b16 %v305
      %v521 = vunpack.c.l.b16 %v306
      %v522 = vunpack.c.l.b16 %v307
      %v523 = vunpack.c.l.b16 %v308
      %v524 = vpack.c.b16 %v461, %v460
      %v525 = vpack.c.b16 %v463, %v462
      %v526 = vpack.c.b16 %v465, %v464
      %v527 = vpack.c.b16 %v467, %v466
      %v528 = vpack.c.b16 %v469, %v468
      %v529 = vpack.c.b16 %v471, %v470
      %v530 = vpack.c.b16 %v473, %v472
      %v531 = vpack.c.b16 %v475, %v474
      %v532 = vpack.c.b16 %v477, %v476
      %v533 = vpack.c.b16 %v479, %v478
      %v534 = vpack.c.b16 %v481, %v480
      %v535 = vpack.c.b16 %v483, %v482
      %v536 = vpack.c.b16 %v485, %v484
      %v537 = vpack.c.b16 %v487, %v486
      %v538 = vpack.c.b16 %v489, %v488
      %v539 = vpack.c.b16 %v491, %v490
      %v540 = vpack.c.b16 %v493, %v492
      %v541 = vpack.c.b16 %v495, %v494
      %v542 = vpack.c.b16 %v497, %v496
      %v543 = vpack.c.b16 %v499, %v498
      %v544 = vpack.c.b16 %v501, %v500
      %v545 = vpack.c.b16 %v503, %v502
      %v546 = vpack.c.b16 %v505, %v504
      %v547 = vpack.c.b16 %v507, %v506
      %v548 = vpack.c.b16 %v509, %v508
      %v549 = vpack.c.b16 %v511, %v510
      %v550 = vpack.c.b16 %v513, %v512
      %v551 = vpack.c.b16 %v515, %v514
      %v552 = vpack.c.b16 %v517, %v516
      %v553 = vpack.c.b16 %v519, %v518
      %v554 = vpack.c.b16 %v521, %v520
      %v555 = vpack.c.b16 %v523, %v522
      %588 = vmatprep.subr.bf16.mxu0 0
      %589 = vmatpush1.bf16.msra.mxu0 %v524
      %590 = vmatprep.subr.bf16.mxu0 0
      %591 = vmatpush1.bf16.msra.mxu0 %v525
      %592 = vmatprep.subr.bf16.mxu0 0
      %593 = vmatpush1.bf16.msra.mxu0 %v526
      %594 = vmatprep.subr.bf16.mxu0 0
      %595 = vmatpush1.bf16.msra.mxu0 %v527
      %596 = vmatprep.subr.bf16.mxu0 0
      %597 = vmatpush1.bf16.msra.mxu0 %v528
      %598 = vmatprep.subr.bf16.mxu0 0
      %599 = vmatpush1.bf16.msra.mxu0 %v529
      %600 = vmatprep.subr.bf16.mxu0 0
      %601 = vmatpush1.bf16.msra.mxu0 %v530
      %602 = vmatprep.subr.bf16.mxu0 0
      %603 = vmatpush1.bf16.msra.mxu0 %v531
      %604 = vmatprep.subr.bf16.mxu0 0
      %605 = vmatpush1.bf16.msra.mxu0 %v532
      %606 = vmatprep.subr.bf16.mxu0 0
      %607 = vmatpush1.bf16.msra.mxu0 %v533
      %608 = vmatprep.subr.bf16.mxu0 0
      %609 = vmatpush1.bf16.msra.mxu0 %v534
      %610 = vmatprep.subr.bf16.mxu0 0
      %611 = vmatpush1.bf16.msra.mxu0 %v535
      %612 = vmatprep.subr.bf16.mxu0 0
      %613 = vmatpush1.bf16.msra.mxu0 %v536
      %614 = vmatprep.subr.bf16.mxu0 0
      %615 = vmatpush1.bf16.msra.mxu0 %v537
      %616 = vmatprep.subr.bf16.mxu0 0
      %617 = vmatpush1.bf16.msra.mxu0 %v538
      %618 = vmatprep.subr.bf16.mxu0 0
      %619 = vmatpush1.bf16.msra.mxu0 %v539
      %620 = vmatprep.mubr.bf16.mxu0 %v365
      %621 = vmatmul.mubr.bf16.gmra.mrb[0].mxu0 %v364
      %v622 = vpop.f32.mrb[0].mxu0
      %v623 = vadd.f32 %v314, %v622
      %v624 = vpop.f32.mrb[0].mxu0
      %v625 = vpop.f32.mrb[0].mxu0
      %v626 = vadd.f32 %v314, %v625
      %v627 = vpop.f32.mrb[0].mxu0
      %628 = vmatprep.mubr.bf16.mxu0 %v369
      %629 = vmatmul.mubr.bf16.gmra.mrb[0].mxu0 %v368
      %v630 = vpop.f32.mrb[0].mxu0
      %v631 = vadd.f32 %v314, %v630
      %v632 = vpop.f32.mrb[0].mxu0
      %v633 = vpop.f32.mrb[0].mxu0
      %v634 = vadd.f32 %v314, %v633
      %v635 = vpop.f32.mrb[0].mxu0
      %636 = vmatprep.mubr.bf16.mxu0 %v373
      %637 = vmatmul.mubr.bf16.gmra.mrb[0].mxu0 %v372
      %v638 = vpop.f32.mrb[0].mxu0
      %v639 = vadd.f32 %v314, %v638
      %v640 = vpop.f32.mrb[0].mxu0
      %v641 = vpop.f32.mrb[0].mxu0
      %v642 = vadd.f32 %v314, %v641
      %v643 = vpop.f32.mrb[0].mxu0
      %644 = vmatprep.mubr.bf16.mxu0 %v377
      %645 = vmatmul.mubr.bf16.gmra.mrb[0].mxu0 %v376
      %v646 = vpop.f32.mrb[0].mxu0
      %v647 = vadd.f32 %v314, %v646
      %v648 = vpop.f32.mrb[0].mxu0
      %v649 = vpop.f32.mrb[0].mxu0
      %v650 = vadd.f32 %v314, %v649
      %v651 = vpop.f32.mrb[0].mxu0
      %652 = vdwg.mxu0
      %653 = vmatprep.subr.bf16.mxu0 0
      %654 = vmatpush1.bf16.msra.mxu0 %v540
      %655 = vmatprep.subr.bf16.mxu0 0
      %656 = vmatpush1.bf16.msra.mxu0 %v541
      %657 = vmatprep.subr.bf16.mxu0 0
      %658 = vmatpush1.bf16.msra.mxu0 %v542
      %659 = vmatprep.subr.bf16.mxu0 0
      %660 = vmatpush1.bf16.msra.mxu0 %v543
      %661 = vmatprep.subr.bf16.mxu0 0
      %662 = vmatpush1.bf16.msra.mxu0 %v544
      %663 = vmatprep.subr.bf16.mxu0 0
      %664 = vmatpush1.bf16.msra.mxu0 %v545
      %665 = vmatprep.subr.bf16.mxu0 0
      %666 = vmatpush1.bf16.msra.mxu0 %v546
      %667 = vmatprep.subr.bf16.mxu0 0
      %668 = vmatpush1.bf16.msra.mxu0 %v547
      %669 = vmatprep.subr.bf16.mxu0 0
      %670 = vmatpush1.bf16.msra.mxu0 %v548
      %671 = vmatprep.subr.bf16.mxu0 0
      %672 = vmatpush1.bf16.msra.mxu0 %v549
      %673 = vmatprep.subr.bf16.mxu0 0
      %674 = vmatpush1.bf16.msra.mxu0 %v550
      %675 = vmatprep.subr.bf16.mxu0 0
      %676 = vmatpush1.bf16.msra.mxu0 %v551
      %677 = vmatprep.subr.bf16.mxu0 0
      %678 = vmatpush1.bf16.msra.mxu0 %v552
      %679 = vmatprep.subr.bf16.mxu0 0
      %680 = vmatpush1.bf16.msra.mxu0 %v553
      %681 = vmatprep.subr.bf16.mxu0 0
      %682 = vmatpush1.bf16.msra.mxu0 %v554
      %683 = vmatprep.subr.bf16.mxu0 0
      %684 = vmatpush1.bf16.msra.mxu0 %v555
      %685 = vmatprep.mubr.bf16.mxu0 %v367
      %686 = vmatmul.mubr.bf16.gmra.mrb[0].mxu0 %v366
      %v687 = vpop.f32.mrb[0].mxu0
      %v688 = vadd.f32 %v623, %v687
      %v689 = vpop.f32.mrb[0].mxu0
      %v690 = vpop.f32.mrb[0].mxu0
      %v691 = vadd.f32 %v626, %v690
      %v692 = vpop.f32.mrb[0].mxu0
      %693 = vmatprep.mubr.bf16.mxu0 %v371
      %694 = vmatmul.mubr.bf16.gmra.mrb[0].mxu0 %v370
      %v695 = vpop.f32.mrb[0].mxu0
      %v696 = vadd.f32 %v631, %v695
      %v697 = vpop.f32.mrb[0].mxu0
      %v698 = vpop.f32.mrb[0].mxu0
      %v699 = vadd.f32 %v634, %v698
      %v700 = vpop.f32.mrb[0].mxu0
      %701 = vmatprep.mubr.bf16.mxu0 %v375
      %702 = vmatmul.mubr.bf16.gmra.mrb[0].mxu0 %v374
      %v703 = vpop.f32.mrb[0].mxu0
      %v704 = vadd.f32 %v639, %v703
      %v705 = vpop.f32.mrb[0].mxu0
      %v706 = vpop.f32.mrb[0].mxu0
      %v707 = vadd.f32 %v642, %v706
      %v708 = vpop.f32.mrb[0].mxu0
      %709 = vmatprep.mubr.bf16.mxu0 %v379
      %710 = vmatmul.mubr.bf16.gmra.mrb[0].mxu0 %v378
      %v711 = vpop.f32.mrb[0].mxu0
      %v712 = vadd.f32 %v647, %v711
      %v713 = vpop.f32.mrb[0].mxu0
      %v714 = vpop.f32.mrb[0].mxu0
      %v715 = vadd.f32 %v650, %v714
      %v716 = vpop.f32.mrb[0].mxu0
      %717 = vdwg.mxu0
      %v718 = vmax.f32 %v688, 0.0
      %v719 = vmax.f32 %v691, 0.0
      %v720 = vmax.f32 %v696, 0.0
      %v721 = vmax.f32 %v699, 0.0
      %v722 = vmax.f32 %v704, 0.0
      %v723 = vmax.f32 %v707, 0.0
      %v724 = vmax.f32 %v712, 0.0
      %v725 = vmax.f32 %v715, 0.0
      %726 = vst [vmem:[%s226] sm:$0xff] %v718
      %727 = vst [vmem:[%s226 + $0x8] sm:$0xff] %v719
      %728 = vst [vmem:[%s226 + $0x10] sm:$0xff] %v720
      %729 = vst [vmem:[%s226 + $0x18] sm:$0xff] %v721
      %730 = vst [vmem:[%s226 + $0x20] sm:$0xff] %v722
      %731 = vst [vmem:[%s226 + $0x28] sm:$0xff] %v723
      %732 = vst [vmem:[%s226 + $0x30] sm:$0xff] %v724
      %733 = vst [vmem:[%s226 + $0x38] sm:$0xff] %v725
      %s734 = smul.u32 8, %s18
      %p735 = scmp.lt.s32.totalorder %s734, 15
      %s736 = scalar_select %p735, %s734, 15
      %p737 = scmp.lt.s32.totalorder %s19, 0
      %s738 = scalar_select %p737, %s19, 0
      %s739 = sadd.s32 %s738, %s736
      %s740 = smul.addr %s739, 8
      %s741 = scalar_lea.vmem %s3, %s740
      // Predicated region
      $region33: #{forward.21} parent=31 // pred_check
        %p742 = pneg %p124
      $region34: #{forward.21} parent=31 // pred_check_branch
        %744 = sbr.rel (%p742) target = $region36
      $region35: #{forward.21} parent=31 // pred_region
        %s745 = smul.u32 8, %s18
      $region36: #{forward.21} parent=31 // pred_fallthru
        _
    $region32: #{forward.21} parent=5 // pred_fallthru
      _
    %p746 = scmp.le.s32.totalorder 2, %s9
    // Predicated region
    $region37: #{forward.21} parent=5 // pred_check
      %p747 = pneg %p746
    $region38: #{forward.21} parent=5 // pred_check_branch
      %749 = sbr.rel (%p747) target = $region40
    $region39: #{forward.21} parent=5 // pred_region
      %s750 = ssub.s32 %s9, 2
      // Predicated region
      $region41: #{forward.21} parent=39 // pred_check
        %p751 = pneg %p130
      $region42: #{forward.21} parent=39 // pred_check_branch
        %753 = sbr.rel (%p751) target = $region44
      $region43: #{forward.21} parent=39 // pred_region
        %s754 = smul.u32 8, %s20
        %p755 = scmp.lt.s32.totalorder %s754, 15
        %s756 = scalar_select %p755, %s754, 15
        %p757 = scmp.lt.s32.totalorder %s21, 0
        %s758 = scalar_select %p757, %s21, 0
        %s759 = sadd.s32 %s758, %s756
        %s760 = smul.addr %s759, 8
        %s761 = scalar_lea.vmem %s3, %s760
      $region44: #{forward.21} parent=39 // pred_fallthru
        _
    $region40: #{forward.21} parent=5 // pred_fallthru
      _
  $region6: #{forward.21} parent=0 // loop_footer
    %s13 = sadd.s32 1, %s9
  $region7: #{forward.21} parent=0 // loop_footer_branch
    %8 = sbr.rel target = $region3
  $region8: #{forward.21} parent=0 // loop_exit
    _

// kernel: forward.22
$region0: #{forward.22}
  #allocation0 [shape = 'u32[]', space=smem, size = 0x4, offset = 0x4, fixed_abs, tag = 'smem constant byte address 0x4 - core index']
  #allocation1 [shape = 'u32[144,128]{1,0:T(1,128)}', space=vmem, size = 0x12000, scoped, tag = 'internal scratch']
  %s0 = inlined_call_operand.vmem [shape: bf16[512,256], index: 0, kind: input, shape index: {}]
  %s1 = inlined_call_operand.vmem [shape: bf16[256,128], index: 1, kind: input, shape index: {}]
  %s2 = inlined_call_operand.vmem [shape: f32[1,128], index: 2, kind: input, shape index: {}]
  %s3 = inlined_call_operand.vmem [shape: f32[512,128], index: 3, kind: output, shape index: {}]
  %s4 = sld [smem:[#allocation0]]
  $region45: #{forward.22} parent=0
    _
  %s6 = ssub.s32 1, %s4
  %s7 = scalar_select 0, %s6, %s4
  loop: start=0, step=1, limit=4
  $region2: #{forward.22} parent=0 // loop_pre_header
    _
  $region3: #{forward.22} parent=0 // loop_header
    %s9 = sphi 0, %s13
    %p10 = scmp.ge.s32.totalorder %s9, 4
    %s16 = sphi 0, %s28
    %s17 = sphi 0, %s24
    %s18 = sphi 0, %s16
    %s19 = sphi 0, %s17
    %s20 = sphi 0, %s18
    %s21 = sphi 0, %s19
    %s31 = sphi 0, %s33
    %s34 = sphi 0, %s31
    %s35 = sphi 0, %s34
    %s51 = sphi 0, %s35
    %s57 = sphi 0, %s59
    %s60 = sphi 0, %s57
    %s61 = sphi 0, %s60
    %s77 = sphi 0, %s61
    %s83 = sphi 0, %s85
    %s86 = sphi 0, %s83
    %s87 = sphi 0, %s86
    %s103 = sphi 0, %s87
    %s111 = sphi 0, %s113
    %s114 = sphi 0, %s111
    %s115 = sphi 0, %s114
    %s131 = sphi 0, %s115
  $region4: #{forward.22} parent=0 // loop_header_branch
    %12 = sbr.rel (%p10) target = $region8
  $region5: #{forward.22} parent=0 // loop_body
    %s14 = ssub.s32 %s9, 1
    %s15 = ssub.s32 %s9, 2
    %s22 = sadd.s32 1, %s17
    %p23 = scmp.ge.s32.totalorder %s22, 1
    %s24 = scalar_select %p23, 0, %s22
    %s25 = sadd.s32 1, %s16
    %s26 = scalar_select %p23, %s25, %s16
    %p27 = scmp.ge.s32.totalorder %s26, 2
    %s28 = scalar_select %p27, 0, %s26
    %s29 = ssub.s32 %s16, %s28
    %p30 = scmp.eq.s32.totalorder %s29, 0
    %s32 = sadd.s32 %s31, 1
    %s33 = scalar_select %p30, %s31, %s32
    %p36 = pneg %p30
    %p37 = scmp.eq.s32.totalorder %s9, 1
    %p38 = por %p36, %p37
    %p39 = scmp.ne.s32.totalorder %s31, %s34
    %p40 = scmp.eq.s32.totalorder %s9, 0
    %p41 = por %p39, %p40
    %p42 = scmp.ne.s32.totalorder %s31, %s34
    %p43 = scmp.eq.s32.totalorder %s14, 1
    %p44 = por %p42, %p43
    %p45 = scmp.ne.s32.totalorder %s34, %s35
    %p46 = scmp.eq.s32.totalorder %s14, 0
    %p47 = por %p45, %p46
    %p48 = scmp.ne.s32.totalorder %s34, %s35
    %p49 = scmp.eq.s32.totalorder %s15, 1
    %p50 = por %p48, %p49
    %p52 = scmp.ne.s32.totalorder %s35, %s51
    %p53 = scmp.eq.s32.totalorder %s15, 0
    %p54 = por %p52, %p53
    %s55 = ssub.s32 %s17, %s24
    %p56 = scmp.eq.s32.totalorder %s55, 0
    %s58 = sadd.s32 %s57, 1
    %s59 = scalar_select %p56, %s57, %s58
    %p62 = pneg %p56
    %p63 = scmp.eq.s32.totalorder %s9, 1
    %p64 = por %p62, %p63
    %p65 = scmp.ne.s32.totalorder %s57, %s60
    %p66 = scmp.eq.s32.totalorder %s9, 0
    %p67 = por %p65, %p66
    %p68 = scmp.ne.s32.totalorder %s57, %s60
    %p69 = scmp.eq.s32.totalorder %s14, 1
    %p70 = por %p68, %p69
    %p71 = scmp.ne.s32.totalorder %s60, %s61
    %p72 = scmp.eq.s32.totalorder %s14, 0
    %p73 = por %p71, %p72
    %p74 = scmp.ne.s32.totalorder %s60, %s61
    %p75 = scmp.eq.s32.totalorder %s15, 1
    %p76 = por %p74, %p75
    %p78 = scmp.ne.s32.totalorder %s61, %s77
    %p79 = scmp.eq.s32.totalorder %s15, 0
    %p80 = por %p78, %p79
    %s81 = ssub.s32 %s17, %s24
    %p82 = scmp.eq.s32.totalorder %s81, 0
    %s84 = sadd.s32 %s83, 1
    %s85 = scalar_select %p82, %s83, %s84
    %p88 = pneg %p82
    %p89 = scmp.eq.s32.totalorder %s9, 1
    %p90 = por %p88, %p89
    %p91 = scmp.ne.s32.totalorder %s83, %s86
    %p92 = scmp.eq.s32.totalorder %s9, 0
    %p93 = por %p91, %p92
    %p94 = scmp.ne.s32.totalorder %s83, %s86
    %p95 = scmp.eq.s32.totalorder %s14, 1
    %p96 = por %p94, %p95
    %p97 = scmp.ne.s32.totalorder %s86, %s87
    %p98 = scmp.eq.s32.totalorder %s14, 0
    %p99 = por %p97, %p98
    %p100 = scmp.ne.s32.totalorder %s86, %s87
    %p101 = scmp.eq.s32.totalorder %s15, 1
    %p102 = por %p100, %p101
    %p104 = scmp.ne.s32.totalorder %s87, %s103
    %p105 = scmp.eq.s32.totalorder %s15, 0
    %p106 = por %p104, %p105
    %s107 = ssub.s32 %s16, %s28
    %s108 = ssub.s32 %s17, %s24
    %s109 = sor.u32 %s107, %s108
    %p110 = scmp.eq.s32.totalorder %s109, 0
    %s112 = sadd.s32 %s111, 1
    %s113 = scalar_select %p110, %s111, %s112
    %p116 = pneg %p110
    %p117 = scmp.eq.s32.totalorder %s9, 1
    %p118 = por %p116, %p117
    %p119 = scmp.ne.s32.totalorder %s111, %s114
    %p120 = scmp.eq.s32.totalorder %s9, 0
    %p121 = por %p119, %p120
    %p122 = scmp.ne.s32.totalorder %s111, %s114
    %p123 = scmp.eq.s32.totalorder %s14, 1
    %p124 = por %p122, %p123
    %p125 = scmp.ne.s32.totalorder %s114, %s115
    %p126 = scmp.eq.s32.totalorder %s14, 0
    %p127 = por %p125, %p126
    %p128 = scmp.ne.s32.totalorder %s114, %s115
    %p129 = scmp.eq.s32.totalorder %s15, 1
    %p130 = por %p128, %p129
    %p132 = scmp.ne.s32.totalorder %s115, %s131
    %p133 = scmp.eq.s32.totalorder %s15, 0
    %p134 = por %p132, %p133
    %p135 = scmp.le.s32.totalorder 1, %s9
    %p136 = scmp.lt.s32.totalorder %s9, 3
    %p137 = pnand %p135, %p136
    %p138 = pneg %p137
    // Predicated region
    $region9: #{forward.22} parent=5 // pred_check
      _
    $region10: #{forward.22} parent=5 // pred_check_branch
      %140 = sbr.rel (%p137) target = $region12
    $region11: #{forward.22} parent=5 // pred_region
      %s141 = ssub.s32 %s9, 1
      // Predicated region
      $region13: #{forward.22} parent=11 // pred_check
        %p142 = pneg %p73
      $region14: #{forward.22} parent=11 // pred_check_branch
        %144 = sbr.rel (%p142) target = $region16
      $region15: #{forward.22} parent=11 // pred_region
        %p145 = scmp.lt.s32.totalorder %s19, 0
        %s146 = scalar_select %p145, %s19, 0
        %s147 = smul.addr %s146, 4
        %s148 = scalar_lea.vmem %s1, %s147
      $region16: #{forward.22} parent=11 // pred_fallthru
        _
      // Predicated region
      $region17: #{forward.22} parent=11 // pred_check
        %p149 = pneg %p99
      $region18: #{forward.22} parent=11 // pred_check_branch
        %151 = sbr.rel (%p149) target = $region20
      $region19: #{forward.22} parent=11 // pred_region
        %p152 = scmp.lt.s32.totalorder %s19, 0
        %s153 = scalar_select %p152, %s19, 0
        %s154 = scalar_lea.vmem %s2, %s153
      $region20: #{forward.22} parent=11 // pred_fallthru
        _
    $region12: #{forward.22} parent=5 // pred_fallthru
      _
    %p155 = scmp.lt.s32.totalorder %s9, 2
    // Predicated region
    $region21: #{forward.22} parent=5 // pred_check
      %p156 = pneg %p155
    $region22: #{forward.22} parent=5 // pred_check_branch
      %158 = sbr.rel (%p156) target = $region24
    $region23: #{forward.22} parent=5 // pred_region
      // Predicated region
      $region25: #{forward.22} parent=23 // pred_check
        %p159 = pneg %p41
      $region26: #{forward.22} parent=23 // pred_check_branch
        %161 = sbr.rel (%p159) target = $region28
      $region27: #{forward.22} parent=23 // pred_region
        %s162 = smul.u32 32, %s16
        %p163 = scmp.lt.s32.totalorder %s162, 63
        %s164 = scalar_select %p163, %s162, 63
        %s165 = smul.addr %s164, 2
        %s166 = smul.addr %s165, 4
        %s167 = scalar_lea.vmem %s0, %s166
        %s168 = smul.u32 32, %s16
      $region28: #{forward.22} parent=23 // pred_fallthru
        _
    $region24: #{forward.22} parent=5 // pred_fallthru
      _
    %p169 = scmp.le.s32.totalorder 1, %s9
    %p170 = scmp.lt.s32.totalorder %s9, 3
    %p171 = pnand %p169, %p170
    %p172 = pneg %p171
    // Predicated region
    $region29: #{forward.22} parent=5 // pred_check
      _
    $region30: #{forward.22} parent=5 // pred_check_branch
      %174 = sbr.rel (%p171) target = $region32
    $region31: #{forward.22} parent=5 // pred_region
      %s175 = ssub.s32 %s9, 1
      %s176 = smul.u32 32, %s18
      %p177 = scmp.lt.s32.totalorder %s176, 63
      %s178 = scalar_select %p177, %s176, 63
      %s179 = smul.addr %s178, 2
      %s180 = smul.addr %s179, 4
      %s181 = scalar_lea.vmem %s0, %s180
      %p182 = pneg %p47
      %p183 = pneg %p44
      %p184 = scmp.lt.s32.totalorder %s19, 0
      %s185 = scalar_select %p184, %s19, 0
      %s186 = smul.addr %s185, 4
      %s187 = scalar_lea.vmem %s1, %s186
      %p188 = pneg %p73
      %p189 = pneg %p70
      %p190 = scmp.lt.s32.totalorder %s19, 0
      %s191 = scalar_select %p190, %s19, 0
      %s192 = scalar_lea.vmem %s2, %s191
      %p193 = pneg %p99
      %p194 = pneg %p96
      %p195 = pneg %p127
      %p196 = pneg %p124
      %s197 = smul.u32 32, %s18
      %p198 = scmp.lt.s32.totalorder %s197, 63
      %s199 = scalar_select %p198, %s197, 63
      %p200 = scmp.lt.s32.totalorder %s19, 0
      %s201 = scalar_select %p200, %s19, 0
      %s202 = sadd.s32 %s201, %s199
      %s203 = smul.addr %s202, 8
      %s204 = scalar_lea.vmem %s3, %s203
      %s205 = smul.u32 32, %s18
      %p206 = scmp.lt.s32.totalorder %s205, 63
      %s207 = scalar_select %p206, %s205, 63
      %s208 = smul.addr %s207, 2
      %s209 = smul.addr %s208, 4
      %s210 = scalar_lea.vmem %s0, %s209
      %s211 = smul.u32 32, %s18
      %p212 = scmp.lt.s32.totalorder %s19, 0
      %s213 = scalar_select %p212, %s19, 0
      %s214 = smul.addr %s213, 4
      %s215 = scalar_lea.vmem %s1, %s214
      %p216 = scmp.lt.s32.totalorder %s19, 0
      %s217 = scalar_select %p216, %s19, 0
      %s218 = scalar_lea.vmem %s2, %s217
      %s219 = smul.u32 32, %s18
      %p220 = scmp.lt.s32.totalorder %s219, 63
      %s221 = scalar_select %p220, %s219, 63
      %p222 = scmp.lt.s32.totalorder %s19, 0
      %s223 = scalar_select %p222, %s19, 0
      %s224 = sadd.s32 %s223, %s221
      %s225 = smul.addr %s224, 8
      %s226 = scalar_lea.vmem %s3, %s225
      %s227 = smul.u32 32, %s18
      %v229 = vld [vmem:[%s210] sm:$0xff]
      %v230 = vld [vmem:[%s210 + $0x8] sm:$0xff]
      %v231 = vld [vmem:[%s210 + $0x10] sm:$0xff]
      %v232 = vld [vmem:[%s210 + $0x18] sm:$0xff]
      %v233 = vld [vmem:[%s210 + $0x20] sm:$0xff]
      %v234 = vld [vmem:[%s210 + $0x28] sm:$0xff]
      %v235 = vld [vmem:[%s210 + $0x30] sm:$0xff]
      %v236 = vld [vmem:[%s210 + $0x38] sm:$0xff]
      %v237 = vld [vmem:[%s210 + $0x40] sm:$0xff]
      %v238 = vld [vmem:[%s210 + $0x48] sm:$0xff]
      %v239 = vld [vmem:[%s210 + $0x50] sm:$0xff]
      %v240 = vld [vmem:[%s210 + $0x58] sm:$0xff]
      %v241 = vld [vmem:[%s210 + $0x60] sm:$0xff]
      %v242 = vld [vmem:[%s210 + $0x68] sm:$0xff]
      %v243 = vld [vmem:[%s210 + $0x70] sm:$0xff]
      %v244 = vld [vmem:[%s210 + $0x78] sm:$0xff]
      %v245 = vld [vmem:[%s210 + $0x80] sm:$0xff]
      %v246 = vld [vmem:[%s210 + $0x88] sm:$0xff]
      %v247 = vld [vmem:[%s210 + $0x90] sm:$0xff]
      %v248 = vld [vmem:[%s210 + $0x98] sm:$0xff]
      %v249 = vld [vmem:[%s210 + $0xa0] sm:$0xff]
      %v250 = vld [vmem:[%s210 + $0xa8] sm:$0xff]
      %v251 = vld [vmem:[%s210 + $0xb0] sm:$0xff]
      %v252 = vld [vmem:[%s210 + $0xb8] sm:$0xff]
      %v253 = vld [vmem:[%s210 + $0xc0] sm:$0xff]
      %v254 = vld [vmem:[%s210 + $0xc8] sm:$0xff]
      %v255 = vld [vmem:[%s210 + $0xd0] sm:$0xff]
      %v256 = vld [vmem:[%s210 + $0xd8] sm:$0xff]
      %v257 = vld [vmem:[%s210 + $0xe0] sm:$0xff]
      %v258 = vld [vmem:[%s210 + $0xe8] sm:$0xff]
      %v259 = vld [vmem:[%s210 + $0xf0] sm:$0xff]
      %v260 = vld [vmem:[%s210 + $0xf8] sm:$0xff]
      %v261 = vld [vmem:[%s215] sm:$0xf]
      %v262 = vld [vmem:[%s215 + $0x4] sm:$0xf]
      %v263 = vld [vmem:[%s215 + $0x8] sm:$0xf]
      %v264 = vld [vmem:[%s215 + $0xc] sm:$0xf]
      %v265 = vld [vmem:[%s215 + $0x10] sm:$0xf]
      %v266 = vld [vmem:[%s215 + $0x14] sm:$0xf]
      %v267 = vld [vmem:[%s215 + $0x18] sm:$0xf]
      %v268 = vld [vmem:[%s215 + $0x1c] sm:$0xf]
      %v269 = vld [vmem:[%s215 + $0x20] sm:$0xf]
      %v270 = vld [vmem:[%s215 + $0x24] sm:$0xf]
      %v271 = vld [vmem:[%s215 + $0x28] sm:$0xf]
      %v272 = vld [vmem:[%s215 + $0x2c] sm:$0xf]
      %v273 = vld [vmem:[%s215 + $0x30] sm:$0xf]
      %v274 = vld [vmem:[%s215 + $0x34] sm:$0xf]
      %v275 = vld [vmem:[%s215 + $0x38] sm:$0xf]
      %v276 = vld [vmem:[%s215 + $0x3c] sm:$0xf]
      %v277 = vld [vmem:[%s215 + $0x40] sm:$0xf]
      %v278 = vld [vmem:[%s215 + $0x44] sm:$0xf]
      %v279 = vld [vmem:[%s215 + $0x48] sm:$0xf]
      %v280 = vld [vmem:[%s215 + $0x4c] sm:$0xf]
      %v281 = vld [vmem:[%s215 + $0x50] sm:$0xf]
      %v282 = vld [vmem:[%s215 + $0x54] sm:$0xf]
      %v283 = vld [vmem:[%s215 + $0x58] sm:$0xf]
      %v284 = vld [vmem:[%s215 + $0x5c] sm:$0xf]
      %v285 = vld [vmem:[%s215 + $0x60] sm:$0xf]
      %v286 = vld [vmem:[%s215 + $0x64] sm:$0xf]
      %v287 = vld [vmem:[%s215 + $0x68] sm:$0xf]
      %v288 = vld [vmem:[%s215 + $0x6c] sm:$0xf]
      %v289 = vld [vmem:[%s215 + $0x70] sm:$0xf]
      %v290 = vld [vmem:[%s215 + $0x74] sm:$0xf]
      %v291 = vld [vmem:[%s215 + $0x78] sm:$0xf]
      %v292 = vld [vmem:[%s215 + $0x7c] sm:$0xf]
      %v293 = vld [vmem:[%s218] sm:$0x1]
      %v295 = vlaneseq
      %v296 = vshrl.u32 %v295, 7
      %v297 = vsub.s32 0, %v296
      %v298 = vrot.slane %v293, %v297
      %v332 = vunpack.c.l.b16 %v229
      %v333 = vunpack.c.h.b16 %v229
      %v334 = vunpack.c.l.b16 %v230
      %v335 = vunpack.c.h.b16 %v230
      %v336 = vunpack.c.l.b16 %v231
      %v337 = vunpack.c.h.b16 %v231
      %v338 = vunpack.c.l.b16 %v232
      %v339 = vunpack.c.h.b16 %v232
      %v340 = vunpack.c.l.b16 %v233
      %v341 = vunpack.c.h.b16 %v233
      %v342 = vunpack.c.l.b16 %v234
      %v343 = vunpack.c.h.b16 %v234
      %v344 = vunpack.c.l.b16 %v235
      %v345 = vunpack.c.h.b16 %v235
      %v346 = vunpack.c.l.b16 %v236
      %v347 = vunpack.c.h.b16 %v236
      %v348 = vunpack.c.l.b16 %v237
      %v349 = vunpack.c.h.b16 %v237
      %v350 = vunpack.c.l.b16 %v238
      %v351 = vunpack.c.h.b16 %v238
      %v352 = vunpack.c.l.b16 %v239
      %v353 = vunpack.c.h.b16 %v239
      %v354 = vunpack.c.l.b16 %v240
      %v355 = vunpack.c.h.b16 %v240
      %v356 = vunpack.c.l.b16 %v241
      %v357 = vunpack.c.h.b16 %v241
      %v358 = vunpack.c.l.b16 %v242
      %v359 = vunpack.c.h.b16 %v242
      %v360 = vunpack.c.l.b16 %v243
      %v361 = vunpack.c.h.b16 %v243
      %v362 = vunpack.c.l.b16 %v244
      %v363 = vunpack.c.h.b16 %v244
      %v364 = vunpack.c.l.b16 %v245
      %v365 = vunpack.c.h.b16 %v245
      %v366 = vunpack.c.l.b16 %v246
      %v367 = vunpack.c.h.b16 %v246
      %v368 = vunpack.c.l.b16 %v247
      %v369 = vunpack.c.h.b16 %v247
      %v370 = vunpack.c.l.b16 %v248
      %v371 = vunpack.c.h.b16 %v248
      %v372 = vunpack.c.l.b16 %v249
      %v373 = vunpack.c.h.b16 %v249
      %v374 = vunpack.c.l.b16 %v250
      %v375 = vunpack.c.h.b16 %v250
      %v376 = vunpack.c.l.b16 %v251
      %v377 = vunpack.c.h.b16 %v251
      %v378 = vunpack.c.l.b16 %v252
      %v379 = vunpack.c.h.b16 %v252
      %v380 = vunpack.c.l.b16 %v253
      %v381 = vunpack.c.h.b16 %v253
      %v382 = vunpack.c.l.b16 %v254
      %v383 = vunpack.c.h.b16 %v254
      %v384 = vunpack.c.l.b16 %v255
      %v385 = vunpack.c.h.b16 %v255
      %v386 = vunpack.c.l.b16 %v256
      %v387 = vunpack.c.h.b16 %v256
      %v388 = vunpack.c.l.b16 %v257
      %v389 = vunpack.c.h.b16 %v257
      %v390 = vunpack.c.l.b16 %v258
      %v391 = vunpack.c.h.b16 %v258
      %v392 = vunpack.c.l.b16 %v259
      %v393 = vunpack.c.h.b16 %v259
      %v394 = vunpack.c.l.b16 %v260
      %v395 = vunpack.c.h.b16 %v260
      %v396 = vpack.c.b16 %v334, %v332
      %v397 = vpack.c.b16 %v335, %v333
      %v398 = vpack.c.b16 %v338, %v336
      %v399 = vpack.c.b16 %v339, %v337
      %v400 = vpack.c.b16 %v342, %v340
      %v401 = vpack.c.b16 %v343, %v341
      %v402 = vpack.c.b16 %v346, %v344
      %v403 = vpack.c.b16 %v347, %v345
      %v404 = vpack.c.b16 %v350, %v348
      %v405 = vpack.c.b16 %v351, %v349
      %v406 = vpack.c.b16 %v354, %v352
      %v407 = vpack.c.b16 %v355, %v353
      %v408 = vpack.c.b16 %v358, %v356
      %v409 = vpack.c.b16 %v359, %v357
      %v410 = vpack.c.b16 %v362, %v360
      %v411 = vpack.c.b16 %v363, %v361
      %v412 = vpack.c.b16 %v366, %v364
      %v413 = vpack.c.b16 %v367, %v365
      %v414 = vpack.c.b16 %v370, %v368
      %v415 = vpack.c.b16 %v371, %v369
      %v416 = vpack.c.b16 %v374, %v372
      %v417 = vpack.c.b16 %v375, %v373
      %v418 = vpack.c.b16 %v378, %v376
      %v419 = vpack.c.b16 %v379, %v377
      %v420 = vpack.c.b16 %v382, %v380
      %v421 = vpack.c.b16 %v383, %v381
      %v422 = vpack.c.b16 %v386, %v384
      %v423 = vpack.c.b16 %v387, %v385
      %v424 = vpack.c.b16 %v390, %v388
      %v425 = vpack.c.b16 %v391, %v389
      %v426 = vpack.c.b16 %v394, %v392
      %v427 = vpack.c.b16 %v395, %v393
      %v492 = vunpack.c.l.b16 %v261
      %v493 = vunpack.c.l.b16 %v262
      %v494 = vunpack.c.l.b16 %v263
      %v495 = vunpack.c.l.b16 %v264
      %v496 = vunpack.c.l.b16 %v265
      %v497 = vunpack.c.l.b16 %v266
      %v498 = vunpack.c.l.b16 %v267
      %v499 = vunpack.c.l.b16 %v268
      %v500 = vunpack.c.l.b16 %v269
      %v501 = vunpack.c.l.b16 %v270
      %v502 = vunpack.c.l.b16 %v271
      %v503 = vunpack.c.l.b16 %v272
      %v504 = vunpack.c.l.b16 %v273
      %v505 = vunpack.c.l.b16 %v274
      %v506 = vunpack.c.l.b16 %v275
      %v507 = vunpack.c.l.b16 %v276
      %v508 = vunpack.c.l.b16 %v277
      %v509 = vunpack.c.l.b16 %v278
      %v510 = vunpack.c.l.b16 %v279
      %v511 = vunpack.c.l.b16 %v280
      %v512 = vunpack.c.l.b16 %v281
      %v513 = vunpack.c.l.b16 %v282
      %v514 = vunpack.c.l.b16 %v283
      %v515 = vunpack.c.l.b16 %v284
      %v516 = vunpack.c.l.b16 %v285
      %v517 = vunpack.c.l.b16 %v286
      %v518 = vunpack.c.l.b16 %v287
      %v519 = vunpack.c.l.b16 %v288
      %v520 = vunpack.c.l.b16 %v289
      %v521 = vunpack.c.l.b16 %v290
      %v522 = vunpack.c.l.b16 %v291
      %v523 = vunpack.c.l.b16 %v292
      %v524 = vpack.c.b16 %v493, %v492
      %v525 = vpack.c.b16 %v495, %v494
      %v526 = vpack.c.b16 %v497, %v496
      %v527 = vpack.c.b16 %v499, %v498
      %v528 = vpack.c.b16 %v501, %v500
      %v529 = vpack.c.b16 %v503, %v502
      %v530 = vpack.c.b16 %v505, %v504
      %v531 = vpack.c.b16 %v507, %v506
      %v532 = vpack.c.b16 %v509, %v508
      %v533 = vpack.c.b16 %v511, %v510
      %v534 = vpack.c.b16 %v513, %v512
      %v535 = vpack.c.b16 %v515, %v514
      %v536 = vpack.c.b16 %v517, %v516
      %v537 = vpack.c.b16 %v519, %v518
      %v538 = vpack.c.b16 %v521, %v520
      %v539 = vpack.c.b16 %v523, %v522
      %556 = vmatprep.subr.bf16.mxu0 0
      %557 = vmatpush1.bf16.msra.mxu0 %v524
      %558 = vmatprep.subr.bf16.mxu0 0
      %559 = vmatpush1.bf16.msra.mxu0 %v525
      %560 = vmatprep.subr.bf16.mxu0 0
      %561 = vmatpush1.bf16.msra.mxu0 %v526
      %562 = vmatprep.subr.bf16.mxu0 0
      %563 = vmatpush1.bf16.msra.mxu0 %v527
      %564 = vmatprep.subr.bf16.mxu0 0
      %565 = vmatpush1.bf16.msra.mxu0 %v528
      %566 = vmatprep.subr.bf16.mxu0 0
      %567 = vmatpush1.bf16.msra.mxu0 %v529
      %568 = vmatprep.subr.bf16.mxu0 0
      %569 = vmatpush1.bf16.msra.mxu0 %v530
      %570 = vmatprep.subr.bf16.mxu0 0
      %571 = vmatpush1.bf16.msra.mxu0 %v531
      %572 = vmatprep.subr.bf16.mxu0 0
      %573 = vmatpush1.bf16.msra.mxu0 %v532
      %574 = vmatprep.subr.bf16.mxu0 0
      %575 = vmatpush1.bf16.msra.mxu0 %v533
      %576 = vmatprep.subr.bf16.mxu0 0
      %577 = vmatpush1.bf16.msra.mxu0 %v534
      %578 = vmatprep.subr.bf16.mxu0 0
      %579 = vmatpush1.bf16.msra.mxu0 %v535
      %580 = vmatprep.subr.bf16.mxu0 0
      %581 = vmatpush1.bf16.msra.mxu0 %v536
      %582 = vmatprep.subr.bf16.mxu0 0
      %583 = vmatpush1.bf16.msra.mxu0 %v537
      %584 = vmatprep.subr.bf16.mxu0 0
      %585 = vmatpush1.bf16.msra.mxu0 %v538
      %586 = vmatprep.subr.bf16.mxu0 0
      %587 = vmatpush1.bf16.msra.mxu0 %v539
      %588 = vmatprep.mubr.bf16.mxu0 %v397
      %589 = vmatmul.mubr.bf16.gmra.mrb[0].mxu0 %v396
      %v590 = vpop.f32.mrb[0].mxu0
      %v591 = vadd.f32 %v298, %v590
      %v592 = vpop.f32.mrb[0].mxu0
      %v593 = vpop.f32.mrb[0].mxu0
      %v594 = vadd.f32 %v298, %v593
      %v595 = vpop.f32.mrb[0].mxu0
      %596 = vmatprep.mubr.bf16.mxu0 %v399
      %597 = vmatmul.mubr.bf16.gmra.mrb[0].mxu0 %v398
      %v598 = vpop.f32.mrb[0].mxu0
      %v599 = vadd.f32 %v298, %v598
      %v600 = vpop.f32.mrb[0].mxu0
      %v601 = vpop.f32.mrb[0].mxu0
      %v602 = vadd.f32 %v298, %v601
      %v603 = vpop.f32.mrb[0].mxu0
      %604 = vmatprep.mubr.bf16.mxu0 %v401
      %605 = vmatmul.mubr.bf16.gmra.mrb[0].mxu0 %v400
      %v606 = vpop.f32.mrb[0].mxu0
      %v607 = vadd.f32 %v298, %v606
      %v608 = vpop.f32.mrb[0].mxu0
      %v609 = vpop.f32.mrb[0].mxu0
      %v610 = vadd.f32 %v298, %v609
      %v611 = vpop.f32.mrb[0].mxu0
      %612 = vmatprep.mubr.bf16.mxu0 %v403
      %613 = vmatmul.mubr.bf16.gmra.mrb[0].mxu0 %v402
      %v614 = vpop.f32.mrb[0].mxu0
      %v615 = vadd.f32 %v298, %v614
      %v616 = vpop.f32.mrb[0].mxu0
      %v617 = vpop.f32.mrb[0].mxu0
      %v618 = vadd.f32 %v298, %v617
      %v619 = vpop.f32.mrb[0].mxu0
      %620 = vmatprep.mubr.bf16.mxu0 %v405
      %621 = vmatmul.mubr.bf16.gmra.mrb[0].mxu0 %v404
      %v622 = vpop.f32.mrb[0].mxu0
      %v623 = vadd.f32 %v298, %v622
      %v624 = vpop.f32.mrb[0].mxu0
      %v625 = vpop.f32.mrb[0].mxu0
      %v626 = vadd.f32 %v298, %v625
      %v627 = vpop.f32.mrb[0].mxu0
      %628 = vmatprep.mubr.bf16.mxu0 %v407
      %629 = vmatmul.mubr.bf16.gmra.mrb[0].mxu0 %v406
      %v630 = vpop.f32.mrb[0].mxu0
      %v631 = vadd.f32 %v298, %v630
      %v632 = vpop.f32.mrb[0].mxu0
      %v633 = vpop.f32.mrb[0].mxu0
      %v634 = vadd.f32 %v298, %v633
      %v635 = vpop.f32.mrb[0].mxu0
      %636 = vmatprep.mubr.bf16.mxu0 %v409
      %637 = vmatmul.mubr.bf16.gmra.mrb[0].mxu0 %v408
      %v638 = vpop.f32.mrb[0].mxu0
      %v639 = vadd.f32 %v298, %v638
      %v640 = vpop.f32.mrb[0].mxu0
      %v641 = vpop.f32.mrb[0].mxu0
      %v642 = vadd.f32 %v298, %v641
      %v643 = vpop.f32.mrb[0].mxu0
      %644 = vmatprep.mubr.bf16.mxu0 %v411
      %645 = vmatmul.mubr.bf16.gmra.mrb[0].mxu0 %v410
      %v646 = vpop.f32.mrb[0].mxu0
      %v647 = vadd.f32 %v298, %v646
      %v648 = vpop.f32.mrb[0].mxu0
      %v649 = vpop.f32.mrb[0].mxu0
      %v650 = vadd.f32 %v298, %v649
      %v651 = vpop.f32.mrb[0].mxu0
      %652 = vmatprep.mubr.bf16.mxu0 %v413
      %653 = vmatmul.mubr.bf16.gmra.mrb[0].mxu0 %v412
      %v654 = vpop.f32.mrb[0].mxu0
      %v655 = vadd.f32 %v298, %v654
      %v656 = vpop.f32.mrb[0].mxu0
      %v657 = vpop.f32.mrb[0].mxu0
      %v658 = vadd.f32 %v298, %v657
      %v659 = vpop.f32.mrb[0].mxu0
      %660 = vmatprep.mubr.bf16.mxu0 %v415
      %661 = vmatmul.mubr.bf16.gmra.mrb[0].mxu0 %v414
      %v662 = vpop.f32.mrb[0].mxu0
      %v663 = vadd.f32 %v298, %v662
      %v664 = vpop.f32.mrb[0].mxu0
      %v665 = vpop.f32.mrb[0].mxu0
      %v666 = vadd.f32 %v298, %v665
      %v667 = vpop.f32.mrb[0].mxu0
      %668 = vmatprep.mubr.bf16.mxu0 %v417
      %669 = vmatmul.mubr.bf16.gmra.mrb[0].mxu0 %v416
      %v670 = vpop.f32.mrb[0].mxu0
      %v671 = vadd.f32 %v298, %v670
      %v672 = vpop.f32.mrb[0].mxu0
      %v673 = vpop.f32.mrb[0].mxu0
      %v674 = vadd.f32 %v298, %v673
      %v675 = vpop.f32.mrb[0].mxu0
      %676 = vmatprep.mubr.bf16.mxu0 %v419
      %677 = vmatmul.mubr.bf16.gmra.mrb[0].mxu0 %v418
      %v678 = vpop.f32.mrb[0].mxu0
      %v679 = vadd.f32 %v298, %v678
      %v680 = vpop.f32.mrb[0].mxu0
      %v681 = vpop.f32.mrb[0].mxu0
      %v682 = vadd.f32 %v298, %v681
      %v683 = vpop.f32.mrb[0].mxu0
      %684 = vmatprep.mubr.bf16.mxu0 %v421
      %685 = vmatmul.mubr.bf16.gmra.mrb[0].mxu0 %v420
      %v686 = vpop.f32.mrb[0].mxu0
      %v687 = vadd.f32 %v298, %v686
      %v688 = vpop.f32.mrb[0].mxu0
      %v689 = vpop.f32.mrb[0].mxu0
      %v690 = vadd.f32 %v298, %v689
      %v691 = vpop.f32.mrb[0].mxu0
      %692 = vmatprep.mubr.bf16.mxu0 %v423
      %693 = vmatmul.mubr.bf16.gmra.mrb[0].mxu0 %v422
      %v694 = vpop.f32.mrb[0].mxu0
      %v695 = vadd.f32 %v298, %v694
      %v696 = vpop.f32.mrb[0].mxu0
      %v697 = vpop.f32.mrb[0].mxu0
      %v698 = vadd.f32 %v298, %v697
      %v699 = vpop.f32.mrb[0].mxu0
      %700 = vmatprep.mubr.bf16.mxu0 %v425
      %701 = vmatmul.mubr.bf16.gmra.mrb[0].mxu0 %v424
      %v702 = vpop.f32.mrb[0].mxu0
      %v703 = vadd.f32 %v298, %v702
      %v704 = vpop.f32.mrb[0].mxu0
      %v705 = vpop.f32.mrb[0].mxu0
      %v706 = vadd.f32 %v298, %v705
      %v707 = vpop.f32.mrb[0].mxu0
      %708 = vmatprep.mubr.bf16.mxu0 %v427
      %709 = vmatmul.mubr.bf16.gmra.mrb[0].mxu0 %v426
      %v710 = vpop.f32.mrb[0].mxu0
      %v711 = vadd.f32 %v298, %v710
      %v712 = vpop.f32.mrb[0].mxu0
      %v713 = vpop.f32.mrb[0].mxu0
      %v714 = vadd.f32 %v298, %v713
      %v715 = vpop.f32.mrb[0].mxu0
      %716 = vdwg.mxu0
      %v717 = vmax.f32 %v591, 0.0
      %v718 = vmax.f32 %v594, 0.0
      %v719 = vmax.f32 %v599, 0.0
      %v720 = vmax.f32 %v602, 0.0
      %v721 = vmax.f32 %v607, 0.0
      %v722 = vmax.f32 %v610, 0.0
      %v723 = vmax.f32 %v615, 0.0
      %v724 = vmax.f32 %v618, 0.0
      %v725 = vmax.f32 %v623, 0.0
      %v726 = vmax.f32 %v626, 0.0
      %v727 = vmax.f32 %v631, 0.0
      %v728 = vmax.f32 %v634, 0.0
      %v729 = vmax.f32 %v639, 0.0
      %v730 = vmax.f32 %v642, 0.0
      %v731 = vmax.f32 %v647, 0.0
      %v732 = vmax.f32 %v650, 0.0
      %v733 = vmax.f32 %v655, 0.0
      %v734 = vmax.f32 %v658, 0.0
      %v735 = vmax.f32 %v663, 0.0
      %v736 = vmax.f32 %v666, 0.0
      %v737 = vmax.f32 %v671, 0.0
      %v738 = vmax.f32 %v674, 0.0
      %v739 = vmax.f32 %v679, 0.0
      %v740 = vmax.f32 %v682, 0.0
      %v741 = vmax.f32 %v687, 0.0
      %v742 = vmax.f32 %v690, 0.0
      %v743 = vmax.f32 %v695, 0.0
      %v744 = vmax.f32 %v698, 0.0
      %v745 = vmax.f32 %v703, 0.0
      %v746 = vmax.f32 %v706, 0.0
      %v747 = vmax.f32 %v711, 0.0
      %v748 = vmax.f32 %v714, 0.0
      %749 = vst [vmem:[%s226] sm:$0xff] %v717
      %750 = vst [vmem:[%s226 + $0x8] sm:$0xff] %v718
      %751 = vst [vmem:[%s226 + $0x10] sm:$0xff] %v719
      %752 = vst [vmem:[%s226 + $0x18] sm:$0xff] %v720
      %753 = vst [vmem:[%s226 + $0x20] sm:$0xff] %v721
      %754 = vst [vmem:[%s226 + $0x28] sm:$0xff] %v722
      %755 = vst [vmem:[%s226 + $0x30] sm:$0xff] %v723
      %756 = vst [vmem:[%s226 + $0x38] sm:$0xff] %v724
      %757 = vst [vmem:[%s226 + $0x40] sm:$0xff] %v725
      %758 = vst [vmem:[%s226 + $0x48] sm:$0xff] %v726
      %759 = vst [vmem:[%s226 + $0x50] sm:$0xff] %v727
      %760 = vst [vmem:[%s226 + $0x58] sm:$0xff] %v728
      %761 = vst [vmem:[%s226 + $0x60] sm:$0xff] %v729
      %762 = vst [vmem:[%s226 + $0x68] sm:$0xff] %v730
      %763 = vst [vmem:[%s226 + $0x70] sm:$0xff] %v731
      %764 = vst [vmem:[%s226 + $0x78] sm:$0xff] %v732
      %765 = vst [vmem:[%s226 + $0x80] sm:$0xff] %v733
      %766 = vst [vmem:[%s226 + $0x88] sm:$0xff] %v734
      %767 = vst [vmem:[%s226 + $0x90] sm:$0xff] %v735
      %768 = vst [vmem:[%s226 + $0x98] sm:$0xff] %v736
      %769 = vst [vmem:[%s226 + $0xa0] sm:$0xff] %v737
      %770 = vst [vmem:[%s226 + $0xa8] sm:$0xff] %v738
      %771 = vst [vmem:[%s226 + $0xb0] sm:$0xff] %v739
      %772 = vst [vmem:[%s226 + $0xb8] sm:$0xff] %v740
      %773 = vst [vmem:[%s226 + $0xc0] sm:$0xff] %v741
      %774 = vst [vmem:[%s226 + $0xc8] sm:$0xff] %v742
      %775 = vst [vmem:[%s226 + $0xd0] sm:$0xff] %v743
      %776 = vst [vmem:[%s226 + $0xd8] sm:$0xff] %v744
      %777 = vst [vmem:[%s226 + $0xe0] sm:$0xff] %v745
      %778 = vst [vmem:[%s226 + $0xe8] sm:$0xff] %v746
      %779 = vst [vmem:[%s226 + $0xf0] sm:$0xff] %v747
      %780 = vst [vmem:[%s226 + $0xf8] sm:$0xff] %v748
      %s781 = smul.u32 32, %s18
      %p782 = scmp.lt.s32.totalorder %s781, 63
      %s783 = scalar_select %p782, %s781, 63
      %p784 = scmp.lt.s32.totalorder %s19, 0
      %s785 = scalar_select %p784, %s19, 0
      %s786 = sadd.s32 %s785, %s783
      %s787 = smul.addr %s786, 8
      %s788 = scalar_lea.vmem %s3, %s787
      // Predicated region
      $region33: #{forward.22} parent=31 // pred_check
        %p789 = pneg %p124
      $region34: #{forward.22} parent=31 // pred_check_branch
        %791 = sbr.rel (%p789) target = $region36
      $region35: #{forward.22} parent=31 // pred_region
        %s792 = smul.u32 32, %s18
      $region36: #{forward.22} parent=31 // pred_fallthru
        _
    $region32: #{forward.22} parent=5 // pred_fallthru
      _
    %p793 = scmp.le.s32.totalorder 2, %s9
    // Predicated region
    $region37: #{forward.22} parent=5 // pred_check
      %p794 = pneg %p793
    $region38: #{forward.22} parent=5 // pred_check_branch
      %796 = sbr.rel (%p794) target = $region40
    $region39: #{forward.22} parent=5 // pred_region
      %s797 = ssub.s32 %s9, 2
      // Predicated region
      $region41: #{forward.22} parent=39 // pred_check
        %p798 = pneg %p130
      $region42: #{forward.22} parent=39 // pred_check_branch
        %800 = sbr.rel (%p798) target = $region44
      $region43: #{forward.22} parent=39 // pred_region
        %s801 = smul.u32 32, %s20
        %p802 = scmp.lt.s32.totalorder %s801, 63
        %s803 = scalar_select %p802, %s801, 63
        %p804 = scmp.lt.s32.totalorder %s21, 0
        %s805 = scalar_select %p804, %s21, 0
        %s806 = sadd.s32 %s805, %s803
        %s807 = smul.addr %s806, 8
        %s808 = scalar_lea.vmem %s3, %s807
      $region44: #{forward.22} parent=39 // pred_fallthru
        _
    $region40: #{forward.22} parent=5 // pred_fallthru
      _
  $region6: #{forward.22} parent=0 // loop_footer
    %s13 = sadd.s32 1, %s9
  $region7: #{forward.22} parent=0 // loop_footer_branch
    %8 = sbr.rel target = $region3
  $region8: #{forward.22} parent=0 // loop_exit
    _

// kernel: forward.23
$region0: #{forward.23}
  #allocation0 [shape = 'u32[]', space=smem, size = 0x4, offset = 0x4, fixed_abs, tag = 'smem constant byte address 0x4 - core index']
  #allocation1 [shape = 'u32[144,128]{1,0:T(1,128)}', space=vmem, size = 0x12000, scoped, tag = 'internal scratch']
  %s0 = inlined_call_operand.vmem [shape: bf16[2048,128], index: 0, kind: input, shape index: {}]
  %s1 = inlined_call_operand.vmem [shape: bf16[128,128], index: 1, kind: input, shape index: {}]
  %s2 = inlined_call_operand.vmem [shape: f32[1,128], index: 2, kind: input, shape index: {}]
  %s3 = inlined_call_operand.vmem [shape: f32[2048,128], index: 3, kind: output, shape index: {}]
  %s4 = sld [smem:[#allocation0]]
  $region45: #{forward.23} parent=0
    _
  %s6 = ssub.s32 1, %s4
  %s7 = scalar_select 0, %s6, %s4
  loop: start=0, step=1, limit=6
  $region2: #{forward.23} parent=0 // loop_pre_header
    _
  $region3: #{forward.23} parent=0 // loop_header
    %s9 = sphi 0, %s13
    %p10 = scmp.ge.s32.totalorder %s9, 6
    %s16 = sphi 0, %s28
    %s17 = sphi 0, %s24
    %s18 = sphi 0, %s16
    %s19 = sphi 0, %s17
    %s20 = sphi 0, %s18
    %s21 = sphi 0, %s19
    %s31 = sphi 0, %s33
    %s34 = sphi 0, %s31
    %s35 = sphi 0, %s34
    %s51 = sphi 0, %s35
    %s57 = sphi 0, %s59
    %s60 = sphi 0, %s57
    %s61 = sphi 0, %s60
    %s77 = sphi 0, %s61
    %s83 = sphi 0, %s85
    %s86 = sphi 0, %s83
    %s87 = sphi 0, %s86
    %s103 = sphi 0, %s87
    %s111 = sphi 0, %s113
    %s114 = sphi 0, %s111
    %s115 = sphi 0, %s114
    %s131 = sphi 0, %s115
  $region4: #{forward.23} parent=0 // loop_header_branch
    %12 = sbr.rel (%p10) target = $region8
  $region5: #{forward.23} parent=0 // loop_body
    %s14 = ssub.s32 %s9, 1
    %s15 = ssub.s32 %s9, 2
    %s22 = sadd.s32 1, %s17
    %p23 = scmp.ge.s32.totalorder %s22, 1
    %s24 = scalar_select %p23, 0, %s22
    %s25 = sadd.s32 1, %s16
    %s26 = scalar_select %p23, %s25, %s16
    %p27 = scmp.ge.s32.totalorder %s26, 4
    %s28 = scalar_select %p27, 0, %s26
    %s29 = ssub.s32 %s16, %s28
    %p30 = scmp.eq.s32.totalorder %s29, 0
    %s32 = sadd.s32 %s31, 1
    %s33 = scalar_select %p30, %s31, %s32
    %p36 = pneg %p30
    %p37 = scmp.eq.s32.totalorder %s9, 3
    %p38 = por %p36, %p37
    %p39 = scmp.ne.s32.totalorder %s31, %s34
    %p40 = scmp.eq.s32.totalorder %s9, 0
    %p41 = por %p39, %p40
    %p42 = scmp.ne.s32.totalorder %s31, %s34
    %p43 = scmp.eq.s32.totalorder %s14, 3
    %p44 = por %p42, %p43
    %p45 = scmp.ne.s32.totalorder %s34, %s35
    %p46 = scmp.eq.s32.totalorder %s14, 0
    %p47 = por %p45, %p46
    %p48 = scmp.ne.s32.totalorder %s34, %s35
    %p49 = scmp.eq.s32.totalorder %s15, 3
    %p50 = por %p48, %p49
    %p52 = scmp.ne.s32.totalorder %s35, %s51
    %p53 = scmp.eq.s32.totalorder %s15, 0
    %p54 = por %p52, %p53
    %s55 = ssub.s32 %s17, %s24
    %p56 = scmp.eq.s32.totalorder %s55, 0
    %s58 = sadd.s32 %s57, 1
    %s59 = scalar_select %p56, %s57, %s58
    %p62 = pneg %p56
    %p63 = scmp.eq.s32.totalorder %s9, 3
    %p64 = por %p62, %p63
    %p65 = scmp.ne.s32.totalorder %s57, %s60
    %p66 = scmp.eq.s32.totalorder %s9, 0
    %p67 = por %p65, %p66
    %p68 = scmp.ne.s32.totalorder %s57, %s60
    %p69 = scmp.eq.s32.totalorder %s14, 3
    %p70 = por %p68, %p69
    %p71 = scmp.ne.s32.totalorder %s60, %s61
    %p72 = scmp.eq.s32.totalorder %s14, 0
    %p73 = por %p71, %p72
    %p74 = scmp.ne.s32.totalorder %s60, %s61
    %p75 = scmp.eq.s32.totalorder %s15, 3
    %p76 = por %p74, %p75
    %p78 = scmp.ne.s32.totalorder %s61, %s77
    %p79 = scmp.eq.s32.totalorder %s15, 0
    %p80 = por %p78, %p79
    %s81 = ssub.s32 %s17, %s24
    %p82 = scmp.eq.s32.totalorder %s81, 0
    %s84 = sadd.s32 %s83, 1
    %s85 = scalar_select %p82, %s83, %s84
    %p88 = pneg %p82
    %p89 = scmp.eq.s32.totalorder %s9, 3
    %p90 = por %p88, %p89
    %p91 = scmp.ne.s32.totalorder %s83, %s86
    %p92 = scmp.eq.s32.totalorder %s9, 0
    %p93 = por %p91, %p92
    %p94 = scmp.ne.s32.totalorder %s83, %s86
    %p95 = scmp.eq.s32.totalorder %s14, 3
    %p96 = por %p94, %p95
    %p97 = scmp.ne.s32.totalorder %s86, %s87
    %p98 = scmp.eq.s32.totalorder %s14, 0
    %p99 = por %p97, %p98
    %p100 = scmp.ne.s32.totalorder %s86, %s87
    %p101 = scmp.eq.s32.totalorder %s15, 3
    %p102 = por %p100, %p101
    %p104 = scmp.ne.s32.totalorder %s87, %s103
    %p105 = scmp.eq.s32.totalorder %s15, 0
    %p106 = por %p104, %p105
    %s107 = ssub.s32 %s16, %s28
    %s108 = ssub.s32 %s17, %s24
    %s109 = sor.u32 %s107, %s108
    %p110 = scmp.eq.s32.totalorder %s109, 0
    %s112 = sadd.s32 %s111, 1
    %s113 = scalar_select %p110, %s111, %s112
    %p116 = pneg %p110
    %p117 = scmp.eq.s32.totalorder %s9, 3
    %p118 = por %p116, %p117
    %p119 = scmp.ne.s32.totalorder %s111, %s114
    %p120 = scmp.eq.s32.totalorder %s9, 0
    %p121 = por %p119, %p120
    %p122 = scmp.ne.s32.totalorder %s111, %s114
    %p123 = scmp.eq.s32.totalorder %s14, 3
    %p124 = por %p122, %p123
    %p125 = scmp.ne.s32.totalorder %s114, %s115
    %p126 = scmp.eq.s32.totalorder %s14, 0
    %p127 = por %p125, %p126
    %p128 = scmp.ne.s32.totalorder %s114, %s115
    %p129 = scmp.eq.s32.totalorder %s15, 3
    %p130 = por %p128, %p129
    %p132 = scmp.ne.s32.totalorder %s115, %s131
    %p133 = scmp.eq.s32.totalorder %s15, 0
    %p134 = por %p132, %p133
    %p135 = scmp.le.s32.totalorder 1, %s9
    %p136 = scmp.lt.s32.totalorder %s9, 5
    %p137 = pnand %p135, %p136
    %p138 = pneg %p137
    // Predicated region
    $region9: #{forward.23} parent=5 // pred_check
      _
    $region10: #{forward.23} parent=5 // pred_check_branch
      %140 = sbr.rel (%p137) target = $region12
    $region11: #{forward.23} parent=5 // pred_region
      %s141 = ssub.s32 %s9, 1
      // Predicated region
      $region13: #{forward.23} parent=11 // pred_check
        %p142 = pneg %p73
      $region14: #{forward.23} parent=11 // pred_check_branch
        %144 = sbr.rel (%p142) target = $region16
      $region15: #{forward.23} parent=11 // pred_region
        %p145 = scmp.lt.s32.totalorder %s19, 0
        %s146 = scalar_select %p145, %s19, 0
        %s147 = smul.addr %s146, 4
        %s148 = scalar_lea.vmem %s1, %s147
      $region16: #{forward.23} parent=11 // pred_fallthru
        _
      // Predicated region
      $region17: #{forward.23} parent=11 // pred_check
        %p149 = pneg %p99
      $region18: #{forward.23} parent=11 // pred_check_branch
        %151 = sbr.rel (%p149) target = $region20
      $region19: #{forward.23} parent=11 // pred_region
        %p152 = scmp.lt.s32.totalorder %s19, 0
        %s153 = scalar_select %p152, %s19, 0
        %s154 = scalar_lea.vmem %s2, %s153
      $region20: #{forward.23} parent=11 // pred_fallthru
        _
    $region12: #{forward.23} parent=5 // pred_fallthru
      _
    %p155 = scmp.lt.s32.totalorder %s9, 4
    // Predicated region
    $region21: #{forward.23} parent=5 // pred_check
      %p156 = pneg %p155
    $region22: #{forward.23} parent=5 // pred_check_branch
      %158 = sbr.rel (%p156) target = $region24
    $region23: #{forward.23} parent=5 // pred_region
      // Predicated region
      $region25: #{forward.23} parent=23 // pred_check
        %p159 = pneg %p41
      $region26: #{forward.23} parent=23 // pred_check_branch
        %161 = sbr.rel (%p159) target = $region28
      $region27: #{forward.23} parent=23 // pred_region
        %s162 = smul.u32 64, %s16
        %p163 = scmp.lt.s32.totalorder %s162, 255
        %s164 = scalar_select %p163, %s162, 255
        %s165 = smul.addr %s164, 4
        %s166 = scalar_lea.vmem %s0, %s165
        %s167 = smul.u32 64, %s16
      $region28: #{forward.23} parent=23 // pred_fallthru
        _
    $region24: #{forward.23} parent=5 // pred_fallthru
      _
    %p168 = scmp.le.s32.totalorder 1, %s9
    %p169 = scmp.lt.s32.totalorder %s9, 5
    %p170 = pnand %p168, %p169
    %p171 = pneg %p170
    // Predicated region
    $region29: #{forward.23} parent=5 // pred_check
      _
    $region30: #{forward.23} parent=5 // pred_check_branch
      %173 = sbr.rel (%p170) target = $region32
    $region31: #{forward.23} parent=5 // pred_region
      %s174 = ssub.s32 %s9, 1
      %s175 = smul.u32 64, %s18
      %p176 = scmp.lt.s32.totalorder %s175, 255
      %s177 = scalar_select %p176, %s175, 255
      %s178 = smul.addr %s177, 4
      %s179 = scalar_lea.vmem %s0, %s178
      %p180 = pneg %p47
      %p181 = pneg %p44
      %p182 = scmp.lt.s32.totalorder %s19, 0
      %s183 = scalar_select %p182, %s19, 0
      %s184 = smul.addr %s183, 4
      %s185 = scalar_lea.vmem %s1, %s184
      %p186 = pneg %p73
      %p187 = pneg %p70
      %p188 = scmp.lt.s32.totalorder %s19, 0
      %s189 = scalar_select %p188, %s19, 0
      %s190 = scalar_lea.vmem %s2, %s189
      %p191 = pneg %p99
      %p192 = pneg %p96
      %p193 = pneg %p127
      %p194 = pneg %p124
      %s195 = smul.u32 64, %s18
      %p196 = scmp.lt.s32.totalorder %s195, 255
      %s197 = scalar_select %p196, %s195, 255
      %p198 = scmp.lt.s32.totalorder %s19, 0
      %s199 = scalar_select %p198, %s19, 0
      %s200 = sadd.s32 %s199, %s197
      %s201 = smul.addr %s200, 8
      %s202 = scalar_lea.vmem %s3, %s201
      %s203 = smul.u32 64, %s18
      %p204 = scmp.lt.s32.totalorder %s203, 255
      %s205 = scalar_select %p204, %s203, 255
      %s206 = smul.addr %s205, 4
      %s207 = scalar_lea.vmem %s0, %s206
      %s208 = smul.u32 64, %s18
      %p209 = scmp.lt.s32.totalorder %s19, 0
      %s210 = scalar_select %p209, %s19, 0
      %s211 = smul.addr %s210, 4
      %s212 = scalar_lea.vmem %s1, %s211
      %p213 = scmp.lt.s32.totalorder %s19, 0
      %s214 = scalar_select %p213, %s19, 0
      %s215 = scalar_lea.vmem %s2, %s214
      %s216 = smul.u32 64, %s18
      %p217 = scmp.lt.s32.totalorder %s216, 255
      %s218 = scalar_select %p217, %s216, 255
      %p219 = scmp.lt.s32.totalorder %s19, 0
      %s220 = scalar_select %p219, %s19, 0
      %s221 = sadd.s32 %s220, %s218
      %s222 = smul.addr %s221, 8
      %s223 = scalar_lea.vmem %s3, %s222
      %s224 = smul.u32 64, %s18
      %v226 = vld [vmem:[%s207] sm:$0xf]
      %v227 = vld [vmem:[%s207 + $0x4] sm:$0xf]
      %v228 = vld [vmem:[%s207 + $0x8] sm:$0xf]
      %v229 = vld [vmem:[%s207 + $0xc] sm:$0xf]
      %v230 = vld [vmem:[%s207 + $0x10] sm:$0xf]
      %v231 = vld [vmem:[%s207 + $0x14] sm:$0xf]
      %v232 = vld [vmem:[%s207 + $0x18] sm:$0xf]
      %v233 = vld [vmem:[%s207 + $0x1c] sm:$0xf]
      %v234 = vld [vmem:[%s207 + $0x20] sm:$0xf]
      %v235 = vld [vmem:[%s207 + $0x24] sm:$0xf]
      %v236 = vld [vmem:[%s207 + $0x28] sm:$0xf]
      %v237 = vld [vmem:[%s207 + $0x2c] sm:$0xf]
      %v238 = vld [vmem:[%s207 + $0x30] sm:$0xf]
      %v239 = vld [vmem:[%s207 + $0x34] sm:$0xf]
      %v240 = vld [vmem:[%s207 + $0x38] sm:$0xf]
      %v241 = vld [vmem:[%s207 + $0x3c] sm:$0xf]
      %v242 = vld [vmem:[%s207 + $0x40] sm:$0xf]
      %v243 = vld [vmem:[%s207 + $0x44] sm:$0xf]
      %v244 = vld [vmem:[%s207 + $0x48] sm:$0xf]
      %v245 = vld [vmem:[%s207 + $0x4c] sm:$0xf]
      %v246 = vld [vmem:[%s207 + $0x50] sm:$0xf]
      %v247 = vld [vmem:[%s207 + $0x54] sm:$0xf]
      %v248 = vld [vmem:[%s207 + $0x58] sm:$0xf]
      %v249 = vld [vmem:[%s207 + $0x5c] sm:$0xf]
      %v250 = vld [vmem:[%s207 + $0x60] sm:$0xf]
      %v251 = vld [vmem:[%s207 + $0x64] sm:$0xf]
      %v252 = vld [vmem:[%s207 + $0x68] sm:$0xf]
      %v253 = vld [vmem:[%s207 + $0x6c] sm:$0xf]
      %v254 = vld [vmem:[%s207 + $0x70] sm:$0xf]
      %v255 = vld [vmem:[%s207 + $0x74] sm:$0xf]
      %v256 = vld [vmem:[%s207 + $0x78] sm:$0xf]
      %v257 = vld [vmem:[%s207 + $0x7c] sm:$0xf]
      %v258 = vld [vmem:[%s207 + $0x80] sm:$0xf]
      %v259 = vld [vmem:[%s207 + $0x84] sm:$0xf]
      %v260 = vld [vmem:[%s207 + $0x88] sm:$0xf]
      %v261 = vld [vmem:[%s207 + $0x8c] sm:$0xf]
      %v262 = vld [vmem:[%s207 + $0x90] sm:$0xf]
      %v263 = vld [vmem:[%s207 + $0x94] sm:$0xf]
      %v264 = vld [vmem:[%s207 + $0x98] sm:$0xf]
      %v265 = vld [vmem:[%s207 + $0x9c] sm:$0xf]
      %v266 = vld [vmem:[%s207 + $0xa0] sm:$0xf]
      %v267 = vld [vmem:[%s207 + $0xa4] sm:$0xf]
      %v268 = vld [vmem:[%s207 + $0xa8] sm:$0xf]
      %v269 = vld [vmem:[%s207 + $0xac] sm:$0xf]
      %v270 = vld [vmem:[%s207 + $0xb0] sm:$0xf]
      %v271 = vld [vmem:[%s207 + $0xb4] sm:$0xf]
      %v272 = vld [vmem:[%s207 + $0xb8] sm:$0xf]
      %v273 = vld [vmem:[%s207 + $0xbc] sm:$0xf]
      %v274 = vld [vmem:[%s207 + $0xc0] sm:$0xf]
      %v275 = vld [vmem:[%s207 + $0xc4] sm:$0xf]
      %v276 = vld [vmem:[%s207 + $0xc8] sm:$0xf]
      %v277 = vld [vmem:[%s207 + $0xcc] sm:$0xf]
      %v278 = vld [vmem:[%s207 + $0xd0] sm:$0xf]
      %v279 = vld [vmem:[%s207 + $0xd4] sm:$0xf]
      %v280 = vld [vmem:[%s207 + $0xd8] sm:$0xf]
      %v281 = vld [vmem:[%s207 + $0xdc] sm:$0xf]
      %v282 = vld [vmem:[%s207 + $0xe0] sm:$0xf]
      %v283 = vld [vmem:[%s207 + $0xe4] sm:$0xf]
      %v284 = vld [vmem:[%s207 + $0xe8] sm:$0xf]
      %v285 = vld [vmem:[%s207 + $0xec] sm:$0xf]
      %v286 = vld [vmem:[%s207 + $0xf0] sm:$0xf]
      %v287 = vld [vmem:[%s207 + $0xf4] sm:$0xf]
      %v288 = vld [vmem:[%s207 + $0xf8] sm:$0xf]
      %v289 = vld [vmem:[%s207 + $0xfc] sm:$0xf]
      %v290 = vld [vmem:[%s212] sm:$0xf]
      %v291 = vld [vmem:[%s212 + $0x4] sm:$0xf]
      %v292 = vld [vmem:[%s212 + $0x8] sm:$0xf]
      %v293 = vld [vmem:[%s212 + $0xc] sm:$0xf]
      %v294 = vld [vmem:[%s212 + $0x10] sm:$0xf]
      %v295 = vld [vmem:[%s212 + $0x14] sm:$0xf]
      %v296 = vld [vmem:[%s212 + $0x18] sm:$0xf]
      %v297 = vld [vmem:[%s212 + $0x1c] sm:$0xf]
      %v298 = vld [vmem:[%s212 + $0x20] sm:$0xf]
      %v299 = vld [vmem:[%s212 + $0x24] sm:$0xf]
      %v300 = vld [vmem:[%s212 + $0x28] sm:$0xf]
      %v301 = vld [vmem:[%s212 + $0x2c] sm:$0xf]
      %v302 = vld [vmem:[%s212 + $0x30] sm:$0xf]
      %v303 = vld [vmem:[%s212 + $0x34] sm:$0xf]
      %v304 = vld [vmem:[%s212 + $0x38] sm:$0xf]
      %v305 = vld [vmem:[%s212 + $0x3c] sm:$0xf]
      %v306 = vld [vmem:[%s215] sm:$0x1]
      %v308 = vlaneseq
      %v309 = vshrl.u32 %v308, 7
      %v310 = vsub.s32 0, %v309
      %v311 = vrot.slane %v306, %v310
      %v377 = vunpack.c.l.b16 %v226
      %v378 = vunpack.c.l.b16 %v227
      %v379 = vunpack.c.l.b16 %v228
      %v380 = vunpack.c.l.b16 %v229
      %v381 = vunpack.c.l.b16 %v230
      %v382 = vunpack.c.l.b16 %v231
      %v383 = vunpack.c.l.b16 %v232
      %v384 = vunpack.c.l.b16 %v233
      %v385 = vunpack.c.l.b16 %v234
      %v386 = vunpack.c.l.b16 %v235
      %v387 = vunpack.c.l.b16 %v236
      %v388 = vunpack.c.l.b16 %v237
      %v389 = vunpack.c.l.b16 %v238
      %v390 = vunpack.c.l.b16 %v239
      %v391 = vunpack.c.l.b16 %v240
      %v392 = vunpack.c.l.b16 %v241
      %v393 = vunpack.c.l.b16 %v242
      %v394 = vunpack.c.l.b16 %v243
      %v395 = vunpack.c.l.b16 %v244
      %v396 = vunpack.c.l.b16 %v245
      %v397 = vunpack.c.l.b16 %v246
      %v398 = vunpack.c.l.b16 %v247
      %v399 = vunpack.c.l.b16 %v248
      %v400 = vunpack.c.l.b16 %v249
      %v401 = vunpack.c.l.b16 %v250
      %v402 = vunpack.c.l.b16 %v251
      %v403 = vunpack.c.l.b16 %v252
      %v404 = vunpack.c.l.b16 %v253
      %v405 = vunpack.c.l.b16 %v254
      %v406 = vunpack.c.l.b16 %v255
      %v407 = vunpack.c.l.b16 %v256
      %v408 = vunpack.c.l.b16 %v257
      %v409 = vunpack.c.l.b16 %v258
      %v410 = vunpack.c.l.b16 %v259
      %v411 = vunpack.c.l.b16 %v260
      %v412 = vunpack.c.l.b16 %v261
      %v413 = vunpack.c.l.b16 %v262
      %v414 = vunpack.c.l.b16 %v263
      %v415 = vunpack.c.l.b16 %v264
      %v416 = vunpack.c.l.b16 %v265
      %v417 = vunpack.c.l.b16 %v266
      %v418 = vunpack.c.l.b16 %v267
      %v419 = vunpack.c.l.b16 %v268
      %v420 = vunpack.c.l.b16 %v269
      %v421 = vunpack.c.l.b16 %v270
      %v422 = vunpack.c.l.b16 %v271
      %v423 = vunpack.c.l.b16 %v272
      %v424 = vunpack.c.l.b16 %v273
      %v425 = vunpack.c.l.b16 %v274
      %v426 = vunpack.c.l.b16 %v275
      %v427 = vunpack.c.l.b16 %v276
      %v428 = vunpack.c.l.b16 %v277
      %v429 = vunpack.c.l.b16 %v278
      %v430 = vunpack.c.l.b16 %v279
      %v431 = vunpack.c.l.b16 %v280
      %v432 = vunpack.c.l.b16 %v281
      %v433 = vunpack.c.l.b16 %v282
      %v434 = vunpack.c.l.b16 %v283
      %v435 = vunpack.c.l.b16 %v284
      %v436 = vunpack.c.l.b16 %v285
      %v437 = vunpack.c.l.b16 %v286
      %v438 = vunpack.c.l.b16 %v287
      %v439 = vunpack.c.l.b16 %v288
      %v440 = vunpack.c.l.b16 %v289
      %v441 = vpack.c.b16 %v378, %v377
      %v442 = vpack.c.b16 %v380, %v379
      %v443 = vpack.c.b16 %v382, %v381
      %v444 = vpack.c.b16 %v384, %v383
      %v445 = vpack.c.b16 %v386, %v385
      %v446 = vpack.c.b16 %v388, %v387
      %v447 = vpack.c.b16 %v390, %v389
      %v448 = vpack.c.b16 %v392, %v391
      %v449 = vpack.c.b16 %v394, %v393
      %v450 = vpack.c.b16 %v396, %v395
      %v451 = vpack.c.b16 %v398, %v397
      %v452 = vpack.c.b16 %v400, %v399
      %v453 = vpack.c.b16 %v402, %v401
      %v454 = vpack.c.b16 %v404, %v403
      %v455 = vpack.c.b16 %v406, %v405
      %v456 = vpack.c.b16 %v408, %v407
      %v457 = vpack.c.b16 %v410, %v409
      %v458 = vpack.c.b16 %v412, %v411
      %v459 = vpack.c.b16 %v414, %v413
      %v460 = vpack.c.b16 %v416, %v415
      %v461 = vpack.c.b16 %v418, %v417
      %v462 = vpack.c.b16 %v420, %v419
      %v463 = vpack.c.b16 %v422, %v421
      %v464 = vpack.c.b16 %v424, %v423
      %v465 = vpack.c.b16 %v426, %v425
      %v466 = vpack.c.b16 %v428, %v427
      %v467 = vpack.c.b16 %v430, %v429
      %v468 = vpack.c.b16 %v432, %v431
      %v469 = vpack.c.b16 %v434, %v433
      %v470 = vpack.c.b16 %v436, %v435
      %v471 = vpack.c.b16 %v438, %v437
      %v472 = vpack.c.b16 %v440, %v439
      %v521 = vunpack.c.l.b16 %v290
      %v522 = vunpack.c.l.b16 %v291
      %v523 = vunpack.c.l.b16 %v292
      %v524 = vunpack.c.l.b16 %v293
      %v525 = vunpack.c.l.b16 %v294
      %v526 = vunpack.c.l.b16 %v295
      %v527 = vunpack.c.l.b16 %v296
      %v528 = vunpack.c.l.b16 %v297
      %v529 = vunpack.c.l.b16 %v298
      %v530 = vunpack.c.l.b16 %v299
      %v531 = vunpack.c.l.b16 %v300
      %v532 = vunpack.c.l.b16 %v301
      %v533 = vunpack.c.l.b16 %v302
      %v534 = vunpack.c.l.b16 %v303
      %v535 = vunpack.c.l.b16 %v304
      %v536 = vunpack.c.l.b16 %v305
      %v537 = vpack.c.b16 %v522, %v521
      %v538 = vpack.c.b16 %v524, %v523
      %v539 = vpack.c.b16 %v526, %v525
      %v540 = vpack.c.b16 %v528, %v527
      %v541 = vpack.c.b16 %v530, %v529
      %v542 = vpack.c.b16 %v532, %v531
      %v543 = vpack.c.b16 %v534, %v533
      %v544 = vpack.c.b16 %v536, %v535
      %553 = vmatprep.subr.bf16.mxu0 0
      %554 = vmatpush1.bf16.msra.mxu0 %v537
      %555 = vmatprep.subr.bf16.mxu0 0
      %556 = vmatpush1.bf16.msra.mxu0 %v538
      %557 = vmatprep.subr.bf16.mxu0 0
      %558 = vmatpush1.bf16.msra.mxu0 %v539
      %559 = vmatprep.subr.bf16.mxu0 0
      %560 = vmatpush1.bf16.msra.mxu0 %v540
      %561 = vmatprep.subr.bf16.mxu0 0
      %562 = vmatpush1.bf16.msra.mxu0 %v541
      %563 = vmatprep.subr.bf16.mxu0 0
      %564 = vmatpush1.bf16.msra.mxu0 %v542
      %565 = vmatprep.subr.bf16.mxu0 0
      %566 = vmatpush1.bf16.msra.mxu0 %v543
      %567 = vmatprep.subr.bf16.mxu0 0
      %568 = vmatpush1.bf16.msra.mxu0 %v544
      %569 = vmatprep.subr.bf16.mxu0 0
      %570 = vmatpush1.bf16.msra.mxu0 0
      %571 = vmatprep.subr.bf16.mxu0 0
      %572 = vmatpush1.bf16.msra.mxu0 0
      %573 = vmatprep.subr.bf16.mxu0 0
      %574 = vmatpush1.bf16.msra.mxu0 0
      %575 = vmatprep.subr.bf16.mxu0 0
      %576 = vmatpush1.bf16.msra.mxu0 0
      %577 = vmatprep.subr.bf16.mxu0 0
      %578 = vmatpush1.bf16.msra.mxu0 0
      %579 = vmatprep.subr.bf16.mxu0 0
      %580 = vmatpush1.bf16.msra.mxu0 0
      %581 = vmatprep.subr.bf16.mxu0 0
      %582 = vmatpush1.bf16.msra.mxu0 0
      %583 = vmatprep.subr.bf16.mxu0 0
      %584 = vmatpush1.bf16.msra.mxu0 0
      %585 = vmatprep.mubr.bf16.mxu0 0
      %586 = vmatmul.mubr.bf16.gmra.mrb[0].mxu0 %v441
      %v587 = vpop.f32.mrb[0].mxu0
      %v588 = vadd.f32 %v311, %v587
      %v589 = vpop.f32.mrb[0].mxu0
      %v590 = vpop.f32.mrb[0].mxu0
      %v591 = vadd.f32 %v311, %v590
      %v592 = vpop.f32.mrb[0].mxu0
      %593 = vmatprep.mubr.bf16.mxu0 0
      %594 = vmatmul.mubr.bf16.gmra.mrb[0].mxu0 %v442
      %v595 = vpop.f32.mrb[0].mxu0
      %v596 = vadd.f32 %v311, %v595
      %v597 = vpop.f32.mrb[0].mxu0
      %v598 = vpop.f32.mrb[0].mxu0
      %v599 = vadd.f32 %v311, %v598
      %v600 = vpop.f32.mrb[0].mxu0
      %601 = vmatprep.mubr.bf16.mxu0 0
      %602 = vmatmul.mubr.bf16.gmra.mrb[0].mxu0 %v443
      %v603 = vpop.f32.mrb[0].mxu0
      %v604 = vadd.f32 %v311, %v603
      %v605 = vpop.f32.mrb[0].mxu0
      %v606 = vpop.f32.mrb[0].mxu0
      %v607 = vadd.f32 %v311, %v606
      %v608 = vpop.f32.mrb[0].mxu0
      %609 = vmatprep.mubr.bf16.mxu0 0
      %610 = vmatmul.mubr.bf16.gmra.mrb[0].mxu0 %v444
      %v611 = vpop.f32.mrb[0].mxu0
      %v612 = vadd.f32 %v311, %v611
      %v613 = vpop.f32.mrb[0].mxu0
      %v614 = vpop.f32.mrb[0].mxu0
      %v615 = vadd.f32 %v311, %v614
      %v616 = vpop.f32.mrb[0].mxu0
      %617 = vmatprep.mubr.bf16.mxu0 0
      %618 = vmatmul.mubr.bf16.gmra.mrb[0].mxu0 %v445
      %v619 = vpop.f32.mrb[0].mxu0
      %v620 = vadd.f32 %v311, %v619
      %v621 = vpop.f32.mrb[0].mxu0
      %v622 = vpop.f32.mrb[0].mxu0
      %v623 = vadd.f32 %v311, %v622
      %v624 = vpop.f32.mrb[0].mxu0
      %625 = vmatprep.mubr.bf16.mxu0 0
      %626 = vmatmul.mubr.bf16.gmra.mrb[0].mxu0 %v446
      %v627 = vpop.f32.mrb[0].mxu0
      %v628 = vadd.f32 %v311, %v627
      %v629 = vpop.f32.mrb[0].mxu0
      %v630 = vpop.f32.mrb[0].mxu0
      %v631 = vadd.f32 %v311, %v630
      %v632 = vpop.f32.mrb[0].mxu0
      %633 = vmatprep.mubr.bf16.mxu0 0
      %634 = vmatmul.mubr.bf16.gmra.mrb[0].mxu0 %v447
      %v635 = vpop.f32.mrb[0].mxu0
      %v636 = vadd.f32 %v311, %v635
      %v637 = vpop.f32.mrb[0].mxu0
      %v638 = vpop.f32.mrb[0].mxu0
      %v639 = vadd.f32 %v311, %v638
      %v640 = vpop.f32.mrb[0].mxu0
      %641 = vmatprep.mubr.bf16.mxu0 0
      %642 = vmatmul.mubr.bf16.gmra.mrb[0].mxu0 %v448
      %v643 = vpop.f32.mrb[0].mxu0
      %v644 = vadd.f32 %v311, %v643
      %v645 = vpop.f32.mrb[0].mxu0
      %v646 = vpop.f32.mrb[0].mxu0
      %v647 = vadd.f32 %v311, %v646
      %v648 = vpop.f32.mrb[0].mxu0
      %649 = vmatprep.mubr.bf16.mxu0 0
      %650 = vmatmul.mubr.bf16.gmra.mrb[0].mxu0 %v449
      %v651 = vpop.f32.mrb[0].mxu0
      %v652 = vadd.f32 %v311, %v651
      %v653 = vpop.f32.mrb[0].mxu0
      %v654 = vpop.f32.mrb[0].mxu0
      %v655 = vadd.f32 %v311, %v654
      %v656 = vpop.f32.mrb[0].mxu0
      %657 = vmatprep.mubr.bf16.mxu0 0
      %658 = vmatmul.mubr.bf16.gmra.mrb[0].mxu0 %v450
      %v659 = vpop.f32.mrb[0].mxu0
      %v660 = vadd.f32 %v311, %v659
      %v661 = vpop.f32.mrb[0].mxu0
      %v662 = vpop.f32.mrb[0].mxu0
      %v663 = vadd.f32 %v311, %v662
      %v664 = vpop.f32.mrb[0].mxu0
      %665 = vmatprep.mubr.bf16.mxu0 0
      %666 = vmatmul.mubr.bf16.gmra.mrb[0].mxu0 %v451
      %v667 = vpop.f32.mrb[0].mxu0
      %v668 = vadd.f32 %v311, %v667
      %v669 = vpop.f32.mrb[0].mxu0
      %v670 = vpop.f32.mrb[0].mxu0
      %v671 = vadd.f32 %v311, %v670
      %v672 = vpop.f32.mrb[0].mxu0
      %673 = vmatprep.mubr.bf16.mxu0 0
      %674 = vmatmul.mubr.bf16.gmra.mrb[0].mxu0 %v452
      %v675 = vpop.f32.mrb[0].mxu0
      %v676 = vadd.f32 %v311, %v675
      %v677 = vpop.f32.mrb[0].mxu0
      %v678 = vpop.f32.mrb[0].mxu0
      %v679 = vadd.f32 %v311, %v678
      %v680 = vpop.f32.mrb[0].mxu0
      %681 = vmatprep.mubr.bf16.mxu0 0
      %682 = vmatmul.mubr.bf16.gmra.mrb[0].mxu0 %v453
      %v683 = vpop.f32.mrb[0].mxu0
      %v684 = vadd.f32 %v311, %v683
      %v685 = vpop.f32.mrb[0].mxu0
      %v686 = vpop.f32.mrb[0].mxu0
      %v687 = vadd.f32 %v311, %v686
      %v688 = vpop.f32.mrb[0].mxu0
      %689 = vmatprep.mubr.bf16.mxu0 0
      %690 = vmatmul.mubr.bf16.gmra.mrb[0].mxu0 %v454
      %v691 = vpop.f32.mrb[0].mxu0
      %v692 = vadd.f32 %v311, %v691
      %v693 = vpop.f32.mrb[0].mxu0
      %v694 = vpop.f32.mrb[0].mxu0
      %v695 = vadd.f32 %v311, %v694
      %v696 = vpop.f32.mrb[0].mxu0
      %697 = vmatprep.mubr.bf16.mxu0 0
      %698 = vmatmul.mubr.bf16.gmra.mrb[0].mxu0 %v455
      %v699 = vpop.f32.mrb[0].mxu0
      %v700 = vadd.f32 %v311, %v699
      %v701 = vpop.f32.mrb[0].mxu0
      %v702 = vpop.f32.mrb[0].mxu0
      %v703 = vadd.f32 %v311, %v702
      %v704 = vpop.f32.mrb[0].mxu0
      %705 = vmatprep.mubr.bf16.mxu0 0
      %706 = vmatmul.mubr.bf16.gmra.mrb[0].mxu0 %v456
      %v707 = vpop.f32.mrb[0].mxu0
      %v708 = vadd.f32 %v311, %v707
      %v709 = vpop.f32.mrb[0].mxu0
      %v710 = vpop.f32.mrb[0].mxu0
      %v711 = vadd.f32 %v311, %v710
      %v712 = vpop.f32.mrb[0].mxu0
      %713 = vmatprep.mubr.bf16.mxu0 0
      %714 = vmatmul.mubr.bf16.gmra.mrb[0].mxu0 %v457
      %v715 = vpop.f32.mrb[0].mxu0
      %v716 = vadd.f32 %v311, %v715
      %v717 = vpop.f32.mrb[0].mxu0
      %v718 = vpop.f32.mrb[0].mxu0
      %v719 = vadd.f32 %v311, %v718
      %v720 = vpop.f32.mrb[0].mxu0
      %721 = vmatprep.mubr.bf16.mxu0 0
      %722 = vmatmul.mubr.bf16.gmra.mrb[0].mxu0 %v458
      %v723 = vpop.f32.mrb[0].mxu0
      %v724 = vadd.f32 %v311, %v723
      %v725 = vpop.f32.mrb[0].mxu0
      %v726 = vpop.f32.mrb[0].mxu0
      %v727 = vadd.f32 %v311, %v726
      %v728 = vpop.f32.mrb[0].mxu0
      %729 = vmatprep.mubr.bf16.mxu0 0
      %730 = vmatmul.mubr.bf16.gmra.mrb[0].mxu0 %v459
      %v731 = vpop.f32.mrb[0].mxu0
      %v732 = vadd.f32 %v311, %v731
      %v733 = vpop.f32.mrb[0].mxu0
      %v734 = vpop.f32.mrb[0].mxu0
      %v735 = vadd.f32 %v311, %v734
      %v736 = vpop.f32.mrb[0].mxu0
      %737 = vmatprep.mubr.bf16.mxu0 0
      %738 = vmatmul.mubr.bf16.gmra.mrb[0].mxu0 %v460
      %v739 = vpop.f32.mrb[0].mxu0
      %v740 = vadd.f32 %v311, %v739
      %v741 = vpop.f32.mrb[0].mxu0
      %v742 = vpop.f32.mrb[0].mxu0
      %v743 = vadd.f32 %v311, %v742
      %v744 = vpop.f32.mrb[0].mxu0
      %745 = vmatprep.mubr.bf16.mxu0 0
      %746 = vmatmul.mubr.bf16.gmra.mrb[0].mxu0 %v461
      %v747 = vpop.f32.mrb[0].mxu0
      %v748 = vadd.f32 %v311, %v747
      %v749 = vpop.f32.mrb[0].mxu0
      %v750 = vpop.f32.mrb[0].mxu0
      %v751 = vadd.f32 %v311, %v750
      %v752 = vpop.f32.mrb[0].mxu0
      %753 = vmatprep.mubr.bf16.mxu0 0
      %754 = vmatmul.mubr.bf16.gmra.mrb[0].mxu0 %v462
      %v755 = vpop.f32.mrb[0].mxu0
      %v756 = vadd.f32 %v311, %v755
      %v757 = vpop.f32.mrb[0].mxu0
      %v758 = vpop.f32.mrb[0].mxu0
      %v759 = vadd.f32 %v311, %v758
      %v760 = vpop.f32.mrb[0].mxu0
      %761 = vmatprep.mubr.bf16.mxu0 0
      %762 = vmatmul.mubr.bf16.gmra.mrb[0].mxu0 %v463
      %v763 = vpop.f32.mrb[0].mxu0
      %v764 = vadd.f32 %v311, %v763
      %v765 = vpop.f32.mrb[0].mxu0
      %v766 = vpop.f32.mrb[0].mxu0
      %v767 = vadd.f32 %v311, %v766
      %v768 = vpop.f32.mrb[0].mxu0
      %769 = vmatprep.mubr.bf16.mxu0 0
      %770 = vmatmul.mubr.bf16.gmra.mrb[0].mxu0 %v464
      %v771 = vpop.f32.mrb[0].mxu0
      %v772 = vadd.f32 %v311, %v771
      %v773 = vpop.f32.mrb[0].mxu0
      %v774 = vpop.f32.mrb[0].mxu0
      %v775 = vadd.f32 %v311, %v774
      %v776 = vpop.f32.mrb[0].mxu0
      %777 = vmatprep.mubr.bf16.mxu0 0
      %778 = vmatmul.mubr.bf16.gmra.mrb[0].mxu0 %v465
      %v779 = vpop.f32.mrb[0].mxu0
      %v780 = vadd.f32 %v311, %v779
      %v781 = vpop.f32.mrb[0].mxu0
      %v782 = vpop.f32.mrb[0].mxu0
      %v783 = vadd.f32 %v311, %v782
      %v784 = vpop.f32.mrb[0].mxu0
      %785 = vmatprep.mubr.bf16.mxu0 0
      %786 = vmatmul.mubr.bf16.gmra.mrb[0].mxu0 %v466
      %v787 = vpop.f32.mrb[0].mxu0
      %v788 = vadd.f32 %v311, %v787
      %v789 = vpop.f32.mrb[0].mxu0
      %v790 = vpop.f32.mrb[0].mxu0
      %v791 = vadd.f32 %v311, %v790
      %v792 = vpop.f32.mrb[0].mxu0
      %793 = vmatprep.mubr.bf16.mxu0 0
      %794 = vmatmul.mubr.bf16.gmra.mrb[0].mxu0 %v467
      %v795 = vpop.f32.mrb[0].mxu0
      %v796 = vadd.f32 %v311, %v795
      %v797 = vpop.f32.mrb[0].mxu0
      %v798 = vpop.f32.mrb[0].mxu0
      %v799 = vadd.f32 %v311, %v798
      %v800 = vpop.f32.mrb[0].mxu0
      %801 = vmatprep.mubr.bf16.mxu0 0
      %802 = vmatmul.mubr.bf16.gmra.mrb[0].mxu0 %v468
      %v803 = vpop.f32.mrb[0].mxu0
      %v804 = vadd.f32 %v311, %v803
      %v805 = vpop.f32.mrb[0].mxu0
      %v806 = vpop.f32.mrb[0].mxu0
      %v807 = vadd.f32 %v311, %v806
      %v808 = vpop.f32.mrb[0].mxu0
      %809 = vmatprep.mubr.bf16.mxu0 0
      %810 = vmatmul.mubr.bf16.gmra.mrb[0].mxu0 %v469
      %v811 = vpop.f32.mrb[0].mxu0
      %v812 = vadd.f32 %v311, %v811
      %v813 = vpop.f32.mrb[0].mxu0
      %v814 = vpop.f32.mrb[0].mxu0
      %v815 = vadd.f32 %v311, %v814
      %v816 = vpop.f32.mrb[0].mxu0
      %817 = vmatprep.mubr.bf16.mxu0 0
      %818 = vmatmul.mubr.bf16.gmra.mrb[0].mxu0 %v470
      %v819 = vpop.f32.mrb[0].mxu0
      %v820 = vadd.f32 %v311, %v819
      %v821 = vpop.f32.mrb[0].mxu0
      %v822 = vpop.f32.mrb[0].mxu0
      %v823 = vadd.f32 %v311, %v822
      %v824 = vpop.f32.mrb[0].mxu0
      %825 = vmatprep.mubr.bf16.mxu0 0
      %826 = vmatmul.mubr.bf16.gmra.mrb[0].mxu0 %v471
      %v827 = vpop.f32.mrb[0].mxu0
      %v828 = vadd.f32 %v311, %v827
      %v829 = vpop.f32.mrb[0].mxu0
      %v830 = vpop.f32.mrb[0].mxu0
      %v831 = vadd.f32 %v311, %v830
      %v832 = vpop.f32.mrb[0].mxu0
      %833 = vmatprep.mubr.bf16.mxu0 0
      %834 = vmatmul.mubr.bf16.gmra.mrb[0].mxu0 %v472
      %v835 = vpop.f32.mrb[0].mxu0
      %v836 = vadd.f32 %v311, %v835
      %v837 = vpop.f32.mrb[0].mxu0
      %v838 = vpop.f32.mrb[0].mxu0
      %v839 = vadd.f32 %v311, %v838
      %v840 = vpop.f32.mrb[0].mxu0
      %841 = vdwg.mxu0
      %v842 = vtanh.pop %v588
      %v843 = vtanh.pop %v591
      %v844 = vtanh.pop %v596
      %v845 = vtanh.pop %v599
      %v846 = vtanh.pop %v604
      %v847 = vtanh.pop %v607
      %v848 = vtanh.pop %v612
      %v849 = vtanh.pop %v615
      %v850 = vtanh.pop %v620
      %v851 = vtanh.pop %v623
      %v852 = vtanh.pop %v628
      %v853 = vtanh.pop %v631
      %v854 = vtanh.pop %v636
      %v855 = vtanh.pop %v639
      %v856 = vtanh.pop %v644
      %v857 = vtanh.pop %v647
      %v858 = vtanh.pop %v652
      %v859 = vtanh.pop %v655
      %v860 = vtanh.pop %v660
      %v861 = vtanh.pop %v663
      %v862 = vtanh.pop %v668
      %v863 = vtanh.pop %v671
      %v864 = vtanh.pop %v676
      %v865 = vtanh.pop %v679
      %v866 = vtanh.pop %v684
      %v867 = vtanh.pop %v687
      %v868 = vtanh.pop %v692
      %v869 = vtanh.pop %v695
      %v870 = vtanh.pop %v700
      %v871 = vtanh.pop %v703
      %v872 = vtanh.pop %v708
      %v873 = vtanh.pop %v711
      %v874 = vtanh.pop %v716
      %v875 = vtanh.pop %v719
      %v876 = vtanh.pop %v724
      %v877 = vtanh.pop %v727
      %v878 = vtanh.pop %v732
      %v879 = vtanh.pop %v735
      %v880 = vtanh.pop %v740
      %v881 = vtanh.pop %v743
      %v882 = vtanh.pop %v748
      %v883 = vtanh.pop %v751
      %v884 = vtanh.pop %v756
      %v885 = vtanh.pop %v759
      %v886 = vtanh.pop %v764
      %v887 = vtanh.pop %v767
      %v888 = vtanh.pop %v772
      %v889 = vtanh.pop %v775
      %v890 = vtanh.pop %v780
      %v891 = vtanh.pop %v783
      %v892 = vtanh.pop %v788
      %v893 = vtanh.pop %v791
      %v894 = vtanh.pop %v796
      %v895 = vtanh.pop %v799
      %v896 = vtanh.pop %v804
      %v897 = vtanh.pop %v807
      %v898 = vtanh.pop %v812
      %v899 = vtanh.pop %v815
      %v900 = vtanh.pop %v820
      %v901 = vtanh.pop %v823
      %v902 = vtanh.pop %v828
      %v903 = vtanh.pop %v831
      %v904 = vtanh.pop %v836
      %v905 = vtanh.pop %v839
      %906 = vst [vmem:[%s223] sm:$0xff] %v842
      %907 = vst [vmem:[%s223 + $0x8] sm:$0xff] %v843
      %908 = vst [vmem:[%s223 + $0x10] sm:$0xff] %v844
      %909 = vst [vmem:[%s223 + $0x18] sm:$0xff] %v845
      %910 = vst [vmem:[%s223 + $0x20] sm:$0xff] %v846
      %911 = vst [vmem:[%s223 + $0x28] sm:$0xff] %v847
      %912 = vst [vmem:[%s223 + $0x30] sm:$0xff] %v848
      %913 = vst [vmem:[%s223 + $0x38] sm:$0xff] %v849
      %914 = vst [vmem:[%s223 + $0x40] sm:$0xff] %v850
      %915 = vst [vmem:[%s223 + $0x48] sm:$0xff] %v851
      %916 = vst [vmem:[%s223 + $0x50] sm:$0xff] %v852
      %917 = vst [vmem:[%s223 + $0x58] sm:$0xff] %v853
      %918 = vst [vmem:[%s223 + $0x60] sm:$0xff] %v854
      %919 = vst [vmem:[%s223 + $0x68] sm:$0xff] %v855
      %920 = vst [vmem:[%s223 + $0x70] sm:$0xff] %v856
      %921 = vst [vmem:[%s223 + $0x78] sm:$0xff] %v857
      %922 = vst [vmem:[%s223 + $0x80] sm:$0xff] %v858
      %923 = vst [vmem:[%s223 + $0x88] sm:$0xff] %v859
      %924 = vst [vmem:[%s223 + $0x90] sm:$0xff] %v860
      %925 = vst [vmem:[%s223 + $0x98] sm:$0xff] %v861
      %926 = vst [vmem:[%s223 + $0xa0] sm:$0xff] %v862
      %927 = vst [vmem:[%s223 + $0xa8] sm:$0xff] %v863
      %928 = vst [vmem:[%s223 + $0xb0] sm:$0xff] %v864
      %929 = vst [vmem:[%s223 + $0xb8] sm:$0xff] %v865
      %930 = vst [vmem:[%s223 + $0xc0] sm:$0xff] %v866
      %931 = vst [vmem:[%s223 + $0xc8] sm:$0xff] %v867
      %932 = vst [vmem:[%s223 + $0xd0] sm:$0xff] %v868
      %933 = vst [vmem:[%s223 + $0xd8] sm:$0xff] %v869
      %934 = vst [vmem:[%s223 + $0xe0] sm:$0xff] %v870
      %935 = vst [vmem:[%s223 + $0xe8] sm:$0xff] %v871
      %936 = vst [vmem:[%s223 + $0xf0] sm:$0xff] %v872
      %937 = vst [vmem:[%s223 + $0xf8] sm:$0xff] %v873
      %938 = vst [vmem:[%s223 + $0x100] sm:$0xff] %v874
      %939 = vst [vmem:[%s223 + $0x108] sm:$0xff] %v875
      %940 = vst [vmem:[%s223 + $0x110] sm:$0xff] %v876
      %941 = vst [vmem:[%s223 + $0x118] sm:$0xff] %v877
      %942 = vst [vmem:[%s223 + $0x120] sm:$0xff] %v878
      %943 = vst [vmem:[%s223 + $0x128] sm:$0xff] %v879
      %944 = vst [vmem:[%s223 + $0x130] sm:$0xff] %v880
      %945 = vst [vmem:[%s223 + $0x138] sm:$0xff] %v881
      %946 = vst [vmem:[%s223 + $0x140] sm:$0xff] %v882
      %947 = vst [vmem:[%s223 + $0x148] sm:$0xff] %v883
      %948 = vst [vmem:[%s223 + $0x150] sm:$0xff] %v884
      %949 = vst [vmem:[%s223 + $0x158] sm:$0xff] %v885
      %950 = vst [vmem:[%s223 + $0x160] sm:$0xff] %v886
      %951 = vst [vmem:[%s223 + $0x168] sm:$0xff] %v887
      %952 = vst [vmem:[%s223 + $0x170] sm:$0xff] %v888
      %953 = vst [vmem:[%s223 + $0x178] sm:$0xff] %v889
      %954 = vst [vmem:[%s223 + $0x180] sm:$0xff] %v890
      %955 = vst [vmem:[%s223 + $0x188] sm:$0xff] %v891
      %956 = vst [vmem:[%s223 + $0x190] sm:$0xff] %v892
      %957 = vst [vmem:[%s223 + $0x198] sm:$0xff] %v893
      %958 = vst [vmem:[%s223 + $0x1a0] sm:$0xff] %v894
      %959 = vst [vmem:[%s223 + $0x1a8] sm:$0xff] %v895
      %960 = vst [vmem:[%s223 + $0x1b0] sm:$0xff] %v896
      %961 = vst [vmem:[%s223 + $0x1b8] sm:$0xff] %v897
      %962 = vst [vmem:[%s223 + $0x1c0] sm:$0xff] %v898
      %963 = vst [vmem:[%s223 + $0x1c8] sm:$0xff] %v899
      %964 = vst [vmem:[%s223 + $0x1d0] sm:$0xff] %v900
      %965 = vst [vmem:[%s223 + $0x1d8] sm:$0xff] %v901
      %966 = vst [vmem:[%s223 + $0x1e0] sm:$0xff] %v902
      %967 = vst [vmem:[%s223 + $0x1e8] sm:$0xff] %v903
      %968 = vst [vmem:[%s223 + $0x1f0] sm:$0xff] %v904
      %969 = vst [vmem:[%s223 + $0x1f8] sm:$0xff] %v905
      %s970 = smul.u32 64, %s18
      %p971 = scmp.lt.s32.totalorder %s970, 255
      %s972 = scalar_select %p971, %s970, 255
      %p973 = scmp.lt.s32.totalorder %s19, 0
      %s974 = scalar_select %p973, %s19, 0
      %s975 = sadd.s32 %s974, %s972
      %s976 = smul.addr %s975, 8
      %s977 = scalar_lea.vmem %s3, %s976
      // Predicated region
      $region33: #{forward.23} parent=31 // pred_check
        %p978 = pneg %p124
      $region34: #{forward.23} parent=31 // pred_check_branch
        %980 = sbr.rel (%p978) target = $region36
      $region35: #{forward.23} parent=31 // pred_region
        %s981 = smul.u32 64, %s18
      $region36: #{forward.23} parent=31 // pred_fallthru
        _
    $region32: #{forward.23} parent=5 // pred_fallthru
      _
    %p982 = scmp.le.s32.totalorder 2, %s9
    // Predicated region
    $region37: #{forward.23} parent=5 // pred_check
      %p983 = pneg %p982
    $region38: #{forward.23} parent=5 // pred_check_branch
      %985 = sbr.rel (%p983) target = $region40
    $region39: #{forward.23} parent=5 // pred_region
      %s986 = ssub.s32 %s9, 2
      // Predicated region
      $region41: #{forward.23} parent=39 // pred_check
        %p987 = pneg %p130
      $region42: #{forward.23} parent=39 // pred_check_branch
        %989 = sbr.rel (%p987) target = $region44
      $region43: #{forward.23} parent=39 // pred_region
        %s990 = smul.u32 64, %s20
        %p991 = scmp.lt.s32.totalorder %s990, 255
        %s992 = scalar_select %p991, %s990, 255
        %p993 = scmp.lt.s32.totalorder %s21, 0
        %s994 = scalar_select %p993, %s21, 0
        %s995 = sadd.s32 %s994, %s992
        %s996 = smul.addr %s995, 8
        %s997 = scalar_lea.vmem %s3, %s996
      $region44: #{forward.23} parent=39 // pred_fallthru
        _
    $region40: #{forward.23} parent=5 // pred_fallthru
      _
  $region6: #{forward.23} parent=0 // loop_footer
    %s13 = sadd.s32 1, %s9
  $region7: #{forward.23} parent=0 // loop_footer_branch
    %8 = sbr.rel target = $region3
  $region8: #{forward.23} parent=0 // loop_exit
    _

// kernel: forward.26
$region0: #{forward.26}
  #allocation0 [shape = 'u32[]', space=smem, size = 0x4, offset = 0x4, fixed_abs, tag = 'smem constant byte address 0x4 - core index']
  #allocation1 [shape = 'u32[144,128]{1,0:T(1,128)}', space=vmem, size = 0x12000, scoped, tag = 'internal scratch']
  %s0 = inlined_call_operand.vmem [shape: bf16[512,128], index: 0, kind: input, shape index: {}]
  %s1 = inlined_call_operand.vmem [shape: bf16[128,128], index: 1, kind: input, shape index: {}]
  %s2 = inlined_call_operand.vmem [shape: f32[1,128], index: 2, kind: input, shape index: {}]
  %s3 = inlined_call_operand.vmem [shape: f32[512,128], index: 3, kind: output, shape index: {}]
  %s4 = sld [smem:[#allocation0]]
  $region45: #{forward.26} parent=0
    _
  %s6 = ssub.s32 1, %s4
  %s7 = scalar_select 0, %s6, %s4
  loop: start=0, step=1, limit=4
  $region2: #{forward.26} parent=0 // loop_pre_header
    _
  $region3: #{forward.26} parent=0 // loop_header
    %s9 = sphi 0, %s13
    %p10 = scmp.ge.s32.totalorder %s9, 4
    %s16 = sphi 0, %s28
    %s17 = sphi 0, %s24
    %s18 = sphi 0, %s16
    %s19 = sphi 0, %s17
    %s20 = sphi 0, %s18
    %s21 = sphi 0, %s19
    %s31 = sphi 0, %s33
    %s34 = sphi 0, %s31
    %s35 = sphi 0, %s34
    %s51 = sphi 0, %s35
    %s57 = sphi 0, %s59
    %s60 = sphi 0, %s57
    %s61 = sphi 0, %s60
    %s77 = sphi 0, %s61
    %s83 = sphi 0, %s85
    %s86 = sphi 0, %s83
    %s87 = sphi 0, %s86
    %s103 = sphi 0, %s87
    %s111 = sphi 0, %s113
    %s114 = sphi 0, %s111
    %s115 = sphi 0, %s114
    %s131 = sphi 0, %s115
  $region4: #{forward.26} parent=0 // loop_header_branch
    %12 = sbr.rel (%p10) target = $region8
  $region5: #{forward.26} parent=0 // loop_body
    %s14 = ssub.s32 %s9, 1
    %s15 = ssub.s32 %s9, 2
    %s22 = sadd.s32 1, %s17
    %p23 = scmp.ge.s32.totalorder %s22, 1
    %s24 = scalar_select %p23, 0, %s22
    %s25 = sadd.s32 1, %s16
    %s26 = scalar_select %p23, %s25, %s16
    %p27 = scmp.ge.s32.totalorder %s26, 2
    %s28 = scalar_select %p27, 0, %s26
    %s29 = ssub.s32 %s16, %s28
    %p30 = scmp.eq.s32.totalorder %s29, 0
    %s32 = sadd.s32 %s31, 1
    %s33 = scalar_select %p30, %s31, %s32
    %p36 = pneg %p30
    %p37 = scmp.eq.s32.totalorder %s9, 1
    %p38 = por %p36, %p37
    %p39 = scmp.ne.s32.totalorder %s31, %s34
    %p40 = scmp.eq.s32.totalorder %s9, 0
    %p41 = por %p39, %p40
    %p42 = scmp.ne.s32.totalorder %s31, %s34
    %p43 = scmp.eq.s32.totalorder %s14, 1
    %p44 = por %p42, %p43
    %p45 = scmp.ne.s32.totalorder %s34, %s35
    %p46 = scmp.eq.s32.totalorder %s14, 0
    %p47 = por %p45, %p46
    %p48 = scmp.ne.s32.totalorder %s34, %s35
    %p49 = scmp.eq.s32.totalorder %s15, 1
    %p50 = por %p48, %p49
    %p52 = scmp.ne.s32.totalorder %s35, %s51
    %p53 = scmp.eq.s32.totalorder %s15, 0
    %p54 = por %p52, %p53
    %s55 = ssub.s32 %s17, %s24
    %p56 = scmp.eq.s32.totalorder %s55, 0
    %s58 = sadd.s32 %s57, 1
    %s59 = scalar_select %p56, %s57, %s58
    %p62 = pneg %p56
    %p63 = scmp.eq.s32.totalorder %s9, 1
    %p64 = por %p62, %p63
    %p65 = scmp.ne.s32.totalorder %s57, %s60
    %p66 = scmp.eq.s32.totalorder %s9, 0
    %p67 = por %p65, %p66
    %p68 = scmp.ne.s32.totalorder %s57, %s60
    %p69 = scmp.eq.s32.totalorder %s14, 1
    %p70 = por %p68, %p69
    %p71 = scmp.ne.s32.totalorder %s60, %s61
    %p72 = scmp.eq.s32.totalorder %s14, 0
    %p73 = por %p71, %p72
    %p74 = scmp.ne.s32.totalorder %s60, %s61
    %p75 = scmp.eq.s32.totalorder %s15, 1
    %p76 = por %p74, %p75
    %p78 = scmp.ne.s32.totalorder %s61, %s77
    %p79 = scmp.eq.s32.totalorder %s15, 0
    %p80 = por %p78, %p79
    %s81 = ssub.s32 %s17, %s24
    %p82 = scmp.eq.s32.totalorder %s81, 0
    %s84 = sadd.s32 %s83, 1
    %s85 = scalar_select %p82, %s83, %s84
    %p88 = pneg %p82
    %p89 = scmp.eq.s32.totalorder %s9, 1
    %p90 = por %p88, %p89
    %p91 = scmp.ne.s32.totalorder %s83, %s86
    %p92 = scmp.eq.s32.totalorder %s9, 0
    %p93 = por %p91, %p92
    %p94 = scmp.ne.s32.totalorder %s83, %s86
    %p95 = scmp.eq.s32.totalorder %s14, 1
    %p96 = por %p94, %p95
    %p97 = scmp.ne.s32.totalorder %s86, %s87
    %p98 = scmp.eq.s32.totalorder %s14, 0
    %p99 = por %p97, %p98
    %p100 = scmp.ne.s32.totalorder %s86, %s87
    %p101 = scmp.eq.s32.totalorder %s15, 1
    %p102 = por %p100, %p101
    %p104 = scmp.ne.s32.totalorder %s87, %s103
    %p105 = scmp.eq.s32.totalorder %s15, 0
    %p106 = por %p104, %p105
    %s107 = ssub.s32 %s16, %s28
    %s108 = ssub.s32 %s17, %s24
    %s109 = sor.u32 %s107, %s108
    %p110 = scmp.eq.s32.totalorder %s109, 0
    %s112 = sadd.s32 %s111, 1
    %s113 = scalar_select %p110, %s111, %s112
    %p116 = pneg %p110
    %p117 = scmp.eq.s32.totalorder %s9, 1
    %p118 = por %p116, %p117
    %p119 = scmp.ne.s32.totalorder %s111, %s114
    %p120 = scmp.eq.s32.totalorder %s9, 0
    %p121 = por %p119, %p120
    %p122 = scmp.ne.s32.totalorder %s111, %s114
    %p123 = scmp.eq.s32.totalorder %s14, 1
    %p124 = por %p122, %p123
    %p125 = scmp.ne.s32.totalorder %s114, %s115
    %p126 = scmp.eq.s32.totalorder %s14, 0
    %p127 = por %p125, %p126
    %p128 = scmp.ne.s32.totalorder %s114, %s115
    %p129 = scmp.eq.s32.totalorder %s15, 1
    %p130 = por %p128, %p129
    %p132 = scmp.ne.s32.totalorder %s115, %s131
    %p133 = scmp.eq.s32.totalorder %s15, 0
    %p134 = por %p132, %p133
    %p135 = scmp.le.s32.totalorder 1, %s9
    %p136 = scmp.lt.s32.totalorder %s9, 3
    %p137 = pnand %p135, %p136
    %p138 = pneg %p137
    // Predicated region
    $region9: #{forward.26} parent=5 // pred_check
      _
    $region10: #{forward.26} parent=5 // pred_check_branch
      %140 = sbr.rel (%p137) target = $region12
    $region11: #{forward.26} parent=5 // pred_region
      %s141 = ssub.s32 %s9, 1
      // Predicated region
      $region13: #{forward.26} parent=11 // pred_check
        %p142 = pneg %p73
      $region14: #{forward.26} parent=11 // pred_check_branch
        %144 = sbr.rel (%p142) target = $region16
      $region15: #{forward.26} parent=11 // pred_region
        %p145 = scmp.lt.s32.totalorder %s19, 0
        %s146 = scalar_select %p145, %s19, 0
        %s147 = smul.addr %s146, 4
        %s148 = scalar_lea.vmem %s1, %s147
      $region16: #{forward.26} parent=11 // pred_fallthru
        _
      // Predicated region
      $region17: #{forward.26} parent=11 // pred_check
        %p149 = pneg %p99
      $region18: #{forward.26} parent=11 // pred_check_branch
        %151 = sbr.rel (%p149) target = $region20
      $region19: #{forward.26} parent=11 // pred_region
        %p152 = scmp.lt.s32.totalorder %s19, 0
        %s153 = scalar_select %p152, %s19, 0
        %s154 = scalar_lea.vmem %s2, %s153
      $region20: #{forward.26} parent=11 // pred_fallthru
        _
    $region12: #{forward.26} parent=5 // pred_fallthru
      _
    %p155 = scmp.lt.s32.totalorder %s9, 2
    // Predicated region
    $region21: #{forward.26} parent=5 // pred_check
      %p156 = pneg %p155
    $region22: #{forward.26} parent=5 // pred_check_branch
      %158 = sbr.rel (%p156) target = $region24
    $region23: #{forward.26} parent=5 // pred_region
      // Predicated region
      $region25: #{forward.26} parent=23 // pred_check
        %p159 = pneg %p41
      $region26: #{forward.26} parent=23 // pred_check_branch
        %161 = sbr.rel (%p159) target = $region28
      $region27: #{forward.26} parent=23 // pred_region
        %s162 = smul.u32 32, %s16
        %p163 = scmp.lt.s32.totalorder %s162, 63
        %s164 = scalar_select %p163, %s162, 63
        %s165 = smul.addr %s164, 4
        %s166 = scalar_lea.vmem %s0, %s165
        %s167 = smul.u32 32, %s16
      $region28: #{forward.26} parent=23 // pred_fallthru
        _
    $region24: #{forward.26} parent=5 // pred_fallthru
      _
    %p168 = scmp.le.s32.totalorder 1, %s9
    %p169 = scmp.lt.s32.totalorder %s9, 3
    %p170 = pnand %p168, %p169
    %p171 = pneg %p170
    // Predicated region
    $region29: #{forward.26} parent=5 // pred_check
      _
    $region30: #{forward.26} parent=5 // pred_check_branch
      %173 = sbr.rel (%p170) target = $region32
    $region31: #{forward.26} parent=5 // pred_region
      %s174 = ssub.s32 %s9, 1
      %s175 = smul.u32 32, %s18
      %p176 = scmp.lt.s32.totalorder %s175, 63
      %s177 = scalar_select %p176, %s175, 63
      %s178 = smul.addr %s177, 4
      %s179 = scalar_lea.vmem %s0, %s178
      %p180 = pneg %p47
      %p181 = pneg %p44
      %p182 = scmp.lt.s32.totalorder %s19, 0
      %s183 = scalar_select %p182, %s19, 0
      %s184 = smul.addr %s183, 4
      %s185 = scalar_lea.vmem %s1, %s184
      %p186 = pneg %p73
      %p187 = pneg %p70
      %p188 = scmp.lt.s32.totalorder %s19, 0
      %s189 = scalar_select %p188, %s19, 0
      %s190 = scalar_lea.vmem %s2, %s189
      %p191 = pneg %p99
      %p192 = pneg %p96
      %p193 = pneg %p127
      %p194 = pneg %p124
      %s195 = smul.u32 32, %s18
      %p196 = scmp.lt.s32.totalorder %s195, 63
      %s197 = scalar_select %p196, %s195, 63
      %p198 = scmp.lt.s32.totalorder %s19, 0
      %s199 = scalar_select %p198, %s19, 0
      %s200 = sadd.s32 %s199, %s197
      %s201 = smul.addr %s200, 8
      %s202 = scalar_lea.vmem %s3, %s201
      %s203 = smul.u32 32, %s18
      %p204 = scmp.lt.s32.totalorder %s203, 63
      %s205 = scalar_select %p204, %s203, 63
      %s206 = smul.addr %s205, 4
      %s207 = scalar_lea.vmem %s0, %s206
      %s208 = smul.u32 32, %s18
      %p209 = scmp.lt.s32.totalorder %s19, 0
      %s210 = scalar_select %p209, %s19, 0
      %s211 = smul.addr %s210, 4
      %s212 = scalar_lea.vmem %s1, %s211
      %p213 = scmp.lt.s32.totalorder %s19, 0
      %s214 = scalar_select %p213, %s19, 0
      %s215 = scalar_lea.vmem %s2, %s214
      %s216 = smul.u32 32, %s18
      %p217 = scmp.lt.s32.totalorder %s216, 63
      %s218 = scalar_select %p217, %s216, 63
      %p219 = scmp.lt.s32.totalorder %s19, 0
      %s220 = scalar_select %p219, %s19, 0
      %s221 = sadd.s32 %s220, %s218
      %s222 = smul.addr %s221, 8
      %s223 = scalar_lea.vmem %s3, %s222
      %s224 = smul.u32 32, %s18
      %v226 = vld [vmem:[%s207] sm:$0xf]
      %v227 = vld [vmem:[%s207 + $0x4] sm:$0xf]
      %v228 = vld [vmem:[%s207 + $0x8] sm:$0xf]
      %v229 = vld [vmem:[%s207 + $0xc] sm:$0xf]
      %v230 = vld [vmem:[%s207 + $0x10] sm:$0xf]
      %v231 = vld [vmem:[%s207 + $0x14] sm:$0xf]
      %v232 = vld [vmem:[%s207 + $0x18] sm:$0xf]
      %v233 = vld [vmem:[%s207 + $0x1c] sm:$0xf]
      %v234 = vld [vmem:[%s207 + $0x20] sm:$0xf]
      %v235 = vld [vmem:[%s207 + $0x24] sm:$0xf]
      %v236 = vld [vmem:[%s207 + $0x28] sm:$0xf]
      %v237 = vld [vmem:[%s207 + $0x2c] sm:$0xf]
      %v238 = vld [vmem:[%s207 + $0x30] sm:$0xf]
      %v239 = vld [vmem:[%s207 + $0x34] sm:$0xf]
      %v240 = vld [vmem:[%s207 + $0x38] sm:$0xf]
      %v241 = vld [vmem:[%s207 + $0x3c] sm:$0xf]
      %v242 = vld [vmem:[%s207 + $0x40] sm:$0xf]
      %v243 = vld [vmem:[%s207 + $0x44] sm:$0xf]
      %v244 = vld [vmem:[%s207 + $0x48] sm:$0xf]
      %v245 = vld [vmem:[%s207 + $0x4c] sm:$0xf]
      %v246 = vld [vmem:[%s207 + $0x50] sm:$0xf]
      %v247 = vld [vmem:[%s207 + $0x54] sm:$0xf]
      %v248 = vld [vmem:[%s207 + $0x58] sm:$0xf]
      %v249 = vld [vmem:[%s207 + $0x5c] sm:$0xf]
      %v250 = vld [vmem:[%s207 + $0x60] sm:$0xf]
      %v251 = vld [vmem:[%s207 + $0x64] sm:$0xf]
      %v252 = vld [vmem:[%s207 + $0x68] sm:$0xf]
      %v253 = vld [vmem:[%s207 + $0x6c] sm:$0xf]
      %v254 = vld [vmem:[%s207 + $0x70] sm:$0xf]
      %v255 = vld [vmem:[%s207 + $0x74] sm:$0xf]
      %v256 = vld [vmem:[%s207 + $0x78] sm:$0xf]
      %v257 = vld [vmem:[%s207 + $0x7c] sm:$0xf]
      %v258 = vld [vmem:[%s212] sm:$0xf]
      %v259 = vld [vmem:[%s212 + $0x4] sm:$0xf]
      %v260 = vld [vmem:[%s212 + $0x8] sm:$0xf]
      %v261 = vld [vmem:[%s212 + $0xc] sm:$0xf]
      %v262 = vld [vmem:[%s212 + $0x10] sm:$0xf]
      %v263 = vld [vmem:[%s212 + $0x14] sm:$0xf]
      %v264 = vld [vmem:[%s212 + $0x18] sm:$0xf]
      %v265 = vld [vmem:[%s212 + $0x1c] sm:$0xf]
      %v266 = vld [vmem:[%s212 + $0x20] sm:$0xf]
      %v267 = vld [vmem:[%s212 + $0x24] sm:$0xf]
      %v268 = vld [vmem:[%s212 + $0x28] sm:$0xf]
      %v269 = vld [vmem:[%s212 + $0x2c] sm:$0xf]
      %v270 = vld [vmem:[%s212 + $0x30] sm:$0xf]
      %v271 = vld [vmem:[%s212 + $0x34] sm:$0xf]
      %v272 = vld [vmem:[%s212 + $0x38] sm:$0xf]
      %v273 = vld [vmem:[%s212 + $0x3c] sm:$0xf]
      %v274 = vld [vmem:[%s215] sm:$0x1]
      %v276 = vlaneseq
      %v277 = vshrl.u32 %v276, 7
      %v278 = vsub.s32 0, %v277
      %v279 = vrot.slane %v274, %v278
      %v313 = vunpack.c.l.b16 %v226
      %v314 = vunpack.c.l.b16 %v227
      %v315 = vunpack.c.l.b16 %v228
      %v316 = vunpack.c.l.b16 %v229
      %v317 = vunpack.c.l.b16 %v230
      %v318 = vunpack.c.l.b16 %v231
      %v319 = vunpack.c.l.b16 %v232
      %v320 = vunpack.c.l.b16 %v233
      %v321 = vunpack.c.l.b16 %v234
      %v322 = vunpack.c.l.b16 %v235
      %v323 = vunpack.c.l.b16 %v236
      %v324 = vunpack.c.l.b16 %v237
      %v325 = vunpack.c.l.b16 %v238
      %v326 = vunpack.c.l.b16 %v239
      %v327 = vunpack.c.l.b16 %v240
      %v328 = vunpack.c.l.b16 %v241
      %v329 = vunpack.c.l.b16 %v242
      %v330 = vunpack.c.l.b16 %v243
      %v331 = vunpack.c.l.b16 %v244
      %v332 = vunpack.c.l.b16 %v245
      %v333 = vunpack.c.l.b16 %v246
      %v334 = vunpack.c.l.b16 %v247
      %v335 = vunpack.c.l.b16 %v248
      %v336 = vunpack.c.l.b16 %v249
      %v337 = vunpack.c.l.b16 %v250
      %v338 = vunpack.c.l.b16 %v251
      %v339 = vunpack.c.l.b16 %v252
      %v340 = vunpack.c.l.b16 %v253
      %v341 = vunpack.c.l.b16 %v254
      %v342 = vunpack.c.l.b16 %v255
      %v343 = vunpack.c.l.b16 %v256
      %v344 = vunpack.c.l.b16 %v257
      %v345 = vpack.c.b16 %v314, %v313
      %v346 = vpack.c.b16 %v316, %v315
      %v347 = vpack.c.b16 %v318, %v317
      %v348 = vpack.c.b16 %v320, %v319
      %v349 = vpack.c.b16 %v322, %v321
      %v350 = vpack.c.b16 %v324, %v323
      %v351 = vpack.c.b16 %v326, %v325
      %v352 = vpack.c.b16 %v328, %v327
      %v353 = vpack.c.b16 %v330, %v329
      %v354 = vpack.c.b16 %v332, %v331
      %v355 = vpack.c.b16 %v334, %v333
      %v356 = vpack.c.b16 %v336, %v335
      %v357 = vpack.c.b16 %v338, %v337
      %v358 = vpack.c.b16 %v340, %v339
      %v359 = vpack.c.b16 %v342, %v341
      %v360 = vpack.c.b16 %v344, %v343
      %v393 = vunpack.c.l.b16 %v258
      %v394 = vunpack.c.l.b16 %v259
      %v395 = vunpack.c.l.b16 %v260
      %v396 = vunpack.c.l.b16 %v261
      %v397 = vunpack.c.l.b16 %v262
      %v398 = vunpack.c.l.b16 %v263
      %v399 = vunpack.c.l.b16 %v264
      %v400 = vunpack.c.l.b16 %v265
      %v401 = vunpack.c.l.b16 %v266
      %v402 = vunpack.c.l.b16 %v267
      %v403 = vunpack.c.l.b16 %v268
      %v404 = vunpack.c.l.b16 %v269
      %v405 = vunpack.c.l.b16 %v270
      %v406 = vunpack.c.l.b16 %v271
      %v407 = vunpack.c.l.b16 %v272
      %v408 = vunpack.c.l.b16 %v273
      %v409 = vpack.c.b16 %v394, %v393
      %v410 = vpack.c.b16 %v396, %v395
      %v411 = vpack.c.b16 %v398, %v397
      %v412 = vpack.c.b16 %v400, %v399
      %v413 = vpack.c.b16 %v402, %v401
      %v414 = vpack.c.b16 %v404, %v403
      %v415 = vpack.c.b16 %v406, %v405
      %v416 = vpack.c.b16 %v408, %v407
      %425 = vmatprep.subr.bf16.mxu0 0
      %426 = vmatpush1.bf16.msra.mxu0 %v409
      %427 = vmatprep.subr.bf16.mxu0 0
      %428 = vmatpush1.bf16.msra.mxu0 %v410
      %429 = vmatprep.subr.bf16.mxu0 0
      %430 = vmatpush1.bf16.msra.mxu0 %v411
      %431 = vmatprep.subr.bf16.mxu0 0
      %432 = vmatpush1.bf16.msra.mxu0 %v412
      %433 = vmatprep.subr.bf16.mxu0 0
      %434 = vmatpush1.bf16.msra.mxu0 %v413
      %435 = vmatprep.subr.bf16.mxu0 0
      %436 = vmatpush1.bf16.msra.mxu0 %v414
      %437 = vmatprep.subr.bf16.mxu0 0
      %438 = vmatpush1.bf16.msra.mxu0 %v415
      %439 = vmatprep.subr.bf16.mxu0 0
      %440 = vmatpush1.bf16.msra.mxu0 %v416
      %441 = vmatprep.subr.bf16.mxu0 0
      %442 = vmatpush1.bf16.msra.mxu0 0
      %443 = vmatprep.subr.bf16.mxu0 0
      %444 = vmatpush1.bf16.msra.mxu0 0
      %445 = vmatprep.subr.bf16.mxu0 0
      %446 = vmatpush1.bf16.msra.mxu0 0
      %447 = vmatprep.subr.bf16.mxu0 0
      %448 = vmatpush1.bf16.msra.mxu0 0
      %449 = vmatprep.subr.bf16.mxu0 0
      %450 = vmatpush1.bf16.msra.mxu0 0
      %451 = vmatprep.subr.bf16.mxu0 0
      %452 = vmatpush1.bf16.msra.mxu0 0
      %453 = vmatprep.subr.bf16.mxu0 0
      %454 = vmatpush1.bf16.msra.mxu0 0
      %455 = vmatprep.subr.bf16.mxu0 0
      %456 = vmatpush1.bf16.msra.mxu0 0
      %457 = vmatprep.mubr.bf16.mxu0 0
      %458 = vmatmul.mubr.bf16.gmra.mrb[0].mxu0 %v345
      %v459 = vpop.f32.mrb[0].mxu0
      %v460 = vadd.f32 %v279, %v459
      %v461 = vpop.f32.mrb[0].mxu0
      %v462 = vpop.f32.mrb[0].mxu0
      %v463 = vadd.f32 %v279, %v462
      %v464 = vpop.f32.mrb[0].mxu0
      %465 = vmatprep.mubr.bf16.mxu0 0
      %466 = vmatmul.mubr.bf16.gmra.mrb[0].mxu0 %v346
      %v467 = vpop.f32.mrb[0].mxu0
      %v468 = vadd.f32 %v279, %v467
      %v469 = vpop.f32.mrb[0].mxu0
      %v470 = vpop.f32.mrb[0].mxu0
      %v471 = vadd.f32 %v279, %v470
      %v472 = vpop.f32.mrb[0].mxu0
      %473 = vmatprep.mubr.bf16.mxu0 0
      %474 = vmatmul.mubr.bf16.gmra.mrb[0].mxu0 %v347
      %v475 = vpop.f32.mrb[0].mxu0
      %v476 = vadd.f32 %v279, %v475
      %v477 = vpop.f32.mrb[0].mxu0
      %v478 = vpop.f32.mrb[0].mxu0
      %v479 = vadd.f32 %v279, %v478
      %v480 = vpop.f32.mrb[0].mxu0
      %481 = vmatprep.mubr.bf16.mxu0 0
      %482 = vmatmul.mubr.bf16.gmra.mrb[0].mxu0 %v348
      %v483 = vpop.f32.mrb[0].mxu0
      %v484 = vadd.f32 %v279, %v483
      %v485 = vpop.f32.mrb[0].mxu0
      %v486 = vpop.f32.mrb[0].mxu0
      %v487 = vadd.f32 %v279, %v486
      %v488 = vpop.f32.mrb[0].mxu0
      %489 = vmatprep.mubr.bf16.mxu0 0
      %490 = vmatmul.mubr.bf16.gmra.mrb[0].mxu0 %v349
      %v491 = vpop.f32.mrb[0].mxu0
      %v492 = vadd.f32 %v279, %v491
      %v493 = vpop.f32.mrb[0].mxu0
      %v494 = vpop.f32.mrb[0].mxu0
      %v495 = vadd.f32 %v279, %v494
      %v496 = vpop.f32.mrb[0].mxu0
      %497 = vmatprep.mubr.bf16.mxu0 0
      %498 = vmatmul.mubr.bf16.gmra.mrb[0].mxu0 %v350
      %v499 = vpop.f32.mrb[0].mxu0
      %v500 = vadd.f32 %v279, %v499
      %v501 = vpop.f32.mrb[0].mxu0
      %v502 = vpop.f32.mrb[0].mxu0
      %v503 = vadd.f32 %v279, %v502
      %v504 = vpop.f32.mrb[0].mxu0
      %505 = vmatprep.mubr.bf16.mxu0 0
      %506 = vmatmul.mubr.bf16.gmra.mrb[0].mxu0 %v351
      %v507 = vpop.f32.mrb[0].mxu0
      %v508 = vadd.f32 %v279, %v507
      %v509 = vpop.f32.mrb[0].mxu0
      %v510 = vpop.f32.mrb[0].mxu0
      %v511 = vadd.f32 %v279, %v510
      %v512 = vpop.f32.mrb[0].mxu0
      %513 = vmatprep.mubr.bf16.mxu0 0
      %514 = vmatmul.mubr.bf16.gmra.mrb[0].mxu0 %v352
      %v515 = vpop.f32.mrb[0].mxu0
      %v516 = vadd.f32 %v279, %v515
      %v517 = vpop.f32.mrb[0].mxu0
      %v518 = vpop.f32.mrb[0].mxu0
      %v519 = vadd.f32 %v279, %v518
      %v520 = vpop.f32.mrb[0].mxu0
      %521 = vmatprep.mubr.bf16.mxu0 0
      %522 = vmatmul.mubr.bf16.gmra.mrb[0].mxu0 %v353
      %v523 = vpop.f32.mrb[0].mxu0
      %v524 = vadd.f32 %v279, %v523
      %v525 = vpop.f32.mrb[0].mxu0
      %v526 = vpop.f32.mrb[0].mxu0
      %v527 = vadd.f32 %v279, %v526
      %v528 = vpop.f32.mrb[0].mxu0
      %529 = vmatprep.mubr.bf16.mxu0 0
      %530 = vmatmul.mubr.bf16.gmra.mrb[0].mxu0 %v354
      %v531 = vpop.f32.mrb[0].mxu0
      %v532 = vadd.f32 %v279, %v531
      %v533 = vpop.f32.mrb[0].mxu0
      %v534 = vpop.f32.mrb[0].mxu0
      %v535 = vadd.f32 %v279, %v534
      %v536 = vpop.f32.mrb[0].mxu0
      %537 = vmatprep.mubr.bf16.mxu0 0
      %538 = vmatmul.mubr.bf16.gmra.mrb[0].mxu0 %v355
      %v539 = vpop.f32.mrb[0].mxu0
      %v540 = vadd.f32 %v279, %v539
      %v541 = vpop.f32.mrb[0].mxu0
      %v542 = vpop.f32.mrb[0].mxu0
      %v543 = vadd.f32 %v279, %v542
      %v544 = vpop.f32.mrb[0].mxu0
      %545 = vmatprep.mubr.bf16.mxu0 0
      %546 = vmatmul.mubr.bf16.gmra.mrb[0].mxu0 %v356
      %v547 = vpop.f32.mrb[0].mxu0
      %v548 = vadd.f32 %v279, %v547
      %v549 = vpop.f32.mrb[0].mxu0
      %v550 = vpop.f32.mrb[0].mxu0
      %v551 = vadd.f32 %v279, %v550
      %v552 = vpop.f32.mrb[0].mxu0
      %553 = vmatprep.mubr.bf16.mxu0 0
      %554 = vmatmul.mubr.bf16.gmra.mrb[0].mxu0 %v357
      %v555 = vpop.f32.mrb[0].mxu0
      %v556 = vadd.f32 %v279, %v555
      %v557 = vpop.f32.mrb[0].mxu0
      %v558 = vpop.f32.mrb[0].mxu0
      %v559 = vadd.f32 %v279, %v558
      %v560 = vpop.f32.mrb[0].mxu0
      %561 = vmatprep.mubr.bf16.mxu0 0
      %562 = vmatmul.mubr.bf16.gmra.mrb[0].mxu0 %v358
      %v563 = vpop.f32.mrb[0].mxu0
      %v564 = vadd.f32 %v279, %v563
      %v565 = vpop.f32.mrb[0].mxu0
      %v566 = vpop.f32.mrb[0].mxu0
      %v567 = vadd.f32 %v279, %v566
      %v568 = vpop.f32.mrb[0].mxu0
      %569 = vmatprep.mubr.bf16.mxu0 0
      %570 = vmatmul.mubr.bf16.gmra.mrb[0].mxu0 %v359
      %v571 = vpop.f32.mrb[0].mxu0
      %v572 = vadd.f32 %v279, %v571
      %v573 = vpop.f32.mrb[0].mxu0
      %v574 = vpop.f32.mrb[0].mxu0
      %v575 = vadd.f32 %v279, %v574
      %v576 = vpop.f32.mrb[0].mxu0
      %577 = vmatprep.mubr.bf16.mxu0 0
      %578 = vmatmul.mubr.bf16.gmra.mrb[0].mxu0 %v360
      %v579 = vpop.f32.mrb[0].mxu0
      %v580 = vadd.f32 %v279, %v579
      %v581 = vpop.f32.mrb[0].mxu0
      %v582 = vpop.f32.mrb[0].mxu0
      %v583 = vadd.f32 %v279, %v582
      %v584 = vpop.f32.mrb[0].mxu0
      %585 = vdwg.mxu0
      %v586 = vmax.f32 %v460, 0.0
      %v587 = vmax.f32 %v463, 0.0
      %v588 = vmax.f32 %v468, 0.0
      %v589 = vmax.f32 %v471, 0.0
      %v590 = vmax.f32 %v476, 0.0
      %v591 = vmax.f32 %v479, 0.0
      %v592 = vmax.f32 %v484, 0.0
      %v593 = vmax.f32 %v487, 0.0
      %v594 = vmax.f32 %v492, 0.0
      %v595 = vmax.f32 %v495, 0.0
      %v596 = vmax.f32 %v500, 0.0
      %v597 = vmax.f32 %v503, 0.0
      %v598 = vmax.f32 %v508, 0.0
      %v599 = vmax.f32 %v511, 0.0
      %v600 = vmax.f32 %v516, 0.0
      %v601 = vmax.f32 %v519, 0.0
      %v602 = vmax.f32 %v524, 0.0
      %v603 = vmax.f32 %v527, 0.0
      %v604 = vmax.f32 %v532, 0.0
      %v605 = vmax.f32 %v535, 0.0
      %v606 = vmax.f32 %v540, 0.0
      %v607 = vmax.f32 %v543, 0.0
      %v608 = vmax.f32 %v548, 0.0
      %v609 = vmax.f32 %v551, 0.0
      %v610 = vmax.f32 %v556, 0.0
      %v611 = vmax.f32 %v559, 0.0
      %v612 = vmax.f32 %v564, 0.0
      %v613 = vmax.f32 %v567, 0.0
      %v614 = vmax.f32 %v572, 0.0
      %v615 = vmax.f32 %v575, 0.0
      %v616 = vmax.f32 %v580, 0.0
      %v617 = vmax.f32 %v583, 0.0
      %618 = vst [vmem:[%s223] sm:$0xff] %v586
      %619 = vst [vmem:[%s223 + $0x8] sm:$0xff] %v587
      %620 = vst [vmem:[%s223 + $0x10] sm:$0xff] %v588
      %621 = vst [vmem:[%s223 + $0x18] sm:$0xff] %v589
      %622 = vst [vmem:[%s223 + $0x20] sm:$0xff] %v590
      %623 = vst [vmem:[%s223 + $0x28] sm:$0xff] %v591
      %624 = vst [vmem:[%s223 + $0x30] sm:$0xff] %v592
      %625 = vst [vmem:[%s223 + $0x38] sm:$0xff] %v593
      %626 = vst [vmem:[%s223 + $0x40] sm:$0xff] %v594
      %627 = vst [vmem:[%s223 + $0x48] sm:$0xff] %v595
      %628 = vst [vmem:[%s223 + $0x50] sm:$0xff] %v596
      %629 = vst [vmem:[%s223 + $0x58] sm:$0xff] %v597
      %630 = vst [vmem:[%s223 + $0x60] sm:$0xff] %v598
      %631 = vst [vmem:[%s223 + $0x68] sm:$0xff] %v599
      %632 = vst [vmem:[%s223 + $0x70] sm:$0xff] %v600
      %633 = vst [vmem:[%s223 + $0x78] sm:$0xff] %v601
      %634 = vst [vmem:[%s223 + $0x80] sm:$0xff] %v602
      %635 = vst [vmem:[%s223 + $0x88] sm:$0xff] %v603
      %636 = vst [vmem:[%s223 + $0x90] sm:$0xff] %v604
      %637 = vst [vmem:[%s223 + $0x98] sm:$0xff] %v605
      %638 = vst [vmem:[%s223 + $0xa0] sm:$0xff] %v606
      %639 = vst [vmem:[%s223 + $0xa8] sm:$0xff] %v607
      %640 = vst [vmem:[%s223 + $0xb0] sm:$0xff] %v608
      %641 = vst [vmem:[%s223 + $0xb8] sm:$0xff] %v609
      %642 = vst [vmem:[%s223 + $0xc0] sm:$0xff] %v610
      %643 = vst [vmem:[%s223 + $0xc8] sm:$0xff] %v611
      %644 = vst [vmem:[%s223 + $0xd0] sm:$0xff] %v612
      %645 = vst [vmem:[%s223 + $0xd8] sm:$0xff] %v613
      %646 = vst [vmem:[%s223 + $0xe0] sm:$0xff] %v614
      %647 = vst [vmem:[%s223 + $0xe8] sm:$0xff] %v615
      %648 = vst [vmem:[%s223 + $0xf0] sm:$0xff] %v616
      %649 = vst [vmem:[%s223 + $0xf8] sm:$0xff] %v617
      %s650 = smul.u32 32, %s18
      %p651 = scmp.lt.s32.totalorder %s650, 63
      %s652 = scalar_select %p651, %s650, 63
      %p653 = scmp.lt.s32.totalorder %s19, 0
      %s654 = scalar_select %p653, %s19, 0
      %s655 = sadd.s32 %s654, %s652
      %s656 = smul.addr %s655, 8
      %s657 = scalar_lea.vmem %s3, %s656
      // Predicated region
      $region33: #{forward.26} parent=31 // pred_check
        %p658 = pneg %p124
      $region34: #{forward.26} parent=31 // pred_check_branch
        %660 = sbr.rel (%p658) target = $region36
      $region35: #{forward.26} parent=31 // pred_region
        %s661 = smul.u32 32, %s18
      $region36: #{forward.26} parent=31 // pred_fallthru
        _
    $region32: #{forward.26} parent=5 // pred_fallthru
      _
    %p662 = scmp.le.s32.totalorder 2, %s9
    // Predicated region
    $region37: #{forward.26} parent=5 // pred_check
      %p663 = pneg %p662
    $region38: #{forward.26} parent=5 // pred_check_branch
      %665 = sbr.rel (%p663) target = $region40
    $region39: #{forward.26} parent=5 // pred_region
      %s666 = ssub.s32 %s9, 2
      // Predicated region
      $region41: #{forward.26} parent=39 // pred_check
        %p667 = pneg %p130
      $region42: #{forward.26} parent=39 // pred_check_branch
        %669 = sbr.rel (%p667) target = $region44
      $region43: #{forward.26} parent=39 // pred_region
        %s670 = smul.u32 32, %s20
        %p671 = scmp.lt.s32.totalorder %s670, 63
        %s672 = scalar_select %p671, %s670, 63
        %p673 = scmp.lt.s32.totalorder %s21, 0
        %s674 = scalar_select %p673, %s21, 0
        %s675 = sadd.s32 %s674, %s672
        %s676 = smul.addr %s675, 8
        %s677 = scalar_lea.vmem %s3, %s676
      $region44: #{forward.26} parent=39 // pred_fallthru
        _
    $region40: #{forward.26} parent=5 // pred_fallthru
      _
  $region6: #{forward.26} parent=0 // loop_footer
    %s13 = sadd.s32 1, %s9
  $region7: #{forward.26} parent=0 // loop_footer_branch
    %8 = sbr.rel target = $region3
  $region8: #{forward.26} parent=0 // loop_exit
    _

// kernel: forward.27
$region0: #{forward.27}
  #allocation0 [shape = 'u32[]', space=smem, size = 0x4, offset = 0x4, fixed_abs, tag = 'smem constant byte address 0x4 - core index']
  #allocation1 [shape = 'u32[144,128]{1,0:T(1,128)}', space=vmem, size = 0x12000, scoped, tag = 'internal scratch']
  %s0 = inlined_call_operand.vmem [shape: bf16[128,128], index: 0, kind: input, shape index: {}]
  %s1 = inlined_call_operand.vmem [shape: bf16[128,128], index: 1, kind: input, shape index: {}]
  %s2 = inlined_call_operand.vmem [shape: f32[1,128], index: 2, kind: input, shape index: {}]
  %s3 = inlined_call_operand.vmem [shape: f32[128,128], index: 3, kind: output, shape index: {}]
  %s4 = sld [smem:[#allocation0]]
  $region45: #{forward.27} parent=0
    _
  %s6 = ssub.s32 1, %s4
  %s7 = scalar_select 0, %s6, %s4
  loop: start=0, step=1, limit=4
  $region2: #{forward.27} parent=0 // loop_pre_header
    _
  $region3: #{forward.27} parent=0 // loop_header
    %s9 = sphi 0, %s13
    %p10 = scmp.ge.s32.totalorder %s9, 4
    %s16 = sphi 0, %s28
    %s17 = sphi 0, %s24
    %s18 = sphi 0, %s16
    %s19 = sphi 0, %s17
    %s20 = sphi 0, %s18
    %s21 = sphi 0, %s19
    %s31 = sphi 0, %s33
    %s34 = sphi 0, %s31
    %s35 = sphi 0, %s34
    %s51 = sphi 0, %s35
    %s57 = sphi 0, %s59
    %s60 = sphi 0, %s57
    %s61 = sphi 0, %s60
    %s77 = sphi 0, %s61
    %s83 = sphi 0, %s85
    %s86 = sphi 0, %s83
    %s87 = sphi 0, %s86
    %s103 = sphi 0, %s87
    %s111 = sphi 0, %s113
    %s114 = sphi 0, %s111
    %s115 = sphi 0, %s114
    %s131 = sphi 0, %s115
  $region4: #{forward.27} parent=0 // loop_header_branch
    %12 = sbr.rel (%p10) target = $region8
  $region5: #{forward.27} parent=0 // loop_body
    %s14 = ssub.s32 %s9, 1
    %s15 = ssub.s32 %s9, 2
    %s22 = sadd.s32 1, %s17
    %p23 = scmp.ge.s32.totalorder %s22, 1
    %s24 = scalar_select %p23, 0, %s22
    %s25 = sadd.s32 1, %s16
    %s26 = scalar_select %p23, %s25, %s16
    %p27 = scmp.ge.s32.totalorder %s26, 2
    %s28 = scalar_select %p27, 0, %s26
    %s29 = ssub.s32 %s16, %s28
    %p30 = scmp.eq.s32.totalorder %s29, 0
    %s32 = sadd.s32 %s31, 1
    %s33 = scalar_select %p30, %s31, %s32
    %p36 = pneg %p30
    %p37 = scmp.eq.s32.totalorder %s9, 1
    %p38 = por %p36, %p37
    %p39 = scmp.ne.s32.totalorder %s31, %s34
    %p40 = scmp.eq.s32.totalorder %s9, 0
    %p41 = por %p39, %p40
    %p42 = scmp.ne.s32.totalorder %s31, %s34
    %p43 = scmp.eq.s32.totalorder %s14, 1
    %p44 = por %p42, %p43
    %p45 = scmp.ne.s32.totalorder %s34, %s35
    %p46 = scmp.eq.s32.totalorder %s14, 0
    %p47 = por %p45, %p46
    %p48 = scmp.ne.s32.totalorder %s34, %s35
    %p49 = scmp.eq.s32.totalorder %s15, 1
    %p50 = por %p48, %p49
    %p52 = scmp.ne.s32.totalorder %s35, %s51
    %p53 = scmp.eq.s32.totalorder %s15, 0
    %p54 = por %p52, %p53
    %s55 = ssub.s32 %s17, %s24
    %p56 = scmp.eq.s32.totalorder %s55, 0
    %s58 = sadd.s32 %s57, 1
    %s59 = scalar_select %p56, %s57, %s58
    %p62 = pneg %p56
    %p63 = scmp.eq.s32.totalorder %s9, 1
    %p64 = por %p62, %p63
    %p65 = scmp.ne.s32.totalorder %s57, %s60
    %p66 = scmp.eq.s32.totalorder %s9, 0
    %p67 = por %p65, %p66
    %p68 = scmp.ne.s32.totalorder %s57, %s60
    %p69 = scmp.eq.s32.totalorder %s14, 1
    %p70 = por %p68, %p69
    %p71 = scmp.ne.s32.totalorder %s60, %s61
    %p72 = scmp.eq.s32.totalorder %s14, 0
    %p73 = por %p71, %p72
    %p74 = scmp.ne.s32.totalorder %s60, %s61
    %p75 = scmp.eq.s32.totalorder %s15, 1
    %p76 = por %p74, %p75
    %p78 = scmp.ne.s32.totalorder %s61, %s77
    %p79 = scmp.eq.s32.totalorder %s15, 0
    %p80 = por %p78, %p79
    %s81 = ssub.s32 %s17, %s24
    %p82 = scmp.eq.s32.totalorder %s81, 0
    %s84 = sadd.s32 %s83, 1
    %s85 = scalar_select %p82, %s83, %s84
    %p88 = pneg %p82
    %p89 = scmp.eq.s32.totalorder %s9, 1
    %p90 = por %p88, %p89
    %p91 = scmp.ne.s32.totalorder %s83, %s86
    %p92 = scmp.eq.s32.totalorder %s9, 0
    %p93 = por %p91, %p92
    %p94 = scmp.ne.s32.totalorder %s83, %s86
    %p95 = scmp.eq.s32.totalorder %s14, 1
    %p96 = por %p94, %p95
    %p97 = scmp.ne.s32.totalorder %s86, %s87
    %p98 = scmp.eq.s32.totalorder %s14, 0
    %p99 = por %p97, %p98
    %p100 = scmp.ne.s32.totalorder %s86, %s87
    %p101 = scmp.eq.s32.totalorder %s15, 1
    %p102 = por %p100, %p101
    %p104 = scmp.ne.s32.totalorder %s87, %s103
    %p105 = scmp.eq.s32.totalorder %s15, 0
    %p106 = por %p104, %p105
    %s107 = ssub.s32 %s16, %s28
    %s108 = ssub.s32 %s17, %s24
    %s109 = sor.u32 %s107, %s108
    %p110 = scmp.eq.s32.totalorder %s109, 0
    %s112 = sadd.s32 %s111, 1
    %s113 = scalar_select %p110, %s111, %s112
    %p116 = pneg %p110
    %p117 = scmp.eq.s32.totalorder %s9, 1
    %p118 = por %p116, %p117
    %p119 = scmp.ne.s32.totalorder %s111, %s114
    %p120 = scmp.eq.s32.totalorder %s9, 0
    %p121 = por %p119, %p120
    %p122 = scmp.ne.s32.totalorder %s111, %s114
    %p123 = scmp.eq.s32.totalorder %s14, 1
    %p124 = por %p122, %p123
    %p125 = scmp.ne.s32.totalorder %s114, %s115
    %p126 = scmp.eq.s32.totalorder %s14, 0
    %p127 = por %p125, %p126
    %p128 = scmp.ne.s32.totalorder %s114, %s115
    %p129 = scmp.eq.s32.totalorder %s15, 1
    %p130 = por %p128, %p129
    %p132 = scmp.ne.s32.totalorder %s115, %s131
    %p133 = scmp.eq.s32.totalorder %s15, 0
    %p134 = por %p132, %p133
    %p135 = scmp.le.s32.totalorder 1, %s9
    %p136 = scmp.lt.s32.totalorder %s9, 3
    %p137 = pnand %p135, %p136
    %p138 = pneg %p137
    // Predicated region
    $region9: #{forward.27} parent=5 // pred_check
      _
    $region10: #{forward.27} parent=5 // pred_check_branch
      %140 = sbr.rel (%p137) target = $region12
    $region11: #{forward.27} parent=5 // pred_region
      %s141 = ssub.s32 %s9, 1
      // Predicated region
      $region13: #{forward.27} parent=11 // pred_check
        %p142 = pneg %p73
      $region14: #{forward.27} parent=11 // pred_check_branch
        %144 = sbr.rel (%p142) target = $region16
      $region15: #{forward.27} parent=11 // pred_region
        %p145 = scmp.lt.s32.totalorder %s19, 0
        %s146 = scalar_select %p145, %s19, 0
        %s147 = smul.addr %s146, 4
        %s148 = scalar_lea.vmem %s1, %s147
      $region16: #{forward.27} parent=11 // pred_fallthru
        _
      // Predicated region
      $region17: #{forward.27} parent=11 // pred_check
        %p149 = pneg %p99
      $region18: #{forward.27} parent=11 // pred_check_branch
        %151 = sbr.rel (%p149) target = $region20
      $region19: #{forward.27} parent=11 // pred_region
        %p152 = scmp.lt.s32.totalorder %s19, 0
        %s153 = scalar_select %p152, %s19, 0
        %s154 = scalar_lea.vmem %s2, %s153
      $region20: #{forward.27} parent=11 // pred_fallthru
        _
    $region12: #{forward.27} parent=5 // pred_fallthru
      _
    %p155 = scmp.lt.s32.totalorder %s9, 2
    // Predicated region
    $region21: #{forward.27} parent=5 // pred_check
      %p156 = pneg %p155
    $region22: #{forward.27} parent=5 // pred_check_branch
      %158 = sbr.rel (%p156) target = $region24
    $region23: #{forward.27} parent=5 // pred_region
      // Predicated region
      $region25: #{forward.27} parent=23 // pred_check
        %p159 = pneg %p41
      $region26: #{forward.27} parent=23 // pred_check_branch
        %161 = sbr.rel (%p159) target = $region28
      $region27: #{forward.27} parent=23 // pred_region
        %s162 = smul.u32 8, %s16
        %p163 = scmp.lt.s32.totalorder %s162, 15
        %s164 = scalar_select %p163, %s162, 15
        %s165 = smul.addr %s164, 4
        %s166 = scalar_lea.vmem %s0, %s165
        %s167 = smul.u32 8, %s16
      $region28: #{forward.27} parent=23 // pred_fallthru
        _
    $region24: #{forward.27} parent=5 // pred_fallthru
      _
    %p168 = scmp.le.s32.totalorder 1, %s9
    %p169 = scmp.lt.s32.totalorder %s9, 3
    %p170 = pnand %p168, %p169
    %p171 = pneg %p170
    // Predicated region
    $region29: #{forward.27} parent=5 // pred_check
      _
    $region30: #{forward.27} parent=5 // pred_check_branch
      %173 = sbr.rel (%p170) target = $region32
    $region31: #{forward.27} parent=5 // pred_region
      %s174 = ssub.s32 %s9, 1
      %s175 = smul.u32 8, %s18
      %p176 = scmp.lt.s32.totalorder %s175, 15
      %s177 = scalar_select %p176, %s175, 15
      %s178 = smul.addr %s177, 4
      %s179 = scalar_lea.vmem %s0, %s178
      %p180 = pneg %p47
      %p181 = pneg %p44
      %p182 = scmp.lt.s32.totalorder %s19, 0
      %s183 = scalar_select %p182, %s19, 0
      %s184 = smul.addr %s183, 4
      %s185 = scalar_lea.vmem %s1, %s184
      %p186 = pneg %p73
      %p187 = pneg %p70
      %p188 = scmp.lt.s32.totalorder %s19, 0
      %s189 = scalar_select %p188, %s19, 0
      %s190 = scalar_lea.vmem %s2, %s189
      %p191 = pneg %p99
      %p192 = pneg %p96
      %p193 = pneg %p127
      %p194 = pneg %p124
      %s195 = smul.u32 8, %s18
      %p196 = scmp.lt.s32.totalorder %s195, 15
      %s197 = scalar_select %p196, %s195, 15
      %p198 = scmp.lt.s32.totalorder %s19, 0
      %s199 = scalar_select %p198, %s19, 0
      %s200 = sadd.s32 %s199, %s197
      %s201 = smul.addr %s200, 8
      %s202 = scalar_lea.vmem %s3, %s201
      %s203 = smul.u32 8, %s18
      %p204 = scmp.lt.s32.totalorder %s203, 15
      %s205 = scalar_select %p204, %s203, 15
      %s206 = smul.addr %s205, 4
      %s207 = scalar_lea.vmem %s0, %s206
      %s208 = smul.u32 8, %s18
      %p209 = scmp.lt.s32.totalorder %s19, 0
      %s210 = scalar_select %p209, %s19, 0
      %s211 = smul.addr %s210, 4
      %s212 = scalar_lea.vmem %s1, %s211
      %p213 = scmp.lt.s32.totalorder %s19, 0
      %s214 = scalar_select %p213, %s19, 0
      %s215 = scalar_lea.vmem %s2, %s214
      %s216 = smul.u32 8, %s18
      %p217 = scmp.lt.s32.totalorder %s216, 15
      %s218 = scalar_select %p217, %s216, 15
      %p219 = scmp.lt.s32.totalorder %s19, 0
      %s220 = scalar_select %p219, %s19, 0
      %s221 = sadd.s32 %s220, %s218
      %s222 = smul.addr %s221, 8
      %s223 = scalar_lea.vmem %s3, %s222
      %s224 = smul.u32 8, %s18
      %v226 = vld [vmem:[%s207] sm:$0xf]
      %v227 = vld [vmem:[%s207 + $0x4] sm:$0xf]
      %v228 = vld [vmem:[%s207 + $0x8] sm:$0xf]
      %v229 = vld [vmem:[%s207 + $0xc] sm:$0xf]
      %v230 = vld [vmem:[%s207 + $0x10] sm:$0xf]
      %v231 = vld [vmem:[%s207 + $0x14] sm:$0xf]
      %v232 = vld [vmem:[%s207 + $0x18] sm:$0xf]
      %v233 = vld [vmem:[%s207 + $0x1c] sm:$0xf]
      %v234 = vld [vmem:[%s212] sm:$0xf]
      %v235 = vld [vmem:[%s212 + $0x4] sm:$0xf]
      %v236 = vld [vmem:[%s212 + $0x8] sm:$0xf]
      %v237 = vld [vmem:[%s212 + $0xc] sm:$0xf]
      %v238 = vld [vmem:[%s212 + $0x10] sm:$0xf]
      %v239 = vld [vmem:[%s212 + $0x14] sm:$0xf]
      %v240 = vld [vmem:[%s212 + $0x18] sm:$0xf]
      %v241 = vld [vmem:[%s212 + $0x1c] sm:$0xf]
      %v242 = vld [vmem:[%s212 + $0x20] sm:$0xf]
      %v243 = vld [vmem:[%s212 + $0x24] sm:$0xf]
      %v244 = vld [vmem:[%s212 + $0x28] sm:$0xf]
      %v245 = vld [vmem:[%s212 + $0x2c] sm:$0xf]
      %v246 = vld [vmem:[%s212 + $0x30] sm:$0xf]
      %v247 = vld [vmem:[%s212 + $0x34] sm:$0xf]
      %v248 = vld [vmem:[%s212 + $0x38] sm:$0xf]
      %v249 = vld [vmem:[%s212 + $0x3c] sm:$0xf]
      %v250 = vld [vmem:[%s215] sm:$0x1]
      %v252 = vlaneseq
      %v253 = vshrl.u32 %v252, 7
      %v254 = vsub.s32 0, %v253
      %v255 = vrot.slane %v250, %v254
      %v265 = vunpack.c.l.b16 %v226
      %v266 = vunpack.c.l.b16 %v227
      %v267 = vunpack.c.l.b16 %v228
      %v268 = vunpack.c.l.b16 %v229
      %v269 = vunpack.c.l.b16 %v230
      %v270 = vunpack.c.l.b16 %v231
      %v271 = vunpack.c.l.b16 %v232
      %v272 = vunpack.c.l.b16 %v233
      %v273 = vpack.c.b16 %v266, %v265
      %v274 = vpack.c.b16 %v268, %v267
      %v275 = vpack.c.b16 %v270, %v269
      %v276 = vpack.c.b16 %v272, %v271
      %v297 = vunpack.c.l.b16 %v234
      %v298 = vunpack.c.l.b16 %v235
      %v299 = vunpack.c.l.b16 %v236
      %v300 = vunpack.c.l.b16 %v237
      %v301 = vunpack.c.l.b16 %v238
      %v302 = vunpack.c.l.b16 %v239
      %v303 = vunpack.c.l.b16 %v240
      %v304 = vunpack.c.l.b16 %v241
      %v305 = vunpack.c.l.b16 %v242
      %v306 = vunpack.c.l.b16 %v243
      %v307 = vunpack.c.l.b16 %v244
      %v308 = vunpack.c.l.b16 %v245
      %v309 = vunpack.c.l.b16 %v246
      %v310 = vunpack.c.l.b16 %v247
      %v311 = vunpack.c.l.b16 %v248
      %v312 = vunpack.c.l.b16 %v249
      %v313 = vpack.c.b16 %v298, %v297
      %v314 = vpack.c.b16 %v300, %v299
      %v315 = vpack.c.b16 %v302, %v301
      %v316 = vpack.c.b16 %v304, %v303
      %v317 = vpack.c.b16 %v306, %v305
      %v318 = vpack.c.b16 %v308, %v307
      %v319 = vpack.c.b16 %v310, %v309
      %v320 = vpack.c.b16 %v312, %v311
      %329 = vmatprep.subr.bf16.mxu0 0
      %330 = vmatpush1.bf16.msra.mxu0 %v313
      %331 = vmatprep.subr.bf16.mxu0 0
      %332 = vmatpush1.bf16.msra.mxu0 %v314
      %333 = vmatprep.subr.bf16.mxu0 0
      %334 = vmatpush1.bf16.msra.mxu0 %v315
      %335 = vmatprep.subr.bf16.mxu0 0
      %336 = vmatpush1.bf16.msra.mxu0 %v316
      %337 = vmatprep.subr.bf16.mxu0 0
      %338 = vmatpush1.bf16.msra.mxu0 %v317
      %339 = vmatprep.subr.bf16.mxu0 0
      %340 = vmatpush1.bf16.msra.mxu0 %v318
      %341 = vmatprep.subr.bf16.mxu0 0
      %342 = vmatpush1.bf16.msra.mxu0 %v319
      %343 = vmatprep.subr.bf16.mxu0 0
      %344 = vmatpush1.bf16.msra.mxu0 %v320
      %345 = vmatprep.subr.bf16.mxu0 0
      %346 = vmatpush1.bf16.msra.mxu0 0
      %347 = vmatprep.subr.bf16.mxu0 0
      %348 = vmatpush1.bf16.msra.mxu0 0
      %349 = vmatprep.subr.bf16.mxu0 0
      %350 = vmatpush1.bf16.msra.mxu0 0
      %351 = vmatprep.subr.bf16.mxu0 0
      %352 = vmatpush1.bf16.msra.mxu0 0
      %353 = vmatprep.subr.bf16.mxu0 0
      %354 = vmatpush1.bf16.msra.mxu0 0
      %355 = vmatprep.subr.bf16.mxu0 0
      %356 = vmatpush1.bf16.msra.mxu0 0
      %357 = vmatprep.subr.bf16.mxu0 0
      %358 = vmatpush1.bf16.msra.mxu0 0
      %359 = vmatprep.subr.bf16.mxu0 0
      %360 = vmatpush1.bf16.msra.mxu0 0
      %361 = vmatprep.mubr.bf16.mxu0 0
      %362 = vmatmul.mubr.bf16.gmra.mrb[0].mxu0 %v273
      %v363 = vpop.f32.mrb[0].mxu0
      %v364 = vadd.f32 %v255, %v363
      %v365 = vpop.f32.mrb[0].mxu0
      %v366 = vpop.f32.mrb[0].mxu0
      %v367 = vadd.f32 %v255, %v366
      %v368 = vpop.f32.mrb[0].mxu0
      %369 = vmatprep.mubr.bf16.mxu0 0
      %370 = vmatmul.mubr.bf16.gmra.mrb[0].mxu0 %v274
      %v371 = vpop.f32.mrb[0].mxu0
      %v372 = vadd.f32 %v255, %v371
      %v373 = vpop.f32.mrb[0].mxu0
      %v374 = vpop.f32.mrb[0].mxu0
      %v375 = vadd.f32 %v255, %v374
      %v376 = vpop.f32.mrb[0].mxu0
      %377 = vmatprep.mubr.bf16.mxu0 0
      %378 = vmatmul.mubr.bf16.gmra.mrb[0].mxu0 %v275
      %v379 = vpop.f32.mrb[0].mxu0
      %v380 = vadd.f32 %v255, %v379
      %v381 = vpop.f32.mrb[0].mxu0
      %v382 = vpop.f32.mrb[0].mxu0
      %v383 = vadd.f32 %v255, %v382
      %v384 = vpop.f32.mrb[0].mxu0
      %385 = vmatprep.mubr.bf16.mxu0 0
      %386 = vmatmul.mubr.bf16.gmra.mrb[0].mxu0 %v276
      %v387 = vpop.f32.mrb[0].mxu0
      %v388 = vadd.f32 %v255, %v387
      %v389 = vpop.f32.mrb[0].mxu0
      %v390 = vpop.f32.mrb[0].mxu0
      %v391 = vadd.f32 %v255, %v390
      %v392 = vpop.f32.mrb[0].mxu0
      %393 = vdwg.mxu0
      %v394 = vmax.f32 %v364, 0.0
      %v395 = vmax.f32 %v367, 0.0
      %v396 = vmax.f32 %v372, 0.0
      %v397 = vmax.f32 %v375, 0.0
      %v398 = vmax.f32 %v380, 0.0
      %v399 = vmax.f32 %v383, 0.0
      %v400 = vmax.f32 %v388, 0.0
      %v401 = vmax.f32 %v391, 0.0
      %402 = vst [vmem:[%s223] sm:$0xff] %v394
      %403 = vst [vmem:[%s223 + $0x8] sm:$0xff] %v395
      %404 = vst [vmem:[%s223 + $0x10] sm:$0xff] %v396
      %405 = vst [vmem:[%s223 + $0x18] sm:$0xff] %v397
      %406 = vst [vmem:[%s223 + $0x20] sm:$0xff] %v398
      %407 = vst [vmem:[%s223 + $0x28] sm:$0xff] %v399
      %408 = vst [vmem:[%s223 + $0x30] sm:$0xff] %v400
      %409 = vst [vmem:[%s223 + $0x38] sm:$0xff] %v401
      %s410 = smul.u32 8, %s18
      %p411 = scmp.lt.s32.totalorder %s410, 15
      %s412 = scalar_select %p411, %s410, 15
      %p413 = scmp.lt.s32.totalorder %s19, 0
      %s414 = scalar_select %p413, %s19, 0
      %s415 = sadd.s32 %s414, %s412
      %s416 = smul.addr %s415, 8
      %s417 = scalar_lea.vmem %s3, %s416
      // Predicated region
      $region33: #{forward.27} parent=31 // pred_check
        %p418 = pneg %p124
      $region34: #{forward.27} parent=31 // pred_check_branch
        %420 = sbr.rel (%p418) target = $region36
      $region35: #{forward.27} parent=31 // pred_region
        %s421 = smul.u32 8, %s18
      $region36: #{forward.27} parent=31 // pred_fallthru
        _
    $region32: #{forward.27} parent=5 // pred_fallthru
      _
    %p422 = scmp.le.s32.totalorder 2, %s9
    // Predicated region
    $region37: #{forward.27} parent=5 // pred_check
      %p423 = pneg %p422
    $region38: #{forward.27} parent=5 // pred_check_branch
      %425 = sbr.rel (%p423) target = $region40
    $region39: #{forward.27} parent=5 // pred_region
      %s426 = ssub.s32 %s9, 2
      // Predicated region
      $region41: #{forward.27} parent=39 // pred_check
        %p427 = pneg %p130
      $region42: #{forward.27} parent=39 // pred_check_branch
        %429 = sbr.rel (%p427) target = $region44
      $region43: #{forward.27} parent=39 // pred_region
        %s430 = smul.u32 8, %s20
        %p431 = scmp.lt.s32.totalorder %s430, 15
        %s432 = scalar_select %p431, %s430, 15
        %p433 = scmp.lt.s32.totalorder %s21, 0
        %s434 = scalar_select %p433, %s21, 0
        %s435 = sadd.s32 %s434, %s432
        %s436 = smul.addr %s435, 8
        %s437 = scalar_lea.vmem %s3, %s436
      $region44: #{forward.27} parent=39 // pred_fallthru
        _
    $region40: #{forward.27} parent=5 // pred_fallthru
      _
  $region6: #{forward.27} parent=0 // loop_footer
    %s13 = sadd.s32 1, %s9
  $region7: #{forward.27} parent=0 // loop_footer_branch
    %8 = sbr.rel target = $region3
  $region8: #{forward.27} parent=0 // loop_exit
    _

</llo_original>
